<compile_context>
chip_gen: v5e
topology: v5e:2x2
jax: 0.10.0
libtpu: 0.0.40
codegen_flags: <defaults>
</compile_context>

<pallas_src>
import math

import jax
import jax.numpy as jnp
from jax.experimental import pallas as pl
from jax.experimental.pallas import tpu as pltpu

# ----------------------------------------------------------------------------
# Hyperparameters consistent with the module's __init__/forward
# ----------------------------------------------------------------------------
INPUT_DIM   = 16
HIDDEN_DIM  = 32      # d_model
NUM_HEADS   = 4
NUM_LAYERS  = 2
NUM_CLASSES = 10
FFN_DIM     = 2048    # nn.TransformerEncoderLayer default dim_feedforward
MAX_SEQ_LEN = 16      # max_sequence_length for the learned positional encoding
LN_EPS      = 1e-5    # nn.LayerNorm default eps
FFN_CHUNK   = 512     # chunk size over the feed-forward dim

BATCH = 2
SEQ   = 8
HEAD_DIM = HIDDEN_DIM // NUM_HEADS


def _layer_norm(x, g, b):
    # x: (N, E) f32; g, b: (E,)
    mu = jnp.mean(x, axis=-1, keepdims=True)
    var = jnp.mean(jnp.square(x - mu), axis=-1, keepdims=True)
    return (x - mu) * jax.lax.rsqrt(var + LN_EPS) * g[None, :] + b[None, :]


def transformer_kernel(x_ref, emb_w_ref, emb_b_ref, pos_ref,
                       qkv_w_ref, qkv_b_ref, out_w_ref, out_b_ref,
                       ln1_g_ref, ln1_b_ref, ln2_g_ref, ln2_b_ref,
                       ff1_w_ref, ff1_b_ref, ff2_w_ref, ff2_b_ref,
                       fc_w_ref, fc_b_ref, o_ref):
    S, B, _ = x_ref.shape
    N = S * B
    E, H, D = HIDDEN_DIM, NUM_HEADS, HEAD_DIM

    # Embedding (Linear): bf16 weights, f32 accumulation.
    x2 = x_ref[...].reshape(N, INPUT_DIM).astype(jnp.bfloat16)
    h = jnp.dot(x2, emb_w_ref[...], preferred_element_type=jnp.float32) + emb_b_ref[...]
    # Learned positional encoding broadcasts over the batch axis.
    h = (h.reshape(S, B, E) + pos_ref[0:S, :][:, None, :]).reshape(N, E)

    # TODO(synk): optional v5e-only improvement -- prefetch layer l+1 weights via
    # manual make_async_copy double-buffering; skipped (all weights fit in VMEM
    # and DMA is already mostly hidden on v6e/v7x).
    for l in range(NUM_LAYERS):
        # ---- multi-head self-attention (post-norm encoder layer) ----
        h_b = h.astype(jnp.bfloat16)
        qkv = (jnp.dot(h_b, qkv_w_ref[l], preferred_element_type=jnp.float32)
               + qkv_b_ref[l][None, :]).reshape(S, B, 3 * E)     # 1/sqrt(D) pre-folded into Q
        attn = jnp.zeros((N, E), jnp.float32)
        # TODO(synk): heads stay in a static python loop (Mosaic dot_general supports a
        # single batch dim and only minor-dim transposes); the concat relayout is removed
        # by accumulating the out-projection per head instead.
        for hh in range(H):
            q = qkv[:, :, hh * D:(hh + 1) * D]                    # (S, B, D)
            k = qkv[:, :, E + hh * D:E + (hh + 1) * D]
            v = qkv[:, :, 2 * E + hh * D:2 * E + (hh + 1) * D]
            s_ = jnp.einsum('sbd,scd->sbc', q, k, preferred_element_type=jnp.float32)
            s_ = s_ - jnp.max(s_, axis=-1, keepdims=True)
            p = jnp.exp(s_)
            p = p / jnp.sum(p, axis=-1, keepdims=True)            # softmax over keys (f32)
            o = jnp.einsum('sbc,scd->sbd', p, v, preferred_element_type=jnp.float32)
            attn = attn + jnp.dot(o.reshape(N, D),
                                  out_w_ref[l, hh * D:(hh + 1) * D, :],
                                  preferred_element_type=jnp.float32)
        attn = attn + out_b_ref[l][None, :]
        # TODO(synk): dropout is identity here (eval-mode semantics), no RNG dropout.
        h = _layer_norm(h + attn, ln1_g_ref[l], ln1_b_ref[l])

        # ---- position-wise feed-forward (ReLU), chunked over the 2048 dim ----
        h_b = h.astype(jnp.bfloat16)
        ff_acc = jnp.zeros((N, E), jnp.float32)
        for c in range(FFN_DIM // FFN_CHUNK):
            c0, c1 = c * FFN_CHUNK, (c + 1) * FFN_CHUNK
            a = (jnp.dot(h_b, ff1_w_ref[l, :, c0:c1], preferred_element_type=jnp.float32)
                 + ff1_b_ref[l, c0:c1][None, :])
            a = jnp.maximum(a, 0.0).astype(jnp.bfloat16)          # ReLU in f32, then bf16 for MXU
            ff_acc = ff_acc + jnp.dot(a, ff2_w_ref[l, c0:c1, :],
                                      preferred_element_type=jnp.float32)
        ff_acc = ff_acc + ff2_b_ref[l][None, :]
        h = _layer_norm(h + ff_acc, ln2_g_ref[l], ln2_b_ref[l])

    pooled = jnp.mean(h.reshape(S, B, E), axis=0)                 # == x.mean(dim=1) in PyTorch
    logits = (jnp.dot(pooled.astype(jnp.bfloat16), fc_w_ref[...],
                      preferred_element_type=jnp.float32) + fc_b_ref[...])
    o_ref[...] = logits.astype(o_ref.dtype)


@jax.jit
def transformer_forward(x, params):
    B, S, _ = x.shape
    # Only per-call glue: transpose the (tiny) input to the internal (S, B, In)
    # layout.  All weights are already stored kernel-ready, so no per-call
    # weight transposes/casts hit HBM.
    x_sb = jnp.transpose(x, (1, 0, 2))
    inputs = (
        x_sb,
        params["emb_w"], params["emb_b"], params["pos"],
        params["qkv_w"], params["qkv_b"], params["out_w"], params["out_b"],
        params["ln1_g"], params["ln1_b"], params["ln2_g"], params["ln2_b"],
        params["ff1_w"], params["ff1_b"], params["ff2_w"], params["ff2_b"],
        params["fc_w"], params["fc_b"],
    )
    return pl.pallas_call(
        transformer_kernel,
        out_shape=jax.ShapeDtypeStruct((B, NUM_CLASSES), jnp.float32),
        in_specs=[pl.BlockSpec(memory_space=pltpu.MemorySpace.VMEM) for _ in inputs],
        out_specs=pl.BlockSpec(memory_space=pltpu.MemorySpace.VMEM),
    )(*inputs)


def init_params(key):
    """Returns kernel-ready parameters.

    Raw draws follow the PyTorch layouts/scales; they are then converted ONCE
    (at init, not per call) to: (in, out) weight layout, bf16 for the large
    matrices, and the 1/sqrt(head_dim) attention scale folded into the Q rows
    of the in_proj weight and bias.
    """
    ks = jax.random.split(key, 16)
    E, F, L, D = HIDDEN_DIM, FFN_DIM, NUM_LAYERS, HEAD_DIM

    def nrm(k, shape, scale):
        return scale * jax.random.normal(k, shape, dtype=jnp.float32)

    emb_w = nrm(ks[0], (E, INPUT_DIM), 1.0 / math.sqrt(INPUT_DIM))   # PyTorch (out, in)
    qkv_w = nrm(ks[3], (L, 3 * E, E), 1.0 / math.sqrt(E))
    qkv_b = nrm(ks[4], (L, 3 * E), 0.01)
    out_w = nrm(ks[5], (L, E, E), 1.0 / math.sqrt(E))
    ff1_w = nrm(ks[7], (L, F, E), 1.0 / math.sqrt(E))
    ff2_w = nrm(ks[9], (L, E, F), 1.0 / math.sqrt(F))
    fc_w  = nrm(ks[11], (NUM_CLASSES, E), 1.0 / math.sqrt(E))

    scale = 1.0 / math.sqrt(D)
    qkv_w = qkv_w.at[:, :E, :].multiply(scale)   # fold attention scale into Q weight rows
    qkv_b = qkv_b.at[:, :E].multiply(scale)      # ... and the Q bias

    return {
        "emb_w": emb_w.T.astype(jnp.bfloat16),                           # (In, E)
        "emb_b": nrm(ks[1], (1, E), 0.01),
        "pos":   nrm(ks[2], (MAX_SEQ_LEN, E), 1.0),                      # (Smax, E)
        "qkv_w": jnp.transpose(qkv_w, (0, 2, 1)).astype(jnp.bfloat16),   # (L, E, 3E)
        "qkv_b": qkv_b,
        "out_w": jnp.transpose(out_w, (0, 2, 1)),                        # (L, E, E) f32 (tiny)
        "out_b": nrm(ks[6], (L, E), 0.01),
        "ln1_g": jnp.ones((L, E), jnp.float32),
        "ln1_b": jnp.zeros((L, E), jnp.float32),
        "ln2_g": jnp.ones((L, E), jnp.float32),
        "ln2_b": jnp.zeros((L, E), jnp.float32),
        "ff1_w": jnp.transpose(ff1_w, (0, 2, 1)).astype(jnp.bfloat16),   # (L, E, F)
        "ff1_b": nrm(ks[8], (L, F), 0.01),
        "ff2_w": jnp.transpose(ff2_w, (0, 2, 1)).astype(jnp.bfloat16),   # (L, F, E)
        "ff2_b": nrm(ks[10], (L, E), 0.01),
        "fc_w":  fc_w.T.astype(jnp.bfloat16),                            # (E, NC)
        "fc_b":  nrm(ks[12], (1, NUM_CLASSES), 0.01),
    }


# ----------------------------------------------------------------------------
# Pure-JAX reference mirroring the PyTorch semantics (sanity check).
# It consumes the same kernel-ready params (weights already (in,out)-layout,
# the 1/sqrt(D) scale already folded into the Q projection).
# ----------------------------------------------------------------------------
def _ln_ref(x, g, b):
    mu = jnp.mean(x, axis=-1, keepdims=True)
    var = jnp.mean(jnp.square(x - mu), axis=-1, keepdims=True)
    return (x - mu) * jax.lax.rsqrt(var + LN_EPS) * g + b


def reference_forward(x, params):
    B, S, _ = x.shape
    E, H, D, L = HIDDEN_DIM, NUM_HEADS, HEAD_DIM, NUM_LAYERS
    f32 = lambda a: a.astype(jnp.float32)
    h = x @ f32(params["emb_w"]) + params["emb_b"][0]
    h = h + params["pos"][:S, :][None, :, :]
    src = h                      # (B, S, E); batch_first=False -> dim 0 is the attention seq
    for l in range(L):
        qkv = src @ f32(params["qkv_w"][l]) + params["qkv_b"][l]
        q, k, v = qkv[..., :E], qkv[..., E:2 * E], qkv[..., 2 * E:]
        qh = q.reshape(B, S, H, D)
        kh = k.reshape(B, S, H, D)
        vh = v.reshape(B, S, H, D)
        scores = jnp.einsum('bshd,cshd->shbc', qh, kh)   # 1/sqrt(D) already folded into Q
        p = jax.nn.softmax(scores, axis=-1)
        o = jnp.einsum('shbc,cshd->bshd', p, vh).reshape(B, S, E)
        o = o @ params["out_w"][l] + params["out_b"][l]
        src = _ln_ref(src + o, params["ln1_g"][l], params["ln1_b"][l])
        ff = jnp.maximum(src @ f32(params["ff1_w"][l]) + params["ff1_b"][l], 0.0)
        ff = ff @ f32(params["ff2_w"][l]) + params["ff2_b"][l]
        src = _ln_ref(src + ff, params["ln2_g"][l], params["ln2_b"][l])
    pooled = src.mean(axis=1)
    return pooled @ f32(params["fc_w"]) + params["fc_b"][0]


if __name__ == "__main__":
    key = jax.random.PRNGKey(0)
    params = init_params(key)
    x = jax.random.normal(jax.random.fold_in(key, 123),
                          (BATCH, SEQ, INPUT_DIM), dtype=jnp.float32)

    out = transformer_forward(x, params)
    out = jax.block_until_ready(out)

    assert out.shape == (BATCH, NUM_CLASSES)
    assert bool(jnp.all(jnp.isfinite(out)))
    ref = reference_forward(x, params)
    err = float(jnp.max(jnp.abs(out - ref)))
    assert err < 1e-1, f"max abs err vs reference: {err}"
    print("KERNEL_OK")
</pallas_src>

<mosaic_0001>
module attributes {stable_mosaic.version = 11 : i64} {
  func.func @transformer_kernel(%arg0: memref<8x2x16xf32, #tpu.memory_space<vmem>>, %arg1: memref<16x32xbf16, #tpu.memory_space<vmem>>, %arg2: memref<1x32xf32, #tpu.memory_space<vmem>>, %arg3: memref<16x32xf32, #tpu.memory_space<vmem>>, %arg4: memref<2x32x96xbf16, #tpu.memory_space<vmem>>, %arg5: memref<2x96xf32, #tpu.memory_space<vmem>>, %arg6: memref<2x32x32xf32, #tpu.memory_space<vmem>>, %arg7: memref<2x32xf32, #tpu.memory_space<vmem>>, %arg8: memref<2x32xf32, #tpu.memory_space<vmem>>, %arg9: memref<2x32xf32, #tpu.memory_space<vmem>>, %arg10: memref<2x32xf32, #tpu.memory_space<vmem>>, %arg11: memref<2x32xf32, #tpu.memory_space<vmem>>, %arg12: memref<2x32x2048xbf16, #tpu.memory_space<vmem>>, %arg13: memref<2x2048xf32, #tpu.memory_space<vmem>>, %arg14: memref<2x2048x32xbf16, #tpu.memory_space<vmem>>, %arg15: memref<2x32xf32, #tpu.memory_space<vmem>>, %arg16: memref<32x10xbf16, #tpu.memory_space<vmem>>, %arg17: memref<1x10xf32, #tpu.memory_space<vmem>>, %arg18: memref<2x10xf32, #tpu.memory_space<vmem>>) attributes {dimension_semantics = [], scalar_prefetch = 0 : i64, scratch_operands = 0 : i64, tpu.core_type = #tpu.core_type<tc>} {
    %c0 = arith.constant 0 : index
    %c0_0 = arith.constant 0 : index
    %c0_1 = arith.constant 0 : index
    %0 = vector.load %arg0[%c0, %c0_0, %c0_1] : memref<8x2x16xf32, #tpu.memory_space<vmem>>, vector<8x2x16xf32>
    %1 = vector.shape_cast %0 : vector<8x2x16xf32> to vector<16x16xf32>
    %2 = arith.truncf %1 : vector<16x16xf32> to vector<16x16xbf16>
    %c0_2 = arith.constant 0 : index
    %c0_3 = arith.constant 0 : index
    %3 = vector.load %arg1[%c0_2, %c0_3] : memref<16x32xbf16, #tpu.memory_space<vmem>>, vector<16x32xbf16>
    %cst = arith.constant dense<0.000000e+00> : vector<16x32xf32>
    %4 = tpu.matmul %2, %3, %cst {dimension_numbers = #tpu.dot_dimension_numbers<[1], [0], [0], [1], [0, 0, 1, 1], [], []>} : vector<16x16xbf16>, vector<16x32xbf16>, vector<16x32xf32> -> vector<16x32xf32>
    %c0_4 = arith.constant 0 : index
    %c0_5 = arith.constant 0 : index
    %5 = vector.load %arg2[%c0_4, %c0_5] : memref<1x32xf32, #tpu.memory_space<vmem>>, vector<1x32xf32>
    %6 = vector.broadcast %5 : vector<1x32xf32> to vector<16x32xf32>
    %7 = arith.addf %4, %6 : vector<16x32xf32>
    %8 = vector.shape_cast %7 : vector<16x32xf32> to vector<8x2x32xf32>
    %c0_6 = arith.constant 0 : index
    %c0_7 = arith.constant 0 : index
    %9 = vector.load %arg3[%c0_6, %c0_7] : memref<16x32xf32, #tpu.memory_space<vmem>>, vector<8x32xf32>
    %10 = vector.shape_cast %9 : vector<8x32xf32> to vector<8x1x32xf32>
    %11 = vector.broadcast %10 : vector<8x1x32xf32> to vector<8x2x32xf32>
    %12 = arith.addf %8, %11 : vector<8x2x32xf32>
    %13 = vector.shape_cast %12 : vector<8x2x32xf32> to vector<16x32xf32>
    %14 = arith.truncf %13 : vector<16x32xf32> to vector<16x32xbf16>
    %c0_8 = arith.constant 0 : index
    %c0_9 = arith.constant 0 : index
    %c0_10 = arith.constant 0 : index
    %15 = vector.load %arg4[%c0_8, %c0_9, %c0_10] : memref<2x32x96xbf16, #tpu.memory_space<vmem>>, vector<1x32x96xbf16>
    %16 = vector.shape_cast %15 : vector<1x32x96xbf16> to vector<32x96xbf16>
    %cst_11 = arith.constant dense<0.000000e+00> : vector<16x96xf32>
    %17 = tpu.matmul %14, %16, %cst_11 {dimension_numbers = #tpu.dot_dimension_numbers<[1], [0], [0], [1], [0, 0, 1, 1], [], []>} : vector<16x32xbf16>, vector<32x96xbf16>, vector<16x96xf32> -> vector<16x96xf32>
    %c0_12 = arith.constant 0 : index
    %c0_13 = arith.constant 0 : index
    %18 = vector.load %arg5[%c0_12, %c0_13] : memref<2x96xf32, #tpu.memory_space<vmem>>, vector<1x96xf32>
    %19 = vector.shape_cast %18 : vector<1x96xf32> to vector<96xf32>
    %20 = vector.shape_cast %19 : vector<96xf32> to vector<1x96xf32>
    %21 = vector.broadcast %20 : vector<1x96xf32> to vector<16x96xf32>
    %22 = arith.addf %17, %21 : vector<16x96xf32>
    %23 = vector.shape_cast %22 : vector<16x96xf32> to vector<8x2x96xf32>
    %cst_14 = arith.constant 0.000000e+00 : f32
    %24 = vector.broadcast %cst_14 : f32 to vector<16x32xf32>
    %25 = vector.extract_strided_slice %23 {offsets = [0, 0, 0], sizes = [8, 2, 8], strides = [1, 1, 1]} : vector<8x2x96xf32> to vector<8x2x8xf32>
    %26 = vector.extract_strided_slice %23 {offsets = [0, 0, 32], sizes = [8, 2, 8], strides = [1, 1, 1]} : vector<8x2x96xf32> to vector<8x2x8xf32>
    %27 = vector.extract_strided_slice %23 {offsets = [0, 0, 64], sizes = [8, 2, 8], strides = [1, 1, 1]} : vector<8x2x96xf32> to vector<8x2x8xf32>
    "tpu.trace_start"() <{level = 10 : i32, message = "sbd,scd->sbc"}> : () -> ()
    %cst_15 = arith.constant dense<0.000000e+00> : vector<8x2x2xf32>
    %28 = tpu.matmul %25, %26, %cst_15 {dimension_numbers = #tpu.dot_dimension_numbers<[2], [2], [1], [1], [0, 0, 0, 1, 1, 1], [0], [0]>} : vector<8x2x8xf32>, vector<8x2x8xf32>, vector<8x2x2xf32> -> vector<8x2x2xf32>
    "tpu.trace_stop"() : () -> ()
    %cst_16 = arith.constant dense<0xFF800000> : vector<8x2xf32>
    %29 = vector.multi_reduction <maximumf>, %28, %cst_16 [2] : vector<8x2x2xf32> to vector<8x2xf32>
    %30 = vector.shape_cast %29 : vector<8x2xf32> to vector<8x2x1xf32>
    %31 = vector.broadcast %30 : vector<8x2x1xf32> to vector<8x2x2xf32>
    %32 = arith.subf %28, %31 : vector<8x2x2xf32>
    %33 = math.exp %32 : vector<8x2x2xf32>
    %cst_17 = arith.constant dense<0.000000e+00> : vector<8x2xf32>
    %34 = vector.multi_reduction <add>, %33, %cst_17 [2] : vector<8x2x2xf32> to vector<8x2xf32>
    %35 = vector.shape_cast %34 : vector<8x2xf32> to vector<8x2x1xf32>
    %36 = vector.broadcast %35 : vector<8x2x1xf32> to vector<8x2x2xf32>
    %37 = arith.divf %33, %36 : vector<8x2x2xf32>
    "tpu.trace_start"() <{level = 10 : i32, message = "sbc,scd->sbd"}> : () -> ()
    %cst_18 = arith.constant dense<0.000000e+00> : vector<8x2x8xf32>
    %38 = tpu.matmul %37, %27, %cst_18 {dimension_numbers = #tpu.dot_dimension_numbers<[2], [1], [1], [2], [0, 0, 0, 1, 1, 2], [0], [0]>} : vector<8x2x2xf32>, vector<8x2x8xf32>, vector<8x2x8xf32> -> vector<8x2x8xf32>
    "tpu.trace_stop"() : () -> ()
    %39 = vector.shape_cast %38 : vector<8x2x8xf32> to vector<16x8xf32>
    %c0_19 = arith.constant 0 : index
    %c0_20 = arith.constant 0 : index
    %c0_21 = arith.constant 0 : index
    %40 = vector.load %arg6[%c0_19, %c0_20, %c0_21] : memref<2x32x32xf32, #tpu.memory_space<vmem>>, vector<1x8x32xf32>
    %41 = vector.shape_cast %40 : vector<1x8x32xf32> to vector<8x32xf32>
    %cst_22 = arith.constant dense<0.000000e+00> : vector<16x32xf32>
    %42 = tpu.matmul %39, %41, %cst_22 {dimension_numbers = #tpu.dot_dimension_numbers<[1], [0], [0], [1], [0, 0, 1, 1], [], []>} : vector<16x8xf32>, vector<8x32xf32>, vector<16x32xf32> -> vector<16x32xf32>
    %43 = arith.addf %24, %42 : vector<16x32xf32>
    %44 = vector.extract_strided_slice %23 {offsets = [0, 0, 8], sizes = [8, 2, 8], strides = [1, 1, 1]} : vector<8x2x96xf32> to vector<8x2x8xf32>
    %45 = vector.extract_strided_slice %23 {offsets = [0, 0, 40], sizes = [8, 2, 8], strides = [1, 1, 1]} : vector<8x2x96xf32> to vector<8x2x8xf32>
    %46 = vector.extract_strided_slice %23 {offsets = [0, 0, 72], sizes = [8, 2, 8], strides = [1, 1, 1]} : vector<8x2x96xf32> to vector<8x2x8xf32>
    "tpu.trace_start"() <{level = 10 : i32, message = "sbd,scd->sbc"}> : () -> ()
    %cst_23 = arith.constant dense<0.000000e+00> : vector<8x2x2xf32>
    %47 = tpu.matmul %44, %45, %cst_23 {dimension_numbers = #tpu.dot_dimension_numbers<[2], [2], [1], [1], [0, 0, 0, 1, 1, 1], [0], [0]>} : vector<8x2x8xf32>, vector<8x2x8xf32>, vector<8x2x2xf32> -> vector<8x2x2xf32>
    "tpu.trace_stop"() : () -> ()
    %cst_24 = arith.constant dense<0xFF800000> : vector<8x2xf32>
    %48 = vector.multi_reduction <maximumf>, %47, %cst_24 [2] : vector<8x2x2xf32> to vector<8x2xf32>
    %49 = vector.shape_cast %48 : vector<8x2xf32> to vector<8x2x1xf32>
    %50 = vector.broadcast %49 : vector<8x2x1xf32> to vector<8x2x2xf32>
    %51 = arith.subf %47, %50 : vector<8x2x2xf32>
    %52 = math.exp %51 : vector<8x2x2xf32>
    %cst_25 = arith.constant dense<0.000000e+00> : vector<8x2xf32>
    %53 = vector.multi_reduction <add>, %52, %cst_25 [2] : vector<8x2x2xf32> to vector<8x2xf32>
    %54 = vector.shape_cast %53 : vector<8x2xf32> to vector<8x2x1xf32>
    %55 = vector.broadcast %54 : vector<8x2x1xf32> to vector<8x2x2xf32>
    %56 = arith.divf %52, %55 : vector<8x2x2xf32>
    "tpu.trace_start"() <{level = 10 : i32, message = "sbc,scd->sbd"}> : () -> ()
    %cst_26 = arith.constant dense<0.000000e+00> : vector<8x2x8xf32>
    %57 = tpu.matmul %56, %46, %cst_26 {dimension_numbers = #tpu.dot_dimension_numbers<[2], [1], [1], [2], [0, 0, 0, 1, 1, 2], [0], [0]>} : vector<8x2x2xf32>, vector<8x2x8xf32>, vector<8x2x8xf32> -> vector<8x2x8xf32>
    "tpu.trace_stop"() : () -> ()
    %58 = vector.shape_cast %57 : vector<8x2x8xf32> to vector<16x8xf32>
    %c0_27 = arith.constant 0 : index
    %c8 = arith.constant 8 : index
    %c0_28 = arith.constant 0 : index
    %59 = vector.load %arg6[%c0_27, %c8, %c0_28] : memref<2x32x32xf32, #tpu.memory_space<vmem>>, vector<1x8x32xf32>
    %60 = vector.shape_cast %59 : vector<1x8x32xf32> to vector<8x32xf32>
    %cst_29 = arith.constant dense<0.000000e+00> : vector<16x32xf32>
    %61 = tpu.matmul %58, %60, %cst_29 {dimension_numbers = #tpu.dot_dimension_numbers<[1], [0], [0], [1], [0, 0, 1, 1], [], []>} : vector<16x8xf32>, vector<8x32xf32>, vector<16x32xf32> -> vector<16x32xf32>
    %62 = arith.addf %43, %61 : vector<16x32xf32>
    %63 = vector.extract_strided_slice %23 {offsets = [0, 0, 16], sizes = [8, 2, 8], strides = [1, 1, 1]} : vector<8x2x96xf32> to vector<8x2x8xf32>
    %64 = vector.extract_strided_slice %23 {offsets = [0, 0, 48], sizes = [8, 2, 8], strides = [1, 1, 1]} : vector<8x2x96xf32> to vector<8x2x8xf32>
    %65 = vector.extract_strided_slice %23 {offsets = [0, 0, 80], sizes = [8, 2, 8], strides = [1, 1, 1]} : vector<8x2x96xf32> to vector<8x2x8xf32>
    "tpu.trace_start"() <{level = 10 : i32, message = "sbd,scd->sbc"}> : () -> ()
    %cst_30 = arith.constant dense<0.000000e+00> : vector<8x2x2xf32>
    %66 = tpu.matmul %63, %64, %cst_30 {dimension_numbers = #tpu.dot_dimension_numbers<[2], [2], [1], [1], [0, 0, 0, 1, 1, 1], [0], [0]>} : vector<8x2x8xf32>, vector<8x2x8xf32>, vector<8x2x2xf32> -> vector<8x2x2xf32>
    "tpu.trace_stop"() : () -> ()
    %cst_31 = arith.constant dense<0xFF800000> : vector<8x2xf32>
    %67 = vector.multi_reduction <maximumf>, %66, %cst_31 [2] : vector<8x2x2xf32> to vector<8x2xf32>
    %68 = vector.shape_cast %67 : vector<8x2xf32> to vector<8x2x1xf32>
    %69 = vector.broadcast %68 : vector<8x2x1xf32> to vector<8x2x2xf32>
    %70 = arith.subf %66, %69 : vector<8x2x2xf32>
    %71 = math.exp %70 : vector<8x2x2xf32>
    %cst_32 = arith.constant dense<0.000000e+00> : vector<8x2xf32>
    %72 = vector.multi_reduction <add>, %71, %cst_32 [2] : vector<8x2x2xf32> to vector<8x2xf32>
    %73 = vector.shape_cast %72 : vector<8x2xf32> to vector<8x2x1xf32>
    %74 = vector.broadcast %73 : vector<8x2x1xf32> to vector<8x2x2xf32>
    %75 = arith.divf %71, %74 : vector<8x2x2xf32>
    "tpu.trace_start"() <{level = 10 : i32, message = "sbc,scd->sbd"}> : () -> ()
    %cst_33 = arith.constant dense<0.000000e+00> : vector<8x2x8xf32>
    %76 = tpu.matmul %75, %65, %cst_33 {dimension_numbers = #tpu.dot_dimension_numbers<[2], [1], [1], [2], [0, 0, 0, 1, 1, 2], [0], [0]>} : vector<8x2x2xf32>, vector<8x2x8xf32>, vector<8x2x8xf32> -> vector<8x2x8xf32>
    "tpu.trace_stop"() : () -> ()
    %77 = vector.shape_cast %76 : vector<8x2x8xf32> to vector<16x8xf32>
    %c0_34 = arith.constant 0 : index
    %c16 = arith.constant 16 : index
    %c0_35 = arith.constant 0 : index
    %78 = vector.load %arg6[%c0_34, %c16, %c0_35] : memref<2x32x32xf32, #tpu.memory_space<vmem>>, vector<1x8x32xf32>
    %79 = vector.shape_cast %78 : vector<1x8x32xf32> to vector<8x32xf32>
    %cst_36 = arith.constant dense<0.000000e+00> : vector<16x32xf32>
    %80 = tpu.matmul %77, %79, %cst_36 {dimension_numbers = #tpu.dot_dimension_numbers<[1], [0], [0], [1], [0, 0, 1, 1], [], []>} : vector<16x8xf32>, vector<8x32xf32>, vector<16x32xf32> -> vector<16x32xf32>
    %81 = arith.addf %62, %80 : vector<16x32xf32>
    %82 = vector.extract_strided_slice %23 {offsets = [0, 0, 24], sizes = [8, 2, 8], strides = [1, 1, 1]} : vector<8x2x96xf32> to vector<8x2x8xf32>
    %83 = vector.extract_strided_slice %23 {offsets = [0, 0, 56], sizes = [8, 2, 8], strides = [1, 1, 1]} : vector<8x2x96xf32> to vector<8x2x8xf32>
    %84 = vector.extract_strided_slice %23 {offsets = [0, 0, 88], sizes = [8, 2, 8], strides = [1, 1, 1]} : vector<8x2x96xf32> to vector<8x2x8xf32>
    "tpu.trace_start"() <{level = 10 : i32, message = "sbd,scd->sbc"}> : () -> ()
    %cst_37 = arith.constant dense<0.000000e+00> : vector<8x2x2xf32>
    %85 = tpu.matmul %82, %83, %cst_37 {dimension_numbers = #tpu.dot_dimension_numbers<[2], [2], [1], [1], [0, 0, 0, 1, 1, 1], [0], [0]>} : vector<8x2x8xf32>, vector<8x2x8xf32>, vector<8x2x2xf32> -> vector<8x2x2xf32>
    "tpu.trace_stop"() : () -> ()
    %cst_38 = arith.constant dense<0xFF800000> : vector<8x2xf32>
    %86 = vector.multi_reduction <maximumf>, %85, %cst_38 [2] : vector<8x2x2xf32> to vector<8x2xf32>
    %87 = vector.shape_cast %86 : vector<8x2xf32> to vector<8x2x1xf32>
    %88 = vector.broadcast %87 : vector<8x2x1xf32> to vector<8x2x2xf32>
    %89 = arith.subf %85, %88 : vector<8x2x2xf32>
    %90 = math.exp %89 : vector<8x2x2xf32>
    %cst_39 = arith.constant dense<0.000000e+00> : vector<8x2xf32>
    %91 = vector.multi_reduction <add>, %90, %cst_39 [2] : vector<8x2x2xf32> to vector<8x2xf32>
    %92 = vector.shape_cast %91 : vector<8x2xf32> to vector<8x2x1xf32>
    %93 = vector.broadcast %92 : vector<8x2x1xf32> to vector<8x2x2xf32>
    %94 = arith.divf %90, %93 : vector<8x2x2xf32>
    "tpu.trace_start"() <{level = 10 : i32, message = "sbc,scd->sbd"}> : () -> ()
    %cst_40 = arith.constant dense<0.000000e+00> : vector<8x2x8xf32>
    %95 = tpu.matmul %94, %84, %cst_40 {dimension_numbers = #tpu.dot_dimension_numbers<[2], [1], [1], [2], [0, 0, 0, 1, 1, 2], [0], [0]>} : vector<8x2x2xf32>, vector<8x2x8xf32>, vector<8x2x8xf32> -> vector<8x2x8xf32>
    "tpu.trace_stop"() : () -> ()
    %96 = vector.shape_cast %95 : vector<8x2x8xf32> to vector<16x8xf32>
    %c0_41 = arith.constant 0 : index
    %c24 = arith.constant 24 : index
    %c0_42 = arith.constant 0 : index
    %97 = vector.load %arg6[%c0_41, %c24, %c0_42] : memref<2x32x32xf32, #tpu.memory_space<vmem>>, vector<1x8x32xf32>
    %98 = vector.shape_cast %97 : vector<1x8x32xf32> to vector<8x32xf32>
    %cst_43 = arith.constant dense<0.000000e+00> : vector<16x32xf32>
    %99 = tpu.matmul %96, %98, %cst_43 {dimension_numbers = #tpu.dot_dimension_numbers<[1], [0], [0], [1], [0, 0, 1, 1], [], []>} : vector<16x8xf32>, vector<8x32xf32>, vector<16x32xf32> -> vector<16x32xf32>
    %100 = arith.addf %81, %99 : vector<16x32xf32>
    %c0_44 = arith.constant 0 : index
    %c0_45 = arith.constant 0 : index
    %101 = vector.load %arg7[%c0_44, %c0_45] : memref<2x32xf32, #tpu.memory_space<vmem>>, vector<1x32xf32>
    %102 = vector.shape_cast %101 : vector<1x32xf32> to vector<32xf32>
    %103 = vector.shape_cast %102 : vector<32xf32> to vector<1x32xf32>
    %104 = vector.broadcast %103 : vector<1x32xf32> to vector<16x32xf32>
    %105 = arith.addf %100, %104 : vector<16x32xf32>
    %106 = arith.addf %13, %105 : vector<16x32xf32>
    %c0_46 = arith.constant 0 : index
    %c0_47 = arith.constant 0 : index
    %107 = vector.load %arg8[%c0_46, %c0_47] : memref<2x32xf32, #tpu.memory_space<vmem>>, vector<1x32xf32>
    %108 = vector.shape_cast %107 : vector<1x32xf32> to vector<32xf32>
    %c0_48 = arith.constant 0 : index
    %c0_49 = arith.constant 0 : index
    %109 = vector.load %arg9[%c0_48, %c0_49] : memref<2x32xf32, #tpu.memory_space<vmem>>, vector<1x32xf32>
    %110 = vector.shape_cast %109 : vector<1x32xf32> to vector<32xf32>
    %cst_50 = arith.constant dense<0.000000e+00> : vector<16xf32>
    %111 = vector.multi_reduction <add>, %106, %cst_50 [1] : vector<16x32xf32> to vector<16xf32>
    %112 = vector.shape_cast %111 : vector<16xf32> to vector<16x1xf32>
    %cst_51 = arith.constant 3.200000e+01 : f32
    %113 = vector.broadcast %cst_51 : f32 to vector<16x1xf32>
    %114 = arith.divf %112, %113 : vector<16x1xf32>
    %115 = vector.broadcast %114 : vector<16x1xf32> to vector<16x32xf32>
    %116 = arith.subf %106, %115 : vector<16x32xf32>
    %117 = arith.mulf %116, %116 : vector<16x32xf32>
    %cst_52 = arith.constant dense<0.000000e+00> : vector<16xf32>
    %118 = vector.multi_reduction <add>, %117, %cst_52 [1] : vector<16x32xf32> to vector<16xf32>
    %119 = vector.shape_cast %118 : vector<16xf32> to vector<16x1xf32>
    %cst_53 = arith.constant 3.200000e+01 : f32
    %120 = vector.broadcast %cst_53 : f32 to vector<16x1xf32>
    %121 = arith.divf %119, %120 : vector<16x1xf32>
    %122 = vector.broadcast %114 : vector<16x1xf32> to vector<16x32xf32>
    %123 = arith.subf %106, %122 : vector<16x32xf32>
    %cst_54 = arith.constant 9.99999974E-6 : f32
    %124 = vector.broadcast %cst_54 : f32 to vector<16x1xf32>
    %125 = arith.addf %121, %124 : vector<16x1xf32>
    %126 = math.rsqrt %125 : vector<16x1xf32>
    %127 = vector.broadcast %126 : vector<16x1xf32> to vector<16x32xf32>
    %128 = arith.mulf %123, %127 : vector<16x32xf32>
    %129 = vector.shape_cast %108 : vector<32xf32> to vector<1x32xf32>
    %130 = vector.broadcast %129 : vector<1x32xf32> to vector<16x32xf32>
    %131 = arith.mulf %128, %130 : vector<16x32xf32>
    %132 = vector.shape_cast %110 : vector<32xf32> to vector<1x32xf32>
    %133 = vector.broadcast %132 : vector<1x32xf32> to vector<16x32xf32>
    %134 = arith.addf %131, %133 : vector<16x32xf32>
    %135 = arith.truncf %134 : vector<16x32xf32> to vector<16x32xbf16>
    %cst_55 = arith.constant 0.000000e+00 : f32
    %136 = vector.broadcast %cst_55 : f32 to vector<16x32xf32>
    %c0_56 = arith.constant 0 : index
    %c0_57 = arith.constant 0 : index
    %c0_58 = arith.constant 0 : index
    %137 = vector.load %arg12[%c0_56, %c0_57, %c0_58] : memref<2x32x2048xbf16, #tpu.memory_space<vmem>>, vector<1x32x512xbf16>
    %138 = vector.shape_cast %137 : vector<1x32x512xbf16> to vector<32x512xbf16>
    %cst_59 = arith.constant dense<0.000000e+00> : vector<16x512xf32>
    %139 = tpu.matmul %135, %138, %cst_59 {dimension_numbers = #tpu.dot_dimension_numbers<[1], [0], [0], [1], [0, 0, 1, 1], [], []>} : vector<16x32xbf16>, vector<32x512xbf16>, vector<16x512xf32> -> vector<16x512xf32>
    %c0_60 = arith.constant 0 : index
    %c0_61 = arith.constant 0 : index
    %140 = vector.load %arg13[%c0_60, %c0_61] : memref<2x2048xf32, #tpu.memory_space<vmem>>, vector<1x512xf32>
    %141 = vector.shape_cast %140 : vector<1x512xf32> to vector<512xf32>
    %142 = vector.shape_cast %141 : vector<512xf32> to vector<1x512xf32>
    %143 = vector.broadcast %142 : vector<1x512xf32> to vector<16x512xf32>
    %144 = arith.addf %139, %143 : vector<16x512xf32>
    %cst_62 = arith.constant 0.000000e+00 : f32
    %145 = vector.broadcast %cst_62 : f32 to vector<16x512xf32>
    %146 = arith.maximumf %144, %145 : vector<16x512xf32>
    %147 = arith.truncf %146 : vector<16x512xf32> to vector<16x512xbf16>
    %c0_63 = arith.constant 0 : index
    %c0_64 = arith.constant 0 : index
    %c0_65 = arith.constant 0 : index
    %148 = vector.load %arg14[%c0_63, %c0_64, %c0_65] : memref<2x2048x32xbf16, #tpu.memory_space<vmem>>, vector<1x512x32xbf16>
    %149 = vector.shape_cast %148 : vector<1x512x32xbf16> to vector<512x32xbf16>
    %cst_66 = arith.constant dense<0.000000e+00> : vector<16x32xf32>
    %150 = tpu.matmul %147, %149, %cst_66 {dimension_numbers = #tpu.dot_dimension_numbers<[1], [0], [0], [1], [0, 0, 1, 1], [], []>} : vector<16x512xbf16>, vector<512x32xbf16>, vector<16x32xf32> -> vector<16x32xf32>
    %151 = arith.addf %136, %150 : vector<16x32xf32>
    %c0_67 = arith.constant 0 : index
    %c0_68 = arith.constant 0 : index
    %c512 = arith.constant 512 : index
    %152 = vector.load %arg12[%c0_67, %c0_68, %c512] : memref<2x32x2048xbf16, #tpu.memory_space<vmem>>, vector<1x32x512xbf16>
    %153 = vector.shape_cast %152 : vector<1x32x512xbf16> to vector<32x512xbf16>
    %cst_69 = arith.constant dense<0.000000e+00> : vector<16x512xf32>
    %154 = tpu.matmul %135, %153, %cst_69 {dimension_numbers = #tpu.dot_dimension_numbers<[1], [0], [0], [1], [0, 0, 1, 1], [], []>} : vector<16x32xbf16>, vector<32x512xbf16>, vector<16x512xf32> -> vector<16x512xf32>
    %c0_70 = arith.constant 0 : index
    %c512_71 = arith.constant 512 : index
    %155 = vector.load %arg13[%c0_70, %c512_71] : memref<2x2048xf32, #tpu.memory_space<vmem>>, vector<1x512xf32>
    %156 = vector.shape_cast %155 : vector<1x512xf32> to vector<512xf32>
    %157 = vector.shape_cast %156 : vector<512xf32> to vector<1x512xf32>
    %158 = vector.broadcast %157 : vector<1x512xf32> to vector<16x512xf32>
    %159 = arith.addf %154, %158 : vector<16x512xf32>
    %cst_72 = arith.constant 0.000000e+00 : f32
    %160 = vector.broadcast %cst_72 : f32 to vector<16x512xf32>
    %161 = arith.maximumf %159, %160 : vector<16x512xf32>
    %162 = arith.truncf %161 : vector<16x512xf32> to vector<16x512xbf16>
    %c0_73 = arith.constant 0 : index
    %c512_74 = arith.constant 512 : index
    %c0_75 = arith.constant 0 : index
    %163 = vector.load %arg14[%c0_73, %c512_74, %c0_75] : memref<2x2048x32xbf16, #tpu.memory_space<vmem>>, vector<1x512x32xbf16>
    %164 = vector.shape_cast %163 : vector<1x512x32xbf16> to vector<512x32xbf16>
    %cst_76 = arith.constant dense<0.000000e+00> : vector<16x32xf32>
    %165 = tpu.matmul %162, %164, %cst_76 {dimension_numbers = #tpu.dot_dimension_numbers<[1], [0], [0], [1], [0, 0, 1, 1], [], []>} : vector<16x512xbf16>, vector<512x32xbf16>, vector<16x32xf32> -> vector<16x32xf32>
    %166 = arith.addf %151, %165 : vector<16x32xf32>
    %c0_77 = arith.constant 0 : index
    %c0_78 = arith.constant 0 : index
    %c1024 = arith.constant 1024 : index
    %167 = vector.load %arg12[%c0_77, %c0_78, %c1024] : memref<2x32x2048xbf16, #tpu.memory_space<vmem>>, vector<1x32x512xbf16>
    %168 = vector.shape_cast %167 : vector<1x32x512xbf16> to vector<32x512xbf16>
    %cst_79 = arith.constant dense<0.000000e+00> : vector<16x512xf32>
    %169 = tpu.matmul %135, %168, %cst_79 {dimension_numbers = #tpu.dot_dimension_numbers<[1], [0], [0], [1], [0, 0, 1, 1], [], []>} : vector<16x32xbf16>, vector<32x512xbf16>, vector<16x512xf32> -> vector<16x512xf32>
    %c0_80 = arith.constant 0 : index
    %c1024_81 = arith.constant 1024 : index
    %170 = vector.load %arg13[%c0_80, %c1024_81] : memref<2x2048xf32, #tpu.memory_space<vmem>>, vector<1x512xf32>
    %171 = vector.shape_cast %170 : vector<1x512xf32> to vector<512xf32>
    %172 = vector.shape_cast %171 : vector<512xf32> to vector<1x512xf32>
    %173 = vector.broadcast %172 : vector<1x512xf32> to vector<16x512xf32>
    %174 = arith.addf %169, %173 : vector<16x512xf32>
    %cst_82 = arith.constant 0.000000e+00 : f32
    %175 = vector.broadcast %cst_82 : f32 to vector<16x512xf32>
    %176 = arith.maximumf %174, %175 : vector<16x512xf32>
    %177 = arith.truncf %176 : vector<16x512xf32> to vector<16x512xbf16>
    %c0_83 = arith.constant 0 : index
    %c1024_84 = arith.constant 1024 : index
    %c0_85 = arith.constant 0 : index
    %178 = vector.load %arg14[%c0_83, %c1024_84, %c0_85] : memref<2x2048x32xbf16, #tpu.memory_space<vmem>>, vector<1x512x32xbf16>
    %179 = vector.shape_cast %178 : vector<1x512x32xbf16> to vector<512x32xbf16>
    %cst_86 = arith.constant dense<0.000000e+00> : vector<16x32xf32>
    %180 = tpu.matmul %177, %179, %cst_86 {dimension_numbers = #tpu.dot_dimension_numbers<[1], [0], [0], [1], [0, 0, 1, 1], [], []>} : vector<16x512xbf16>, vector<512x32xbf16>, vector<16x32xf32> -> vector<16x32xf32>
    %181 = arith.addf %166, %180 : vector<16x32xf32>
    %c0_87 = arith.constant 0 : index
    %c0_88 = arith.constant 0 : index
    %c1536 = arith.constant 1536 : index
    %182 = vector.load %arg12[%c0_87, %c0_88, %c1536] : memref<2x32x2048xbf16, #tpu.memory_space<vmem>>, vector<1x32x512xbf16>
    %183 = vector.shape_cast %182 : vector<1x32x512xbf16> to vector<32x512xbf16>
    %cst_89 = arith.constant dense<0.000000e+00> : vector<16x512xf32>
    %184 = tpu.matmul %135, %183, %cst_89 {dimension_numbers = #tpu.dot_dimension_numbers<[1], [0], [0], [1], [0, 0, 1, 1], [], []>} : vector<16x32xbf16>, vector<32x512xbf16>, vector<16x512xf32> -> vector<16x512xf32>
    %c0_90 = arith.constant 0 : index
    %c1536_91 = arith.constant 1536 : index
    %185 = vector.load %arg13[%c0_90, %c1536_91] : memref<2x2048xf32, #tpu.memory_space<vmem>>, vector<1x512xf32>
    %186 = vector.shape_cast %185 : vector<1x512xf32> to vector<512xf32>
    %187 = vector.shape_cast %186 : vector<512xf32> to vector<1x512xf32>
    %188 = vector.broadcast %187 : vector<1x512xf32> to vector<16x512xf32>
    %189 = arith.addf %184, %188 : vector<16x512xf32>
    %cst_92 = arith.constant 0.000000e+00 : f32
    %190 = vector.broadcast %cst_92 : f32 to vector<16x512xf32>
    %191 = arith.maximumf %189, %190 : vector<16x512xf32>
    %192 = arith.truncf %191 : vector<16x512xf32> to vector<16x512xbf16>
    %c0_93 = arith.constant 0 : index
    %c1536_94 = arith.constant 1536 : index
    %c0_95 = arith.constant 0 : index
    %193 = vector.load %arg14[%c0_93, %c1536_94, %c0_95] : memref<2x2048x32xbf16, #tpu.memory_space<vmem>>, vector<1x512x32xbf16>
    %194 = vector.shape_cast %193 : vector<1x512x32xbf16> to vector<512x32xbf16>
    %cst_96 = arith.constant dense<0.000000e+00> : vector<16x32xf32>
    %195 = tpu.matmul %192, %194, %cst_96 {dimension_numbers = #tpu.dot_dimension_numbers<[1], [0], [0], [1], [0, 0, 1, 1], [], []>} : vector<16x512xbf16>, vector<512x32xbf16>, vector<16x32xf32> -> vector<16x32xf32>
    %196 = arith.addf %181, %195 : vector<16x32xf32>
    %c0_97 = arith.constant 0 : index
    %c0_98 = arith.constant 0 : index
    %197 = vector.load %arg15[%c0_97, %c0_98] : memref<2x32xf32, #tpu.memory_space<vmem>>, vector<1x32xf32>
    %198 = vector.shape_cast %197 : vector<1x32xf32> to vector<32xf32>
    %199 = vector.shape_cast %198 : vector<32xf32> to vector<1x32xf32>
    %200 = vector.broadcast %199 : vector<1x32xf32> to vector<16x32xf32>
    %201 = arith.addf %196, %200 : vector<16x32xf32>
    %202 = arith.addf %134, %201 : vector<16x32xf32>
    %c0_99 = arith.constant 0 : index
    %c0_100 = arith.constant 0 : index
    %203 = vector.load %arg10[%c0_99, %c0_100] : memref<2x32xf32, #tpu.memory_space<vmem>>, vector<1x32xf32>
    %204 = vector.shape_cast %203 : vector<1x32xf32> to vector<32xf32>
    %c0_101 = arith.constant 0 : index
    %c0_102 = arith.constant 0 : index
    %205 = vector.load %arg11[%c0_101, %c0_102] : memref<2x32xf32, #tpu.memory_space<vmem>>, vector<1x32xf32>
    %206 = vector.shape_cast %205 : vector<1x32xf32> to vector<32xf32>
    %cst_103 = arith.constant dense<0.000000e+00> : vector<16xf32>
    %207 = vector.multi_reduction <add>, %202, %cst_103 [1] : vector<16x32xf32> to vector<16xf32>
    %208 = vector.shape_cast %207 : vector<16xf32> to vector<16x1xf32>
    %cst_104 = arith.constant 3.200000e+01 : f32
    %209 = vector.broadcast %cst_104 : f32 to vector<16x1xf32>
    %210 = arith.divf %208, %209 : vector<16x1xf32>
    %211 = vector.broadcast %210 : vector<16x1xf32> to vector<16x32xf32>
    %212 = arith.subf %202, %211 : vector<16x32xf32>
    %213 = arith.mulf %212, %212 : vector<16x32xf32>
    %cst_105 = arith.constant dense<0.000000e+00> : vector<16xf32>
    %214 = vector.multi_reduction <add>, %213, %cst_105 [1] : vector<16x32xf32> to vector<16xf32>
    %215 = vector.shape_cast %214 : vector<16xf32> to vector<16x1xf32>
    %cst_106 = arith.constant 3.200000e+01 : f32
    %216 = vector.broadcast %cst_106 : f32 to vector<16x1xf32>
    %217 = arith.divf %215, %216 : vector<16x1xf32>
    %218 = vector.broadcast %210 : vector<16x1xf32> to vector<16x32xf32>
    %219 = arith.subf %202, %218 : vector<16x32xf32>
    %cst_107 = arith.constant 9.99999974E-6 : f32
    %220 = vector.broadcast %cst_107 : f32 to vector<16x1xf32>
    %221 = arith.addf %217, %220 : vector<16x1xf32>
    %222 = math.rsqrt %221 : vector<16x1xf32>
    %223 = vector.broadcast %222 : vector<16x1xf32> to vector<16x32xf32>
    %224 = arith.mulf %219, %223 : vector<16x32xf32>
    %225 = vector.shape_cast %204 : vector<32xf32> to vector<1x32xf32>
    %226 = vector.broadcast %225 : vector<1x32xf32> to vector<16x32xf32>
    %227 = arith.mulf %224, %226 : vector<16x32xf32>
    %228 = vector.shape_cast %206 : vector<32xf32> to vector<1x32xf32>
    %229 = vector.broadcast %228 : vector<1x32xf32> to vector<16x32xf32>
    %230 = arith.addf %227, %229 : vector<16x32xf32>
    %231 = arith.truncf %230 : vector<16x32xf32> to vector<16x32xbf16>
    %c1 = arith.constant 1 : index
    %c0_108 = arith.constant 0 : index
    %c0_109 = arith.constant 0 : index
    %232 = vector.load %arg4[%c1, %c0_108, %c0_109] : memref<2x32x96xbf16, #tpu.memory_space<vmem>>, vector<1x32x96xbf16>
    %233 = vector.shape_cast %232 : vector<1x32x96xbf16> to vector<32x96xbf16>
    %cst_110 = arith.constant dense<0.000000e+00> : vector<16x96xf32>
    %234 = tpu.matmul %231, %233, %cst_110 {dimension_numbers = #tpu.dot_dimension_numbers<[1], [0], [0], [1], [0, 0, 1, 1], [], []>} : vector<16x32xbf16>, vector<32x96xbf16>, vector<16x96xf32> -> vector<16x96xf32>
    %c1_111 = arith.constant 1 : index
    %c0_112 = arith.constant 0 : index
    %235 = vector.load %arg5[%c1_111, %c0_112] : memref<2x96xf32, #tpu.memory_space<vmem>>, vector<1x96xf32>
    %236 = vector.shape_cast %235 : vector<1x96xf32> to vector<96xf32>
    %237 = vector.shape_cast %236 : vector<96xf32> to vector<1x96xf32>
    %238 = vector.broadcast %237 : vector<1x96xf32> to vector<16x96xf32>
    %239 = arith.addf %234, %238 : vector<16x96xf32>
    %240 = vector.shape_cast %239 : vector<16x96xf32> to vector<8x2x96xf32>
    %cst_113 = arith.constant 0.000000e+00 : f32
    %241 = vector.broadcast %cst_113 : f32 to vector<16x32xf32>
    %242 = vector.extract_strided_slice %240 {offsets = [0, 0, 0], sizes = [8, 2, 8], strides = [1, 1, 1]} : vector<8x2x96xf32> to vector<8x2x8xf32>
    %243 = vector.extract_strided_slice %240 {offsets = [0, 0, 32], sizes = [8, 2, 8], strides = [1, 1, 1]} : vector<8x2x96xf32> to vector<8x2x8xf32>
    %244 = vector.extract_strided_slice %240 {offsets = [0, 0, 64], sizes = [8, 2, 8], strides = [1, 1, 1]} : vector<8x2x96xf32> to vector<8x2x8xf32>
    "tpu.trace_start"() <{level = 10 : i32, message = "sbd,scd->sbc"}> : () -> ()
    %cst_114 = arith.constant dense<0.000000e+00> : vector<8x2x2xf32>
    %245 = tpu.matmul %242, %243, %cst_114 {dimension_numbers = #tpu.dot_dimension_numbers<[2], [2], [1], [1], [0, 0, 0, 1, 1, 1], [0], [0]>} : vector<8x2x8xf32>, vector<8x2x8xf32>, vector<8x2x2xf32> -> vector<8x2x2xf32>
    "tpu.trace_stop"() : () -> ()
    %cst_115 = arith.constant dense<0xFF800000> : vector<8x2xf32>
    %246 = vector.multi_reduction <maximumf>, %245, %cst_115 [2] : vector<8x2x2xf32> to vector<8x2xf32>
    %247 = vector.shape_cast %246 : vector<8x2xf32> to vector<8x2x1xf32>
    %248 = vector.broadcast %247 : vector<8x2x1xf32> to vector<8x2x2xf32>
    %249 = arith.subf %245, %248 : vector<8x2x2xf32>
    %250 = math.exp %249 : vector<8x2x2xf32>
    %cst_116 = arith.constant dense<0.000000e+00> : vector<8x2xf32>
    %251 = vector.multi_reduction <add>, %250, %cst_116 [2] : vector<8x2x2xf32> to vector<8x2xf32>
    %252 = vector.shape_cast %251 : vector<8x2xf32> to vector<8x2x1xf32>
    %253 = vector.broadcast %252 : vector<8x2x1xf32> to vector<8x2x2xf32>
    %254 = arith.divf %250, %253 : vector<8x2x2xf32>
    "tpu.trace_start"() <{level = 10 : i32, message = "sbc,scd->sbd"}> : () -> ()
    %cst_117 = arith.constant dense<0.000000e+00> : vector<8x2x8xf32>
    %255 = tpu.matmul %254, %244, %cst_117 {dimension_numbers = #tpu.dot_dimension_numbers<[2], [1], [1], [2], [0, 0, 0, 1, 1, 2], [0], [0]>} : vector<8x2x2xf32>, vector<8x2x8xf32>, vector<8x2x8xf32> -> vector<8x2x8xf32>
    "tpu.trace_stop"() : () -> ()
    %256 = vector.shape_cast %255 : vector<8x2x8xf32> to vector<16x8xf32>
    %c1_118 = arith.constant 1 : index
    %c0_119 = arith.constant 0 : index
    %c0_120 = arith.constant 0 : index
    %257 = vector.load %arg6[%c1_118, %c0_119, %c0_120] : memref<2x32x32xf32, #tpu.memory_space<vmem>>, vector<1x8x32xf32>
    %258 = vector.shape_cast %257 : vector<1x8x32xf32> to vector<8x32xf32>
    %cst_121 = arith.constant dense<0.000000e+00> : vector<16x32xf32>
    %259 = tpu.matmul %256, %258, %cst_121 {dimension_numbers = #tpu.dot_dimension_numbers<[1], [0], [0], [1], [0, 0, 1, 1], [], []>} : vector<16x8xf32>, vector<8x32xf32>, vector<16x32xf32> -> vector<16x32xf32>
    %260 = arith.addf %241, %259 : vector<16x32xf32>
    %261 = vector.extract_strided_slice %240 {offsets = [0, 0, 8], sizes = [8, 2, 8], strides = [1, 1, 1]} : vector<8x2x96xf32> to vector<8x2x8xf32>
    %262 = vector.extract_strided_slice %240 {offsets = [0, 0, 40], sizes = [8, 2, 8], strides = [1, 1, 1]} : vector<8x2x96xf32> to vector<8x2x8xf32>
    %263 = vector.extract_strided_slice %240 {offsets = [0, 0, 72], sizes = [8, 2, 8], strides = [1, 1, 1]} : vector<8x2x96xf32> to vector<8x2x8xf32>
    "tpu.trace_start"() <{level = 10 : i32, message = "sbd,scd->sbc"}> : () -> ()
    %cst_122 = arith.constant dense<0.000000e+00> : vector<8x2x2xf32>
    %264 = tpu.matmul %261, %262, %cst_122 {dimension_numbers = #tpu.dot_dimension_numbers<[2], [2], [1], [1], [0, 0, 0, 1, 1, 1], [0], [0]>} : vector<8x2x8xf32>, vector<8x2x8xf32>, vector<8x2x2xf32> -> vector<8x2x2xf32>
    "tpu.trace_stop"() : () -> ()
    %cst_123 = arith.constant dense<0xFF800000> : vector<8x2xf32>
    %265 = vector.multi_reduction <maximumf>, %264, %cst_123 [2] : vector<8x2x2xf32> to vector<8x2xf32>
    %266 = vector.shape_cast %265 : vector<8x2xf32> to vector<8x2x1xf32>
    %267 = vector.broadcast %266 : vector<8x2x1xf32> to vector<8x2x2xf32>
    %268 = arith.subf %264, %267 : vector<8x2x2xf32>
    %269 = math.exp %268 : vector<8x2x2xf32>
    %cst_124 = arith.constant dense<0.000000e+00> : vector<8x2xf32>
    %270 = vector.multi_reduction <add>, %269, %cst_124 [2] : vector<8x2x2xf32> to vector<8x2xf32>
    %271 = vector.shape_cast %270 : vector<8x2xf32> to vector<8x2x1xf32>
    %272 = vector.broadcast %271 : vector<8x2x1xf32> to vector<8x2x2xf32>
    %273 = arith.divf %269, %272 : vector<8x2x2xf32>
    "tpu.trace_start"() <{level = 10 : i32, message = "sbc,scd->sbd"}> : () -> ()
    %cst_125 = arith.constant dense<0.000000e+00> : vector<8x2x8xf32>
    %274 = tpu.matmul %273, %263, %cst_125 {dimension_numbers = #tpu.dot_dimension_numbers<[2], [1], [1], [2], [0, 0, 0, 1, 1, 2], [0], [0]>} : vector<8x2x2xf32>, vector<8x2x8xf32>, vector<8x2x8xf32> -> vector<8x2x8xf32>
    "tpu.trace_stop"() : () -> ()
    %275 = vector.shape_cast %274 : vector<8x2x8xf32> to vector<16x8xf32>
    %c1_126 = arith.constant 1 : index
    %c8_127 = arith.constant 8 : index
    %c0_128 = arith.constant 0 : index
    %276 = vector.load %arg6[%c1_126, %c8_127, %c0_128] : memref<2x32x32xf32, #tpu.memory_space<vmem>>, vector<1x8x32xf32>
    %277 = vector.shape_cast %276 : vector<1x8x32xf32> to vector<8x32xf32>
    %cst_129 = arith.constant dense<0.000000e+00> : vector<16x32xf32>
    %278 = tpu.matmul %275, %277, %cst_129 {dimension_numbers = #tpu.dot_dimension_numbers<[1], [0], [0], [1], [0, 0, 1, 1], [], []>} : vector<16x8xf32>, vector<8x32xf32>, vector<16x32xf32> -> vector<16x32xf32>
    %279 = arith.addf %260, %278 : vector<16x32xf32>
    %280 = vector.extract_strided_slice %240 {offsets = [0, 0, 16], sizes = [8, 2, 8], strides = [1, 1, 1]} : vector<8x2x96xf32> to vector<8x2x8xf32>
    %281 = vector.extract_strided_slice %240 {offsets = [0, 0, 48], sizes = [8, 2, 8], strides = [1, 1, 1]} : vector<8x2x96xf32> to vector<8x2x8xf32>
    %282 = vector.extract_strided_slice %240 {offsets = [0, 0, 80], sizes = [8, 2, 8], strides = [1, 1, 1]} : vector<8x2x96xf32> to vector<8x2x8xf32>
    "tpu.trace_start"() <{level = 10 : i32, message = "sbd,scd->sbc"}> : () -> ()
    %cst_130 = arith.constant dense<0.000000e+00> : vector<8x2x2xf32>
    %283 = tpu.matmul %280, %281, %cst_130 {dimension_numbers = #tpu.dot_dimension_numbers<[2], [2], [1], [1], [0, 0, 0, 1, 1, 1], [0], [0]>} : vector<8x2x8xf32>, vector<8x2x8xf32>, vector<8x2x2xf32> -> vector<8x2x2xf32>
    "tpu.trace_stop"() : () -> ()
    %cst_131 = arith.constant dense<0xFF800000> : vector<8x2xf32>
    %284 = vector.multi_reduction <maximumf>, %283, %cst_131 [2] : vector<8x2x2xf32> to vector<8x2xf32>
    %285 = vector.shape_cast %284 : vector<8x2xf32> to vector<8x2x1xf32>
    %286 = vector.broadcast %285 : vector<8x2x1xf32> to vector<8x2x2xf32>
    %287 = arith.subf %283, %286 : vector<8x2x2xf32>
    %288 = math.exp %287 : vector<8x2x2xf32>
    %cst_132 = arith.constant dense<0.000000e+00> : vector<8x2xf32>
    %289 = vector.multi_reduction <add>, %288, %cst_132 [2] : vector<8x2x2xf32> to vector<8x2xf32>
    %290 = vector.shape_cast %289 : vector<8x2xf32> to vector<8x2x1xf32>
    %291 = vector.broadcast %290 : vector<8x2x1xf32> to vector<8x2x2xf32>
    %292 = arith.divf %288, %291 : vector<8x2x2xf32>
    "tpu.trace_start"() <{level = 10 : i32, message = "sbc,scd->sbd"}> : () -> ()
    %cst_133 = arith.constant dense<0.000000e+00> : vector<8x2x8xf32>
    %293 = tpu.matmul %292, %282, %cst_133 {dimension_numbers = #tpu.dot_dimension_numbers<[2], [1], [1], [2], [0, 0, 0, 1, 1, 2], [0], [0]>} : vector<8x2x2xf32>, vector<8x2x8xf32>, vector<8x2x8xf32> -> vector<8x2x8xf32>
    "tpu.trace_stop"() : () -> ()
    %294 = vector.shape_cast %293 : vector<8x2x8xf32> to vector<16x8xf32>
    %c1_134 = arith.constant 1 : index
    %c16_135 = arith.constant 16 : index
    %c0_136 = arith.constant 0 : index
    %295 = vector.load %arg6[%c1_134, %c16_135, %c0_136] : memref<2x32x32xf32, #tpu.memory_space<vmem>>, vector<1x8x32xf32>
    %296 = vector.shape_cast %295 : vector<1x8x32xf32> to vector<8x32xf32>
    %cst_137 = arith.constant dense<0.000000e+00> : vector<16x32xf32>
    %297 = tpu.matmul %294, %296, %cst_137 {dimension_numbers = #tpu.dot_dimension_numbers<[1], [0], [0], [1], [0, 0, 1, 1], [], []>} : vector<16x8xf32>, vector<8x32xf32>, vector<16x32xf32> -> vector<16x32xf32>
    %298 = arith.addf %279, %297 : vector<16x32xf32>
    %299 = vector.extract_strided_slice %240 {offsets = [0, 0, 24], sizes = [8, 2, 8], strides = [1, 1, 1]} : vector<8x2x96xf32> to vector<8x2x8xf32>
    %300 = vector.extract_strided_slice %240 {offsets = [0, 0, 56], sizes = [8, 2, 8], strides = [1, 1, 1]} : vector<8x2x96xf32> to vector<8x2x8xf32>
    %301 = vector.extract_strided_slice %240 {offsets = [0, 0, 88], sizes = [8, 2, 8], strides = [1, 1, 1]} : vector<8x2x96xf32> to vector<8x2x8xf32>
    "tpu.trace_start"() <{level = 10 : i32, message = "sbd,scd->sbc"}> : () -> ()
    %cst_138 = arith.constant dense<0.000000e+00> : vector<8x2x2xf32>
    %302 = tpu.matmul %299, %300, %cst_138 {dimension_numbers = #tpu.dot_dimension_numbers<[2], [2], [1], [1], [0, 0, 0, 1, 1, 1], [0], [0]>} : vector<8x2x8xf32>, vector<8x2x8xf32>, vector<8x2x2xf32> -> vector<8x2x2xf32>
    "tpu.trace_stop"() : () -> ()
    %cst_139 = arith.constant dense<0xFF800000> : vector<8x2xf32>
    %303 = vector.multi_reduction <maximumf>, %302, %cst_139 [2] : vector<8x2x2xf32> to vector<8x2xf32>
    %304 = vector.shape_cast %303 : vector<8x2xf32> to vector<8x2x1xf32>
    %305 = vector.broadcast %304 : vector<8x2x1xf32> to vector<8x2x2xf32>
    %306 = arith.subf %302, %305 : vector<8x2x2xf32>
    %307 = math.exp %306 : vector<8x2x2xf32>
    %cst_140 = arith.constant dense<0.000000e+00> : vector<8x2xf32>
    %308 = vector.multi_reduction <add>, %307, %cst_140 [2] : vector<8x2x2xf32> to vector<8x2xf32>
    %309 = vector.shape_cast %308 : vector<8x2xf32> to vector<8x2x1xf32>
    %310 = vector.broadcast %309 : vector<8x2x1xf32> to vector<8x2x2xf32>
    %311 = arith.divf %307, %310 : vector<8x2x2xf32>
    "tpu.trace_start"() <{level = 10 : i32, message = "sbc,scd->sbd"}> : () -> ()
    %cst_141 = arith.constant dense<0.000000e+00> : vector<8x2x8xf32>
    %312 = tpu.matmul %311, %301, %cst_141 {dimension_numbers = #tpu.dot_dimension_numbers<[2], [1], [1], [2], [0, 0, 0, 1, 1, 2], [0], [0]>} : vector<8x2x2xf32>, vector<8x2x8xf32>, vector<8x2x8xf32> -> vector<8x2x8xf32>
    "tpu.trace_stop"() : () -> ()
    %313 = vector.shape_cast %312 : vector<8x2x8xf32> to vector<16x8xf32>
    %c1_142 = arith.constant 1 : index
    %c24_143 = arith.constant 24 : index
    %c0_144 = arith.constant 0 : index
    %314 = vector.load %arg6[%c1_142, %c24_143, %c0_144] : memref<2x32x32xf32, #tpu.memory_space<vmem>>, vector<1x8x32xf32>
    %315 = vector.shape_cast %314 : vector<1x8x32xf32> to vector<8x32xf32>
    %cst_145 = arith.constant dense<0.000000e+00> : vector<16x32xf32>
    %316 = tpu.matmul %313, %315, %cst_145 {dimension_numbers = #tpu.dot_dimension_numbers<[1], [0], [0], [1], [0, 0, 1, 1], [], []>} : vector<16x8xf32>, vector<8x32xf32>, vector<16x32xf32> -> vector<16x32xf32>
    %317 = arith.addf %298, %316 : vector<16x32xf32>
    %c1_146 = arith.constant 1 : index
    %c0_147 = arith.constant 0 : index
    %318 = vector.load %arg7[%c1_146, %c0_147] : memref<2x32xf32, #tpu.memory_space<vmem>>, vector<1x32xf32>
    %319 = vector.shape_cast %318 : vector<1x32xf32> to vector<32xf32>
    %320 = vector.shape_cast %319 : vector<32xf32> to vector<1x32xf32>
    %321 = vector.broadcast %320 : vector<1x32xf32> to vector<16x32xf32>
    %322 = arith.addf %317, %321 : vector<16x32xf32>
    %323 = arith.addf %230, %322 : vector<16x32xf32>
    %c1_148 = arith.constant 1 : index
    %c0_149 = arith.constant 0 : index
    %324 = vector.load %arg8[%c1_148, %c0_149] : memref<2x32xf32, #tpu.memory_space<vmem>>, vector<1x32xf32>
    %325 = vector.shape_cast %324 : vector<1x32xf32> to vector<32xf32>
    %c1_150 = arith.constant 1 : index
    %c0_151 = arith.constant 0 : index
    %326 = vector.load %arg9[%c1_150, %c0_151] : memref<2x32xf32, #tpu.memory_space<vmem>>, vector<1x32xf32>
    %327 = vector.shape_cast %326 : vector<1x32xf32> to vector<32xf32>
    %cst_152 = arith.constant dense<0.000000e+00> : vector<16xf32>
    %328 = vector.multi_reduction <add>, %323, %cst_152 [1] : vector<16x32xf32> to vector<16xf32>
    %329 = vector.shape_cast %328 : vector<16xf32> to vector<16x1xf32>
    %cst_153 = arith.constant 3.200000e+01 : f32
    %330 = vector.broadcast %cst_153 : f32 to vector<16x1xf32>
    %331 = arith.divf %329, %330 : vector<16x1xf32>
    %332 = vector.broadcast %331 : vector<16x1xf32> to vector<16x32xf32>
    %333 = arith.subf %323, %332 : vector<16x32xf32>
    %334 = arith.mulf %333, %333 : vector<16x32xf32>
    %cst_154 = arith.constant dense<0.000000e+00> : vector<16xf32>
    %335 = vector.multi_reduction <add>, %334, %cst_154 [1] : vector<16x32xf32> to vector<16xf32>
    %336 = vector.shape_cast %335 : vector<16xf32> to vector<16x1xf32>
    %cst_155 = arith.constant 3.200000e+01 : f32
    %337 = vector.broadcast %cst_155 : f32 to vector<16x1xf32>
    %338 = arith.divf %336, %337 : vector<16x1xf32>
    %339 = vector.broadcast %331 : vector<16x1xf32> to vector<16x32xf32>
    %340 = arith.subf %323, %339 : vector<16x32xf32>
    %cst_156 = arith.constant 9.99999974E-6 : f32
    %341 = vector.broadcast %cst_156 : f32 to vector<16x1xf32>
    %342 = arith.addf %338, %341 : vector<16x1xf32>
    %343 = math.rsqrt %342 : vector<16x1xf32>
    %344 = vector.broadcast %343 : vector<16x1xf32> to vector<16x32xf32>
    %345 = arith.mulf %340, %344 : vector<16x32xf32>
    %346 = vector.shape_cast %325 : vector<32xf32> to vector<1x32xf32>
    %347 = vector.broadcast %346 : vector<1x32xf32> to vector<16x32xf32>
    %348 = arith.mulf %345, %347 : vector<16x32xf32>
    %349 = vector.shape_cast %327 : vector<32xf32> to vector<1x32xf32>
    %350 = vector.broadcast %349 : vector<1x32xf32> to vector<16x32xf32>
    %351 = arith.addf %348, %350 : vector<16x32xf32>
    %352 = arith.truncf %351 : vector<16x32xf32> to vector<16x32xbf16>
    %cst_157 = arith.constant 0.000000e+00 : f32
    %353 = vector.broadcast %cst_157 : f32 to vector<16x32xf32>
    %c1_158 = arith.constant 1 : index
    %c0_159 = arith.constant 0 : index
    %c0_160 = arith.constant 0 : index
    %354 = vector.load %arg12[%c1_158, %c0_159, %c0_160] : memref<2x32x2048xbf16, #tpu.memory_space<vmem>>, vector<1x32x512xbf16>
    %355 = vector.shape_cast %354 : vector<1x32x512xbf16> to vector<32x512xbf16>
    %cst_161 = arith.constant dense<0.000000e+00> : vector<16x512xf32>
    %356 = tpu.matmul %352, %355, %cst_161 {dimension_numbers = #tpu.dot_dimension_numbers<[1], [0], [0], [1], [0, 0, 1, 1], [], []>} : vector<16x32xbf16>, vector<32x512xbf16>, vector<16x512xf32> -> vector<16x512xf32>
    %c1_162 = arith.constant 1 : index
    %c0_163 = arith.constant 0 : index
    %357 = vector.load %arg13[%c1_162, %c0_163] : memref<2x2048xf32, #tpu.memory_space<vmem>>, vector<1x512xf32>
    %358 = vector.shape_cast %357 : vector<1x512xf32> to vector<512xf32>
    %359 = vector.shape_cast %358 : vector<512xf32> to vector<1x512xf32>
    %360 = vector.broadcast %359 : vector<1x512xf32> to vector<16x512xf32>
    %361 = arith.addf %356, %360 : vector<16x512xf32>
    %cst_164 = arith.constant 0.000000e+00 : f32
    %362 = vector.broadcast %cst_164 : f32 to vector<16x512xf32>
    %363 = arith.maximumf %361, %362 : vector<16x512xf32>
    %364 = arith.truncf %363 : vector<16x512xf32> to vector<16x512xbf16>
    %c1_165 = arith.constant 1 : index
    %c0_166 = arith.constant 0 : index
    %c0_167 = arith.constant 0 : index
    %365 = vector.load %arg14[%c1_165, %c0_166, %c0_167] : memref<2x2048x32xbf16, #tpu.memory_space<vmem>>, vector<1x512x32xbf16>
    %366 = vector.shape_cast %365 : vector<1x512x32xbf16> to vector<512x32xbf16>
    %cst_168 = arith.constant dense<0.000000e+00> : vector<16x32xf32>
    %367 = tpu.matmul %364, %366, %cst_168 {dimension_numbers = #tpu.dot_dimension_numbers<[1], [0], [0], [1], [0, 0, 1, 1], [], []>} : vector<16x512xbf16>, vector<512x32xbf16>, vector<16x32xf32> -> vector<16x32xf32>
    %368 = arith.addf %353, %367 : vector<16x32xf32>
    %c1_169 = arith.constant 1 : index
    %c0_170 = arith.constant 0 : index
    %c512_171 = arith.constant 512 : index
    %369 = vector.load %arg12[%c1_169, %c0_170, %c512_171] : memref<2x32x2048xbf16, #tpu.memory_space<vmem>>, vector<1x32x512xbf16>
    %370 = vector.shape_cast %369 : vector<1x32x512xbf16> to vector<32x512xbf16>
    %cst_172 = arith.constant dense<0.000000e+00> : vector<16x512xf32>
    %371 = tpu.matmul %352, %370, %cst_172 {dimension_numbers = #tpu.dot_dimension_numbers<[1], [0], [0], [1], [0, 0, 1, 1], [], []>} : vector<16x32xbf16>, vector<32x512xbf16>, vector<16x512xf32> -> vector<16x512xf32>
    %c1_173 = arith.constant 1 : index
    %c512_174 = arith.constant 512 : index
    %372 = vector.load %arg13[%c1_173, %c512_174] : memref<2x2048xf32, #tpu.memory_space<vmem>>, vector<1x512xf32>
    %373 = vector.shape_cast %372 : vector<1x512xf32> to vector<512xf32>
    %374 = vector.shape_cast %373 : vector<512xf32> to vector<1x512xf32>
    %375 = vector.broadcast %374 : vector<1x512xf32> to vector<16x512xf32>
    %376 = arith.addf %371, %375 : vector<16x512xf32>
    %cst_175 = arith.constant 0.000000e+00 : f32
    %377 = vector.broadcast %cst_175 : f32 to vector<16x512xf32>
    %378 = arith.maximumf %376, %377 : vector<16x512xf32>
    %379 = arith.truncf %378 : vector<16x512xf32> to vector<16x512xbf16>
    %c1_176 = arith.constant 1 : index
    %c512_177 = arith.constant 512 : index
    %c0_178 = arith.constant 0 : index
    %380 = vector.load %arg14[%c1_176, %c512_177, %c0_178] : memref<2x2048x32xbf16, #tpu.memory_space<vmem>>, vector<1x512x32xbf16>
    %381 = vector.shape_cast %380 : vector<1x512x32xbf16> to vector<512x32xbf16>
    %cst_179 = arith.constant dense<0.000000e+00> : vector<16x32xf32>
    %382 = tpu.matmul %379, %381, %cst_179 {dimension_numbers = #tpu.dot_dimension_numbers<[1], [0], [0], [1], [0, 0, 1, 1], [], []>} : vector<16x512xbf16>, vector<512x32xbf16>, vector<16x32xf32> -> vector<16x32xf32>
    %383 = arith.addf %368, %382 : vector<16x32xf32>
    %c1_180 = arith.constant 1 : index
    %c0_181 = arith.constant 0 : index
    %c1024_182 = arith.constant 1024 : index
    %384 = vector.load %arg12[%c1_180, %c0_181, %c1024_182] : memref<2x32x2048xbf16, #tpu.memory_space<vmem>>, vector<1x32x512xbf16>
    %385 = vector.shape_cast %384 : vector<1x32x512xbf16> to vector<32x512xbf16>
    %cst_183 = arith.constant dense<0.000000e+00> : vector<16x512xf32>
    %386 = tpu.matmul %352, %385, %cst_183 {dimension_numbers = #tpu.dot_dimension_numbers<[1], [0], [0], [1], [0, 0, 1, 1], [], []>} : vector<16x32xbf16>, vector<32x512xbf16>, vector<16x512xf32> -> vector<16x512xf32>
    %c1_184 = arith.constant 1 : index
    %c1024_185 = arith.constant 1024 : index
    %387 = vector.load %arg13[%c1_184, %c1024_185] : memref<2x2048xf32, #tpu.memory_space<vmem>>, vector<1x512xf32>
    %388 = vector.shape_cast %387 : vector<1x512xf32> to vector<512xf32>
    %389 = vector.shape_cast %388 : vector<512xf32> to vector<1x512xf32>
    %390 = vector.broadcast %389 : vector<1x512xf32> to vector<16x512xf32>
    %391 = arith.addf %386, %390 : vector<16x512xf32>
    %cst_186 = arith.constant 0.000000e+00 : f32
    %392 = vector.broadcast %cst_186 : f32 to vector<16x512xf32>
    %393 = arith.maximumf %391, %392 : vector<16x512xf32>
    %394 = arith.truncf %393 : vector<16x512xf32> to vector<16x512xbf16>
    %c1_187 = arith.constant 1 : index
    %c1024_188 = arith.constant 1024 : index
    %c0_189 = arith.constant 0 : index
    %395 = vector.load %arg14[%c1_187, %c1024_188, %c0_189] : memref<2x2048x32xbf16, #tpu.memory_space<vmem>>, vector<1x512x32xbf16>
    %396 = vector.shape_cast %395 : vector<1x512x32xbf16> to vector<512x32xbf16>
    %cst_190 = arith.constant dense<0.000000e+00> : vector<16x32xf32>
    %397 = tpu.matmul %394, %396, %cst_190 {dimension_numbers = #tpu.dot_dimension_numbers<[1], [0], [0], [1], [0, 0, 1, 1], [], []>} : vector<16x512xbf16>, vector<512x32xbf16>, vector<16x32xf32> -> vector<16x32xf32>
    %398 = arith.addf %383, %397 : vector<16x32xf32>
    %c1_191 = arith.constant 1 : index
    %c0_192 = arith.constant 0 : index
    %c1536_193 = arith.constant 1536 : index
    %399 = vector.load %arg12[%c1_191, %c0_192, %c1536_193] : memref<2x32x2048xbf16, #tpu.memory_space<vmem>>, vector<1x32x512xbf16>
    %400 = vector.shape_cast %399 : vector<1x32x512xbf16> to vector<32x512xbf16>
    %cst_194 = arith.constant dense<0.000000e+00> : vector<16x512xf32>
    %401 = tpu.matmul %352, %400, %cst_194 {dimension_numbers = #tpu.dot_dimension_numbers<[1], [0], [0], [1], [0, 0, 1, 1], [], []>} : vector<16x32xbf16>, vector<32x512xbf16>, vector<16x512xf32> -> vector<16x512xf32>
    %c1_195 = arith.constant 1 : index
    %c1536_196 = arith.constant 1536 : index
    %402 = vector.load %arg13[%c1_195, %c1536_196] : memref<2x2048xf32, #tpu.memory_space<vmem>>, vector<1x512xf32>
    %403 = vector.shape_cast %402 : vector<1x512xf32> to vector<512xf32>
    %404 = vector.shape_cast %403 : vector<512xf32> to vector<1x512xf32>
    %405 = vector.broadcast %404 : vector<1x512xf32> to vector<16x512xf32>
    %406 = arith.addf %401, %405 : vector<16x512xf32>
    %cst_197 = arith.constant 0.000000e+00 : f32
    %407 = vector.broadcast %cst_197 : f32 to vector<16x512xf32>
    %408 = arith.maximumf %406, %407 : vector<16x512xf32>
    %409 = arith.truncf %408 : vector<16x512xf32> to vector<16x512xbf16>
    %c1_198 = arith.constant 1 : index
    %c1536_199 = arith.constant 1536 : index
    %c0_200 = arith.constant 0 : index
    %410 = vector.load %arg14[%c1_198, %c1536_199, %c0_200] : memref<2x2048x32xbf16, #tpu.memory_space<vmem>>, vector<1x512x32xbf16>
    %411 = vector.shape_cast %410 : vector<1x512x32xbf16> to vector<512x32xbf16>
    %cst_201 = arith.constant dense<0.000000e+00> : vector<16x32xf32>
    %412 = tpu.matmul %409, %411, %cst_201 {dimension_numbers = #tpu.dot_dimension_numbers<[1], [0], [0], [1], [0, 0, 1, 1], [], []>} : vector<16x512xbf16>, vector<512x32xbf16>, vector<16x32xf32> -> vector<16x32xf32>
    %413 = arith.addf %398, %412 : vector<16x32xf32>
    %c1_202 = arith.constant 1 : index
    %c0_203 = arith.constant 0 : index
    %414 = vector.load %arg15[%c1_202, %c0_203] : memref<2x32xf32, #tpu.memory_space<vmem>>, vector<1x32xf32>
    %415 = vector.shape_cast %414 : vector<1x32xf32> to vector<32xf32>
    %416 = vector.shape_cast %415 : vector<32xf32> to vector<1x32xf32>
    %417 = vector.broadcast %416 : vector<1x32xf32> to vector<16x32xf32>
    %418 = arith.addf %413, %417 : vector<16x32xf32>
    %419 = arith.addf %351, %418 : vector<16x32xf32>
    %c1_204 = arith.constant 1 : index
    %c0_205 = arith.constant 0 : index
    %420 = vector.load %arg10[%c1_204, %c0_205] : memref<2x32xf32, #tpu.memory_space<vmem>>, vector<1x32xf32>
    %421 = vector.shape_cast %420 : vector<1x32xf32> to vector<32xf32>
    %c1_206 = arith.constant 1 : index
    %c0_207 = arith.constant 0 : index
    %422 = vector.load %arg11[%c1_206, %c0_207] : memref<2x32xf32, #tpu.memory_space<vmem>>, vector<1x32xf32>
    %423 = vector.shape_cast %422 : vector<1x32xf32> to vector<32xf32>
    %cst_208 = arith.constant dense<0.000000e+00> : vector<16xf32>
    %424 = vector.multi_reduction <add>, %419, %cst_208 [1] : vector<16x32xf32> to vector<16xf32>
    %425 = vector.shape_cast %424 : vector<16xf32> to vector<16x1xf32>
    %cst_209 = arith.constant 3.200000e+01 : f32
    %426 = vector.broadcast %cst_209 : f32 to vector<16x1xf32>
    %427 = arith.divf %425, %426 : vector<16x1xf32>
    %428 = vector.broadcast %427 : vector<16x1xf32> to vector<16x32xf32>
    %429 = arith.subf %419, %428 : vector<16x32xf32>
    %430 = arith.mulf %429, %429 : vector<16x32xf32>
    %cst_210 = arith.constant dense<0.000000e+00> : vector<16xf32>
    %431 = vector.multi_reduction <add>, %430, %cst_210 [1] : vector<16x32xf32> to vector<16xf32>
    %432 = vector.shape_cast %431 : vector<16xf32> to vector<16x1xf32>
    %cst_211 = arith.constant 3.200000e+01 : f32
    %433 = vector.broadcast %cst_211 : f32 to vector<16x1xf32>
    %434 = arith.divf %432, %433 : vector<16x1xf32>
    %435 = vector.broadcast %427 : vector<16x1xf32> to vector<16x32xf32>
    %436 = arith.subf %419, %435 : vector<16x32xf32>
    %cst_212 = arith.constant 9.99999974E-6 : f32
    %437 = vector.broadcast %cst_212 : f32 to vector<16x1xf32>
    %438 = arith.addf %434, %437 : vector<16x1xf32>
    %439 = math.rsqrt %438 : vector<16x1xf32>
    %440 = vector.broadcast %439 : vector<16x1xf32> to vector<16x32xf32>
    %441 = arith.mulf %436, %440 : vector<16x32xf32>
    %442 = vector.shape_cast %421 : vector<32xf32> to vector<1x32xf32>
    %443 = vector.broadcast %442 : vector<1x32xf32> to vector<16x32xf32>
    %444 = arith.mulf %441, %443 : vector<16x32xf32>
    %445 = vector.shape_cast %423 : vector<32xf32> to vector<1x32xf32>
    %446 = vector.broadcast %445 : vector<1x32xf32> to vector<16x32xf32>
    %447 = arith.addf %444, %446 : vector<16x32xf32>
    %448 = vector.shape_cast %447 : vector<16x32xf32> to vector<8x2x32xf32>
    %cst_213 = arith.constant dense<0.000000e+00> : vector<2x32xf32>
    %449 = vector.multi_reduction <add>, %448, %cst_213 [0] : vector<8x2x32xf32> to vector<2x32xf32>
    %cst_214 = arith.constant 8.000000e+00 : f32
    %450 = vector.broadcast %cst_214 : f32 to vector<2x32xf32>
    %451 = arith.divf %449, %450 : vector<2x32xf32>
    %452 = arith.truncf %451 : vector<2x32xf32> to vector<2x32xbf16>
    %c0_215 = arith.constant 0 : index
    %c0_216 = arith.constant 0 : index
    %453 = vector.load %arg16[%c0_215, %c0_216] : memref<32x10xbf16, #tpu.memory_space<vmem>>, vector<32x10xbf16>
    %cst_217 = arith.constant dense<0.000000e+00> : vector<2x10xf32>
    %454 = tpu.matmul %452, %453, %cst_217 {dimension_numbers = #tpu.dot_dimension_numbers<[1], [0], [0], [1], [0, 0, 1, 1], [], []>} : vector<2x32xbf16>, vector<32x10xbf16>, vector<2x10xf32> -> vector<2x10xf32>
    %c0_218 = arith.constant 0 : index
    %c0_219 = arith.constant 0 : index
    %455 = vector.load %arg17[%c0_218, %c0_219] : memref<1x10xf32, #tpu.memory_space<vmem>>, vector<1x10xf32>
    %456 = vector.broadcast %455 : vector<1x10xf32> to vector<2x10xf32>
    %457 = arith.addf %454, %456 : vector<2x10xf32>
    %c0_220 = arith.constant 0 : index
    %c0_221 = arith.constant 0 : index
    %458 = vector.load %arg18[%c0_220, %c0_221] : memref<2x10xf32, #tpu.memory_space<vmem>>, vector<2x10xf32>
    tpu.vector_store %arg18[%c0_220, %c0_221], %457 {strides = array<i32>} : memref<2x10xf32, #tpu.memory_space<vmem>>, vector<2x10xf32>,
    return
  }
}

</mosaic_0001>

<llo_original>
// kernel: transformer_forward.1
$region0: #{transformer_forward.1}
  #allocation0 [shape = 'u32[]', space=smem, size = 0x4, offset = 0x4, fixed_abs, tag = 'smem constant byte address 0x4 - core index']
  #allocation1 [shape = 'u32[72,128]{1,0:T(1,128)}', space=vmem, size = 0x9000, scoped, tag = 'internal scratch']
  %s0 = inlined_call_operand.vmem [shape: f32[8,2,16], index: 0, kind: input, shape index: {}]
  %s1 = inlined_call_operand.vmem [shape: bf16[16,32], index: 1, kind: input, shape index: {}]
  %s2 = inlined_call_operand.vmem [shape: f32[1,32], index: 2, kind: input, shape index: {}]
  %s3 = inlined_call_operand.vmem [shape: f32[16,32], index: 3, kind: input, shape index: {}]
  %s4 = inlined_call_operand.vmem [shape: bf16[2,32,96], index: 4, kind: input, shape index: {}]
  %s5 = inlined_call_operand.vmem [shape: f32[2,96], index: 5, kind: input, shape index: {}]
  %s6 = inlined_call_operand.vmem [shape: f32[2,32,32], index: 6, kind: input, shape index: {}]
  %s7 = inlined_call_operand.vmem [shape: f32[2,32], index: 7, kind: input, shape index: {}]
  %s8 = inlined_call_operand.vmem [shape: f32[2,32], index: 8, kind: input, shape index: {}]
  %s9 = inlined_call_operand.vmem [shape: f32[2,32], index: 9, kind: input, shape index: {}]
  %s10 = inlined_call_operand.vmem [shape: f32[2,32], index: 10, kind: input, shape index: {}]
  %s11 = inlined_call_operand.vmem [shape: f32[2,32], index: 11, kind: input, shape index: {}]
  %s12 = inlined_call_operand.vmem [shape: bf16[2,32,2048], index: 12, kind: input, shape index: {}]
  %s13 = inlined_call_operand.vmem [shape: f32[2,2048], index: 13, kind: input, shape index: {}]
  %s14 = inlined_call_operand.vmem [shape: bf16[2,2048,32], index: 14, kind: input, shape index: {}]
  %s15 = inlined_call_operand.vmem [shape: f32[2,32], index: 15, kind: input, shape index: {}]
  %s16 = inlined_call_operand.vmem [shape: bf16[32,10], index: 16, kind: input, shape index: {}]
  %s17 = inlined_call_operand.vmem [shape: f32[1,10], index: 17, kind: input, shape index: {}]
  %s18 = inlined_call_operand.hbm [shape: f32[2,10], index: 18, kind: output, shape index: {}]
  %s19 = sld [smem:[#allocation0]]
  $region82: #{transformer_forward.1} parent=0
    _
  %s21 = ssub.s32 1, %s19
  %s22 = scalar_select 0, %s21, %s19
  $region1: #{transformer_forward.1} parent=0
    #allocation2 [shape = 'u8[1024]{0}', space=vmem, size = 0x400, scoped, tag = 'output window, operand 0, single buffered']
    #allocation3 [shape = 's32[1]{0}', space=sflag, size = 0x4, scoped, tag = 'scoped memory for transformer_forward.1']
    %23 = vsyncpa [#allocation3], 0
    // Predicated region
    $region2: #{transformer_forward.1} parent=1 // pred_check
      _
    $region3: #{transformer_forward.1} parent=1 // pred_check_branch
      %25 = sbr.rel (0) target = $region5
    $region4: #{transformer_forward.1} parent=1 // pred_region
      _
    $region5: #{transformer_forward.1} parent=1 // pred_fallthru
      _
    // Predicated region
    $region6: #{transformer_forward.1} parent=1 // pred_check
      _
    $region7: #{transformer_forward.1} parent=1 // pred_check_branch
      %27 = sbr.rel (0) target = $region9
    $region8: #{transformer_forward.1} parent=1 // pred_region
      _
    $region9: #{transformer_forward.1} parent=1 // pred_fallthru
      _
    // Predicated region
    $region10: #{transformer_forward.1} parent=1 // pred_check
      _
    $region11: #{transformer_forward.1} parent=1 // pred_check_branch
      %29 = sbr.rel (0) target = $region13
    $region12: #{transformer_forward.1} parent=1 // pred_region
      _
    $region13: #{transformer_forward.1} parent=1 // pred_fallthru
      _
    // Predicated region
    $region14: #{transformer_forward.1} parent=1 // pred_check
      _
    $region15: #{transformer_forward.1} parent=1 // pred_check_branch
      %31 = sbr.rel (0) target = $region17
    $region16: #{transformer_forward.1} parent=1 // pred_region
      _
    $region17: #{transformer_forward.1} parent=1 // pred_fallthru
      _
    // Predicated region
    $region18: #{transformer_forward.1} parent=1 // pred_check
      _
    $region19: #{transformer_forward.1} parent=1 // pred_check_branch
      %33 = sbr.rel (0) target = $region21
    $region20: #{transformer_forward.1} parent=1 // pred_region
      _
    $region21: #{transformer_forward.1} parent=1 // pred_fallthru
      _
    // Predicated region
    $region22: #{transformer_forward.1} parent=1 // pred_check
      _
    $region23: #{transformer_forward.1} parent=1 // pred_check_branch
      %35 = sbr.rel (0) target = $region25
    $region24: #{transformer_forward.1} parent=1 // pred_region
      _
    $region25: #{transformer_forward.1} parent=1 // pred_fallthru
      _
    // Predicated region
    $region26: #{transformer_forward.1} parent=1 // pred_check
      _
    $region27: #{transformer_forward.1} parent=1 // pred_check_branch
      %37 = sbr.rel (0) target = $region29
    $region28: #{transformer_forward.1} parent=1 // pred_region
      _
    $region29: #{transformer_forward.1} parent=1 // pred_fallthru
      _
    // Predicated region
    $region30: #{transformer_forward.1} parent=1 // pred_check
      _
    $region31: #{transformer_forward.1} parent=1 // pred_check_branch
      %39 = sbr.rel (0) target = $region33
    $region32: #{transformer_forward.1} parent=1 // pred_region
      _
    $region33: #{transformer_forward.1} parent=1 // pred_fallthru
      _
    // Predicated region
    $region34: #{transformer_forward.1} parent=1 // pred_check
      _
    $region35: #{transformer_forward.1} parent=1 // pred_check_branch
      %41 = sbr.rel (0) target = $region37
    $region36: #{transformer_forward.1} parent=1 // pred_region
      _
    $region37: #{transformer_forward.1} parent=1 // pred_fallthru
      _
    // Predicated region
    $region38: #{transformer_forward.1} parent=1 // pred_check
      _
    $region39: #{transformer_forward.1} parent=1 // pred_check_branch
      %43 = sbr.rel (0) target = $region41
    $region40: #{transformer_forward.1} parent=1 // pred_region
      _
    $region41: #{transformer_forward.1} parent=1 // pred_fallthru
      _
    // Predicated region
    $region42: #{transformer_forward.1} parent=1 // pred_check
      _
    $region43: #{transformer_forward.1} parent=1 // pred_check_branch
      %45 = sbr.rel (0) target = $region45
    $region44: #{transformer_forward.1} parent=1 // pred_region
      _
    $region45: #{transformer_forward.1} parent=1 // pred_fallthru
      _
    // Predicated region
    $region46: #{transformer_forward.1} parent=1 // pred_check
      _
    $region47: #{transformer_forward.1} parent=1 // pred_check_branch
      %47 = sbr.rel (0) target = $region49
    $region48: #{transformer_forward.1} parent=1 // pred_region
      _
    $region49: #{transformer_forward.1} parent=1 // pred_fallthru
      _
    // Predicated region
    $region50: #{transformer_forward.1} parent=1 // pred_check
      _
    $region51: #{transformer_forward.1} parent=1 // pred_check_branch
      %49 = sbr.rel (0) target = $region53
    $region52: #{transformer_forward.1} parent=1 // pred_region
      _
    $region53: #{transformer_forward.1} parent=1 // pred_fallthru
      _
    // Predicated region
    $region54: #{transformer_forward.1} parent=1 // pred_check
      _
    $region55: #{transformer_forward.1} parent=1 // pred_check_branch
      %51 = sbr.rel (0) target = $region57
    $region56: #{transformer_forward.1} parent=1 // pred_region
      _
    $region57: #{transformer_forward.1} parent=1 // pred_fallthru
      _
    // Predicated region
    $region58: #{transformer_forward.1} parent=1 // pred_check
      _
    $region59: #{transformer_forward.1} parent=1 // pred_check_branch
      %53 = sbr.rel (0) target = $region61
    $region60: #{transformer_forward.1} parent=1 // pred_region
      _
    $region61: #{transformer_forward.1} parent=1 // pred_fallthru
      _
    // Predicated region
    $region62: #{transformer_forward.1} parent=1 // pred_check
      _
    $region63: #{transformer_forward.1} parent=1 // pred_check_branch
      %55 = sbr.rel (0) target = $region65
    $region64: #{transformer_forward.1} parent=1 // pred_region
      _
    $region65: #{transformer_forward.1} parent=1 // pred_fallthru
      _
    // Predicated region
    $region66: #{transformer_forward.1} parent=1 // pred_check
      _
    $region67: #{transformer_forward.1} parent=1 // pred_check_branch
      %57 = sbr.rel (0) target = $region69
    $region68: #{transformer_forward.1} parent=1 // pred_region
      _
    $region69: #{transformer_forward.1} parent=1 // pred_fallthru
      _
    // Predicated region
    $region70: #{transformer_forward.1} parent=1 // pred_check
      _
    $region71: #{transformer_forward.1} parent=1 // pred_check_branch
      %59 = sbr.rel (0) target = $region73
    $region72: #{transformer_forward.1} parent=1 // pred_region
      _
    $region73: #{transformer_forward.1} parent=1 // pred_fallthru
      _
    %v61 = vld [vmem:[%s0] sm:$0x3]
    %v62 = vld [vmem:[%s0 + $0x2] sm:$0x3]
    %v63 = vld [vmem:[%s0 + $0x4] sm:$0x3]
    %v64 = vld [vmem:[%s0 + $0x6] sm:$0x3]
    %v65 = vld [vmem:[%s0 + $0x8] sm:$0x3]
    %v66 = vld [vmem:[%s0 + $0xa] sm:$0x3]
    %v67 = vld [vmem:[%s0 + $0xc] sm:$0x3]
    %v68 = vld [vmem:[%s0 + $0xe] sm:$0x3]
    %77 = vst [vmem:[#allocation1] ss:$4 sm:$0xff] %v61
    %s78 = scalar_lea.vmem [#allocation1], 1
    %79 = vst [vmem:[%s78] ss:$4 sm:$0xff] %v62
    %s80 = scalar_lea.vmem [#allocation1], 2
    %81 = vst [vmem:[%s80] ss:$4 sm:$0xff] %v63
    %s82 = scalar_lea.vmem [#allocation1], 3
    %83 = vst [vmem:[%s82] ss:$4 sm:$0xff] %v64
    %s84 = scalar_lea.vmem [#allocation1], 32
    %85 = vst [vmem:[%s84] ss:$4 sm:$0xff] %v65
    %s86 = scalar_lea.vmem [#allocation1], 33
    %87 = vst [vmem:[%s86] ss:$4 sm:$0xff] %v66
    %s88 = scalar_lea.vmem [#allocation1], 34
    %89 = vst [vmem:[%s88] ss:$4 sm:$0xff] %v67
    %s90 = scalar_lea.vmem [#allocation1], 35
    %91 = vst [vmem:[%s90] ss:$4 sm:$0xff] %v68
    %v92 = vld.sshfl [vmem:[#allocation1] sm:$0xff pattern:$0x73625140]
    %v93 = vld.sshfl [vmem:[#allocation1 + $0x20] sm:$0xff pattern:$0x73625140]
    %v96 = vpack.c.bf16 %v93, %v92
    %v97 = vld [vmem:[%s1] sm:$0xf]
    %v98 = vld [vmem:[%s1 + $0x4] sm:$0xf]
    %v99 = vld [vmem:[%s2] sm:$0x1]
    %v101 = vperm.slane %v99, 0
    %v105 = vunpack.c.l.b16 %v97
    %v106 = vunpack.c.l.b16 %v98
    %v107 = vpack.c.b16 %v106, %v105
    %vm109 = vcmask 130048
    %v111 = vsel %vm109, %v96, 0
    %113 = vmatpush.bf16.msra.mxu0 0
    %114 = vmatpush.bf16.msra.mxu0 0
    %115 = vmatpush.bf16.msra.mxu0 0
    %116 = vmatpush.bf16.msra.mxu0 0
    %117 = vmatpush.bf16.msra.mxu0 0
    %118 = vmatpush.bf16.msra.mxu0 0
    %119 = vmatpush.bf16.msra.mxu0 0
    %120 = vmatpush.bf16.msra.mxu0 %v107
    %121 = vmatmul.bf16.gmra.mxu0 %v111
    %v122 = vpop.f32.mrf.mxu0
    %v123 = vadd.f32 %v101, %v122
    %v124 = vpop.f32.mrf.mxu0
    %v125 = vadd.f32 %v101, %v124
    %126 = vdwg.mxu0
    %v129 = vrot.slane %v123, 2
    %v130 = vrot.slane %v123, 4
    %v131 = vrot.slane %v123, 6
    %v132 = vrot.slane %v125, 2
    %v133 = vrot.slane %v125, 4
    %v134 = vrot.slane %v125, 6
    %v141 = vld [vmem:[%s3] sm:$0xff]
    %v143 = vrot.slane %v141, 1
    %v144 = vrot.slane %v141, 2
    %v145 = vrot.slane %v141, 3
    %v146 = vrot.slane %v141, 4
    %v147 = vrot.slane %v141, 5
    %v148 = vrot.slane %v141, 6
    %v149 = vrot.slane %v141, 7
    %v150 = vperm.slane %v141, 0
    %v151 = vperm.slane %v143, 0
    %v152 = vperm.slane %v144, 0
    %v153 = vperm.slane %v145, 0
    %v154 = vperm.slane %v146, 0
    %v155 = vperm.slane %v147, 0
    %v156 = vperm.slane %v148, 0
    %v157 = vperm.slane %v149, 0
    %v166 = vadd.f32 %v123, %v150
    %v167 = vadd.f32 %v129, %v151
    %v168 = vadd.f32 %v130, %v152
    %v169 = vadd.f32 %v131, %v153
    %v170 = vadd.f32 %v125, %v154
    %v171 = vadd.f32 %v132, %v155
    %v172 = vadd.f32 %v133, %v156
    %v173 = vadd.f32 %v134, %v157
    %182 = vst [vmem:[#allocation1] ss:$4 sm:$0xff] %v166
    %s183 = scalar_lea.vmem [#allocation1], 1
    %184 = vst [vmem:[%s183] ss:$4 sm:$0xff] %v167
    %s185 = scalar_lea.vmem [#allocation1], 2
    %186 = vst [vmem:[%s185] ss:$4 sm:$0xff] %v168
    %s187 = scalar_lea.vmem [#allocation1], 3
    %188 = vst [vmem:[%s187] ss:$4 sm:$0xff] %v169
    %s189 = scalar_lea.vmem [#allocation1], 32
    %190 = vst [vmem:[%s189] ss:$4 sm:$0xff] %v170
    %s191 = scalar_lea.vmem [#allocation1], 33
    %192 = vst [vmem:[%s191] ss:$4 sm:$0xff] %v171
    %s193 = scalar_lea.vmem [#allocation1], 34
    %194 = vst [vmem:[%s193] ss:$4 sm:$0xff] %v172
    %s195 = scalar_lea.vmem [#allocation1], 35
    %196 = vst [vmem:[%s195] ss:$4 sm:$0xff] %v173
    %v197 = vld.sshfl [vmem:[#allocation1] sm:$0xff pattern:$0x73625140]
    %v198 = vld.sshfl [vmem:[#allocation1 + $0x20] sm:$0xff pattern:$0x73625140]
    %v201 = vpack.c.bf16 %v198, %v197
    %v202 = vld [vmem:[%s4] sm:$0xf]
    %v203 = vld [vmem:[%s4 + $0x4] sm:$0xf]
    %v204 = vld [vmem:[%s4 + $0x8] sm:$0xf]
    %v205 = vld [vmem:[%s4 + $0xc] sm:$0xf]
    %v206 = vld [vmem:[%s5] sm:$0x1]
    %v207 = vperm.slane %v206, 0
    %v212 = vunpack.c.l.b16 %v202
    %v213 = vunpack.c.l.b16 %v203
    %v214 = vunpack.c.l.b16 %v204
    %v215 = vunpack.c.l.b16 %v205
    %v216 = vpack.c.b16 %v213, %v212
    %v217 = vpack.c.b16 %v215, %v214
    %vm220 = vcmask 261120
    %v222 = vsel %vm220, %v201, 0
    %224 = vmatpush.bf16.msra.mxu0 0
    %225 = vmatpush.bf16.msra.mxu0 0
    %226 = vmatpush.bf16.msra.mxu0 0
    %227 = vmatpush.bf16.msra.mxu0 0
    %228 = vmatpush.bf16.msra.mxu0 0
    %229 = vmatpush.bf16.msra.mxu0 0
    %230 = vmatpush.bf16.msra.mxu0 %v217
    %231 = vmatpush.bf16.msra.mxu0 %v216
    %232 = vmatmul.bf16.gmra.mxu0 %v222
    %v233 = vpop.f32.mrf.mxu0
    %v234 = vadd.f32 %v207, %v233
    %v235 = vpop.f32.mrf.mxu0
    %v236 = vadd.f32 %v207, %v235
    %237 = vdwg.mxu0
    %v240 = vrot.slane %v234, 2
    %v241 = vrot.slane %v234, 4
    %v242 = vrot.slane %v234, 6
    %v243 = vrot.slane %v236, 2
    %v244 = vrot.slane %v236, 4
    %v245 = vrot.slane %v236, 6
    %246 = vst [vmem:[#allocation1] ss:$4 sm:$0xff] %v234
    %v247 = vld.sshfl [vmem:[#allocation1] sm:$0xff pattern:$0x73625140]
    %248 = vrot.lane.b32.xlu0 %v247, 96
    %v249 = vpop.permute.xlu0 %248
    %vm250 = vcmask 64512
    %v251 = vsel %vm250, %v234, 0
    %v253 = vsel %vm250, %v249, 0
    %255 = vmatpush.xpose.msra.mxu0 0.0
    %256 = vmatpush.xpose.msra.mxu0 0.0
    %257 = vmatpush.xpose.msra.mxu0 0.0
    %258 = vmatpush.xpose.msra.mxu0 0.0
    %259 = vmatpush.xpose.msra.mxu0 0.0
    %260 = vmatpush.xpose.msra.mxu0 0.0
    %261 = vmatpush.xpose.msra.mxu0 0.0
    %262 = vmatpush.xpose.msra.mxu0 0.0
    %263 = vmatpush.xpose.msra.mxu0 0.0
    %264 = vmatpush.xpose.msra.mxu0 0.0
    %265 = vmatpush.xpose.msra.mxu0 0.0
    %266 = vmatpush.xpose.msra.mxu0 0.0
    %267 = vmatpush.xpose.msra.mxu0 0.0
    %268 = vmatpush.xpose.msra.mxu0 0.0
    %269 = vmatpush.xpose.msra.mxu0 0.0
    %270 = vmatpush.xpose.msra.mxu0 %v253
    %271 = vmatmul.f32.gmra.mxu0 %v251
    %v272 = vpop.f32.mrf.mxu0
    %v273 = vadd.f32 0.0, %v272
    %274 = vdwg.mxu0
    %275 = vst [vmem:[#allocation1] ss:$4 sm:$0xff] %v240
    %v276 = vld.sshfl [vmem:[#allocation1] sm:$0xff pattern:$0x73625140]
    %277 = vrot.lane.b32.xlu0 %v276, 96
    %v278 = vpop.permute.xlu0 %277
    %v279 = vsel %vm250, %v240, 0
    %v281 = vsel %vm250, %v278, 0
    %283 = vmatpush.xpose.msra.mxu0 0.0
    %284 = vmatpush.xpose.msra.mxu0 0.0
    %285 = vmatpush.xpose.msra.mxu0 0.0
    %286 = vmatpush.xpose.msra.mxu0 0.0
    %287 = vmatpush.xpose.msra.mxu0 0.0
    %288 = vmatpush.xpose.msra.mxu0 0.0
    %289 = vmatpush.xpose.msra.mxu0 0.0
    %290 = vmatpush.xpose.msra.mxu0 0.0
    %291 = vmatpush.xpose.msra.mxu0 0.0
    %292 = vmatpush.xpose.msra.mxu0 0.0
    %293 = vmatpush.xpose.msra.mxu0 0.0
    %294 = vmatpush.xpose.msra.mxu0 0.0
    %295 = vmatpush.xpose.msra.mxu0 0.0
    %296 = vmatpush.xpose.msra.mxu0 0.0
    %297 = vmatpush.xpose.msra.mxu0 0.0
    %298 = vmatpush.xpose.msra.mxu0 %v281
    %299 = vmatmul.f32.gmra.mxu0 %v279
    %v300 = vpop.f32.mrf.mxu0
    %v301 = vadd.f32 0.0, %v300
    %302 = vdwg.mxu0
    %303 = vst [vmem:[#allocation1] ss:$4 sm:$0xff] %v241
    %v304 = vld.sshfl [vmem:[#allocation1] sm:$0xff pattern:$0x73625140]
    %305 = vrot.lane.b32.xlu0 %v304, 96
    %v306 = vpop.permute.xlu0 %305
    %v307 = vsel %vm250, %v241, 0
    %v309 = vsel %vm250, %v306, 0
    %311 = vmatpush.xpose.msra.mxu0 0.0
    %312 = vmatpush.xpose.msra.mxu0 0.0
    %313 = vmatpush.xpose.msra.mxu0 0.0
    %314 = vmatpush.xpose.msra.mxu0 0.0
    %315 = vmatpush.xpose.msra.mxu0 0.0
    %316 = vmatpush.xpose.msra.mxu0 0.0
    %317 = vmatpush.xpose.msra.mxu0 0.0
    %318 = vmatpush.xpose.msra.mxu0 0.0
    %319 = vmatpush.xpose.msra.mxu0 0.0
    %320 = vmatpush.xpose.msra.mxu0 0.0
    %321 = vmatpush.xpose.msra.mxu0 0.0
    %322 = vmatpush.xpose.msra.mxu0 0.0
    %323 = vmatpush.xpose.msra.mxu0 0.0
    %324 = vmatpush.xpose.msra.mxu0 0.0
    %325 = vmatpush.xpose.msra.mxu0 0.0
    %326 = vmatpush.xpose.msra.mxu0 %v309
    %327 = vmatmul.f32.gmra.mxu0 %v307
    %v328 = vpop.f32.mrf.mxu0
    %v329 = vadd.f32 0.0, %v328
    %330 = vdwg.mxu0
    %331 = vst [vmem:[#allocation1] ss:$4 sm:$0xff] %v242
    %v332 = vld.sshfl [vmem:[#allocation1] sm:$0xff pattern:$0x73625140]
    %333 = vrot.lane.b32.xlu0 %v332, 96
    %v334 = vpop.permute.xlu0 %333
    %v335 = vsel %vm250, %v242, 0
    %v337 = vsel %vm250, %v334, 0
    %339 = vmatpush.xpose.msra.mxu0 0.0
    %340 = vmatpush.xpose.msra.mxu0 0.0
    %341 = vmatpush.xpose.msra.mxu0 0.0
    %342 = vmatpush.xpose.msra.mxu0 0.0
    %343 = vmatpush.xpose.msra.mxu0 0.0
    %344 = vmatpush.xpose.msra.mxu0 0.0
    %345 = vmatpush.xpose.msra.mxu0 0.0
    %346 = vmatpush.xpose.msra.mxu0 0.0
    %347 = vmatpush.xpose.msra.mxu0 0.0
    %348 = vmatpush.xpose.msra.mxu0 0.0
    %349 = vmatpush.xpose.msra.mxu0 0.0
    %350 = vmatpush.xpose.msra.mxu0 0.0
    %351 = vmatpush.xpose.msra.mxu0 0.0
    %352 = vmatpush.xpose.msra.mxu0 0.0
    %353 = vmatpush.xpose.msra.mxu0 0.0
    %354 = vmatpush.xpose.msra.mxu0 %v337
    %355 = vmatmul.f32.gmra.mxu0 %v335
    %v356 = vpop.f32.mrf.mxu0
    %v357 = vadd.f32 0.0, %v356
    %358 = vdwg.mxu0
    %359 = vst [vmem:[#allocation1] ss:$4 sm:$0xff] %v236
    %v360 = vld.sshfl [vmem:[#allocation1] sm:$0xff pattern:$0x73625140]
    %361 = vrot.lane.b32.xlu0 %v360, 96
    %v362 = vpop.permute.xlu0 %361
    %v363 = vsel %vm250, %v236, 0
    %v365 = vsel %vm250, %v362, 0
    %367 = vmatpush.xpose.msra.mxu0 0.0
    %368 = vmatpush.xpose.msra.mxu0 0.0
    %369 = vmatpush.xpose.msra.mxu0 0.0
    %370 = vmatpush.xpose.msra.mxu0 0.0
    %371 = vmatpush.xpose.msra.mxu0 0.0
    %372 = vmatpush.xpose.msra.mxu0 0.0
    %373 = vmatpush.xpose.msra.mxu0 0.0
    %374 = vmatpush.xpose.msra.mxu0 0.0
    %375 = vmatpush.xpose.msra.mxu0 0.0
    %376 = vmatpush.xpose.msra.mxu0 0.0
    %377 = vmatpush.xpose.msra.mxu0 0.0
    %378 = vmatpush.xpose.msra.mxu0 0.0
    %379 = vmatpush.xpose.msra.mxu0 0.0
    %380 = vmatpush.xpose.msra.mxu0 0.0
    %381 = vmatpush.xpose.msra.mxu0 0.0
    %382 = vmatpush.xpose.msra.mxu0 %v365
    %383 = vmatmul.f32.gmra.mxu0 %v363
    %v384 = vpop.f32.mrf.mxu0
    %v385 = vadd.f32 0.0, %v384
    %386 = vdwg.mxu0
    %387 = vst [vmem:[#allocation1] ss:$4 sm:$0xff] %v243
    %v388 = vld.sshfl [vmem:[#allocation1] sm:$0xff pattern:$0x73625140]
    %389 = vrot.lane.b32.xlu0 %v388, 96
    %v390 = vpop.permute.xlu0 %389
    %v391 = vsel %vm250, %v243, 0
    %v393 = vsel %vm250, %v390, 0
    %395 = vmatpush.xpose.msra.mxu0 0.0
    %396 = vmatpush.xpose.msra.mxu0 0.0
    %397 = vmatpush.xpose.msra.mxu0 0.0
    %398 = vmatpush.xpose.msra.mxu0 0.0
    %399 = vmatpush.xpose.msra.mxu0 0.0
    %400 = vmatpush.xpose.msra.mxu0 0.0
    %401 = vmatpush.xpose.msra.mxu0 0.0
    %402 = vmatpush.xpose.msra.mxu0 0.0
    %403 = vmatpush.xpose.msra.mxu0 0.0
    %404 = vmatpush.xpose.msra.mxu0 0.0
    %405 = vmatpush.xpose.msra.mxu0 0.0
    %406 = vmatpush.xpose.msra.mxu0 0.0
    %407 = vmatpush.xpose.msra.mxu0 0.0
    %408 = vmatpush.xpose.msra.mxu0 0.0
    %409 = vmatpush.xpose.msra.mxu0 0.0
    %410 = vmatpush.xpose.msra.mxu0 %v393
    %411 = vmatmul.f32.gmra.mxu0 %v391
    %v412 = vpop.f32.mrf.mxu0
    %v413 = vadd.f32 0.0, %v412
    %414 = vdwg.mxu0
    %415 = vst [vmem:[#allocation1] ss:$4 sm:$0xff] %v244
    %v416 = vld.sshfl [vmem:[#allocation1] sm:$0xff pattern:$0x73625140]
    %417 = vrot.lane.b32.xlu0 %v416, 96
    %v418 = vpop.permute.xlu0 %417
    %v419 = vsel %vm250, %v244, 0
    %v421 = vsel %vm250, %v418, 0
    %423 = vmatpush.xpose.msra.mxu0 0.0
    %424 = vmatpush.xpose.msra.mxu0 0.0
    %425 = vmatpush.xpose.msra.mxu0 0.0
    %426 = vmatpush.xpose.msra.mxu0 0.0
    %427 = vmatpush.xpose.msra.mxu0 0.0
    %428 = vmatpush.xpose.msra.mxu0 0.0
    %429 = vmatpush.xpose.msra.mxu0 0.0
    %430 = vmatpush.xpose.msra.mxu0 0.0
    %431 = vmatpush.xpose.msra.mxu0 0.0
    %432 = vmatpush.xpose.msra.mxu0 0.0
    %433 = vmatpush.xpose.msra.mxu0 0.0
    %434 = vmatpush.xpose.msra.mxu0 0.0
    %435 = vmatpush.xpose.msra.mxu0 0.0
    %436 = vmatpush.xpose.msra.mxu0 0.0
    %437 = vmatpush.xpose.msra.mxu0 0.0
    %438 = vmatpush.xpose.msra.mxu0 %v421
    %439 = vmatmul.f32.gmra.mxu0 %v419
    %v440 = vpop.f32.mrf.mxu0
    %v441 = vadd.f32 0.0, %v440
    %442 = vdwg.mxu0
    %443 = vst [vmem:[#allocation1] ss:$4 sm:$0xff] %v245
    %v444 = vld.sshfl [vmem:[#allocation1] sm:$0xff pattern:$0x73625140]
    %445 = vrot.lane.b32.xlu0 %v444, 96
    %v446 = vpop.permute.xlu0 %445
    %v447 = vsel %vm250, %v245, 0
    %v449 = vsel %vm250, %v446, 0
    %451 = vmatpush.xpose.msra.mxu0 0.0
    %452 = vmatpush.xpose.msra.mxu0 0.0
    %453 = vmatpush.xpose.msra.mxu0 0.0
    %454 = vmatpush.xpose.msra.mxu0 0.0
    %455 = vmatpush.xpose.msra.mxu0 0.0
    %456 = vmatpush.xpose.msra.mxu0 0.0
    %457 = vmatpush.xpose.msra.mxu0 0.0
    %458 = vmatpush.xpose.msra.mxu0 0.0
    %459 = vmatpush.xpose.msra.mxu0 0.0
    %460 = vmatpush.xpose.msra.mxu0 0.0
    %461 = vmatpush.xpose.msra.mxu0 0.0
    %462 = vmatpush.xpose.msra.mxu0 0.0
    %463 = vmatpush.xpose.msra.mxu0 0.0
    %464 = vmatpush.xpose.msra.mxu0 0.0
    %465 = vmatpush.xpose.msra.mxu0 0.0
    %466 = vmatpush.xpose.msra.mxu0 %v449
    %467 = vmatmul.f32.gmra.mxu0 %v447
    %v468 = vpop.f32.mrf.mxu0
    %v469 = vadd.f32 0.0, %v468
    %470 = vdwg.mxu0
    %vm471 = vcmask 9216
    %v472 = vsel %vm471, %v273, -inf
    %473 = vmax.xlane.f32.xlu0 %v472
    %v474 = vpop.xlane.xlu0 %473
    %v475 = vsel %vm471, %v301, -inf
    %476 = vmax.xlane.f32.xlu0 %v475
    %v477 = vpop.xlane.xlu0 %476
    %v478 = vsel %vm471, %v329, -inf
    %479 = vmax.xlane.f32.xlu0 %v478
    %v480 = vpop.xlane.xlu0 %479
    %v481 = vsel %vm471, %v357, -inf
    %482 = vmax.xlane.f32.xlu0 %v481
    %v483 = vpop.xlane.xlu0 %482
    %v484 = vsel %vm471, %v385, -inf
    %485 = vmax.xlane.f32.xlu0 %v484
    %v486 = vpop.xlane.xlu0 %485
    %v487 = vsel %vm471, %v413, -inf
    %488 = vmax.xlane.f32.xlu0 %v487
    %v489 = vpop.xlane.xlu0 %488
    %v490 = vsel %vm471, %v441, -inf
    %491 = vmax.xlane.f32.xlu0 %v490
    %v492 = vpop.xlane.xlu0 %491
    %v493 = vsel %vm471, %v469, -inf
    %494 = vmax.xlane.f32.xlu0 %v493
    %v495 = vpop.xlane.xlu0 %494
    %v496 = vsub.f32 %v273, %v474
    %v497 = vsub.f32 %v301, %v477
    %v498 = vsub.f32 %v329, %v480
    %v499 = vsub.f32 %v357, %v483
    %v500 = vsub.f32 %v385, %v486
    %v501 = vsub.f32 %v413, %v489
    %v502 = vsub.f32 %v441, %v492
    %v503 = vsub.f32 %v469, %v495
    %v504 = vmul.f32 %v496, 1.442695
    %v505 = vpow.pop %v504
    %v506 = vmul.f32 %v497, 1.442695
    %v507 = vpow.pop %v506
    %v508 = vmul.f32 %v498, 1.442695
    %v509 = vpow.pop %v508
    %v510 = vmul.f32 %v499, 1.442695
    %v511 = vpow.pop %v510
    %v512 = vmul.f32 %v500, 1.442695
    %v513 = vpow.pop %v512
    %v514 = vmul.f32 %v501, 1.442695
    %v515 = vpow.pop %v514
    %v516 = vmul.f32 %v502, 1.442695
    %v517 = vpow.pop %v516
    %v518 = vmul.f32 %v503, 1.442695
    %v519 = vpow.pop %v518
    %v520 = vsel %vm471, %v505, 0.0
    %521 = vadd.xlane.f32.xlu0 %v520
    %v522 = vpop.xlane.xlu0 %521
    %v523 = vsel %vm471, %v507, 0.0
    %524 = vadd.xlane.f32.xlu0 %v523
    %v525 = vpop.xlane.xlu0 %524
    %v526 = vsel %vm471, %v509, 0.0
    %527 = vadd.xlane.f32.xlu0 %v526
    %v528 = vpop.xlane.xlu0 %527
    %v529 = vsel %vm471, %v511, 0.0
    %530 = vadd.xlane.f32.xlu0 %v529
    %v531 = vpop.xlane.xlu0 %530
    %v532 = vsel %vm471, %v513, 0.0
    %533 = vadd.xlane.f32.xlu0 %v532
    %v534 = vpop.xlane.xlu0 %533
    %v535 = vsel %vm471, %v515, 0.0
    %536 = vadd.xlane.f32.xlu0 %v535
    %v537 = vpop.xlane.xlu0 %536
    %v538 = vsel %vm471, %v517, 0.0
    %539 = vadd.xlane.f32.xlu0 %v538
    %v540 = vpop.xlane.xlu0 %539
    %v541 = vsel %vm471, %v519, 0.0
    %542 = vadd.xlane.f32.xlu0 %v541
    %v543 = vpop.xlane.xlu0 %542
    %v544 = vrcp.pop %v522
    %v545 = vmul.f32 %v522, %v544
    %v546 = vsub.f32 1.0, %v545
    %v547 = vmul.f32 %v544, %v546
    %v548 = vadd.f32 %v544, %v547
    %vm549 = vweird.f32 %v522
    %vm550 = vweird.f32 %v544
    %vm551 = vmor %vm549, %vm550
    %v552 = vsel %vm551, %v544, %v548
    %v553 = vand.u32 2147483647, %v522
    %vm554 = vcmp.eq.f32.partialorder %v553, 8.507059e+37
    %v555 = vand.u32 %v522, 2147483648
    %v556 = vor.u32 1.1754944e-38, %v555
    %v557 = vsel %vm554, %v556, %v552
    %v558 = vmul.f32 %v505, %v557
    %v559 = vrcp.pop %v525
    %v560 = vmul.f32 %v525, %v559
    %v561 = vsub.f32 1.0, %v560
    %v562 = vmul.f32 %v559, %v561
    %v563 = vadd.f32 %v559, %v562
    %vm564 = vweird.f32 %v525
    %vm565 = vweird.f32 %v559
    %vm566 = vmor %vm564, %vm565
    %v567 = vsel %vm566, %v559, %v563
    %v568 = vand.u32 2147483647, %v525
    %vm569 = vcmp.eq.f32.partialorder %v568, 8.507059e+37
    %v570 = vand.u32 %v525, 2147483648
    %v571 = vor.u32 1.1754944e-38, %v570
    %v572 = vsel %vm569, %v571, %v567
    %v573 = vmul.f32 %v507, %v572
    %v574 = vrcp.pop %v528
    %v575 = vmul.f32 %v528, %v574
    %v576 = vsub.f32 1.0, %v575
    %v577 = vmul.f32 %v574, %v576
    %v578 = vadd.f32 %v574, %v577
    %vm579 = vweird.f32 %v528
    %vm580 = vweird.f32 %v574
    %vm581 = vmor %vm579, %vm580
    %v582 = vsel %vm581, %v574, %v578
    %v583 = vand.u32 2147483647, %v528
    %vm584 = vcmp.eq.f32.partialorder %v583, 8.507059e+37
    %v585 = vand.u32 %v528, 2147483648
    %v586 = vor.u32 1.1754944e-38, %v585
    %v587 = vsel %vm584, %v586, %v582
    %v588 = vmul.f32 %v509, %v587
    %v589 = vrcp.pop %v531
    %v590 = vmul.f32 %v531, %v589
    %v591 = vsub.f32 1.0, %v590
    %v592 = vmul.f32 %v589, %v591
    %v593 = vadd.f32 %v589, %v592
    %vm594 = vweird.f32 %v531
    %vm595 = vweird.f32 %v589
    %vm596 = vmor %vm594, %vm595
    %v597 = vsel %vm596, %v589, %v593
    %v598 = vand.u32 2147483647, %v531
    %vm599 = vcmp.eq.f32.partialorder %v598, 8.507059e+37
    %v600 = vand.u32 %v531, 2147483648
    %v601 = vor.u32 1.1754944e-38, %v600
    %v602 = vsel %vm599, %v601, %v597
    %v603 = vmul.f32 %v511, %v602
    %v604 = vrcp.pop %v534
    %v605 = vmul.f32 %v534, %v604
    %v606 = vsub.f32 1.0, %v605
    %v607 = vmul.f32 %v604, %v606
    %v608 = vadd.f32 %v604, %v607
    %vm609 = vweird.f32 %v534
    %vm610 = vweird.f32 %v604
    %vm611 = vmor %vm609, %vm610
    %v612 = vsel %vm611, %v604, %v608
    %v613 = vand.u32 2147483647, %v534
    %vm614 = vcmp.eq.f32.partialorder %v613, 8.507059e+37
    %v615 = vand.u32 %v534, 2147483648
    %v616 = vor.u32 1.1754944e-38, %v615
    %v617 = vsel %vm614, %v616, %v612
    %v618 = vmul.f32 %v513, %v617
    %v619 = vrcp.pop %v537
    %v620 = vmul.f32 %v537, %v619
    %v621 = vsub.f32 1.0, %v620
    %v622 = vmul.f32 %v619, %v621
    %v623 = vadd.f32 %v619, %v622
    %vm624 = vweird.f32 %v537
    %vm625 = vweird.f32 %v619
    %vm626 = vmor %vm624, %vm625
    %v627 = vsel %vm626, %v619, %v623
    %v628 = vand.u32 2147483647, %v537
    %vm629 = vcmp.eq.f32.partialorder %v628, 8.507059e+37
    %v630 = vand.u32 %v537, 2147483648
    %v631 = vor.u32 1.1754944e-38, %v630
    %v632 = vsel %vm629, %v631, %v627
    %v633 = vmul.f32 %v515, %v632
    %v634 = vrcp.pop %v540
    %v635 = vmul.f32 %v540, %v634
    %v636 = vsub.f32 1.0, %v635
    %v637 = vmul.f32 %v634, %v636
    %v638 = vadd.f32 %v634, %v637
    %vm639 = vweird.f32 %v540
    %vm640 = vweird.f32 %v634
    %vm641 = vmor %vm639, %vm640
    %v642 = vsel %vm641, %v634, %v638
    %v643 = vand.u32 2147483647, %v540
    %vm644 = vcmp.eq.f32.partialorder %v643, 8.507059e+37
    %v645 = vand.u32 %v540, 2147483648
    %v646 = vor.u32 1.1754944e-38, %v645
    %v647 = vsel %vm644, %v646, %v642
    %v648 = vmul.f32 %v517, %v647
    %v649 = vrcp.pop %v543
    %v650 = vmul.f32 %v543, %v649
    %v651 = vsub.f32 1.0, %v650
    %v652 = vmul.f32 %v649, %v651
    %v653 = vadd.f32 %v649, %v652
    %vm654 = vweird.f32 %v543
    %vm655 = vweird.f32 %v649
    %vm656 = vmor %vm654, %vm655
    %v657 = vsel %vm656, %v649, %v653
    %v658 = vand.u32 2147483647, %v543
    %vm659 = vcmp.eq.f32.partialorder %v658, 8.507059e+37
    %v660 = vand.u32 %v543, 2147483648
    %v661 = vor.u32 1.1754944e-38, %v660
    %v662 = vsel %vm659, %v661, %v657
    %v663 = vmul.f32 %v519, %v662
    %664 = vst [vmem:[#allocation1] ss:$4 sm:$0xff] %v234
    %v665 = vld.sshfl [vmem:[#allocation1] sm:$0xff pattern:$0x73625140]
    %666 = vrot.lane.b32.xlu0 %v665, 64
    %v667 = vpop.permute.xlu0 %666
    %vm668 = vcmask 15360
    %v670 = vsel %vm668, %v558, 0
    %vm672 = vcmask 1041408
    %v673 = vsel %vm672, %v667, 0
    %675 = vmatpush.msra.mxu0 0.0
    %676 = vmatpush.msra.mxu0 0.0
    %677 = vmatpush.msra.mxu0 0.0
    %678 = vmatpush.msra.mxu0 0.0
    %679 = vmatpush.msra.mxu0 0.0
    %680 = vmatpush.msra.mxu0 0.0
    %681 = vmatpush.msra.mxu0 0.0
    %682 = vmatpush.msra.mxu0 0.0
    %683 = vmatpush.msra.mxu0 0.0
    %684 = vmatpush.msra.mxu0 0.0
    %685 = vmatpush.msra.mxu0 0.0
    %686 = vmatpush.msra.mxu0 0.0
    %687 = vmatpush.msra.mxu0 0.0
    %688 = vmatpush.msra.mxu0 0.0
    %689 = vmatpush.msra.mxu0 0.0
    %690 = vmatpush.msra.mxu0 %v673
    %691 = vmatmul.f32.gmra.mxu0 %v670
    %v692 = vpop.f32.mrf.mxu0
    %v693 = vadd.f32 0.0, %v692
    %694 = vdwg.mxu0
    %695 = vst [vmem:[#allocation1] ss:$4 sm:$0xff] %v240
    %v696 = vld.sshfl [vmem:[#allocation1] sm:$0xff pattern:$0x73625140]
    %697 = vrot.lane.b32.xlu0 %v696, 64
    %v698 = vpop.permute.xlu0 %697
    %v700 = vsel %vm668, %v573, 0
    %v702 = vsel %vm672, %v698, 0
    %704 = vmatpush.msra.mxu0 0.0
    %705 = vmatpush.msra.mxu0 0.0
    %706 = vmatpush.msra.mxu0 0.0
    %707 = vmatpush.msra.mxu0 0.0
    %708 = vmatpush.msra.mxu0 0.0
    %709 = vmatpush.msra.mxu0 0.0
    %710 = vmatpush.msra.mxu0 0.0
    %711 = vmatpush.msra.mxu0 0.0
    %712 = vmatpush.msra.mxu0 0.0
    %713 = vmatpush.msra.mxu0 0.0
    %714 = vmatpush.msra.mxu0 0.0
    %715 = vmatpush.msra.mxu0 0.0
    %716 = vmatpush.msra.mxu0 0.0
    %717 = vmatpush.msra.mxu0 0.0
    %718 = vmatpush.msra.mxu0 0.0
    %719 = vmatpush.msra.mxu0 %v702
    %720 = vmatmul.f32.gmra.mxu0 %v700
    %v721 = vpop.f32.mrf.mxu0
    %v722 = vadd.f32 0.0, %v721
    %723 = vdwg.mxu0
    %724 = vst [vmem:[#allocation1] ss:$4 sm:$0xff] %v241
    %v725 = vld.sshfl [vmem:[#allocation1] sm:$0xff pattern:$0x73625140]
    %726 = vrot.lane.b32.xlu0 %v725, 64
    %v727 = vpop.permute.xlu0 %726
    %v729 = vsel %vm668, %v588, 0
    %v731 = vsel %vm672, %v727, 0
    %733 = vmatpush.msra.mxu0 0.0
    %734 = vmatpush.msra.mxu0 0.0
    %735 = vmatpush.msra.mxu0 0.0
    %736 = vmatpush.msra.mxu0 0.0
    %737 = vmatpush.msra.mxu0 0.0
    %738 = vmatpush.msra.mxu0 0.0
    %739 = vmatpush.msra.mxu0 0.0
    %740 = vmatpush.msra.mxu0 0.0
    %741 = vmatpush.msra.mxu0 0.0
    %742 = vmatpush.msra.mxu0 0.0
    %743 = vmatpush.msra.mxu0 0.0
    %744 = vmatpush.msra.mxu0 0.0
    %745 = vmatpush.msra.mxu0 0.0
    %746 = vmatpush.msra.mxu0 0.0
    %747 = vmatpush.msra.mxu0 0.0
    %748 = vmatpush.msra.mxu0 %v731
    %749 = vmatmul.f32.gmra.mxu0 %v729
    %v750 = vpop.f32.mrf.mxu0
    %v751 = vadd.f32 0.0, %v750
    %752 = vdwg.mxu0
    %753 = vst [vmem:[#allocation1] ss:$4 sm:$0xff] %v242
    %v754 = vld.sshfl [vmem:[#allocation1] sm:$0xff pattern:$0x73625140]
    %755 = vrot.lane.b32.xlu0 %v754, 64
    %v756 = vpop.permute.xlu0 %755
    %v758 = vsel %vm668, %v603, 0
    %v760 = vsel %vm672, %v756, 0
    %762 = vmatpush.msra.mxu0 0.0
    %763 = vmatpush.msra.mxu0 0.0
    %764 = vmatpush.msra.mxu0 0.0
    %765 = vmatpush.msra.mxu0 0.0
    %766 = vmatpush.msra.mxu0 0.0
    %767 = vmatpush.msra.mxu0 0.0
    %768 = vmatpush.msra.mxu0 0.0
    %769 = vmatpush.msra.mxu0 0.0
    %770 = vmatpush.msra.mxu0 0.0
    %771 = vmatpush.msra.mxu0 0.0
    %772 = vmatpush.msra.mxu0 0.0
    %773 = vmatpush.msra.mxu0 0.0
    %774 = vmatpush.msra.mxu0 0.0
    %775 = vmatpush.msra.mxu0 0.0
    %776 = vmatpush.msra.mxu0 0.0
    %777 = vmatpush.msra.mxu0 %v760
    %778 = vmatmul.f32.gmra.mxu0 %v758
    %v779 = vpop.f32.mrf.mxu0
    %v780 = vadd.f32 0.0, %v779
    %781 = vdwg.mxu0
    %782 = vst [vmem:[#allocation1] ss:$4 sm:$0xff] %v236
    %v783 = vld.sshfl [vmem:[#allocation1] sm:$0xff pattern:$0x73625140]
    %784 = vrot.lane.b32.xlu0 %v783, 64
    %v785 = vpop.permute.xlu0 %784
    %v787 = vsel %vm668, %v618, 0
    %v789 = vsel %vm672, %v785, 0
    %791 = vmatpush.msra.mxu0 0.0
    %792 = vmatpush.msra.mxu0 0.0
    %793 = vmatpush.msra.mxu0 0.0
    %794 = vmatpush.msra.mxu0 0.0
    %795 = vmatpush.msra.mxu0 0.0
    %796 = vmatpush.msra.mxu0 0.0
    %797 = vmatpush.msra.mxu0 0.0
    %798 = vmatpush.msra.mxu0 0.0
    %799 = vmatpush.msra.mxu0 0.0
    %800 = vmatpush.msra.mxu0 0.0
    %801 = vmatpush.msra.mxu0 0.0
    %802 = vmatpush.msra.mxu0 0.0
    %803 = vmatpush.msra.mxu0 0.0
    %804 = vmatpush.msra.mxu0 0.0
    %805 = vmatpush.msra.mxu0 0.0
    %806 = vmatpush.msra.mxu0 %v789
    %807 = vmatmul.f32.gmra.mxu0 %v787
    %v808 = vpop.f32.mrf.mxu0
    %v809 = vadd.f32 0.0, %v808
    %810 = vdwg.mxu0
    %811 = vst [vmem:[#allocation1] ss:$4 sm:$0xff] %v243
    %v812 = vld.sshfl [vmem:[#allocation1] sm:$0xff pattern:$0x73625140]
    %813 = vrot.lane.b32.xlu0 %v812, 64
    %v814 = vpop.permute.xlu0 %813
    %v816 = vsel %vm668, %v633, 0
    %v818 = vsel %vm672, %v814, 0
    %820 = vmatpush.msra.mxu0 0.0
    %821 = vmatpush.msra.mxu0 0.0
    %822 = vmatpush.msra.mxu0 0.0
    %823 = vmatpush.msra.mxu0 0.0
    %824 = vmatpush.msra.mxu0 0.0
    %825 = vmatpush.msra.mxu0 0.0
    %826 = vmatpush.msra.mxu0 0.0
    %827 = vmatpush.msra.mxu0 0.0
    %828 = vmatpush.msra.mxu0 0.0
    %829 = vmatpush.msra.mxu0 0.0
    %830 = vmatpush.msra.mxu0 0.0
    %831 = vmatpush.msra.mxu0 0.0
    %832 = vmatpush.msra.mxu0 0.0
    %833 = vmatpush.msra.mxu0 0.0
    %834 = vmatpush.msra.mxu0 0.0
    %835 = vmatpush.msra.mxu0 %v818
    %836 = vmatmul.f32.gmra.mxu0 %v816
    %v837 = vpop.f32.mrf.mxu0
    %v838 = vadd.f32 0.0, %v837
    %839 = vdwg.mxu0
    %840 = vst [vmem:[#allocation1] ss:$4 sm:$0xff] %v244
    %v841 = vld.sshfl [vmem:[#allocation1] sm:$0xff pattern:$0x73625140]
    %842 = vrot.lane.b32.xlu0 %v841, 64
    %v843 = vpop.permute.xlu0 %842
    %v845 = vsel %vm668, %v648, 0
    %v847 = vsel %vm672, %v843, 0
    %849 = vmatpush.msra.mxu0 0.0
    %850 = vmatpush.msra.mxu0 0.0
    %851 = vmatpush.msra.mxu0 0.0
    %852 = vmatpush.msra.mxu0 0.0
    %853 = vmatpush.msra.mxu0 0.0
    %854 = vmatpush.msra.mxu0 0.0
    %855 = vmatpush.msra.mxu0 0.0
    %856 = vmatpush.msra.mxu0 0.0
    %857 = vmatpush.msra.mxu0 0.0
    %858 = vmatpush.msra.mxu0 0.0
    %859 = vmatpush.msra.mxu0 0.0
    %860 = vmatpush.msra.mxu0 0.0
    %861 = vmatpush.msra.mxu0 0.0
    %862 = vmatpush.msra.mxu0 0.0
    %863 = vmatpush.msra.mxu0 0.0
    %864 = vmatpush.msra.mxu0 %v847
    %865 = vmatmul.f32.gmra.mxu0 %v845
    %v866 = vpop.f32.mrf.mxu0
    %v867 = vadd.f32 0.0, %v866
    %868 = vdwg.mxu0
    %869 = vst [vmem:[#allocation1] ss:$4 sm:$0xff] %v245
    %v870 = vld.sshfl [vmem:[#allocation1] sm:$0xff pattern:$0x73625140]
    %871 = vrot.lane.b32.xlu0 %v870, 64
    %v872 = vpop.permute.xlu0 %871
    %v874 = vsel %vm668, %v663, 0
    %v876 = vsel %vm672, %v872, 0
    %878 = vmatpush.msra.mxu0 0.0
    %879 = vmatpush.msra.mxu0 0.0
    %880 = vmatpush.msra.mxu0 0.0
    %881 = vmatpush.msra.mxu0 0.0
    %882 = vmatpush.msra.mxu0 0.0
    %883 = vmatpush.msra.mxu0 0.0
    %884 = vmatpush.msra.mxu0 0.0
    %885 = vmatpush.msra.mxu0 0.0
    %886 = vmatpush.msra.mxu0 0.0
    %887 = vmatpush.msra.mxu0 0.0
    %888 = vmatpush.msra.mxu0 0.0
    %889 = vmatpush.msra.mxu0 0.0
    %890 = vmatpush.msra.mxu0 0.0
    %891 = vmatpush.msra.mxu0 0.0
    %892 = vmatpush.msra.mxu0 0.0
    %893 = vmatpush.msra.mxu0 %v876
    %894 = vmatmul.f32.gmra.mxu0 %v874
    %v895 = vpop.f32.mrf.mxu0
    %v896 = vadd.f32 0.0, %v895
    %897 = vdwg.mxu0
    %v898 = vld [vmem:[%s6] sm:$0xff]
    %899 = vst [vmem:[#allocation1] ss:$4 sm:$0xff] %v234
    %v900 = vld.sshfl [vmem:[#allocation1] sm:$0xff pattern:$0x73625140]
    %901 = vrot.lane.b32.xlu0 %v900, 120
    %v902 = vpop.permute.xlu0 %901
    %903 = vst [vmem:[#allocation1] ss:$4 sm:$0xff] %v234
    %v904 = vld.sshfl [vmem:[#allocation1] sm:$0xff pattern:$0x73625140]
    %905 = vrot.lane.b32.xlu0 %v904, 88
    %v906 = vpop.permute.xlu0 %905
    %v907 = vsel %vm250, %v902, 0
    %v909 = vsel %vm250, %v906, 0
    %911 = vmatpush.xpose.msra.mxu0 0.0
    %912 = vmatpush.xpose.msra.mxu0 0.0
    %913 = vmatpush.xpose.msra.mxu0 0.0
    %914 = vmatpush.xpose.msra.mxu0 0.0
    %915 = vmatpush.xpose.msra.mxu0 0.0
    %916 = vmatpush.xpose.msra.mxu0 0.0
    %917 = vmatpush.xpose.msra.mxu0 0.0
    %918 = vmatpush.xpose.msra.mxu0 0.0
    %919 = vmatpush.xpose.msra.mxu0 0.0
    %920 = vmatpush.xpose.msra.mxu0 0.0
    %921 = vmatpush.xpose.msra.mxu0 0.0
    %922 = vmatpush.xpose.msra.mxu0 0.0
    %923 = vmatpush.xpose.msra.mxu0 0.0
    %924 = vmatpush.xpose.msra.mxu0 0.0
    %925 = vmatpush.xpose.msra.mxu0 0.0
    %926 = vmatpush.xpose.msra.mxu0 %v909
    %927 = vmatmul.f32.gmra.mxu0 %v907
    %v928 = vpop.f32.mrf.mxu0
    %v929 = vadd.f32 0.0, %v928
    %930 = vdwg.mxu0
    %931 = vst [vmem:[#allocation1] ss:$4 sm:$0xff] %v240
    %v932 = vld.sshfl [vmem:[#allocation1] sm:$0xff pattern:$0x73625140]
    %933 = vrot.lane.b32.xlu0 %v932, 120
    %v934 = vpop.permute.xlu0 %933
    %935 = vst [vmem:[#allocation1] ss:$4 sm:$0xff] %v240
    %v936 = vld.sshfl [vmem:[#allocation1] sm:$0xff pattern:$0x73625140]
    %937 = vrot.lane.b32.xlu0 %v936, 88
    %v938 = vpop.permute.xlu0 %937
    %v939 = vsel %vm250, %v934, 0
    %v941 = vsel %vm250, %v938, 0
    %943 = vmatpush.xpose.msra.mxu0 0.0
    %944 = vmatpush.xpose.msra.mxu0 0.0
    %945 = vmatpush.xpose.msra.mxu0 0.0
    %946 = vmatpush.xpose.msra.mxu0 0.0
    %947 = vmatpush.xpose.msra.mxu0 0.0
    %948 = vmatpush.xpose.msra.mxu0 0.0
    %949 = vmatpush.xpose.msra.mxu0 0.0
    %950 = vmatpush.xpose.msra.mxu0 0.0
    %951 = vmatpush.xpose.msra.mxu0 0.0
    %952 = vmatpush.xpose.msra.mxu0 0.0
    %953 = vmatpush.xpose.msra.mxu0 0.0
    %954 = vmatpush.xpose.msra.mxu0 0.0
    %955 = vmatpush.xpose.msra.mxu0 0.0
    %956 = vmatpush.xpose.msra.mxu0 0.0
    %957 = vmatpush.xpose.msra.mxu0 0.0
    %958 = vmatpush.xpose.msra.mxu0 %v941
    %959 = vmatmul.f32.gmra.mxu0 %v939
    %v960 = vpop.f32.mrf.mxu0
    %v961 = vadd.f32 0.0, %v960
    %962 = vdwg.mxu0
    %963 = vst [vmem:[#allocation1] ss:$4 sm:$0xff] %v241
    %v964 = vld.sshfl [vmem:[#allocation1] sm:$0xff pattern:$0x73625140]
    %965 = vrot.lane.b32.xlu0 %v964, 120
    %v966 = vpop.permute.xlu0 %965
    %967 = vst [vmem:[#allocation1] ss:$4 sm:$0xff] %v241
    %v968 = vld.sshfl [vmem:[#allocation1] sm:$0xff pattern:$0x73625140]
    %969 = vrot.lane.b32.xlu0 %v968, 88
    %v970 = vpop.permute.xlu0 %969
    %v971 = vsel %vm250, %v966, 0
    %v973 = vsel %vm250, %v970, 0
    %975 = vmatpush.xpose.msra.mxu0 0.0
    %976 = vmatpush.xpose.msra.mxu0 0.0
    %977 = vmatpush.xpose.msra.mxu0 0.0
    %978 = vmatpush.xpose.msra.mxu0 0.0
    %979 = vmatpush.xpose.msra.mxu0 0.0
    %980 = vmatpush.xpose.msra.mxu0 0.0
    %981 = vmatpush.xpose.msra.mxu0 0.0
    %982 = vmatpush.xpose.msra.mxu0 0.0
    %983 = vmatpush.xpose.msra.mxu0 0.0
    %984 = vmatpush.xpose.msra.mxu0 0.0
    %985 = vmatpush.xpose.msra.mxu0 0.0
    %986 = vmatpush.xpose.msra.mxu0 0.0
    %987 = vmatpush.xpose.msra.mxu0 0.0
    %988 = vmatpush.xpose.msra.mxu0 0.0
    %989 = vmatpush.xpose.msra.mxu0 0.0
    %990 = vmatpush.xpose.msra.mxu0 %v973
    %991 = vmatmul.f32.gmra.mxu0 %v971
    %v992 = vpop.f32.mrf.mxu0
    %v993 = vadd.f32 0.0, %v992
    %994 = vdwg.mxu0
    %995 = vst [vmem:[#allocation1] ss:$4 sm:$0xff] %v242
    %v996 = vld.sshfl [vmem:[#allocation1] sm:$0xff pattern:$0x73625140]
    %997 = vrot.lane.b32.xlu0 %v996, 120
    %v998 = vpop.permute.xlu0 %997
    %999 = vst [vmem:[#allocation1] ss:$4 sm:$0xff] %v242
    %v1000 = vld.sshfl [vmem:[#allocation1] sm:$0xff pattern:$0x73625140]
    %1001 = vrot.lane.b32.xlu0 %v1000, 88
    %v1002 = vpop.permute.xlu0 %1001
    %v1003 = vsel %vm250, %v998, 0
    %v1005 = vsel %vm250, %v1002, 0
    %1007 = vmatpush.xpose.msra.mxu0 0.0
    %1008 = vmatpush.xpose.msra.mxu0 0.0
    %1009 = vmatpush.xpose.msra.mxu0 0.0
    %1010 = vmatpush.xpose.msra.mxu0 0.0
    %1011 = vmatpush.xpose.msra.mxu0 0.0
    %1012 = vmatpush.xpose.msra.mxu0 0.0
    %1013 = vmatpush.xpose.msra.mxu0 0.0
    %1014 = vmatpush.xpose.msra.mxu0 0.0
    %1015 = vmatpush.xpose.msra.mxu0 0.0
    %1016 = vmatpush.xpose.msra.mxu0 0.0
    %1017 = vmatpush.xpose.msra.mxu0 0.0
    %1018 = vmatpush.xpose.msra.mxu0 0.0
    %1019 = vmatpush.xpose.msra.mxu0 0.0
    %1020 = vmatpush.xpose.msra.mxu0 0.0
    %1021 = vmatpush.xpose.msra.mxu0 0.0
    %1022 = vmatpush.xpose.msra.mxu0 %v1005
    %1023 = vmatmul.f32.gmra.mxu0 %v1003
    %v1024 = vpop.f32.mrf.mxu0
    %v1025 = vadd.f32 0.0, %v1024
    %1026 = vdwg.mxu0
    %1027 = vst [vmem:[#allocation1] ss:$4 sm:$0xff] %v236
    %v1028 = vld.sshfl [vmem:[#allocation1] sm:$0xff pattern:$0x73625140]
    %1029 = vrot.lane.b32.xlu0 %v1028, 120
    %v1030 = vpop.permute.xlu0 %1029
    %1031 = vst [vmem:[#allocation1] ss:$4 sm:$0xff] %v236
    %v1032 = vld.sshfl [vmem:[#allocation1] sm:$0xff pattern:$0x73625140]
    %1033 = vrot.lane.b32.xlu0 %v1032, 88
    %v1034 = vpop.permute.xlu0 %1033
    %v1035 = vsel %vm250, %v1030, 0
    %v1037 = vsel %vm250, %v1034, 0
    %1039 = vmatpush.xpose.msra.mxu0 0.0
    %1040 = vmatpush.xpose.msra.mxu0 0.0
    %1041 = vmatpush.xpose.msra.mxu0 0.0
    %1042 = vmatpush.xpose.msra.mxu0 0.0
    %1043 = vmatpush.xpose.msra.mxu0 0.0
    %1044 = vmatpush.xpose.msra.mxu0 0.0
    %1045 = vmatpush.xpose.msra.mxu0 0.0
    %1046 = vmatpush.xpose.msra.mxu0 0.0
    %1047 = vmatpush.xpose.msra.mxu0 0.0
    %1048 = vmatpush.xpose.msra.mxu0 0.0
    %1049 = vmatpush.xpose.msra.mxu0 0.0
    %1050 = vmatpush.xpose.msra.mxu0 0.0
    %1051 = vmatpush.xpose.msra.mxu0 0.0
    %1052 = vmatpush.xpose.msra.mxu0 0.0
    %1053 = vmatpush.xpose.msra.mxu0 0.0
    %1054 = vmatpush.xpose.msra.mxu0 %v1037
    %1055 = vmatmul.f32.gmra.mxu0 %v1035
    %v1056 = vpop.f32.mrf.mxu0
    %v1057 = vadd.f32 0.0, %v1056
    %1058 = vdwg.mxu0
    %1059 = vst [vmem:[#allocation1] ss:$4 sm:$0xff] %v243
    %v1060 = vld.sshfl [vmem:[#allocation1] sm:$0xff pattern:$0x73625140]
    %1061 = vrot.lane.b32.xlu0 %v1060, 120
    %v1062 = vpop.permute.xlu0 %1061
    %1063 = vst [vmem:[#allocation1] ss:$4 sm:$0xff] %v243
    %v1064 = vld.sshfl [vmem:[#allocation1] sm:$0xff pattern:$0x73625140]
    %1065 = vrot.lane.b32.xlu0 %v1064, 88
    %v1066 = vpop.permute.xlu0 %1065
    %v1067 = vsel %vm250, %v1062, 0
    %v1069 = vsel %vm250, %v1066, 0
    %1071 = vmatpush.xpose.msra.mxu0 0.0
    %1072 = vmatpush.xpose.msra.mxu0 0.0
    %1073 = vmatpush.xpose.msra.mxu0 0.0
    %1074 = vmatpush.xpose.msra.mxu0 0.0
    %1075 = vmatpush.xpose.msra.mxu0 0.0
    %1076 = vmatpush.xpose.msra.mxu0 0.0
    %1077 = vmatpush.xpose.msra.mxu0 0.0
    %1078 = vmatpush.xpose.msra.mxu0 0.0
    %1079 = vmatpush.xpose.msra.mxu0 0.0
    %1080 = vmatpush.xpose.msra.mxu0 0.0
    %1081 = vmatpush.xpose.msra.mxu0 0.0
    %1082 = vmatpush.xpose.msra.mxu0 0.0
    %1083 = vmatpush.xpose.msra.mxu0 0.0
    %1084 = vmatpush.xpose.msra.mxu0 0.0
    %1085 = vmatpush.xpose.msra.mxu0 0.0
    %1086 = vmatpush.xpose.msra.mxu0 %v1069
    %1087 = vmatmul.f32.gmra.mxu0 %v1067
    %v1088 = vpop.f32.mrf.mxu0
    %v1089 = vadd.f32 0.0, %v1088
    %1090 = vdwg.mxu0
    %1091 = vst [vmem:[#allocation1] ss:$4 sm:$0xff] %v244
    %v1092 = vld.sshfl [vmem:[#allocation1] sm:$0xff pattern:$0x73625140]
    %1093 = vrot.lane.b32.xlu0 %v1092, 120
    %v1094 = vpop.permute.xlu0 %1093
    %1095 = vst [vmem:[#allocation1] ss:$4 sm:$0xff] %v244
    %v1096 = vld.sshfl [vmem:[#allocation1] sm:$0xff pattern:$0x73625140]
    %1097 = vrot.lane.b32.xlu0 %v1096, 88
    %v1098 = vpop.permute.xlu0 %1097
    %v1099 = vsel %vm250, %v1094, 0
    %v1101 = vsel %vm250, %v1098, 0
    %1103 = vmatpush.xpose.msra.mxu0 0.0
    %1104 = vmatpush.xpose.msra.mxu0 0.0
    %1105 = vmatpush.xpose.msra.mxu0 0.0
    %1106 = vmatpush.xpose.msra.mxu0 0.0
    %1107 = vmatpush.xpose.msra.mxu0 0.0
    %1108 = vmatpush.xpose.msra.mxu0 0.0
    %1109 = vmatpush.xpose.msra.mxu0 0.0
    %1110 = vmatpush.xpose.msra.mxu0 0.0
    %1111 = vmatpush.xpose.msra.mxu0 0.0
    %1112 = vmatpush.xpose.msra.mxu0 0.0
    %1113 = vmatpush.xpose.msra.mxu0 0.0
    %1114 = vmatpush.xpose.msra.mxu0 0.0
    %1115 = vmatpush.xpose.msra.mxu0 0.0
    %1116 = vmatpush.xpose.msra.mxu0 0.0
    %1117 = vmatpush.xpose.msra.mxu0 0.0
    %1118 = vmatpush.xpose.msra.mxu0 %v1101
    %1119 = vmatmul.f32.gmra.mxu0 %v1099
    %v1120 = vpop.f32.mrf.mxu0
    %v1121 = vadd.f32 0.0, %v1120
    %1122 = vdwg.mxu0
    %1123 = vst [vmem:[#allocation1] ss:$4 sm:$0xff] %v245
    %v1124 = vld.sshfl [vmem:[#allocation1] sm:$0xff pattern:$0x73625140]
    %1125 = vrot.lane.b32.xlu0 %v1124, 120
    %v1126 = vpop.permute.xlu0 %1125
    %1127 = vst [vmem:[#allocation1] ss:$4 sm:$0xff] %v245
    %v1128 = vld.sshfl [vmem:[#allocation1] sm:$0xff pattern:$0x73625140]
    %1129 = vrot.lane.b32.xlu0 %v1128, 88
    %v1130 = vpop.permute.xlu0 %1129
    %v1131 = vsel %vm250, %v1126, 0
    %v1133 = vsel %vm250, %v1130, 0
    %1135 = vmatpush.xpose.msra.mxu0 0.0
    %1136 = vmatpush.xpose.msra.mxu0 0.0
    %1137 = vmatpush.xpose.msra.mxu0 0.0
    %1138 = vmatpush.xpose.msra.mxu0 0.0
    %1139 = vmatpush.xpose.msra.mxu0 0.0
    %1140 = vmatpush.xpose.msra.mxu0 0.0
    %1141 = vmatpush.xpose.msra.mxu0 0.0
    %1142 = vmatpush.xpose.msra.mxu0 0.0
    %1143 = vmatpush.xpose.msra.mxu0 0.0
    %1144 = vmatpush.xpose.msra.mxu0 0.0
    %1145 = vmatpush.xpose.msra.mxu0 0.0
    %1146 = vmatpush.xpose.msra.mxu0 0.0
    %1147 = vmatpush.xpose.msra.mxu0 0.0
    %1148 = vmatpush.xpose.msra.mxu0 0.0
    %1149 = vmatpush.xpose.msra.mxu0 0.0
    %1150 = vmatpush.xpose.msra.mxu0 %v1133
    %1151 = vmatmul.f32.gmra.mxu0 %v1131
    %v1152 = vpop.f32.mrf.mxu0
    %v1153 = vadd.f32 0.0, %v1152
    %1154 = vdwg.mxu0
    %v1155 = vsel %vm471, %v929, -inf
    %1156 = vmax.xlane.f32.xlu0 %v1155
    %v1157 = vpop.xlane.xlu0 %1156
    %v1158 = vsel %vm471, %v961, -inf
    %1159 = vmax.xlane.f32.xlu0 %v1158
    %v1160 = vpop.xlane.xlu0 %1159
    %v1161 = vsel %vm471, %v993, -inf
    %1162 = vmax.xlane.f32.xlu0 %v1161
    %v1163 = vpop.xlane.xlu0 %1162
    %v1164 = vsel %vm471, %v1025, -inf
    %1165 = vmax.xlane.f32.xlu0 %v1164
    %v1166 = vpop.xlane.xlu0 %1165
    %v1167 = vsel %vm471, %v1057, -inf
    %1168 = vmax.xlane.f32.xlu0 %v1167
    %v1169 = vpop.xlane.xlu0 %1168
    %v1170 = vsel %vm471, %v1089, -inf
    %1171 = vmax.xlane.f32.xlu0 %v1170
    %v1172 = vpop.xlane.xlu0 %1171
    %v1173 = vsel %vm471, %v1121, -inf
    %1174 = vmax.xlane.f32.xlu0 %v1173
    %v1175 = vpop.xlane.xlu0 %1174
    %v1176 = vsel %vm471, %v1153, -inf
    %1177 = vmax.xlane.f32.xlu0 %v1176
    %v1178 = vpop.xlane.xlu0 %1177
    %v1179 = vsub.f32 %v929, %v1157
    %v1180 = vsub.f32 %v961, %v1160
    %v1181 = vsub.f32 %v993, %v1163
    %v1182 = vsub.f32 %v1025, %v1166
    %v1183 = vsub.f32 %v1057, %v1169
    %v1184 = vsub.f32 %v1089, %v1172
    %v1185 = vsub.f32 %v1121, %v1175
    %v1186 = vsub.f32 %v1153, %v1178
    %v1187 = vmul.f32 %v1179, 1.442695
    %v1188 = vpow.pop %v1187
    %v1189 = vmul.f32 %v1180, 1.442695
    %v1190 = vpow.pop %v1189
    %v1191 = vmul.f32 %v1181, 1.442695
    %v1192 = vpow.pop %v1191
    %v1193 = vmul.f32 %v1182, 1.442695
    %v1194 = vpow.pop %v1193
    %v1195 = vmul.f32 %v1183, 1.442695
    %v1196 = vpow.pop %v1195
    %v1197 = vmul.f32 %v1184, 1.442695
    %v1198 = vpow.pop %v1197
    %v1199 = vmul.f32 %v1185, 1.442695
    %v1200 = vpow.pop %v1199
    %v1201 = vmul.f32 %v1186, 1.442695
    %v1202 = vpow.pop %v1201
    %v1203 = vsel %vm471, %v1188, 0.0
    %1204 = vadd.xlane.f32.xlu0 %v1203
    %v1205 = vpop.xlane.xlu0 %1204
    %v1206 = vsel %vm471, %v1190, 0.0
    %1207 = vadd.xlane.f32.xlu0 %v1206
    %v1208 = vpop.xlane.xlu0 %1207
    %v1209 = vsel %vm471, %v1192, 0.0
    %1210 = vadd.xlane.f32.xlu0 %v1209
    %v1211 = vpop.xlane.xlu0 %1210
    %v1212 = vsel %vm471, %v1194, 0.0
    %1213 = vadd.xlane.f32.xlu0 %v1212
    %v1214 = vpop.xlane.xlu0 %1213
    %v1215 = vsel %vm471, %v1196, 0.0
    %1216 = vadd.xlane.f32.xlu0 %v1215
    %v1217 = vpop.xlane.xlu0 %1216
    %v1218 = vsel %vm471, %v1198, 0.0
    %1219 = vadd.xlane.f32.xlu0 %v1218
    %v1220 = vpop.xlane.xlu0 %1219
    %v1221 = vsel %vm471, %v1200, 0.0
    %1222 = vadd.xlane.f32.xlu0 %v1221
    %v1223 = vpop.xlane.xlu0 %1222
    %v1224 = vsel %vm471, %v1202, 0.0
    %1225 = vadd.xlane.f32.xlu0 %v1224
    %v1226 = vpop.xlane.xlu0 %1225
    %v1227 = vrcp.pop %v1205
    %v1228 = vmul.f32 %v1205, %v1227
    %v1229 = vsub.f32 1.0, %v1228
    %v1230 = vmul.f32 %v1227, %v1229
    %v1231 = vadd.f32 %v1227, %v1230
    %vm1232 = vweird.f32 %v1205
    %vm1233 = vweird.f32 %v1227
    %vm1234 = vmor %vm1232, %vm1233
    %v1235 = vsel %vm1234, %v1227, %v1231
    %v1236 = vand.u32 2147483647, %v1205
    %vm1237 = vcmp.eq.f32.partialorder %v1236, 8.507059e+37
    %v1238 = vand.u32 %v1205, 2147483648
    %v1239 = vor.u32 1.1754944e-38, %v1238
    %v1240 = vsel %vm1237, %v1239, %v1235
    %v1241 = vmul.f32 %v1188, %v1240
    %v1242 = vrcp.pop %v1208
    %v1243 = vmul.f32 %v1208, %v1242
    %v1244 = vsub.f32 1.0, %v1243
    %v1245 = vmul.f32 %v1242, %v1244
    %v1246 = vadd.f32 %v1242, %v1245
    %vm1247 = vweird.f32 %v1208
    %vm1248 = vweird.f32 %v1242
    %vm1249 = vmor %vm1247, %vm1248
    %v1250 = vsel %vm1249, %v1242, %v1246
    %v1251 = vand.u32 2147483647, %v1208
    %vm1252 = vcmp.eq.f32.partialorder %v1251, 8.507059e+37
    %v1253 = vand.u32 %v1208, 2147483648
    %v1254 = vor.u32 1.1754944e-38, %v1253
    %v1255 = vsel %vm1252, %v1254, %v1250
    %v1256 = vmul.f32 %v1190, %v1255
    %v1257 = vrcp.pop %v1211
    %v1258 = vmul.f32 %v1211, %v1257
    %v1259 = vsub.f32 1.0, %v1258
    %v1260 = vmul.f32 %v1257, %v1259
    %v1261 = vadd.f32 %v1257, %v1260
    %vm1262 = vweird.f32 %v1211
    %vm1263 = vweird.f32 %v1257
    %vm1264 = vmor %vm1262, %vm1263
    %v1265 = vsel %vm1264, %v1257, %v1261
    %v1266 = vand.u32 2147483647, %v1211
    %vm1267 = vcmp.eq.f32.partialorder %v1266, 8.507059e+37
    %v1268 = vand.u32 %v1211, 2147483648
    %v1269 = vor.u32 1.1754944e-38, %v1268
    %v1270 = vsel %vm1267, %v1269, %v1265
    %v1271 = vmul.f32 %v1192, %v1270
    %v1272 = vrcp.pop %v1214
    %v1273 = vmul.f32 %v1214, %v1272
    %v1274 = vsub.f32 1.0, %v1273
    %v1275 = vmul.f32 %v1272, %v1274
    %v1276 = vadd.f32 %v1272, %v1275
    %vm1277 = vweird.f32 %v1214
    %vm1278 = vweird.f32 %v1272
    %vm1279 = vmor %vm1277, %vm1278
    %v1280 = vsel %vm1279, %v1272, %v1276
    %v1281 = vand.u32 2147483647, %v1214
    %vm1282 = vcmp.eq.f32.partialorder %v1281, 8.507059e+37
    %v1283 = vand.u32 %v1214, 2147483648
    %v1284 = vor.u32 1.1754944e-38, %v1283
    %v1285 = vsel %vm1282, %v1284, %v1280
    %v1286 = vmul.f32 %v1194, %v1285
    %v1287 = vrcp.pop %v1217
    %v1288 = vmul.f32 %v1217, %v1287
    %v1289 = vsub.f32 1.0, %v1288
    %v1290 = vmul.f32 %v1287, %v1289
    %v1291 = vadd.f32 %v1287, %v1290
    %vm1292 = vweird.f32 %v1217
    %vm1293 = vweird.f32 %v1287
    %vm1294 = vmor %vm1292, %vm1293
    %v1295 = vsel %vm1294, %v1287, %v1291
    %v1296 = vand.u32 2147483647, %v1217
    %vm1297 = vcmp.eq.f32.partialorder %v1296, 8.507059e+37
    %v1298 = vand.u32 %v1217, 2147483648
    %v1299 = vor.u32 1.1754944e-38, %v1298
    %v1300 = vsel %vm1297, %v1299, %v1295
    %v1301 = vmul.f32 %v1196, %v1300
    %v1302 = vrcp.pop %v1220
    %v1303 = vmul.f32 %v1220, %v1302
    %v1304 = vsub.f32 1.0, %v1303
    %v1305 = vmul.f32 %v1302, %v1304
    %v1306 = vadd.f32 %v1302, %v1305
    %vm1307 = vweird.f32 %v1220
    %vm1308 = vweird.f32 %v1302
    %vm1309 = vmor %vm1307, %vm1308
    %v1310 = vsel %vm1309, %v1302, %v1306
    %v1311 = vand.u32 2147483647, %v1220
    %vm1312 = vcmp.eq.f32.partialorder %v1311, 8.507059e+37
    %v1313 = vand.u32 %v1220, 2147483648
    %v1314 = vor.u32 1.1754944e-38, %v1313
    %v1315 = vsel %vm1312, %v1314, %v1310
    %v1316 = vmul.f32 %v1198, %v1315
    %v1317 = vrcp.pop %v1223
    %v1318 = vmul.f32 %v1223, %v1317
    %v1319 = vsub.f32 1.0, %v1318
    %v1320 = vmul.f32 %v1317, %v1319
    %v1321 = vadd.f32 %v1317, %v1320
    %vm1322 = vweird.f32 %v1223
    %vm1323 = vweird.f32 %v1317
    %vm1324 = vmor %vm1322, %vm1323
    %v1325 = vsel %vm1324, %v1317, %v1321
    %v1326 = vand.u32 2147483647, %v1223
    %vm1327 = vcmp.eq.f32.partialorder %v1326, 8.507059e+37
    %v1328 = vand.u32 %v1223, 2147483648
    %v1329 = vor.u32 1.1754944e-38, %v1328
    %v1330 = vsel %vm1327, %v1329, %v1325
    %v1331 = vmul.f32 %v1200, %v1330
    %v1332 = vrcp.pop %v1226
    %v1333 = vmul.f32 %v1226, %v1332
    %v1334 = vsub.f32 1.0, %v1333
    %v1335 = vmul.f32 %v1332, %v1334
    %v1336 = vadd.f32 %v1332, %v1335
    %vm1337 = vweird.f32 %v1226
    %vm1338 = vweird.f32 %v1332
    %vm1339 = vmor %vm1337, %vm1338
    %v1340 = vsel %vm1339, %v1332, %v1336
    %v1341 = vand.u32 2147483647, %v1226
    %vm1342 = vcmp.eq.f32.partialorder %v1341, 8.507059e+37
    %v1343 = vand.u32 %v1226, 2147483648
    %v1344 = vor.u32 1.1754944e-38, %v1343
    %v1345 = vsel %vm1342, %v1344, %v1340
    %v1346 = vmul.f32 %v1202, %v1345
    %1347 = vst [vmem:[#allocation1] ss:$4 sm:$0xff] %v234
    %v1348 = vld.sshfl [vmem:[#allocation1] sm:$0xff pattern:$0x73625140]
    %1349 = vrot.lane.b32.xlu0 %v1348, 56
    %v1350 = vpop.permute.xlu0 %1349
    %v1352 = vsel %vm668, %v1241, 0
    %v1354 = vsel %vm672, %v1350, 0
    %1356 = vmatpush.msra.mxu0 0.0
    %1357 = vmatpush.msra.mxu0 0.0
    %1358 = vmatpush.msra.mxu0 0.0
    %1359 = vmatpush.msra.mxu0 0.0
    %1360 = vmatpush.msra.mxu0 0.0
    %1361 = vmatpush.msra.mxu0 0.0
    %1362 = vmatpush.msra.mxu0 0.0
    %1363 = vmatpush.msra.mxu0 0.0
    %1364 = vmatpush.msra.mxu0 0.0
    %1365 = vmatpush.msra.mxu0 0.0
    %1366 = vmatpush.msra.mxu0 0.0
    %1367 = vmatpush.msra.mxu0 0.0
    %1368 = vmatpush.msra.mxu0 0.0
    %1369 = vmatpush.msra.mxu0 0.0
    %1370 = vmatpush.msra.mxu0 0.0
    %1371 = vmatpush.msra.mxu0 %v1354
    %1372 = vmatmul.f32.gmra.mxu0 %v1352
    %v1373 = vpop.f32.mrf.mxu0
    %v1374 = vadd.f32 0.0, %v1373
    %1375 = vdwg.mxu0
    %1376 = vst [vmem:[#allocation1] ss:$4 sm:$0xff] %v240
    %v1377 = vld.sshfl [vmem:[#allocation1] sm:$0xff pattern:$0x73625140]
    %1378 = vrot.lane.b32.xlu0 %v1377, 56
    %v1379 = vpop.permute.xlu0 %1378
    %v1381 = vsel %vm668, %v1256, 0
    %v1383 = vsel %vm672, %v1379, 0
    %1385 = vmatpush.msra.mxu0 0.0
    %1386 = vmatpush.msra.mxu0 0.0
    %1387 = vmatpush.msra.mxu0 0.0
    %1388 = vmatpush.msra.mxu0 0.0
    %1389 = vmatpush.msra.mxu0 0.0
    %1390 = vmatpush.msra.mxu0 0.0
    %1391 = vmatpush.msra.mxu0 0.0
    %1392 = vmatpush.msra.mxu0 0.0
    %1393 = vmatpush.msra.mxu0 0.0
    %1394 = vmatpush.msra.mxu0 0.0
    %1395 = vmatpush.msra.mxu0 0.0
    %1396 = vmatpush.msra.mxu0 0.0
    %1397 = vmatpush.msra.mxu0 0.0
    %1398 = vmatpush.msra.mxu0 0.0
    %1399 = vmatpush.msra.mxu0 0.0
    %1400 = vmatpush.msra.mxu0 %v1383
    %1401 = vmatmul.f32.gmra.mxu0 %v1381
    %v1402 = vpop.f32.mrf.mxu0
    %v1403 = vadd.f32 0.0, %v1402
    %1404 = vdwg.mxu0
    %1405 = vst [vmem:[#allocation1] ss:$4 sm:$0xff] %v241
    %v1406 = vld.sshfl [vmem:[#allocation1] sm:$0xff pattern:$0x73625140]
    %1407 = vrot.lane.b32.xlu0 %v1406, 56
    %v1408 = vpop.permute.xlu0 %1407
    %v1410 = vsel %vm668, %v1271, 0
    %v1412 = vsel %vm672, %v1408, 0
    %1414 = vmatpush.msra.mxu0 0.0
    %1415 = vmatpush.msra.mxu0 0.0
    %1416 = vmatpush.msra.mxu0 0.0
    %1417 = vmatpush.msra.mxu0 0.0
    %1418 = vmatpush.msra.mxu0 0.0
    %1419 = vmatpush.msra.mxu0 0.0
    %1420 = vmatpush.msra.mxu0 0.0
    %1421 = vmatpush.msra.mxu0 0.0
    %1422 = vmatpush.msra.mxu0 0.0
    %1423 = vmatpush.msra.mxu0 0.0
    %1424 = vmatpush.msra.mxu0 0.0
    %1425 = vmatpush.msra.mxu0 0.0
    %1426 = vmatpush.msra.mxu0 0.0
    %1427 = vmatpush.msra.mxu0 0.0
    %1428 = vmatpush.msra.mxu0 0.0
    %1429 = vmatpush.msra.mxu0 %v1412
    %1430 = vmatmul.f32.gmra.mxu0 %v1410
    %v1431 = vpop.f32.mrf.mxu0
    %v1432 = vadd.f32 0.0, %v1431
    %1433 = vdwg.mxu0
    %1434 = vst [vmem:[#allocation1] ss:$4 sm:$0xff] %v242
    %v1435 = vld.sshfl [vmem:[#allocation1] sm:$0xff pattern:$0x73625140]
    %1436 = vrot.lane.b32.xlu0 %v1435, 56
    %v1437 = vpop.permute.xlu0 %1436
    %v1439 = vsel %vm668, %v1286, 0
    %v1441 = vsel %vm672, %v1437, 0
    %1443 = vmatpush.msra.mxu0 0.0
    %1444 = vmatpush.msra.mxu0 0.0
    %1445 = vmatpush.msra.mxu0 0.0
    %1446 = vmatpush.msra.mxu0 0.0
    %1447 = vmatpush.msra.mxu0 0.0
    %1448 = vmatpush.msra.mxu0 0.0
    %1449 = vmatpush.msra.mxu0 0.0
    %1450 = vmatpush.msra.mxu0 0.0
    %1451 = vmatpush.msra.mxu0 0.0
    %1452 = vmatpush.msra.mxu0 0.0
    %1453 = vmatpush.msra.mxu0 0.0
    %1454 = vmatpush.msra.mxu0 0.0
    %1455 = vmatpush.msra.mxu0 0.0
    %1456 = vmatpush.msra.mxu0 0.0
    %1457 = vmatpush.msra.mxu0 0.0
    %1458 = vmatpush.msra.mxu0 %v1441
    %1459 = vmatmul.f32.gmra.mxu0 %v1439
    %v1460 = vpop.f32.mrf.mxu0
    %v1461 = vadd.f32 0.0, %v1460
    %1462 = vdwg.mxu0
    %1463 = vst [vmem:[#allocation1] ss:$4 sm:$0xff] %v236
    %v1464 = vld.sshfl [vmem:[#allocation1] sm:$0xff pattern:$0x73625140]
    %1465 = vrot.lane.b32.xlu0 %v1464, 56
    %v1466 = vpop.permute.xlu0 %1465
    %v1468 = vsel %vm668, %v1301, 0
    %v1470 = vsel %vm672, %v1466, 0
    %1472 = vmatpush.msra.mxu0 0.0
    %1473 = vmatpush.msra.mxu0 0.0
    %1474 = vmatpush.msra.mxu0 0.0
    %1475 = vmatpush.msra.mxu0 0.0
    %1476 = vmatpush.msra.mxu0 0.0
    %1477 = vmatpush.msra.mxu0 0.0
    %1478 = vmatpush.msra.mxu0 0.0
    %1479 = vmatpush.msra.mxu0 0.0
    %1480 = vmatpush.msra.mxu0 0.0
    %1481 = vmatpush.msra.mxu0 0.0
    %1482 = vmatpush.msra.mxu0 0.0
    %1483 = vmatpush.msra.mxu0 0.0
    %1484 = vmatpush.msra.mxu0 0.0
    %1485 = vmatpush.msra.mxu0 0.0
    %1486 = vmatpush.msra.mxu0 0.0
    %1487 = vmatpush.msra.mxu0 %v1470
    %1488 = vmatmul.f32.gmra.mxu0 %v1468
    %v1489 = vpop.f32.mrf.mxu0
    %v1490 = vadd.f32 0.0, %v1489
    %1491 = vdwg.mxu0
    %1492 = vst [vmem:[#allocation1] ss:$4 sm:$0xff] %v243
    %v1493 = vld.sshfl [vmem:[#allocation1] sm:$0xff pattern:$0x73625140]
    %1494 = vrot.lane.b32.xlu0 %v1493, 56
    %v1495 = vpop.permute.xlu0 %1494
    %v1497 = vsel %vm668, %v1316, 0
    %v1499 = vsel %vm672, %v1495, 0
    %1501 = vmatpush.msra.mxu0 0.0
    %1502 = vmatpush.msra.mxu0 0.0
    %1503 = vmatpush.msra.mxu0 0.0
    %1504 = vmatpush.msra.mxu0 0.0
    %1505 = vmatpush.msra.mxu0 0.0
    %1506 = vmatpush.msra.mxu0 0.0
    %1507 = vmatpush.msra.mxu0 0.0
    %1508 = vmatpush.msra.mxu0 0.0
    %1509 = vmatpush.msra.mxu0 0.0
    %1510 = vmatpush.msra.mxu0 0.0
    %1511 = vmatpush.msra.mxu0 0.0
    %1512 = vmatpush.msra.mxu0 0.0
    %1513 = vmatpush.msra.mxu0 0.0
    %1514 = vmatpush.msra.mxu0 0.0
    %1515 = vmatpush.msra.mxu0 0.0
    %1516 = vmatpush.msra.mxu0 %v1499
    %1517 = vmatmul.f32.gmra.mxu0 %v1497
    %v1518 = vpop.f32.mrf.mxu0
    %v1519 = vadd.f32 0.0, %v1518
    %1520 = vdwg.mxu0
    %1521 = vst [vmem:[#allocation1] ss:$4 sm:$0xff] %v244
    %v1522 = vld.sshfl [vmem:[#allocation1] sm:$0xff pattern:$0x73625140]
    %1523 = vrot.lane.b32.xlu0 %v1522, 56
    %v1524 = vpop.permute.xlu0 %1523
    %v1526 = vsel %vm668, %v1331, 0
    %v1528 = vsel %vm672, %v1524, 0
    %1530 = vmatpush.msra.mxu0 0.0
    %1531 = vmatpush.msra.mxu0 0.0
    %1532 = vmatpush.msra.mxu0 0.0
    %1533 = vmatpush.msra.mxu0 0.0
    %1534 = vmatpush.msra.mxu0 0.0
    %1535 = vmatpush.msra.mxu0 0.0
    %1536 = vmatpush.msra.mxu0 0.0
    %1537 = vmatpush.msra.mxu0 0.0
    %1538 = vmatpush.msra.mxu0 0.0
    %1539 = vmatpush.msra.mxu0 0.0
    %1540 = vmatpush.msra.mxu0 0.0
    %1541 = vmatpush.msra.mxu0 0.0
    %1542 = vmatpush.msra.mxu0 0.0
    %1543 = vmatpush.msra.mxu0 0.0
    %1544 = vmatpush.msra.mxu0 0.0
    %1545 = vmatpush.msra.mxu0 %v1528
    %1546 = vmatmul.f32.gmra.mxu0 %v1526
    %v1547 = vpop.f32.mrf.mxu0
    %v1548 = vadd.f32 0.0, %v1547
    %1549 = vdwg.mxu0
    %1550 = vst [vmem:[#allocation1] ss:$4 sm:$0xff] %v245
    %v1551 = vld.sshfl [vmem:[#allocation1] sm:$0xff pattern:$0x73625140]
    %1552 = vrot.lane.b32.xlu0 %v1551, 56
    %v1553 = vpop.permute.xlu0 %1552
    %v1555 = vsel %vm668, %v1346, 0
    %v1557 = vsel %vm672, %v1553, 0
    %1559 = vmatpush.msra.mxu0 0.0
    %1560 = vmatpush.msra.mxu0 0.0
    %1561 = vmatpush.msra.mxu0 0.0
    %1562 = vmatpush.msra.mxu0 0.0
    %1563 = vmatpush.msra.mxu0 0.0
    %1564 = vmatpush.msra.mxu0 0.0
    %1565 = vmatpush.msra.mxu0 0.0
    %1566 = vmatpush.msra.mxu0 0.0
    %1567 = vmatpush.msra.mxu0 0.0
    %1568 = vmatpush.msra.mxu0 0.0
    %1569 = vmatpush.msra.mxu0 0.0
    %1570 = vmatpush.msra.mxu0 0.0
    %1571 = vmatpush.msra.mxu0 0.0
    %1572 = vmatpush.msra.mxu0 0.0
    %1573 = vmatpush.msra.mxu0 0.0
    %1574 = vmatpush.msra.mxu0 %v1557
    %1575 = vmatmul.f32.gmra.mxu0 %v1555
    %v1576 = vpop.f32.mrf.mxu0
    %v1577 = vadd.f32 0.0, %v1576
    %1578 = vdwg.mxu0
    %v1579 = vld [vmem:[%s6 + $0x8] sm:$0xff]
    %1588 = vst [vmem:[#allocation1] ss:$4 sm:$0xff] %v1374
    %s1589 = scalar_lea.vmem [#allocation1], 1
    %1590 = vst [vmem:[%s1589] ss:$4 sm:$0xff] %v1403
    %s1591 = scalar_lea.vmem [#allocation1], 2
    %1592 = vst [vmem:[%s1591] ss:$4 sm:$0xff] %v1432
    %s1593 = scalar_lea.vmem [#allocation1], 3
    %1594 = vst [vmem:[%s1593] ss:$4 sm:$0xff] %v1461
    %s1595 = scalar_lea.vmem [#allocation1], 32
    %1596 = vst [vmem:[%s1595] ss:$4 sm:$0xff] %v1490
    %s1597 = scalar_lea.vmem [#allocation1], 33
    %1598 = vst [vmem:[%s1597] ss:$4 sm:$0xff] %v1519
    %s1599 = scalar_lea.vmem [#allocation1], 34
    %1600 = vst [vmem:[%s1599] ss:$4 sm:$0xff] %v1548
    %s1601 = scalar_lea.vmem [#allocation1], 35
    %1602 = vst [vmem:[%s1601] ss:$4 sm:$0xff] %v1577
    %v1603 = vld.sshfl [vmem:[#allocation1] sm:$0xff pattern:$0x73625140]
    %v1604 = vld.sshfl [vmem:[#allocation1 + $0x20] sm:$0xff pattern:$0x73625140]
    %v1605 = vsel %vm250, %v1603, 0
    %v1607 = vsel %vm250, %v1604, 0
    %1609 = vmatpush.msra.mxu0 0.0
    %1610 = vmatpush.msra.mxu0 0.0
    %1611 = vmatpush.msra.mxu0 0.0
    %1612 = vmatpush.msra.mxu0 0.0
    %1613 = vmatpush.msra.mxu0 0.0
    %1614 = vmatpush.msra.mxu0 0.0
    %1615 = vmatpush.msra.mxu0 0.0
    %1616 = vmatpush.msra.mxu0 0.0
    %1617 = vmatpush.msra.mxu0 0.0
    %1618 = vmatpush.msra.mxu0 0.0
    %1619 = vmatpush.msra.mxu0 0.0
    %1620 = vmatpush.msra.mxu0 0.0
    %1621 = vmatpush.msra.mxu0 0.0
    %1622 = vmatpush.msra.mxu0 0.0
    %1623 = vmatpush.msra.mxu0 0.0
    %1624 = vmatpush.msra.mxu0 %v1579
    %1625 = vmatmul.f32.gmra.mxu0 %v1605
    %v1626 = vpop.f32.mrf.mxu0
    %v1627 = vadd.f32 0.0, %v1626
    %1628 = vmatmul.f32.gmra.mxu0 %v1607
    %v1629 = vpop.f32.mrf.mxu0
    %v1630 = vadd.f32 0.0, %v1629
    %1631 = vdwg.mxu0
    %1640 = vst [vmem:[#allocation1] ss:$4 sm:$0xff] %v693
    %s1641 = scalar_lea.vmem [#allocation1], 1
    %1642 = vst [vmem:[%s1641] ss:$4 sm:$0xff] %v722
    %s1643 = scalar_lea.vmem [#allocation1], 2
    %1644 = vst [vmem:[%s1643] ss:$4 sm:$0xff] %v751
    %s1645 = scalar_lea.vmem [#allocation1], 3
    %1646 = vst [vmem:[%s1645] ss:$4 sm:$0xff] %v780
    %s1647 = scalar_lea.vmem [#allocation1], 32
    %1648 = vst [vmem:[%s1647] ss:$4 sm:$0xff] %v809
    %s1649 = scalar_lea.vmem [#allocation1], 33
    %1650 = vst [vmem:[%s1649] ss:$4 sm:$0xff] %v838
    %s1651 = scalar_lea.vmem [#allocation1], 34
    %1652 = vst [vmem:[%s1651] ss:$4 sm:$0xff] %v867
    %s1653 = scalar_lea.vmem [#allocation1], 35
    %1654 = vst [vmem:[%s1653] ss:$4 sm:$0xff] %v896
    %v1655 = vld.sshfl [vmem:[#allocation1] sm:$0xff pattern:$0x73625140]
    %v1656 = vld.sshfl [vmem:[#allocation1 + $0x20] sm:$0xff pattern:$0x73625140]
    %v1657 = vsel %vm250, %v1655, 0
    %v1659 = vsel %vm250, %v1656, 0
    %1661 = vmatpush.msra.mxu0 0.0
    %1662 = vmatpush.msra.mxu0 0.0
    %1663 = vmatpush.msra.mxu0 0.0
    %1664 = vmatpush.msra.mxu0 0.0
    %1665 = vmatpush.msra.mxu0 0.0
    %1666 = vmatpush.msra.mxu0 0.0
    %1667 = vmatpush.msra.mxu0 0.0
    %1668 = vmatpush.msra.mxu0 0.0
    %1669 = vmatpush.msra.mxu0 0.0
    %1670 = vmatpush.msra.mxu0 0.0
    %1671 = vmatpush.msra.mxu0 0.0
    %1672 = vmatpush.msra.mxu0 0.0
    %1673 = vmatpush.msra.mxu0 0.0
    %1674 = vmatpush.msra.mxu0 0.0
    %1675 = vmatpush.msra.mxu0 0.0
    %1676 = vmatpush.msra.mxu0 %v898
    %1677 = vmatmul.f32.gmra.mxu0 %v1657
    %v1678 = vpop.f32.mrf.mxu0
    %v1679 = vadd.f32 %v1627, %v1678
    %1680 = vmatmul.f32.gmra.mxu0 %v1659
    %v1681 = vpop.f32.mrf.mxu0
    %v1682 = vadd.f32 %v1630, %v1681
    %1683 = vdwg.mxu0
    %1684 = vst [vmem:[#allocation1] ss:$4 sm:$0xff] %v234
    %v1685 = vld.sshfl [vmem:[#allocation1] sm:$0xff pattern:$0x73625140]
    %1686 = vrot.lane.b32.xlu0 %v1685, 112
    %v1687 = vpop.permute.xlu0 %1686
    %1688 = vst [vmem:[#allocation1] ss:$4 sm:$0xff] %v234
    %v1689 = vld.sshfl [vmem:[#allocation1] sm:$0xff pattern:$0x73625140]
    %1690 = vrot.lane.b32.xlu0 %v1689, 80
    %v1691 = vpop.permute.xlu0 %1690
    %v1692 = vsel %vm250, %v1687, 0
    %v1694 = vsel %vm250, %v1691, 0
    %1696 = vmatpush.xpose.msra.mxu0 0.0
    %1697 = vmatpush.xpose.msra.mxu0 0.0
    %1698 = vmatpush.xpose.msra.mxu0 0.0
    %1699 = vmatpush.xpose.msra.mxu0 0.0
    %1700 = vmatpush.xpose.msra.mxu0 0.0
    %1701 = vmatpush.xpose.msra.mxu0 0.0
    %1702 = vmatpush.xpose.msra.mxu0 0.0
    %1703 = vmatpush.xpose.msra.mxu0 0.0
    %1704 = vmatpush.xpose.msra.mxu0 0.0
    %1705 = vmatpush.xpose.msra.mxu0 0.0
    %1706 = vmatpush.xpose.msra.mxu0 0.0
    %1707 = vmatpush.xpose.msra.mxu0 0.0
    %1708 = vmatpush.xpose.msra.mxu0 0.0
    %1709 = vmatpush.xpose.msra.mxu0 0.0
    %1710 = vmatpush.xpose.msra.mxu0 0.0
    %1711 = vmatpush.xpose.msra.mxu0 %v1694
    %1712 = vmatmul.f32.gmra.mxu0 %v1692
    %v1713 = vpop.f32.mrf.mxu0
    %v1714 = vadd.f32 0.0, %v1713
    %1715 = vdwg.mxu0
    %1716 = vst [vmem:[#allocation1] ss:$4 sm:$0xff] %v240
    %v1717 = vld.sshfl [vmem:[#allocation1] sm:$0xff pattern:$0x73625140]
    %1718 = vrot.lane.b32.xlu0 %v1717, 112
    %v1719 = vpop.permute.xlu0 %1718
    %1720 = vst [vmem:[#allocation1] ss:$4 sm:$0xff] %v240
    %v1721 = vld.sshfl [vmem:[#allocation1] sm:$0xff pattern:$0x73625140]
    %1722 = vrot.lane.b32.xlu0 %v1721, 80
    %v1723 = vpop.permute.xlu0 %1722
    %v1724 = vsel %vm250, %v1719, 0
    %v1726 = vsel %vm250, %v1723, 0
    %1728 = vmatpush.xpose.msra.mxu0 0.0
    %1729 = vmatpush.xpose.msra.mxu0 0.0
    %1730 = vmatpush.xpose.msra.mxu0 0.0
    %1731 = vmatpush.xpose.msra.mxu0 0.0
    %1732 = vmatpush.xpose.msra.mxu0 0.0
    %1733 = vmatpush.xpose.msra.mxu0 0.0
    %1734 = vmatpush.xpose.msra.mxu0 0.0
    %1735 = vmatpush.xpose.msra.mxu0 0.0
    %1736 = vmatpush.xpose.msra.mxu0 0.0
    %1737 = vmatpush.xpose.msra.mxu0 0.0
    %1738 = vmatpush.xpose.msra.mxu0 0.0
    %1739 = vmatpush.xpose.msra.mxu0 0.0
    %1740 = vmatpush.xpose.msra.mxu0 0.0
    %1741 = vmatpush.xpose.msra.mxu0 0.0
    %1742 = vmatpush.xpose.msra.mxu0 0.0
    %1743 = vmatpush.xpose.msra.mxu0 %v1726
    %1744 = vmatmul.f32.gmra.mxu0 %v1724
    %v1745 = vpop.f32.mrf.mxu0
    %v1746 = vadd.f32 0.0, %v1745
    %1747 = vdwg.mxu0
    %1748 = vst [vmem:[#allocation1] ss:$4 sm:$0xff] %v241
    %v1749 = vld.sshfl [vmem:[#allocation1] sm:$0xff pattern:$0x73625140]
    %1750 = vrot.lane.b32.xlu0 %v1749, 112
    %v1751 = vpop.permute.xlu0 %1750
    %1752 = vst [vmem:[#allocation1] ss:$4 sm:$0xff] %v241
    %v1753 = vld.sshfl [vmem:[#allocation1] sm:$0xff pattern:$0x73625140]
    %1754 = vrot.lane.b32.xlu0 %v1753, 80
    %v1755 = vpop.permute.xlu0 %1754
    %v1756 = vsel %vm250, %v1751, 0
    %v1758 = vsel %vm250, %v1755, 0
    %1760 = vmatpush.xpose.msra.mxu0 0.0
    %1761 = vmatpush.xpose.msra.mxu0 0.0
    %1762 = vmatpush.xpose.msra.mxu0 0.0
    %1763 = vmatpush.xpose.msra.mxu0 0.0
    %1764 = vmatpush.xpose.msra.mxu0 0.0
    %1765 = vmatpush.xpose.msra.mxu0 0.0
    %1766 = vmatpush.xpose.msra.mxu0 0.0
    %1767 = vmatpush.xpose.msra.mxu0 0.0
    %1768 = vmatpush.xpose.msra.mxu0 0.0
    %1769 = vmatpush.xpose.msra.mxu0 0.0
    %1770 = vmatpush.xpose.msra.mxu0 0.0
    %1771 = vmatpush.xpose.msra.mxu0 0.0
    %1772 = vmatpush.xpose.msra.mxu0 0.0
    %1773 = vmatpush.xpose.msra.mxu0 0.0
    %1774 = vmatpush.xpose.msra.mxu0 0.0
    %1775 = vmatpush.xpose.msra.mxu0 %v1758
    %1776 = vmatmul.f32.gmra.mxu0 %v1756
    %v1777 = vpop.f32.mrf.mxu0
    %v1778 = vadd.f32 0.0, %v1777
    %1779 = vdwg.mxu0
    %1780 = vst [vmem:[#allocation1] ss:$4 sm:$0xff] %v242
    %v1781 = vld.sshfl [vmem:[#allocation1] sm:$0xff pattern:$0x73625140]
    %1782 = vrot.lane.b32.xlu0 %v1781, 112
    %v1783 = vpop.permute.xlu0 %1782
    %1784 = vst [vmem:[#allocation1] ss:$4 sm:$0xff] %v242
    %v1785 = vld.sshfl [vmem:[#allocation1] sm:$0xff pattern:$0x73625140]
    %1786 = vrot.lane.b32.xlu0 %v1785, 80
    %v1787 = vpop.permute.xlu0 %1786
    %v1788 = vsel %vm250, %v1783, 0
    %v1790 = vsel %vm250, %v1787, 0
    %1792 = vmatpush.xpose.msra.mxu0 0.0
    %1793 = vmatpush.xpose.msra.mxu0 0.0
    %1794 = vmatpush.xpose.msra.mxu0 0.0
    %1795 = vmatpush.xpose.msra.mxu0 0.0
    %1796 = vmatpush.xpose.msra.mxu0 0.0
    %1797 = vmatpush.xpose.msra.mxu0 0.0
    %1798 = vmatpush.xpose.msra.mxu0 0.0
    %1799 = vmatpush.xpose.msra.mxu0 0.0
    %1800 = vmatpush.xpose.msra.mxu0 0.0
    %1801 = vmatpush.xpose.msra.mxu0 0.0
    %1802 = vmatpush.xpose.msra.mxu0 0.0
    %1803 = vmatpush.xpose.msra.mxu0 0.0
    %1804 = vmatpush.xpose.msra.mxu0 0.0
    %1805 = vmatpush.xpose.msra.mxu0 0.0
    %1806 = vmatpush.xpose.msra.mxu0 0.0
    %1807 = vmatpush.xpose.msra.mxu0 %v1790
    %1808 = vmatmul.f32.gmra.mxu0 %v1788
    %v1809 = vpop.f32.mrf.mxu0
    %v1810 = vadd.f32 0.0, %v1809
    %1811 = vdwg.mxu0
    %1812 = vst [vmem:[#allocation1] ss:$4 sm:$0xff] %v236
    %v1813 = vld.sshfl [vmem:[#allocation1] sm:$0xff pattern:$0x73625140]
    %1814 = vrot.lane.b32.xlu0 %v1813, 112
    %v1815 = vpop.permute.xlu0 %1814
    %1816 = vst [vmem:[#allocation1] ss:$4 sm:$0xff] %v236
    %v1817 = vld.sshfl [vmem:[#allocation1] sm:$0xff pattern:$0x73625140]
    %1818 = vrot.lane.b32.xlu0 %v1817, 80
    %v1819 = vpop.permute.xlu0 %1818
    %v1820 = vsel %vm250, %v1815, 0
    %v1822 = vsel %vm250, %v1819, 0
    %1824 = vmatpush.xpose.msra.mxu0 0.0
    %1825 = vmatpush.xpose.msra.mxu0 0.0
    %1826 = vmatpush.xpose.msra.mxu0 0.0
    %1827 = vmatpush.xpose.msra.mxu0 0.0
    %1828 = vmatpush.xpose.msra.mxu0 0.0
    %1829 = vmatpush.xpose.msra.mxu0 0.0
    %1830 = vmatpush.xpose.msra.mxu0 0.0
    %1831 = vmatpush.xpose.msra.mxu0 0.0
    %1832 = vmatpush.xpose.msra.mxu0 0.0
    %1833 = vmatpush.xpose.msra.mxu0 0.0
    %1834 = vmatpush.xpose.msra.mxu0 0.0
    %1835 = vmatpush.xpose.msra.mxu0 0.0
    %1836 = vmatpush.xpose.msra.mxu0 0.0
    %1837 = vmatpush.xpose.msra.mxu0 0.0
    %1838 = vmatpush.xpose.msra.mxu0 0.0
    %1839 = vmatpush.xpose.msra.mxu0 %v1822
    %1840 = vmatmul.f32.gmra.mxu0 %v1820
    %v1841 = vpop.f32.mrf.mxu0
    %v1842 = vadd.f32 0.0, %v1841
    %1843 = vdwg.mxu0
    %1844 = vst [vmem:[#allocation1] ss:$4 sm:$0xff] %v243
    %v1845 = vld.sshfl [vmem:[#allocation1] sm:$0xff pattern:$0x73625140]
    %1846 = vrot.lane.b32.xlu0 %v1845, 112
    %v1847 = vpop.permute.xlu0 %1846
    %1848 = vst [vmem:[#allocation1] ss:$4 sm:$0xff] %v243
    %v1849 = vld.sshfl [vmem:[#allocation1] sm:$0xff pattern:$0x73625140]
    %1850 = vrot.lane.b32.xlu0 %v1849, 80
    %v1851 = vpop.permute.xlu0 %1850
    %v1852 = vsel %vm250, %v1847, 0
    %v1854 = vsel %vm250, %v1851, 0
    %1856 = vmatpush.xpose.msra.mxu0 0.0
    %1857 = vmatpush.xpose.msra.mxu0 0.0
    %1858 = vmatpush.xpose.msra.mxu0 0.0
    %1859 = vmatpush.xpose.msra.mxu0 0.0
    %1860 = vmatpush.xpose.msra.mxu0 0.0
    %1861 = vmatpush.xpose.msra.mxu0 0.0
    %1862 = vmatpush.xpose.msra.mxu0 0.0
    %1863 = vmatpush.xpose.msra.mxu0 0.0
    %1864 = vmatpush.xpose.msra.mxu0 0.0
    %1865 = vmatpush.xpose.msra.mxu0 0.0
    %1866 = vmatpush.xpose.msra.mxu0 0.0
    %1867 = vmatpush.xpose.msra.mxu0 0.0
    %1868 = vmatpush.xpose.msra.mxu0 0.0
    %1869 = vmatpush.xpose.msra.mxu0 0.0
    %1870 = vmatpush.xpose.msra.mxu0 0.0
    %1871 = vmatpush.xpose.msra.mxu0 %v1854
    %1872 = vmatmul.f32.gmra.mxu0 %v1852
    %v1873 = vpop.f32.mrf.mxu0
    %v1874 = vadd.f32 0.0, %v1873
    %1875 = vdwg.mxu0
    %1876 = vst [vmem:[#allocation1] ss:$4 sm:$0xff] %v244
    %v1877 = vld.sshfl [vmem:[#allocation1] sm:$0xff pattern:$0x73625140]
    %1878 = vrot.lane.b32.xlu0 %v1877, 112
    %v1879 = vpop.permute.xlu0 %1878
    %1880 = vst [vmem:[#allocation1] ss:$4 sm:$0xff] %v244
    %v1881 = vld.sshfl [vmem:[#allocation1] sm:$0xff pattern:$0x73625140]
    %1882 = vrot.lane.b32.xlu0 %v1881, 80
    %v1883 = vpop.permute.xlu0 %1882
    %v1884 = vsel %vm250, %v1879, 0
    %v1886 = vsel %vm250, %v1883, 0
    %1888 = vmatpush.xpose.msra.mxu0 0.0
    %1889 = vmatpush.xpose.msra.mxu0 0.0
    %1890 = vmatpush.xpose.msra.mxu0 0.0
    %1891 = vmatpush.xpose.msra.mxu0 0.0
    %1892 = vmatpush.xpose.msra.mxu0 0.0
    %1893 = vmatpush.xpose.msra.mxu0 0.0
    %1894 = vmatpush.xpose.msra.mxu0 0.0
    %1895 = vmatpush.xpose.msra.mxu0 0.0
    %1896 = vmatpush.xpose.msra.mxu0 0.0
    %1897 = vmatpush.xpose.msra.mxu0 0.0
    %1898 = vmatpush.xpose.msra.mxu0 0.0
    %1899 = vmatpush.xpose.msra.mxu0 0.0
    %1900 = vmatpush.xpose.msra.mxu0 0.0
    %1901 = vmatpush.xpose.msra.mxu0 0.0
    %1902 = vmatpush.xpose.msra.mxu0 0.0
    %1903 = vmatpush.xpose.msra.mxu0 %v1886
    %1904 = vmatmul.f32.gmra.mxu0 %v1884
    %v1905 = vpop.f32.mrf.mxu0
    %v1906 = vadd.f32 0.0, %v1905
    %1907 = vdwg.mxu0
    %1908 = vst [vmem:[#allocation1] ss:$4 sm:$0xff] %v245
    %v1909 = vld.sshfl [vmem:[#allocation1] sm:$0xff pattern:$0x73625140]
    %1910 = vrot.lane.b32.xlu0 %v1909, 112
    %v1911 = vpop.permute.xlu0 %1910
    %1912 = vst [vmem:[#allocation1] ss:$4 sm:$0xff] %v245
    %v1913 = vld.sshfl [vmem:[#allocation1] sm:$0xff pattern:$0x73625140]
    %1914 = vrot.lane.b32.xlu0 %v1913, 80
    %v1915 = vpop.permute.xlu0 %1914
    %v1916 = vsel %vm250, %v1911, 0
    %v1918 = vsel %vm250, %v1915, 0
    %1920 = vmatpush.xpose.msra.mxu0 0.0
    %1921 = vmatpush.xpose.msra.mxu0 0.0
    %1922 = vmatpush.xpose.msra.mxu0 0.0
    %1923 = vmatpush.xpose.msra.mxu0 0.0
    %1924 = vmatpush.xpose.msra.mxu0 0.0
    %1925 = vmatpush.xpose.msra.mxu0 0.0
    %1926 = vmatpush.xpose.msra.mxu0 0.0
    %1927 = vmatpush.xpose.msra.mxu0 0.0
    %1928 = vmatpush.xpose.msra.mxu0 0.0
    %1929 = vmatpush.xpose.msra.mxu0 0.0
    %1930 = vmatpush.xpose.msra.mxu0 0.0
    %1931 = vmatpush.xpose.msra.mxu0 0.0
    %1932 = vmatpush.xpose.msra.mxu0 0.0
    %1933 = vmatpush.xpose.msra.mxu0 0.0
    %1934 = vmatpush.xpose.msra.mxu0 0.0
    %1935 = vmatpush.xpose.msra.mxu0 %v1918
    %1936 = vmatmul.f32.gmra.mxu0 %v1916
    %v1937 = vpop.f32.mrf.mxu0
    %v1938 = vadd.f32 0.0, %v1937
    %1939 = vdwg.mxu0
    %v1940 = vsel %vm471, %v1714, -inf
    %1941 = vmax.xlane.f32.xlu0 %v1940
    %v1942 = vpop.xlane.xlu0 %1941
    %v1943 = vsel %vm471, %v1746, -inf
    %1944 = vmax.xlane.f32.xlu0 %v1943
    %v1945 = vpop.xlane.xlu0 %1944
    %v1946 = vsel %vm471, %v1778, -inf
    %1947 = vmax.xlane.f32.xlu0 %v1946
    %v1948 = vpop.xlane.xlu0 %1947
    %v1949 = vsel %vm471, %v1810, -inf
    %1950 = vmax.xlane.f32.xlu0 %v1949
    %v1951 = vpop.xlane.xlu0 %1950
    %v1952 = vsel %vm471, %v1842, -inf
    %1953 = vmax.xlane.f32.xlu0 %v1952
    %v1954 = vpop.xlane.xlu0 %1953
    %v1955 = vsel %vm471, %v1874, -inf
    %1956 = vmax.xlane.f32.xlu0 %v1955
    %v1957 = vpop.xlane.xlu0 %1956
    %v1958 = vsel %vm471, %v1906, -inf
    %1959 = vmax.xlane.f32.xlu0 %v1958
    %v1960 = vpop.xlane.xlu0 %1959
    %v1961 = vsel %vm471, %v1938, -inf
    %1962 = vmax.xlane.f32.xlu0 %v1961
    %v1963 = vpop.xlane.xlu0 %1962
    %v1964 = vsub.f32 %v1714, %v1942
    %v1965 = vsub.f32 %v1746, %v1945
    %v1966 = vsub.f32 %v1778, %v1948
    %v1967 = vsub.f32 %v1810, %v1951
    %v1968 = vsub.f32 %v1842, %v1954
    %v1969 = vsub.f32 %v1874, %v1957
    %v1970 = vsub.f32 %v1906, %v1960
    %v1971 = vsub.f32 %v1938, %v1963
    %v1972 = vmul.f32 %v1964, 1.442695
    %v1973 = vpow.pop %v1972
    %v1974 = vmul.f32 %v1965, 1.442695
    %v1975 = vpow.pop %v1974
    %v1976 = vmul.f32 %v1966, 1.442695
    %v1977 = vpow.pop %v1976
    %v1978 = vmul.f32 %v1967, 1.442695
    %v1979 = vpow.pop %v1978
    %v1980 = vmul.f32 %v1968, 1.442695
    %v1981 = vpow.pop %v1980
    %v1982 = vmul.f32 %v1969, 1.442695
    %v1983 = vpow.pop %v1982
    %v1984 = vmul.f32 %v1970, 1.442695
    %v1985 = vpow.pop %v1984
    %v1986 = vmul.f32 %v1971, 1.442695
    %v1987 = vpow.pop %v1986
    %v1988 = vsel %vm471, %v1973, 0.0
    %1989 = vadd.xlane.f32.xlu0 %v1988
    %v1990 = vpop.xlane.xlu0 %1989
    %v1991 = vsel %vm471, %v1975, 0.0
    %1992 = vadd.xlane.f32.xlu0 %v1991
    %v1993 = vpop.xlane.xlu0 %1992
    %v1994 = vsel %vm471, %v1977, 0.0
    %1995 = vadd.xlane.f32.xlu0 %v1994
    %v1996 = vpop.xlane.xlu0 %1995
    %v1997 = vsel %vm471, %v1979, 0.0
    %1998 = vadd.xlane.f32.xlu0 %v1997
    %v1999 = vpop.xlane.xlu0 %1998
    %v2000 = vsel %vm471, %v1981, 0.0
    %2001 = vadd.xlane.f32.xlu0 %v2000
    %v2002 = vpop.xlane.xlu0 %2001
    %v2003 = vsel %vm471, %v1983, 0.0
    %2004 = vadd.xlane.f32.xlu0 %v2003
    %v2005 = vpop.xlane.xlu0 %2004
    %v2006 = vsel %vm471, %v1985, 0.0
    %2007 = vadd.xlane.f32.xlu0 %v2006
    %v2008 = vpop.xlane.xlu0 %2007
    %v2009 = vsel %vm471, %v1987, 0.0
    %2010 = vadd.xlane.f32.xlu0 %v2009
    %v2011 = vpop.xlane.xlu0 %2010
    %v2012 = vrcp.pop %v1990
    %v2013 = vmul.f32 %v1990, %v2012
    %v2014 = vsub.f32 1.0, %v2013
    %v2015 = vmul.f32 %v2012, %v2014
    %v2016 = vadd.f32 %v2012, %v2015
    %vm2017 = vweird.f32 %v1990
    %vm2018 = vweird.f32 %v2012
    %vm2019 = vmor %vm2017, %vm2018
    %v2020 = vsel %vm2019, %v2012, %v2016
    %v2021 = vand.u32 2147483647, %v1990
    %vm2022 = vcmp.eq.f32.partialorder %v2021, 8.507059e+37
    %v2023 = vand.u32 %v1990, 2147483648
    %v2024 = vor.u32 1.1754944e-38, %v2023
    %v2025 = vsel %vm2022, %v2024, %v2020
    %v2026 = vmul.f32 %v1973, %v2025
    %v2027 = vrcp.pop %v1993
    %v2028 = vmul.f32 %v1993, %v2027
    %v2029 = vsub.f32 1.0, %v2028
    %v2030 = vmul.f32 %v2027, %v2029
    %v2031 = vadd.f32 %v2027, %v2030
    %vm2032 = vweird.f32 %v1993
    %vm2033 = vweird.f32 %v2027
    %vm2034 = vmor %vm2032, %vm2033
    %v2035 = vsel %vm2034, %v2027, %v2031
    %v2036 = vand.u32 2147483647, %v1993
    %vm2037 = vcmp.eq.f32.partialorder %v2036, 8.507059e+37
    %v2038 = vand.u32 %v1993, 2147483648
    %v2039 = vor.u32 1.1754944e-38, %v2038
    %v2040 = vsel %vm2037, %v2039, %v2035
    %v2041 = vmul.f32 %v1975, %v2040
    %v2042 = vrcp.pop %v1996
    %v2043 = vmul.f32 %v1996, %v2042
    %v2044 = vsub.f32 1.0, %v2043
    %v2045 = vmul.f32 %v2042, %v2044
    %v2046 = vadd.f32 %v2042, %v2045
    %vm2047 = vweird.f32 %v1996
    %vm2048 = vweird.f32 %v2042
    %vm2049 = vmor %vm2047, %vm2048
    %v2050 = vsel %vm2049, %v2042, %v2046
    %v2051 = vand.u32 2147483647, %v1996
    %vm2052 = vcmp.eq.f32.partialorder %v2051, 8.507059e+37
    %v2053 = vand.u32 %v1996, 2147483648
    %v2054 = vor.u32 1.1754944e-38, %v2053
    %v2055 = vsel %vm2052, %v2054, %v2050
    %v2056 = vmul.f32 %v1977, %v2055
    %v2057 = vrcp.pop %v1999
    %v2058 = vmul.f32 %v1999, %v2057
    %v2059 = vsub.f32 1.0, %v2058
    %v2060 = vmul.f32 %v2057, %v2059
    %v2061 = vadd.f32 %v2057, %v2060
    %vm2062 = vweird.f32 %v1999
    %vm2063 = vweird.f32 %v2057
    %vm2064 = vmor %vm2062, %vm2063
    %v2065 = vsel %vm2064, %v2057, %v2061
    %v2066 = vand.u32 2147483647, %v1999
    %vm2067 = vcmp.eq.f32.partialorder %v2066, 8.507059e+37
    %v2068 = vand.u32 %v1999, 2147483648
    %v2069 = vor.u32 1.1754944e-38, %v2068
    %v2070 = vsel %vm2067, %v2069, %v2065
    %v2071 = vmul.f32 %v1979, %v2070
    %v2072 = vrcp.pop %v2002
    %v2073 = vmul.f32 %v2002, %v2072
    %v2074 = vsub.f32 1.0, %v2073
    %v2075 = vmul.f32 %v2072, %v2074
    %v2076 = vadd.f32 %v2072, %v2075
    %vm2077 = vweird.f32 %v2002
    %vm2078 = vweird.f32 %v2072
    %vm2079 = vmor %vm2077, %vm2078
    %v2080 = vsel %vm2079, %v2072, %v2076
    %v2081 = vand.u32 2147483647, %v2002
    %vm2082 = vcmp.eq.f32.partialorder %v2081, 8.507059e+37
    %v2083 = vand.u32 %v2002, 2147483648
    %v2084 = vor.u32 1.1754944e-38, %v2083
    %v2085 = vsel %vm2082, %v2084, %v2080
    %v2086 = vmul.f32 %v1981, %v2085
    %v2087 = vrcp.pop %v2005
    %v2088 = vmul.f32 %v2005, %v2087
    %v2089 = vsub.f32 1.0, %v2088
    %v2090 = vmul.f32 %v2087, %v2089
    %v2091 = vadd.f32 %v2087, %v2090
    %vm2092 = vweird.f32 %v2005
    %vm2093 = vweird.f32 %v2087
    %vm2094 = vmor %vm2092, %vm2093
    %v2095 = vsel %vm2094, %v2087, %v2091
    %v2096 = vand.u32 2147483647, %v2005
    %vm2097 = vcmp.eq.f32.partialorder %v2096, 8.507059e+37
    %v2098 = vand.u32 %v2005, 2147483648
    %v2099 = vor.u32 1.1754944e-38, %v2098
    %v2100 = vsel %vm2097, %v2099, %v2095
    %v2101 = vmul.f32 %v1983, %v2100
    %v2102 = vrcp.pop %v2008
    %v2103 = vmul.f32 %v2008, %v2102
    %v2104 = vsub.f32 1.0, %v2103
    %v2105 = vmul.f32 %v2102, %v2104
    %v2106 = vadd.f32 %v2102, %v2105
    %vm2107 = vweird.f32 %v2008
    %vm2108 = vweird.f32 %v2102
    %vm2109 = vmor %vm2107, %vm2108
    %v2110 = vsel %vm2109, %v2102, %v2106
    %v2111 = vand.u32 2147483647, %v2008
    %vm2112 = vcmp.eq.f32.partialorder %v2111, 8.507059e+37
    %v2113 = vand.u32 %v2008, 2147483648
    %v2114 = vor.u32 1.1754944e-38, %v2113
    %v2115 = vsel %vm2112, %v2114, %v2110
    %v2116 = vmul.f32 %v1985, %v2115
    %v2117 = vrcp.pop %v2011
    %v2118 = vmul.f32 %v2011, %v2117
    %v2119 = vsub.f32 1.0, %v2118
    %v2120 = vmul.f32 %v2117, %v2119
    %v2121 = vadd.f32 %v2117, %v2120
    %vm2122 = vweird.f32 %v2011
    %vm2123 = vweird.f32 %v2117
    %vm2124 = vmor %vm2122, %vm2123
    %v2125 = vsel %vm2124, %v2117, %v2121
    %v2126 = vand.u32 2147483647, %v2011
    %vm2127 = vcmp.eq.f32.partialorder %v2126, 8.507059e+37
    %v2128 = vand.u32 %v2011, 2147483648
    %v2129 = vor.u32 1.1754944e-38, %v2128
    %v2130 = vsel %vm2127, %v2129, %v2125
    %v2131 = vmul.f32 %v1987, %v2130
    %2132 = vst [vmem:[#allocation1] ss:$4 sm:$0xff] %v234
    %v2133 = vld.sshfl [vmem:[#allocation1] sm:$0xff pattern:$0x73625140]
    %2134 = vrot.lane.b32.xlu0 %v2133, 48
    %v2135 = vpop.permute.xlu0 %2134
    %v2137 = vsel %vm668, %v2026, 0
    %v2139 = vsel %vm672, %v2135, 0
    %2141 = vmatpush.msra.mxu0 0.0
    %2142 = vmatpush.msra.mxu0 0.0
    %2143 = vmatpush.msra.mxu0 0.0
    %2144 = vmatpush.msra.mxu0 0.0
    %2145 = vmatpush.msra.mxu0 0.0
    %2146 = vmatpush.msra.mxu0 0.0
    %2147 = vmatpush.msra.mxu0 0.0
    %2148 = vmatpush.msra.mxu0 0.0
    %2149 = vmatpush.msra.mxu0 0.0
    %2150 = vmatpush.msra.mxu0 0.0
    %2151 = vmatpush.msra.mxu0 0.0
    %2152 = vmatpush.msra.mxu0 0.0
    %2153 = vmatpush.msra.mxu0 0.0
    %2154 = vmatpush.msra.mxu0 0.0
    %2155 = vmatpush.msra.mxu0 0.0
    %2156 = vmatpush.msra.mxu0 %v2139
    %2157 = vmatmul.f32.gmra.mxu0 %v2137
    %v2158 = vpop.f32.mrf.mxu0
    %v2159 = vadd.f32 0.0, %v2158
    %2160 = vdwg.mxu0
    %2161 = vst [vmem:[#allocation1] ss:$4 sm:$0xff] %v240
    %v2162 = vld.sshfl [vmem:[#allocation1] sm:$0xff pattern:$0x73625140]
    %2163 = vrot.lane.b32.xlu0 %v2162, 48
    %v2164 = vpop.permute.xlu0 %2163
    %v2166 = vsel %vm668, %v2041, 0
    %v2168 = vsel %vm672, %v2164, 0
    %2170 = vmatpush.msra.mxu0 0.0
    %2171 = vmatpush.msra.mxu0 0.0
    %2172 = vmatpush.msra.mxu0 0.0
    %2173 = vmatpush.msra.mxu0 0.0
    %2174 = vmatpush.msra.mxu0 0.0
    %2175 = vmatpush.msra.mxu0 0.0
    %2176 = vmatpush.msra.mxu0 0.0
    %2177 = vmatpush.msra.mxu0 0.0
    %2178 = vmatpush.msra.mxu0 0.0
    %2179 = vmatpush.msra.mxu0 0.0
    %2180 = vmatpush.msra.mxu0 0.0
    %2181 = vmatpush.msra.mxu0 0.0
    %2182 = vmatpush.msra.mxu0 0.0
    %2183 = vmatpush.msra.mxu0 0.0
    %2184 = vmatpush.msra.mxu0 0.0
    %2185 = vmatpush.msra.mxu0 %v2168
    %2186 = vmatmul.f32.gmra.mxu0 %v2166
    %v2187 = vpop.f32.mrf.mxu0
    %v2188 = vadd.f32 0.0, %v2187
    %2189 = vdwg.mxu0
    %2190 = vst [vmem:[#allocation1] ss:$4 sm:$0xff] %v241
    %v2191 = vld.sshfl [vmem:[#allocation1] sm:$0xff pattern:$0x73625140]
    %2192 = vrot.lane.b32.xlu0 %v2191, 48
    %v2193 = vpop.permute.xlu0 %2192
    %v2195 = vsel %vm668, %v2056, 0
    %v2197 = vsel %vm672, %v2193, 0
    %2199 = vmatpush.msra.mxu0 0.0
    %2200 = vmatpush.msra.mxu0 0.0
    %2201 = vmatpush.msra.mxu0 0.0
    %2202 = vmatpush.msra.mxu0 0.0
    %2203 = vmatpush.msra.mxu0 0.0
    %2204 = vmatpush.msra.mxu0 0.0
    %2205 = vmatpush.msra.mxu0 0.0
    %2206 = vmatpush.msra.mxu0 0.0
    %2207 = vmatpush.msra.mxu0 0.0
    %2208 = vmatpush.msra.mxu0 0.0
    %2209 = vmatpush.msra.mxu0 0.0
    %2210 = vmatpush.msra.mxu0 0.0
    %2211 = vmatpush.msra.mxu0 0.0
    %2212 = vmatpush.msra.mxu0 0.0
    %2213 = vmatpush.msra.mxu0 0.0
    %2214 = vmatpush.msra.mxu0 %v2197
    %2215 = vmatmul.f32.gmra.mxu0 %v2195
    %v2216 = vpop.f32.mrf.mxu0
    %v2217 = vadd.f32 0.0, %v2216
    %2218 = vdwg.mxu0
    %2219 = vst [vmem:[#allocation1] ss:$4 sm:$0xff] %v242
    %v2220 = vld.sshfl [vmem:[#allocation1] sm:$0xff pattern:$0x73625140]
    %2221 = vrot.lane.b32.xlu0 %v2220, 48
    %v2222 = vpop.permute.xlu0 %2221
    %v2224 = vsel %vm668, %v2071, 0
    %v2226 = vsel %vm672, %v2222, 0
    %2228 = vmatpush.msra.mxu0 0.0
    %2229 = vmatpush.msra.mxu0 0.0
    %2230 = vmatpush.msra.mxu0 0.0
    %2231 = vmatpush.msra.mxu0 0.0
    %2232 = vmatpush.msra.mxu0 0.0
    %2233 = vmatpush.msra.mxu0 0.0
    %2234 = vmatpush.msra.mxu0 0.0
    %2235 = vmatpush.msra.mxu0 0.0
    %2236 = vmatpush.msra.mxu0 0.0
    %2237 = vmatpush.msra.mxu0 0.0
    %2238 = vmatpush.msra.mxu0 0.0
    %2239 = vmatpush.msra.mxu0 0.0
    %2240 = vmatpush.msra.mxu0 0.0
    %2241 = vmatpush.msra.mxu0 0.0
    %2242 = vmatpush.msra.mxu0 0.0
    %2243 = vmatpush.msra.mxu0 %v2226
    %2244 = vmatmul.f32.gmra.mxu0 %v2224
    %v2245 = vpop.f32.mrf.mxu0
    %v2246 = vadd.f32 0.0, %v2245
    %2247 = vdwg.mxu0
    %2248 = vst [vmem:[#allocation1] ss:$4 sm:$0xff] %v236
    %v2249 = vld.sshfl [vmem:[#allocation1] sm:$0xff pattern:$0x73625140]
    %2250 = vrot.lane.b32.xlu0 %v2249, 48
    %v2251 = vpop.permute.xlu0 %2250
    %v2253 = vsel %vm668, %v2086, 0
    %v2255 = vsel %vm672, %v2251, 0
    %2257 = vmatpush.msra.mxu0 0.0
    %2258 = vmatpush.msra.mxu0 0.0
    %2259 = vmatpush.msra.mxu0 0.0
    %2260 = vmatpush.msra.mxu0 0.0
    %2261 = vmatpush.msra.mxu0 0.0
    %2262 = vmatpush.msra.mxu0 0.0
    %2263 = vmatpush.msra.mxu0 0.0
    %2264 = vmatpush.msra.mxu0 0.0
    %2265 = vmatpush.msra.mxu0 0.0
    %2266 = vmatpush.msra.mxu0 0.0
    %2267 = vmatpush.msra.mxu0 0.0
    %2268 = vmatpush.msra.mxu0 0.0
    %2269 = vmatpush.msra.mxu0 0.0
    %2270 = vmatpush.msra.mxu0 0.0
    %2271 = vmatpush.msra.mxu0 0.0
    %2272 = vmatpush.msra.mxu0 %v2255
    %2273 = vmatmul.f32.gmra.mxu0 %v2253
    %v2274 = vpop.f32.mrf.mxu0
    %v2275 = vadd.f32 0.0, %v2274
    %2276 = vdwg.mxu0
    %2277 = vst [vmem:[#allocation1] ss:$4 sm:$0xff] %v243
    %v2278 = vld.sshfl [vmem:[#allocation1] sm:$0xff pattern:$0x73625140]
    %2279 = vrot.lane.b32.xlu0 %v2278, 48
    %v2280 = vpop.permute.xlu0 %2279
    %v2282 = vsel %vm668, %v2101, 0
    %v2284 = vsel %vm672, %v2280, 0
    %2286 = vmatpush.msra.mxu0 0.0
    %2287 = vmatpush.msra.mxu0 0.0
    %2288 = vmatpush.msra.mxu0 0.0
    %2289 = vmatpush.msra.mxu0 0.0
    %2290 = vmatpush.msra.mxu0 0.0
    %2291 = vmatpush.msra.mxu0 0.0
    %2292 = vmatpush.msra.mxu0 0.0
    %2293 = vmatpush.msra.mxu0 0.0
    %2294 = vmatpush.msra.mxu0 0.0
    %2295 = vmatpush.msra.mxu0 0.0
    %2296 = vmatpush.msra.mxu0 0.0
    %2297 = vmatpush.msra.mxu0 0.0
    %2298 = vmatpush.msra.mxu0 0.0
    %2299 = vmatpush.msra.mxu0 0.0
    %2300 = vmatpush.msra.mxu0 0.0
    %2301 = vmatpush.msra.mxu0 %v2284
    %2302 = vmatmul.f32.gmra.mxu0 %v2282
    %v2303 = vpop.f32.mrf.mxu0
    %v2304 = vadd.f32 0.0, %v2303
    %2305 = vdwg.mxu0
    %2306 = vst [vmem:[#allocation1] ss:$4 sm:$0xff] %v244
    %v2307 = vld.sshfl [vmem:[#allocation1] sm:$0xff pattern:$0x73625140]
    %2308 = vrot.lane.b32.xlu0 %v2307, 48
    %v2309 = vpop.permute.xlu0 %2308
    %v2311 = vsel %vm668, %v2116, 0
    %v2313 = vsel %vm672, %v2309, 0
    %2315 = vmatpush.msra.mxu0 0.0
    %2316 = vmatpush.msra.mxu0 0.0
    %2317 = vmatpush.msra.mxu0 0.0
    %2318 = vmatpush.msra.mxu0 0.0
    %2319 = vmatpush.msra.mxu0 0.0
    %2320 = vmatpush.msra.mxu0 0.0
    %2321 = vmatpush.msra.mxu0 0.0
    %2322 = vmatpush.msra.mxu0 0.0
    %2323 = vmatpush.msra.mxu0 0.0
    %2324 = vmatpush.msra.mxu0 0.0
    %2325 = vmatpush.msra.mxu0 0.0
    %2326 = vmatpush.msra.mxu0 0.0
    %2327 = vmatpush.msra.mxu0 0.0
    %2328 = vmatpush.msra.mxu0 0.0
    %2329 = vmatpush.msra.mxu0 0.0
    %2330 = vmatpush.msra.mxu0 %v2313
    %2331 = vmatmul.f32.gmra.mxu0 %v2311
    %v2332 = vpop.f32.mrf.mxu0
    %v2333 = vadd.f32 0.0, %v2332
    %2334 = vdwg.mxu0
    %2335 = vst [vmem:[#allocation1] ss:$4 sm:$0xff] %v245
    %v2336 = vld.sshfl [vmem:[#allocation1] sm:$0xff pattern:$0x73625140]
    %2337 = vrot.lane.b32.xlu0 %v2336, 48
    %v2338 = vpop.permute.xlu0 %2337
    %v2340 = vsel %vm668, %v2131, 0
    %v2342 = vsel %vm672, %v2338, 0
    %2344 = vmatpush.msra.mxu0 0.0
    %2345 = vmatpush.msra.mxu0 0.0
    %2346 = vmatpush.msra.mxu0 0.0
    %2347 = vmatpush.msra.mxu0 0.0
    %2348 = vmatpush.msra.mxu0 0.0
    %2349 = vmatpush.msra.mxu0 0.0
    %2350 = vmatpush.msra.mxu0 0.0
    %2351 = vmatpush.msra.mxu0 0.0
    %2352 = vmatpush.msra.mxu0 0.0
    %2353 = vmatpush.msra.mxu0 0.0
    %2354 = vmatpush.msra.mxu0 0.0
    %2355 = vmatpush.msra.mxu0 0.0
    %2356 = vmatpush.msra.mxu0 0.0
    %2357 = vmatpush.msra.mxu0 0.0
    %2358 = vmatpush.msra.mxu0 0.0
    %2359 = vmatpush.msra.mxu0 %v2342
    %2360 = vmatmul.f32.gmra.mxu0 %v2340
    %v2361 = vpop.f32.mrf.mxu0
    %v2362 = vadd.f32 0.0, %v2361
    %2363 = vdwg.mxu0
    %v2364 = vld [vmem:[%s6 + $0x10] sm:$0xff]
    %2373 = vst [vmem:[#allocation1] ss:$4 sm:$0xff] %v2159
    %s2374 = scalar_lea.vmem [#allocation1], 1
    %2375 = vst [vmem:[%s2374] ss:$4 sm:$0xff] %v2188
    %s2376 = scalar_lea.vmem [#allocation1], 2
    %2377 = vst [vmem:[%s2376] ss:$4 sm:$0xff] %v2217
    %s2378 = scalar_lea.vmem [#allocation1], 3
    %2379 = vst [vmem:[%s2378] ss:$4 sm:$0xff] %v2246
    %s2380 = scalar_lea.vmem [#allocation1], 32
    %2381 = vst [vmem:[%s2380] ss:$4 sm:$0xff] %v2275
    %s2382 = scalar_lea.vmem [#allocation1], 33
    %2383 = vst [vmem:[%s2382] ss:$4 sm:$0xff] %v2304
    %s2384 = scalar_lea.vmem [#allocation1], 34
    %2385 = vst [vmem:[%s2384] ss:$4 sm:$0xff] %v2333
    %s2386 = scalar_lea.vmem [#allocation1], 35
    %2387 = vst [vmem:[%s2386] ss:$4 sm:$0xff] %v2362
    %v2388 = vld.sshfl [vmem:[#allocation1] sm:$0xff pattern:$0x73625140]
    %v2389 = vld.sshfl [vmem:[#allocation1 + $0x20] sm:$0xff pattern:$0x73625140]
    %v2390 = vsel %vm250, %v2388, 0
    %v2392 = vsel %vm250, %v2389, 0
    %2394 = vmatpush.msra.mxu0 0.0
    %2395 = vmatpush.msra.mxu0 0.0
    %2396 = vmatpush.msra.mxu0 0.0
    %2397 = vmatpush.msra.mxu0 0.0
    %2398 = vmatpush.msra.mxu0 0.0
    %2399 = vmatpush.msra.mxu0 0.0
    %2400 = vmatpush.msra.mxu0 0.0
    %2401 = vmatpush.msra.mxu0 0.0
    %2402 = vmatpush.msra.mxu0 0.0
    %2403 = vmatpush.msra.mxu0 0.0
    %2404 = vmatpush.msra.mxu0 0.0
    %2405 = vmatpush.msra.mxu0 0.0
    %2406 = vmatpush.msra.mxu0 0.0
    %2407 = vmatpush.msra.mxu0 0.0
    %2408 = vmatpush.msra.mxu0 0.0
    %2409 = vmatpush.msra.mxu0 %v2364
    %2410 = vmatmul.f32.gmra.mxu0 %v2390
    %v2411 = vpop.f32.mrf.mxu0
    %v2412 = vadd.f32 0.0, %v2411
    %2413 = vmatmul.f32.gmra.mxu0 %v2392
    %v2414 = vpop.f32.mrf.mxu0
    %v2415 = vadd.f32 0.0, %v2414
    %2416 = vdwg.mxu0
    %v2417 = vadd.f32 %v1679, %v2412
    %v2418 = vadd.f32 %v1682, %v2415
    %2419 = vst [vmem:[#allocation1] ss:$4 sm:$0xff] %v234
    %v2420 = vld.sshfl [vmem:[#allocation1] sm:$0xff pattern:$0x73625140]
    %2421 = vrot.lane.b32.xlu0 %v2420, 104
    %v2422 = vpop.permute.xlu0 %2421
    %2423 = vst [vmem:[#allocation1] ss:$4 sm:$0xff] %v234
    %v2424 = vld.sshfl [vmem:[#allocation1] sm:$0xff pattern:$0x73625140]
    %2425 = vrot.lane.b32.xlu0 %v2424, 72
    %v2426 = vpop.permute.xlu0 %2425
    %v2427 = vsel %vm250, %v2422, 0
    %v2429 = vsel %vm250, %v2426, 0
    %2431 = vmatpush.xpose.msra.mxu0 0.0
    %2432 = vmatpush.xpose.msra.mxu0 0.0
    %2433 = vmatpush.xpose.msra.mxu0 0.0
    %2434 = vmatpush.xpose.msra.mxu0 0.0
    %2435 = vmatpush.xpose.msra.mxu0 0.0
    %2436 = vmatpush.xpose.msra.mxu0 0.0
    %2437 = vmatpush.xpose.msra.mxu0 0.0
    %2438 = vmatpush.xpose.msra.mxu0 0.0
    %2439 = vmatpush.xpose.msra.mxu0 0.0
    %2440 = vmatpush.xpose.msra.mxu0 0.0
    %2441 = vmatpush.xpose.msra.mxu0 0.0
    %2442 = vmatpush.xpose.msra.mxu0 0.0
    %2443 = vmatpush.xpose.msra.mxu0 0.0
    %2444 = vmatpush.xpose.msra.mxu0 0.0
    %2445 = vmatpush.xpose.msra.mxu0 0.0
    %2446 = vmatpush.xpose.msra.mxu0 %v2429
    %2447 = vmatmul.f32.gmra.mxu0 %v2427
    %v2448 = vpop.f32.mrf.mxu0
    %v2449 = vadd.f32 0.0, %v2448
    %2450 = vdwg.mxu0
    %2451 = vst [vmem:[#allocation1] ss:$4 sm:$0xff] %v240
    %v2452 = vld.sshfl [vmem:[#allocation1] sm:$0xff pattern:$0x73625140]
    %2453 = vrot.lane.b32.xlu0 %v2452, 104
    %v2454 = vpop.permute.xlu0 %2453
    %2455 = vst [vmem:[#allocation1] ss:$4 sm:$0xff] %v240
    %v2456 = vld.sshfl [vmem:[#allocation1] sm:$0xff pattern:$0x73625140]
    %2457 = vrot.lane.b32.xlu0 %v2456, 72
    %v2458 = vpop.permute.xlu0 %2457
    %v2459 = vsel %vm250, %v2454, 0
    %v2461 = vsel %vm250, %v2458, 0
    %2463 = vmatpush.xpose.msra.mxu0 0.0
    %2464 = vmatpush.xpose.msra.mxu0 0.0
    %2465 = vmatpush.xpose.msra.mxu0 0.0
    %2466 = vmatpush.xpose.msra.mxu0 0.0
    %2467 = vmatpush.xpose.msra.mxu0 0.0
    %2468 = vmatpush.xpose.msra.mxu0 0.0
    %2469 = vmatpush.xpose.msra.mxu0 0.0
    %2470 = vmatpush.xpose.msra.mxu0 0.0
    %2471 = vmatpush.xpose.msra.mxu0 0.0
    %2472 = vmatpush.xpose.msra.mxu0 0.0
    %2473 = vmatpush.xpose.msra.mxu0 0.0
    %2474 = vmatpush.xpose.msra.mxu0 0.0
    %2475 = vmatpush.xpose.msra.mxu0 0.0
    %2476 = vmatpush.xpose.msra.mxu0 0.0
    %2477 = vmatpush.xpose.msra.mxu0 0.0
    %2478 = vmatpush.xpose.msra.mxu0 %v2461
    %2479 = vmatmul.f32.gmra.mxu0 %v2459
    %v2480 = vpop.f32.mrf.mxu0
    %v2481 = vadd.f32 0.0, %v2480
    %2482 = vdwg.mxu0
    %2483 = vst [vmem:[#allocation1] ss:$4 sm:$0xff] %v241
    %v2484 = vld.sshfl [vmem:[#allocation1] sm:$0xff pattern:$0x73625140]
    %2485 = vrot.lane.b32.xlu0 %v2484, 104
    %v2486 = vpop.permute.xlu0 %2485
    %2487 = vst [vmem:[#allocation1] ss:$4 sm:$0xff] %v241
    %v2488 = vld.sshfl [vmem:[#allocation1] sm:$0xff pattern:$0x73625140]
    %2489 = vrot.lane.b32.xlu0 %v2488, 72
    %v2490 = vpop.permute.xlu0 %2489
    %v2491 = vsel %vm250, %v2486, 0
    %v2493 = vsel %vm250, %v2490, 0
    %2495 = vmatpush.xpose.msra.mxu0 0.0
    %2496 = vmatpush.xpose.msra.mxu0 0.0
    %2497 = vmatpush.xpose.msra.mxu0 0.0
    %2498 = vmatpush.xpose.msra.mxu0 0.0
    %2499 = vmatpush.xpose.msra.mxu0 0.0
    %2500 = vmatpush.xpose.msra.mxu0 0.0
    %2501 = vmatpush.xpose.msra.mxu0 0.0
    %2502 = vmatpush.xpose.msra.mxu0 0.0
    %2503 = vmatpush.xpose.msra.mxu0 0.0
    %2504 = vmatpush.xpose.msra.mxu0 0.0
    %2505 = vmatpush.xpose.msra.mxu0 0.0
    %2506 = vmatpush.xpose.msra.mxu0 0.0
    %2507 = vmatpush.xpose.msra.mxu0 0.0
    %2508 = vmatpush.xpose.msra.mxu0 0.0
    %2509 = vmatpush.xpose.msra.mxu0 0.0
    %2510 = vmatpush.xpose.msra.mxu0 %v2493
    %2511 = vmatmul.f32.gmra.mxu0 %v2491
    %v2512 = vpop.f32.mrf.mxu0
    %v2513 = vadd.f32 0.0, %v2512
    %2514 = vdwg.mxu0
    %2515 = vst [vmem:[#allocation1] ss:$4 sm:$0xff] %v242
    %v2516 = vld.sshfl [vmem:[#allocation1] sm:$0xff pattern:$0x73625140]
    %2517 = vrot.lane.b32.xlu0 %v2516, 104
    %v2518 = vpop.permute.xlu0 %2517
    %2519 = vst [vmem:[#allocation1] ss:$4 sm:$0xff] %v242
    %v2520 = vld.sshfl [vmem:[#allocation1] sm:$0xff pattern:$0x73625140]
    %2521 = vrot.lane.b32.xlu0 %v2520, 72
    %v2522 = vpop.permute.xlu0 %2521
    %v2523 = vsel %vm250, %v2518, 0
    %v2525 = vsel %vm250, %v2522, 0
    %2527 = vmatpush.xpose.msra.mxu0 0.0
    %2528 = vmatpush.xpose.msra.mxu0 0.0
    %2529 = vmatpush.xpose.msra.mxu0 0.0
    %2530 = vmatpush.xpose.msra.mxu0 0.0
    %2531 = vmatpush.xpose.msra.mxu0 0.0
    %2532 = vmatpush.xpose.msra.mxu0 0.0
    %2533 = vmatpush.xpose.msra.mxu0 0.0
    %2534 = vmatpush.xpose.msra.mxu0 0.0
    %2535 = vmatpush.xpose.msra.mxu0 0.0
    %2536 = vmatpush.xpose.msra.mxu0 0.0
    %2537 = vmatpush.xpose.msra.mxu0 0.0
    %2538 = vmatpush.xpose.msra.mxu0 0.0
    %2539 = vmatpush.xpose.msra.mxu0 0.0
    %2540 = vmatpush.xpose.msra.mxu0 0.0
    %2541 = vmatpush.xpose.msra.mxu0 0.0
    %2542 = vmatpush.xpose.msra.mxu0 %v2525
    %2543 = vmatmul.f32.gmra.mxu0 %v2523
    %v2544 = vpop.f32.mrf.mxu0
    %v2545 = vadd.f32 0.0, %v2544
    %2546 = vdwg.mxu0
    %2547 = vst [vmem:[#allocation1] ss:$4 sm:$0xff] %v236
    %v2548 = vld.sshfl [vmem:[#allocation1] sm:$0xff pattern:$0x73625140]
    %2549 = vrot.lane.b32.xlu0 %v2548, 104
    %v2550 = vpop.permute.xlu0 %2549
    %2551 = vst [vmem:[#allocation1] ss:$4 sm:$0xff] %v236
    %v2552 = vld.sshfl [vmem:[#allocation1] sm:$0xff pattern:$0x73625140]
    %2553 = vrot.lane.b32.xlu0 %v2552, 72
    %v2554 = vpop.permute.xlu0 %2553
    %v2555 = vsel %vm250, %v2550, 0
    %v2557 = vsel %vm250, %v2554, 0
    %2559 = vmatpush.xpose.msra.mxu0 0.0
    %2560 = vmatpush.xpose.msra.mxu0 0.0
    %2561 = vmatpush.xpose.msra.mxu0 0.0
    %2562 = vmatpush.xpose.msra.mxu0 0.0
    %2563 = vmatpush.xpose.msra.mxu0 0.0
    %2564 = vmatpush.xpose.msra.mxu0 0.0
    %2565 = vmatpush.xpose.msra.mxu0 0.0
    %2566 = vmatpush.xpose.msra.mxu0 0.0
    %2567 = vmatpush.xpose.msra.mxu0 0.0
    %2568 = vmatpush.xpose.msra.mxu0 0.0
    %2569 = vmatpush.xpose.msra.mxu0 0.0
    %2570 = vmatpush.xpose.msra.mxu0 0.0
    %2571 = vmatpush.xpose.msra.mxu0 0.0
    %2572 = vmatpush.xpose.msra.mxu0 0.0
    %2573 = vmatpush.xpose.msra.mxu0 0.0
    %2574 = vmatpush.xpose.msra.mxu0 %v2557
    %2575 = vmatmul.f32.gmra.mxu0 %v2555
    %v2576 = vpop.f32.mrf.mxu0
    %v2577 = vadd.f32 0.0, %v2576
    %2578 = vdwg.mxu0
    %2579 = vst [vmem:[#allocation1] ss:$4 sm:$0xff] %v243
    %v2580 = vld.sshfl [vmem:[#allocation1] sm:$0xff pattern:$0x73625140]
    %2581 = vrot.lane.b32.xlu0 %v2580, 104
    %v2582 = vpop.permute.xlu0 %2581
    %2583 = vst [vmem:[#allocation1] ss:$4 sm:$0xff] %v243
    %v2584 = vld.sshfl [vmem:[#allocation1] sm:$0xff pattern:$0x73625140]
    %2585 = vrot.lane.b32.xlu0 %v2584, 72
    %v2586 = vpop.permute.xlu0 %2585
    %v2587 = vsel %vm250, %v2582, 0
    %v2589 = vsel %vm250, %v2586, 0
    %2591 = vmatpush.xpose.msra.mxu0 0.0
    %2592 = vmatpush.xpose.msra.mxu0 0.0
    %2593 = vmatpush.xpose.msra.mxu0 0.0
    %2594 = vmatpush.xpose.msra.mxu0 0.0
    %2595 = vmatpush.xpose.msra.mxu0 0.0
    %2596 = vmatpush.xpose.msra.mxu0 0.0
    %2597 = vmatpush.xpose.msra.mxu0 0.0
    %2598 = vmatpush.xpose.msra.mxu0 0.0
    %2599 = vmatpush.xpose.msra.mxu0 0.0
    %2600 = vmatpush.xpose.msra.mxu0 0.0
    %2601 = vmatpush.xpose.msra.mxu0 0.0
    %2602 = vmatpush.xpose.msra.mxu0 0.0
    %2603 = vmatpush.xpose.msra.mxu0 0.0
    %2604 = vmatpush.xpose.msra.mxu0 0.0
    %2605 = vmatpush.xpose.msra.mxu0 0.0
    %2606 = vmatpush.xpose.msra.mxu0 %v2589
    %2607 = vmatmul.f32.gmra.mxu0 %v2587
    %v2608 = vpop.f32.mrf.mxu0
    %v2609 = vadd.f32 0.0, %v2608
    %2610 = vdwg.mxu0
    %2611 = vst [vmem:[#allocation1] ss:$4 sm:$0xff] %v244
    %v2612 = vld.sshfl [vmem:[#allocation1] sm:$0xff pattern:$0x73625140]
    %2613 = vrot.lane.b32.xlu0 %v2612, 104
    %v2614 = vpop.permute.xlu0 %2613
    %2615 = vst [vmem:[#allocation1] ss:$4 sm:$0xff] %v244
    %v2616 = vld.sshfl [vmem:[#allocation1] sm:$0xff pattern:$0x73625140]
    %2617 = vrot.lane.b32.xlu0 %v2616, 72
    %v2618 = vpop.permute.xlu0 %2617
    %v2619 = vsel %vm250, %v2614, 0
    %v2621 = vsel %vm250, %v2618, 0
    %2623 = vmatpush.xpose.msra.mxu0 0.0
    %2624 = vmatpush.xpose.msra.mxu0 0.0
    %2625 = vmatpush.xpose.msra.mxu0 0.0
    %2626 = vmatpush.xpose.msra.mxu0 0.0
    %2627 = vmatpush.xpose.msra.mxu0 0.0
    %2628 = vmatpush.xpose.msra.mxu0 0.0
    %2629 = vmatpush.xpose.msra.mxu0 0.0
    %2630 = vmatpush.xpose.msra.mxu0 0.0
    %2631 = vmatpush.xpose.msra.mxu0 0.0
    %2632 = vmatpush.xpose.msra.mxu0 0.0
    %2633 = vmatpush.xpose.msra.mxu0 0.0
    %2634 = vmatpush.xpose.msra.mxu0 0.0
    %2635 = vmatpush.xpose.msra.mxu0 0.0
    %2636 = vmatpush.xpose.msra.mxu0 0.0
    %2637 = vmatpush.xpose.msra.mxu0 0.0
    %2638 = vmatpush.xpose.msra.mxu0 %v2621
    %2639 = vmatmul.f32.gmra.mxu0 %v2619
    %v2640 = vpop.f32.mrf.mxu0
    %v2641 = vadd.f32 0.0, %v2640
    %2642 = vdwg.mxu0
    %2643 = vst [vmem:[#allocation1] ss:$4 sm:$0xff] %v245
    %v2644 = vld.sshfl [vmem:[#allocation1] sm:$0xff pattern:$0x73625140]
    %2645 = vrot.lane.b32.xlu0 %v2644, 104
    %v2646 = vpop.permute.xlu0 %2645
    %2647 = vst [vmem:[#allocation1] ss:$4 sm:$0xff] %v245
    %v2648 = vld.sshfl [vmem:[#allocation1] sm:$0xff pattern:$0x73625140]
    %2649 = vrot.lane.b32.xlu0 %v2648, 72
    %v2650 = vpop.permute.xlu0 %2649
    %v2651 = vsel %vm250, %v2646, 0
    %v2653 = vsel %vm250, %v2650, 0
    %2655 = vmatpush.xpose.msra.mxu0 0.0
    %2656 = vmatpush.xpose.msra.mxu0 0.0
    %2657 = vmatpush.xpose.msra.mxu0 0.0
    %2658 = vmatpush.xpose.msra.mxu0 0.0
    %2659 = vmatpush.xpose.msra.mxu0 0.0
    %2660 = vmatpush.xpose.msra.mxu0 0.0
    %2661 = vmatpush.xpose.msra.mxu0 0.0
    %2662 = vmatpush.xpose.msra.mxu0 0.0
    %2663 = vmatpush.xpose.msra.mxu0 0.0
    %2664 = vmatpush.xpose.msra.mxu0 0.0
    %2665 = vmatpush.xpose.msra.mxu0 0.0
    %2666 = vmatpush.xpose.msra.mxu0 0.0
    %2667 = vmatpush.xpose.msra.mxu0 0.0
    %2668 = vmatpush.xpose.msra.mxu0 0.0
    %2669 = vmatpush.xpose.msra.mxu0 0.0
    %2670 = vmatpush.xpose.msra.mxu0 %v2653
    %2671 = vmatmul.f32.gmra.mxu0 %v2651
    %v2672 = vpop.f32.mrf.mxu0
    %v2673 = vadd.f32 0.0, %v2672
    %2674 = vdwg.mxu0
    %v2675 = vsel %vm471, %v2449, -inf
    %2676 = vmax.xlane.f32.xlu0 %v2675
    %v2677 = vpop.xlane.xlu0 %2676
    %v2678 = vsel %vm471, %v2481, -inf
    %2679 = vmax.xlane.f32.xlu0 %v2678
    %v2680 = vpop.xlane.xlu0 %2679
    %v2681 = vsel %vm471, %v2513, -inf
    %2682 = vmax.xlane.f32.xlu0 %v2681
    %v2683 = vpop.xlane.xlu0 %2682
    %v2684 = vsel %vm471, %v2545, -inf
    %2685 = vmax.xlane.f32.xlu0 %v2684
    %v2686 = vpop.xlane.xlu0 %2685
    %v2687 = vsel %vm471, %v2577, -inf
    %2688 = vmax.xlane.f32.xlu0 %v2687
    %v2689 = vpop.xlane.xlu0 %2688
    %v2690 = vsel %vm471, %v2609, -inf
    %2691 = vmax.xlane.f32.xlu0 %v2690
    %v2692 = vpop.xlane.xlu0 %2691
    %v2693 = vsel %vm471, %v2641, -inf
    %2694 = vmax.xlane.f32.xlu0 %v2693
    %v2695 = vpop.xlane.xlu0 %2694
    %v2696 = vsel %vm471, %v2673, -inf
    %2697 = vmax.xlane.f32.xlu0 %v2696
    %v2698 = vpop.xlane.xlu0 %2697
    %v2699 = vsub.f32 %v2449, %v2677
    %v2700 = vsub.f32 %v2481, %v2680
    %v2701 = vsub.f32 %v2513, %v2683
    %v2702 = vsub.f32 %v2545, %v2686
    %v2703 = vsub.f32 %v2577, %v2689
    %v2704 = vsub.f32 %v2609, %v2692
    %v2705 = vsub.f32 %v2641, %v2695
    %v2706 = vsub.f32 %v2673, %v2698
    %v2707 = vmul.f32 %v2699, 1.442695
    %v2708 = vpow.pop %v2707
    %v2709 = vmul.f32 %v2700, 1.442695
    %v2710 = vpow.pop %v2709
    %v2711 = vmul.f32 %v2701, 1.442695
    %v2712 = vpow.pop %v2711
    %v2713 = vmul.f32 %v2702, 1.442695
    %v2714 = vpow.pop %v2713
    %v2715 = vmul.f32 %v2703, 1.442695
    %v2716 = vpow.pop %v2715
    %v2717 = vmul.f32 %v2704, 1.442695
    %v2718 = vpow.pop %v2717
    %v2719 = vmul.f32 %v2705, 1.442695
    %v2720 = vpow.pop %v2719
    %v2721 = vmul.f32 %v2706, 1.442695
    %v2722 = vpow.pop %v2721
    %v2723 = vsel %vm471, %v2708, 0.0
    %2724 = vadd.xlane.f32.xlu0 %v2723
    %v2725 = vpop.xlane.xlu0 %2724
    %v2726 = vsel %vm471, %v2710, 0.0
    %2727 = vadd.xlane.f32.xlu0 %v2726
    %v2728 = vpop.xlane.xlu0 %2727
    %v2729 = vsel %vm471, %v2712, 0.0
    %2730 = vadd.xlane.f32.xlu0 %v2729
    %v2731 = vpop.xlane.xlu0 %2730
    %v2732 = vsel %vm471, %v2714, 0.0
    %2733 = vadd.xlane.f32.xlu0 %v2732
    %v2734 = vpop.xlane.xlu0 %2733
    %v2735 = vsel %vm471, %v2716, 0.0
    %2736 = vadd.xlane.f32.xlu0 %v2735
    %v2737 = vpop.xlane.xlu0 %2736
    %v2738 = vsel %vm471, %v2718, 0.0
    %2739 = vadd.xlane.f32.xlu0 %v2738
    %v2740 = vpop.xlane.xlu0 %2739
    %v2741 = vsel %vm471, %v2720, 0.0
    %2742 = vadd.xlane.f32.xlu0 %v2741
    %v2743 = vpop.xlane.xlu0 %2742
    %v2744 = vsel %vm471, %v2722, 0.0
    %2745 = vadd.xlane.f32.xlu0 %v2744
    %v2746 = vpop.xlane.xlu0 %2745
    %v2747 = vrcp.pop %v2725
    %v2748 = vmul.f32 %v2725, %v2747
    %v2749 = vsub.f32 1.0, %v2748
    %v2750 = vmul.f32 %v2747, %v2749
    %v2751 = vadd.f32 %v2747, %v2750
    %vm2752 = vweird.f32 %v2725
    %vm2753 = vweird.f32 %v2747
    %vm2754 = vmor %vm2752, %vm2753
    %v2755 = vsel %vm2754, %v2747, %v2751
    %v2756 = vand.u32 2147483647, %v2725
    %vm2757 = vcmp.eq.f32.partialorder %v2756, 8.507059e+37
    %v2758 = vand.u32 %v2725, 2147483648
    %v2759 = vor.u32 1.1754944e-38, %v2758
    %v2760 = vsel %vm2757, %v2759, %v2755
    %v2761 = vmul.f32 %v2708, %v2760
    %v2762 = vrcp.pop %v2728
    %v2763 = vmul.f32 %v2728, %v2762
    %v2764 = vsub.f32 1.0, %v2763
    %v2765 = vmul.f32 %v2762, %v2764
    %v2766 = vadd.f32 %v2762, %v2765
    %vm2767 = vweird.f32 %v2728
    %vm2768 = vweird.f32 %v2762
    %vm2769 = vmor %vm2767, %vm2768
    %v2770 = vsel %vm2769, %v2762, %v2766
    %v2771 = vand.u32 2147483647, %v2728
    %vm2772 = vcmp.eq.f32.partialorder %v2771, 8.507059e+37
    %v2773 = vand.u32 %v2728, 2147483648
    %v2774 = vor.u32 1.1754944e-38, %v2773
    %v2775 = vsel %vm2772, %v2774, %v2770
    %v2776 = vmul.f32 %v2710, %v2775
    %v2777 = vrcp.pop %v2731
    %v2778 = vmul.f32 %v2731, %v2777
    %v2779 = vsub.f32 1.0, %v2778
    %v2780 = vmul.f32 %v2777, %v2779
    %v2781 = vadd.f32 %v2777, %v2780
    %vm2782 = vweird.f32 %v2731
    %vm2783 = vweird.f32 %v2777
    %vm2784 = vmor %vm2782, %vm2783
    %v2785 = vsel %vm2784, %v2777, %v2781
    %v2786 = vand.u32 2147483647, %v2731
    %vm2787 = vcmp.eq.f32.partialorder %v2786, 8.507059e+37
    %v2788 = vand.u32 %v2731, 2147483648
    %v2789 = vor.u32 1.1754944e-38, %v2788
    %v2790 = vsel %vm2787, %v2789, %v2785
    %v2791 = vmul.f32 %v2712, %v2790
    %v2792 = vrcp.pop %v2734
    %v2793 = vmul.f32 %v2734, %v2792
    %v2794 = vsub.f32 1.0, %v2793
    %v2795 = vmul.f32 %v2792, %v2794
    %v2796 = vadd.f32 %v2792, %v2795
    %vm2797 = vweird.f32 %v2734
    %vm2798 = vweird.f32 %v2792
    %vm2799 = vmor %vm2797, %vm2798
    %v2800 = vsel %vm2799, %v2792, %v2796
    %v2801 = vand.u32 2147483647, %v2734
    %vm2802 = vcmp.eq.f32.partialorder %v2801, 8.507059e+37
    %v2803 = vand.u32 %v2734, 2147483648
    %v2804 = vor.u32 1.1754944e-38, %v2803
    %v2805 = vsel %vm2802, %v2804, %v2800
    %v2806 = vmul.f32 %v2714, %v2805
    %v2807 = vrcp.pop %v2737
    %v2808 = vmul.f32 %v2737, %v2807
    %v2809 = vsub.f32 1.0, %v2808
    %v2810 = vmul.f32 %v2807, %v2809
    %v2811 = vadd.f32 %v2807, %v2810
    %vm2812 = vweird.f32 %v2737
    %vm2813 = vweird.f32 %v2807
    %vm2814 = vmor %vm2812, %vm2813
    %v2815 = vsel %vm2814, %v2807, %v2811
    %v2816 = vand.u32 2147483647, %v2737
    %vm2817 = vcmp.eq.f32.partialorder %v2816, 8.507059e+37
    %v2818 = vand.u32 %v2737, 2147483648
    %v2819 = vor.u32 1.1754944e-38, %v2818
    %v2820 = vsel %vm2817, %v2819, %v2815
    %v2821 = vmul.f32 %v2716, %v2820
    %v2822 = vrcp.pop %v2740
    %v2823 = vmul.f32 %v2740, %v2822
    %v2824 = vsub.f32 1.0, %v2823
    %v2825 = vmul.f32 %v2822, %v2824
    %v2826 = vadd.f32 %v2822, %v2825
    %vm2827 = vweird.f32 %v2740
    %vm2828 = vweird.f32 %v2822
    %vm2829 = vmor %vm2827, %vm2828
    %v2830 = vsel %vm2829, %v2822, %v2826
    %v2831 = vand.u32 2147483647, %v2740
    %vm2832 = vcmp.eq.f32.partialorder %v2831, 8.507059e+37
    %v2833 = vand.u32 %v2740, 2147483648
    %v2834 = vor.u32 1.1754944e-38, %v2833
    %v2835 = vsel %vm2832, %v2834, %v2830
    %v2836 = vmul.f32 %v2718, %v2835
    %v2837 = vrcp.pop %v2743
    %v2838 = vmul.f32 %v2743, %v2837
    %v2839 = vsub.f32 1.0, %v2838
    %v2840 = vmul.f32 %v2837, %v2839
    %v2841 = vadd.f32 %v2837, %v2840
    %vm2842 = vweird.f32 %v2743
    %vm2843 = vweird.f32 %v2837
    %vm2844 = vmor %vm2842, %vm2843
    %v2845 = vsel %vm2844, %v2837, %v2841
    %v2846 = vand.u32 2147483647, %v2743
    %vm2847 = vcmp.eq.f32.partialorder %v2846, 8.507059e+37
    %v2848 = vand.u32 %v2743, 2147483648
    %v2849 = vor.u32 1.1754944e-38, %v2848
    %v2850 = vsel %vm2847, %v2849, %v2845
    %v2851 = vmul.f32 %v2720, %v2850
    %v2852 = vrcp.pop %v2746
    %v2853 = vmul.f32 %v2746, %v2852
    %v2854 = vsub.f32 1.0, %v2853
    %v2855 = vmul.f32 %v2852, %v2854
    %v2856 = vadd.f32 %v2852, %v2855
    %vm2857 = vweird.f32 %v2746
    %vm2858 = vweird.f32 %v2852
    %vm2859 = vmor %vm2857, %vm2858
    %v2860 = vsel %vm2859, %v2852, %v2856
    %v2861 = vand.u32 2147483647, %v2746
    %vm2862 = vcmp.eq.f32.partialorder %v2861, 8.507059e+37
    %v2863 = vand.u32 %v2746, 2147483648
    %v2864 = vor.u32 1.1754944e-38, %v2863
    %v2865 = vsel %vm2862, %v2864, %v2860
    %v2866 = vmul.f32 %v2722, %v2865
    %2867 = vst [vmem:[#allocation1] ss:$4 sm:$0xff] %v234
    %v2868 = vld.sshfl [vmem:[#allocation1] sm:$0xff pattern:$0x73625140]
    %2869 = vrot.lane.b32.xlu0 %v2868, 40
    %v2870 = vpop.permute.xlu0 %2869
    %v2872 = vsel %vm668, %v2761, 0
    %v2874 = vsel %vm672, %v2870, 0
    %2876 = vmatpush.msra.mxu0 0.0
    %2877 = vmatpush.msra.mxu0 0.0
    %2878 = vmatpush.msra.mxu0 0.0
    %2879 = vmatpush.msra.mxu0 0.0
    %2880 = vmatpush.msra.mxu0 0.0
    %2881 = vmatpush.msra.mxu0 0.0
    %2882 = vmatpush.msra.mxu0 0.0
    %2883 = vmatpush.msra.mxu0 0.0
    %2884 = vmatpush.msra.mxu0 0.0
    %2885 = vmatpush.msra.mxu0 0.0
    %2886 = vmatpush.msra.mxu0 0.0
    %2887 = vmatpush.msra.mxu0 0.0
    %2888 = vmatpush.msra.mxu0 0.0
    %2889 = vmatpush.msra.mxu0 0.0
    %2890 = vmatpush.msra.mxu0 0.0
    %2891 = vmatpush.msra.mxu0 %v2874
    %2892 = vmatmul.f32.gmra.mxu0 %v2872
    %v2893 = vpop.f32.mrf.mxu0
    %v2894 = vadd.f32 0.0, %v2893
    %2895 = vdwg.mxu0
    %2896 = vst [vmem:[#allocation1] ss:$4 sm:$0xff] %v240
    %v2897 = vld.sshfl [vmem:[#allocation1] sm:$0xff pattern:$0x73625140]
    %2898 = vrot.lane.b32.xlu0 %v2897, 40
    %v2899 = vpop.permute.xlu0 %2898
    %v2901 = vsel %vm668, %v2776, 0
    %v2903 = vsel %vm672, %v2899, 0
    %2905 = vmatpush.msra.mxu0 0.0
    %2906 = vmatpush.msra.mxu0 0.0
    %2907 = vmatpush.msra.mxu0 0.0
    %2908 = vmatpush.msra.mxu0 0.0
    %2909 = vmatpush.msra.mxu0 0.0
    %2910 = vmatpush.msra.mxu0 0.0
    %2911 = vmatpush.msra.mxu0 0.0
    %2912 = vmatpush.msra.mxu0 0.0
    %2913 = vmatpush.msra.mxu0 0.0
    %2914 = vmatpush.msra.mxu0 0.0
    %2915 = vmatpush.msra.mxu0 0.0
    %2916 = vmatpush.msra.mxu0 0.0
    %2917 = vmatpush.msra.mxu0 0.0
    %2918 = vmatpush.msra.mxu0 0.0
    %2919 = vmatpush.msra.mxu0 0.0
    %2920 = vmatpush.msra.mxu0 %v2903
    %2921 = vmatmul.f32.gmra.mxu0 %v2901
    %v2922 = vpop.f32.mrf.mxu0
    %v2923 = vadd.f32 0.0, %v2922
    %2924 = vdwg.mxu0
    %2925 = vst [vmem:[#allocation1] ss:$4 sm:$0xff] %v241
    %v2926 = vld.sshfl [vmem:[#allocation1] sm:$0xff pattern:$0x73625140]
    %2927 = vrot.lane.b32.xlu0 %v2926, 40
    %v2928 = vpop.permute.xlu0 %2927
    %v2930 = vsel %vm668, %v2791, 0
    %v2932 = vsel %vm672, %v2928, 0
    %2934 = vmatpush.msra.mxu0 0.0
    %2935 = vmatpush.msra.mxu0 0.0
    %2936 = vmatpush.msra.mxu0 0.0
    %2937 = vmatpush.msra.mxu0 0.0
    %2938 = vmatpush.msra.mxu0 0.0
    %2939 = vmatpush.msra.mxu0 0.0
    %2940 = vmatpush.msra.mxu0 0.0
    %2941 = vmatpush.msra.mxu0 0.0
    %2942 = vmatpush.msra.mxu0 0.0
    %2943 = vmatpush.msra.mxu0 0.0
    %2944 = vmatpush.msra.mxu0 0.0
    %2945 = vmatpush.msra.mxu0 0.0
    %2946 = vmatpush.msra.mxu0 0.0
    %2947 = vmatpush.msra.mxu0 0.0
    %2948 = vmatpush.msra.mxu0 0.0
    %2949 = vmatpush.msra.mxu0 %v2932
    %2950 = vmatmul.f32.gmra.mxu0 %v2930
    %v2951 = vpop.f32.mrf.mxu0
    %v2952 = vadd.f32 0.0, %v2951
    %2953 = vdwg.mxu0
    %2954 = vst [vmem:[#allocation1] ss:$4 sm:$0xff] %v242
    %v2955 = vld.sshfl [vmem:[#allocation1] sm:$0xff pattern:$0x73625140]
    %2956 = vrot.lane.b32.xlu0 %v2955, 40
    %v2957 = vpop.permute.xlu0 %2956
    %v2959 = vsel %vm668, %v2806, 0
    %v2961 = vsel %vm672, %v2957, 0
    %2963 = vmatpush.msra.mxu0 0.0
    %2964 = vmatpush.msra.mxu0 0.0
    %2965 = vmatpush.msra.mxu0 0.0
    %2966 = vmatpush.msra.mxu0 0.0
    %2967 = vmatpush.msra.mxu0 0.0
    %2968 = vmatpush.msra.mxu0 0.0
    %2969 = vmatpush.msra.mxu0 0.0
    %2970 = vmatpush.msra.mxu0 0.0
    %2971 = vmatpush.msra.mxu0 0.0
    %2972 = vmatpush.msra.mxu0 0.0
    %2973 = vmatpush.msra.mxu0 0.0
    %2974 = vmatpush.msra.mxu0 0.0
    %2975 = vmatpush.msra.mxu0 0.0
    %2976 = vmatpush.msra.mxu0 0.0
    %2977 = vmatpush.msra.mxu0 0.0
    %2978 = vmatpush.msra.mxu0 %v2961
    %2979 = vmatmul.f32.gmra.mxu0 %v2959
    %v2980 = vpop.f32.mrf.mxu0
    %v2981 = vadd.f32 0.0, %v2980
    %2982 = vdwg.mxu0
    %2983 = vst [vmem:[#allocation1] ss:$4 sm:$0xff] %v236
    %v2984 = vld.sshfl [vmem:[#allocation1] sm:$0xff pattern:$0x73625140]
    %2985 = vrot.lane.b32.xlu0 %v2984, 40
    %v2986 = vpop.permute.xlu0 %2985
    %v2988 = vsel %vm668, %v2821, 0
    %v2990 = vsel %vm672, %v2986, 0
    %2992 = vmatpush.msra.mxu0 0.0
    %2993 = vmatpush.msra.mxu0 0.0
    %2994 = vmatpush.msra.mxu0 0.0
    %2995 = vmatpush.msra.mxu0 0.0
    %2996 = vmatpush.msra.mxu0 0.0
    %2997 = vmatpush.msra.mxu0 0.0
    %2998 = vmatpush.msra.mxu0 0.0
    %2999 = vmatpush.msra.mxu0 0.0
    %3000 = vmatpush.msra.mxu0 0.0
    %3001 = vmatpush.msra.mxu0 0.0
    %3002 = vmatpush.msra.mxu0 0.0
    %3003 = vmatpush.msra.mxu0 0.0
    %3004 = vmatpush.msra.mxu0 0.0
    %3005 = vmatpush.msra.mxu0 0.0
    %3006 = vmatpush.msra.mxu0 0.0
    %3007 = vmatpush.msra.mxu0 %v2990
    %3008 = vmatmul.f32.gmra.mxu0 %v2988
    %v3009 = vpop.f32.mrf.mxu0
    %v3010 = vadd.f32 0.0, %v3009
    %3011 = vdwg.mxu0
    %3012 = vst [vmem:[#allocation1] ss:$4 sm:$0xff] %v243
    %v3013 = vld.sshfl [vmem:[#allocation1] sm:$0xff pattern:$0x73625140]
    %3014 = vrot.lane.b32.xlu0 %v3013, 40
    %v3015 = vpop.permute.xlu0 %3014
    %v3017 = vsel %vm668, %v2836, 0
    %v3019 = vsel %vm672, %v3015, 0
    %3021 = vmatpush.msra.mxu0 0.0
    %3022 = vmatpush.msra.mxu0 0.0
    %3023 = vmatpush.msra.mxu0 0.0
    %3024 = vmatpush.msra.mxu0 0.0
    %3025 = vmatpush.msra.mxu0 0.0
    %3026 = vmatpush.msra.mxu0 0.0
    %3027 = vmatpush.msra.mxu0 0.0
    %3028 = vmatpush.msra.mxu0 0.0
    %3029 = vmatpush.msra.mxu0 0.0
    %3030 = vmatpush.msra.mxu0 0.0
    %3031 = vmatpush.msra.mxu0 0.0
    %3032 = vmatpush.msra.mxu0 0.0
    %3033 = vmatpush.msra.mxu0 0.0
    %3034 = vmatpush.msra.mxu0 0.0
    %3035 = vmatpush.msra.mxu0 0.0
    %3036 = vmatpush.msra.mxu0 %v3019
    %3037 = vmatmul.f32.gmra.mxu0 %v3017
    %v3038 = vpop.f32.mrf.mxu0
    %v3039 = vadd.f32 0.0, %v3038
    %3040 = vdwg.mxu0
    %3041 = vst [vmem:[#allocation1] ss:$4 sm:$0xff] %v244
    %v3042 = vld.sshfl [vmem:[#allocation1] sm:$0xff pattern:$0x73625140]
    %3043 = vrot.lane.b32.xlu0 %v3042, 40
    %v3044 = vpop.permute.xlu0 %3043
    %v3046 = vsel %vm668, %v2851, 0
    %v3048 = vsel %vm672, %v3044, 0
    %3050 = vmatpush.msra.mxu0 0.0
    %3051 = vmatpush.msra.mxu0 0.0
    %3052 = vmatpush.msra.mxu0 0.0
    %3053 = vmatpush.msra.mxu0 0.0
    %3054 = vmatpush.msra.mxu0 0.0
    %3055 = vmatpush.msra.mxu0 0.0
    %3056 = vmatpush.msra.mxu0 0.0
    %3057 = vmatpush.msra.mxu0 0.0
    %3058 = vmatpush.msra.mxu0 0.0
    %3059 = vmatpush.msra.mxu0 0.0
    %3060 = vmatpush.msra.mxu0 0.0
    %3061 = vmatpush.msra.mxu0 0.0
    %3062 = vmatpush.msra.mxu0 0.0
    %3063 = vmatpush.msra.mxu0 0.0
    %3064 = vmatpush.msra.mxu0 0.0
    %3065 = vmatpush.msra.mxu0 %v3048
    %3066 = vmatmul.f32.gmra.mxu0 %v3046
    %v3067 = vpop.f32.mrf.mxu0
    %v3068 = vadd.f32 0.0, %v3067
    %3069 = vdwg.mxu0
    %3070 = vst [vmem:[#allocation1] ss:$4 sm:$0xff] %v245
    %v3071 = vld.sshfl [vmem:[#allocation1] sm:$0xff pattern:$0x73625140]
    %3072 = vrot.lane.b32.xlu0 %v3071, 40
    %v3073 = vpop.permute.xlu0 %3072
    %v3075 = vsel %vm668, %v2866, 0
    %v3077 = vsel %vm672, %v3073, 0
    %3079 = vmatpush.msra.mxu0 0.0
    %3080 = vmatpush.msra.mxu0 0.0
    %3081 = vmatpush.msra.mxu0 0.0
    %3082 = vmatpush.msra.mxu0 0.0
    %3083 = vmatpush.msra.mxu0 0.0
    %3084 = vmatpush.msra.mxu0 0.0
    %3085 = vmatpush.msra.mxu0 0.0
    %3086 = vmatpush.msra.mxu0 0.0
    %3087 = vmatpush.msra.mxu0 0.0
    %3088 = vmatpush.msra.mxu0 0.0
    %3089 = vmatpush.msra.mxu0 0.0
    %3090 = vmatpush.msra.mxu0 0.0
    %3091 = vmatpush.msra.mxu0 0.0
    %3092 = vmatpush.msra.mxu0 0.0
    %3093 = vmatpush.msra.mxu0 0.0
    %3094 = vmatpush.msra.mxu0 %v3077
    %3095 = vmatmul.f32.gmra.mxu0 %v3075
    %v3096 = vpop.f32.mrf.mxu0
    %v3097 = vadd.f32 0.0, %v3096
    %3098 = vdwg.mxu0
    %v3099 = vld [vmem:[%s6 + $0x18] sm:$0xff]
    %3108 = vst [vmem:[#allocation1] ss:$4 sm:$0xff] %v2894
    %s3109 = scalar_lea.vmem [#allocation1], 1
    %3110 = vst [vmem:[%s3109] ss:$4 sm:$0xff] %v2923
    %s3111 = scalar_lea.vmem [#allocation1], 2
    %3112 = vst [vmem:[%s3111] ss:$4 sm:$0xff] %v2952
    %s3113 = scalar_lea.vmem [#allocation1], 3
    %3114 = vst [vmem:[%s3113] ss:$4 sm:$0xff] %v2981
    %s3115 = scalar_lea.vmem [#allocation1], 32
    %3116 = vst [vmem:[%s3115] ss:$4 sm:$0xff] %v3010
    %s3117 = scalar_lea.vmem [#allocation1], 33
    %3118 = vst [vmem:[%s3117] ss:$4 sm:$0xff] %v3039
    %s3119 = scalar_lea.vmem [#allocation1], 34
    %3120 = vst [vmem:[%s3119] ss:$4 sm:$0xff] %v3068
    %s3121 = scalar_lea.vmem [#allocation1], 35
    %3122 = vst [vmem:[%s3121] ss:$4 sm:$0xff] %v3097
    %v3123 = vld.sshfl [vmem:[#allocation1] sm:$0xff pattern:$0x73625140]
    %v3124 = vld.sshfl [vmem:[#allocation1 + $0x20] sm:$0xff pattern:$0x73625140]
    %v3125 = vsel %vm250, %v3123, 0
    %v3127 = vsel %vm250, %v3124, 0
    %3129 = vmatpush.msra.mxu0 0.0
    %3130 = vmatpush.msra.mxu0 0.0
    %3131 = vmatpush.msra.mxu0 0.0
    %3132 = vmatpush.msra.mxu0 0.0
    %3133 = vmatpush.msra.mxu0 0.0
    %3134 = vmatpush.msra.mxu0 0.0
    %3135 = vmatpush.msra.mxu0 0.0
    %3136 = vmatpush.msra.mxu0 0.0
    %3137 = vmatpush.msra.mxu0 0.0
    %3138 = vmatpush.msra.mxu0 0.0
    %3139 = vmatpush.msra.mxu0 0.0
    %3140 = vmatpush.msra.mxu0 0.0
    %3141 = vmatpush.msra.mxu0 0.0
    %3142 = vmatpush.msra.mxu0 0.0
    %3143 = vmatpush.msra.mxu0 0.0
    %3144 = vmatpush.msra.mxu0 %v3099
    %3145 = vmatmul.f32.gmra.mxu0 %v3125
    %v3146 = vpop.f32.mrf.mxu0
    %v3147 = vadd.f32 0.0, %v3146
    %3148 = vmatmul.f32.gmra.mxu0 %v3127
    %v3149 = vpop.f32.mrf.mxu0
    %v3150 = vadd.f32 0.0, %v3149
    %3151 = vdwg.mxu0
    %v3152 = vadd.f32 %v2417, %v3147
    %v3153 = vadd.f32 %v2418, %v3150
    %v3154 = vld [vmem:[%s7] sm:$0x1]
    %v3155 = vperm.slane %v3154, 0
    %v3156 = vadd.f32 %v3152, %v3155
    %v3157 = vadd.f32 %v3153, %v3155
    %v3160 = vrot.slane %v3156, 2
    %v3161 = vrot.slane %v3156, 4
    %v3162 = vrot.slane %v3156, 6
    %v3163 = vrot.slane %v3157, 2
    %v3164 = vrot.slane %v3157, 4
    %v3165 = vrot.slane %v3157, 6
    %v3172 = vadd.f32 %v166, %v3156
    %v3173 = vadd.f32 %v167, %v3160
    %v3174 = vadd.f32 %v168, %v3161
    %v3175 = vadd.f32 %v169, %v3162
    %v3176 = vadd.f32 %v170, %v3157
    %v3177 = vadd.f32 %v171, %v3163
    %v3178 = vadd.f32 %v172, %v3164
    %v3179 = vadd.f32 %v173, %v3165
    %v3180 = vld [vmem:[%s8] sm:$0x1]
    %v3181 = vld [vmem:[%s9] sm:$0x1]
    %3190 = vst [vmem:[#allocation1] ss:$4 sm:$0xff] %v3172
    %s3191 = scalar_lea.vmem [#allocation1], 1
    %3192 = vst [vmem:[%s3191] ss:$4 sm:$0xff] %v3173
    %s3193 = scalar_lea.vmem [#allocation1], 2
    %3194 = vst [vmem:[%s3193] ss:$4 sm:$0xff] %v3174
    %s3195 = scalar_lea.vmem [#allocation1], 3
    %3196 = vst [vmem:[%s3195] ss:$4 sm:$0xff] %v3175
    %s3197 = scalar_lea.vmem [#allocation1], 32
    %3198 = vst [vmem:[%s3197] ss:$4 sm:$0xff] %v3176
    %s3199 = scalar_lea.vmem [#allocation1], 33
    %3200 = vst [vmem:[%s3199] ss:$4 sm:$0xff] %v3177
    %s3201 = scalar_lea.vmem [#allocation1], 34
    %3202 = vst [vmem:[%s3201] ss:$4 sm:$0xff] %v3178
    %s3203 = scalar_lea.vmem [#allocation1], 35
    %3204 = vst [vmem:[%s3203] ss:$4 sm:$0xff] %v3179
    %v3205 = vld.sshfl [vmem:[#allocation1] sm:$0xff pattern:$0x73625140]
    %v3206 = vld.sshfl [vmem:[#allocation1 + $0x20] sm:$0xff pattern:$0x73625140]
    %v3209 = vsel %vm220, %v3205, 0.0
    %3210 = vadd.xlane.f32.xlu0 %v3209
    %v3211 = vpop.xlane.xlu0 %3210
    %v3212 = vsel %vm220, %v3206, 0.0
    %3213 = vadd.xlane.f32.xlu0 %v3212
    %v3214 = vpop.xlane.xlu0 %3213
    %v3215 = vrcp.pop 32.0
    %v3216 = vmul.f32 32.0, %v3215
    %v3217 = vsub.f32 1.0, %v3216
    %v3218 = vmul.f32 %v3215, %v3217
    %v3219 = vadd.f32 %v3215, %v3218
    %vm3220 = vweird.f32 %v3215
    %v3221 = vsel %vm3220, %v3215, %v3219
    %v3222 = vmul.f32 %v3211, %v3221
    %v3223 = vmul.f32 %v3214, %v3221
    %v3227 = vunpack.c.l.s4 269488144
    %v3228 = vunpack.c.0.s8 %v3227
    %v3229 = vperm.slane %v3222, %v3228
    %v3231 = vunpack.c.l.s4 842150450
    %v3232 = vunpack.c.0.s8 %v3231
    %v3233 = vperm.slane %v3222, %v3232
    %v3235 = vunpack.c.l.s4 1414812756
    %v3236 = vunpack.c.0.s8 %v3235
    %v3237 = vperm.slane %v3222, %v3236
    %v3239 = vunpack.c.l.s4 1987475062
    %v3240 = vunpack.c.0.s8 %v3239
    %v3241 = vperm.slane %v3222, %v3240
    %v3243 = vunpack.c.l.s4 269488144
    %v3244 = vunpack.c.0.s8 %v3243
    %v3245 = vperm.slane %v3223, %v3244
    %v3247 = vunpack.c.l.s4 842150450
    %v3248 = vunpack.c.0.s8 %v3247
    %v3249 = vperm.slane %v3223, %v3248
    %v3251 = vunpack.c.l.s4 1414812756
    %v3252 = vunpack.c.0.s8 %v3251
    %v3253 = vperm.slane %v3223, %v3252
    %v3255 = vunpack.c.l.s4 1987475062
    %v3256 = vunpack.c.0.s8 %v3255
    %v3257 = vperm.slane %v3223, %v3256
    %v3266 = vsub.f32 %v3172, %v3229
    %v3267 = vsub.f32 %v3173, %v3233
    %v3268 = vsub.f32 %v3174, %v3237
    %v3269 = vsub.f32 %v3175, %v3241
    %v3270 = vsub.f32 %v3176, %v3245
    %v3271 = vsub.f32 %v3177, %v3249
    %v3272 = vsub.f32 %v3178, %v3253
    %v3273 = vsub.f32 %v3179, %v3257
    %v3274 = vmul.f32 %v3266, %v3266
    %v3275 = vmul.f32 %v3267, %v3267
    %v3276 = vmul.f32 %v3268, %v3268
    %v3277 = vmul.f32 %v3269, %v3269
    %v3278 = vmul.f32 %v3270, %v3270
    %v3279 = vmul.f32 %v3271, %v3271
    %v3280 = vmul.f32 %v3272, %v3272
    %v3281 = vmul.f32 %v3273, %v3273
    %3290 = vst [vmem:[#allocation1] ss:$4 sm:$0xff] %v3274
    %s3291 = scalar_lea.vmem [#allocation1], 1
    %3292 = vst [vmem:[%s3291] ss:$4 sm:$0xff] %v3275
    %s3293 = scalar_lea.vmem [#allocation1], 2
    %3294 = vst [vmem:[%s3293] ss:$4 sm:$0xff] %v3276
    %s3295 = scalar_lea.vmem [#allocation1], 3
    %3296 = vst [vmem:[%s3295] ss:$4 sm:$0xff] %v3277
    %s3297 = scalar_lea.vmem [#allocation1], 32
    %3298 = vst [vmem:[%s3297] ss:$4 sm:$0xff] %v3278
    %s3299 = scalar_lea.vmem [#allocation1], 33
    %3300 = vst [vmem:[%s3299] ss:$4 sm:$0xff] %v3279
    %s3301 = scalar_lea.vmem [#allocation1], 34
    %3302 = vst [vmem:[%s3301] ss:$4 sm:$0xff] %v3280
    %s3303 = scalar_lea.vmem [#allocation1], 35
    %3304 = vst [vmem:[%s3303] ss:$4 sm:$0xff] %v3281
    %v3305 = vld.sshfl [vmem:[#allocation1] sm:$0xff pattern:$0x73625140]
    %v3306 = vld.sshfl [vmem:[#allocation1 + $0x20] sm:$0xff pattern:$0x73625140]
    %v3309 = vsel %vm220, %v3305, 0.0
    %3310 = vadd.xlane.f32.xlu0 %v3309
    %v3311 = vpop.xlane.xlu0 %3310
    %v3312 = vsel %vm220, %v3306, 0.0
    %3313 = vadd.xlane.f32.xlu0 %v3312
    %v3314 = vpop.xlane.xlu0 %3313
    %v3315 = vmul.f32 %v3311, %v3221
    %v3316 = vmul.f32 %v3314, %v3221
    %v3317 = vadd.f32 %v3315, 1e-05
    %v3318 = vadd.f32 %v3316, 1e-05
    %v3319 = vrsqrt.pop %v3317
    %v3320 = vmul.f32 %v3319, %v3317
    %v3321 = vmul.f32 %v3320, %v3319
    %v3322 = vmul.f32 0.5, %v3321
    %v3323 = vsub.f32 1.5, %v3322
    %v3324 = vmul.f32 %v3319, %v3323
    %vm3325 = vweird.f32 %v3317
    %vm3326 = vweird.f32 %v3319
    %vm3327 = vmor %vm3325, %vm3326
    %v3328 = vsel %vm3327, %v3319, %v3324
    %v3329 = vrsqrt.pop %v3318
    %v3330 = vmul.f32 %v3329, %v3318
    %v3331 = vmul.f32 %v3330, %v3329
    %v3332 = vmul.f32 0.5, %v3331
    %v3333 = vsub.f32 1.5, %v3332
    %v3334 = vmul.f32 %v3329, %v3333
    %vm3335 = vweird.f32 %v3318
    %vm3336 = vweird.f32 %v3329
    %vm3337 = vmor %vm3335, %vm3336
    %v3338 = vsel %vm3337, %v3329, %v3334
    %v3342 = vunpack.c.l.s4 269488144
    %v3343 = vunpack.c.0.s8 %v3342
    %v3344 = vperm.slane %v3328, %v3343
    %v3346 = vunpack.c.l.s4 842150450
    %v3347 = vunpack.c.0.s8 %v3346
    %v3348 = vperm.slane %v3328, %v3347
    %v3350 = vunpack.c.l.s4 1414812756
    %v3351 = vunpack.c.0.s8 %v3350
    %v3352 = vperm.slane %v3328, %v3351
    %v3354 = vunpack.c.l.s4 1987475062
    %v3355 = vunpack.c.0.s8 %v3354
    %v3356 = vperm.slane %v3328, %v3355
    %v3358 = vunpack.c.l.s4 269488144
    %v3359 = vunpack.c.0.s8 %v3358
    %v3360 = vperm.slane %v3338, %v3359
    %v3362 = vunpack.c.l.s4 842150450
    %v3363 = vunpack.c.0.s8 %v3362
    %v3364 = vperm.slane %v3338, %v3363
    %v3366 = vunpack.c.l.s4 1414812756
    %v3367 = vunpack.c.0.s8 %v3366
    %v3368 = vperm.slane %v3338, %v3367
    %v3370 = vunpack.c.l.s4 1987475062
    %v3371 = vunpack.c.0.s8 %v3370
    %v3372 = vperm.slane %v3338, %v3371
    %v3381 = vmul.f32 %v3266, %v3344
    %v3382 = vmul.f32 %v3267, %v3348
    %v3383 = vmul.f32 %v3268, %v3352
    %v3384 = vmul.f32 %v3269, %v3356
    %v3385 = vmul.f32 %v3270, %v3360
    %v3386 = vmul.f32 %v3271, %v3364
    %v3387 = vmul.f32 %v3272, %v3368
    %v3388 = vmul.f32 %v3273, %v3372
    %v3389 = vperm.slane %v3180, 0
    %v3391 = vrot.slane %v3389, 2
    %v3392 = vrot.slane %v3389, 4
    %v3393 = vrot.slane %v3389, 6
    %v3397 = vmul.f32 %v3381, %v3389
    %v3398 = vmul.f32 %v3382, %v3391
    %v3399 = vmul.f32 %v3383, %v3392
    %v3400 = vmul.f32 %v3384, %v3393
    %v3401 = vmul.f32 %v3385, %v3389
    %v3402 = vmul.f32 %v3386, %v3391
    %v3403 = vmul.f32 %v3387, %v3392
    %v3404 = vmul.f32 %v3388, %v3393
    %v3405 = vperm.slane %v3181, 0
    %v3407 = vrot.slane %v3405, 2
    %v3408 = vrot.slane %v3405, 4
    %v3409 = vrot.slane %v3405, 6
    %v3413 = vadd.f32 %v3397, %v3405
    %v3414 = vadd.f32 %v3398, %v3407
    %v3415 = vadd.f32 %v3399, %v3408
    %v3416 = vadd.f32 %v3400, %v3409
    %v3417 = vadd.f32 %v3401, %v3405
    %v3418 = vadd.f32 %v3402, %v3407
    %v3419 = vadd.f32 %v3403, %v3408
    %v3420 = vadd.f32 %v3404, %v3409
    %3429 = vst [vmem:[#allocation1] ss:$4 sm:$0xff] %v3413
    %s3430 = scalar_lea.vmem [#allocation1], 1
    %3431 = vst [vmem:[%s3430] ss:$4 sm:$0xff] %v3414
    %s3432 = scalar_lea.vmem [#allocation1], 2
    %3433 = vst [vmem:[%s3432] ss:$4 sm:$0xff] %v3415
    %s3434 = scalar_lea.vmem [#allocation1], 3
    %3435 = vst [vmem:[%s3434] ss:$4 sm:$0xff] %v3416
    %s3436 = scalar_lea.vmem [#allocation1], 32
    %3437 = vst [vmem:[%s3436] ss:$4 sm:$0xff] %v3417
    %s3438 = scalar_lea.vmem [#allocation1], 33
    %3439 = vst [vmem:[%s3438] ss:$4 sm:$0xff] %v3418
    %s3440 = scalar_lea.vmem [#allocation1], 34
    %3441 = vst [vmem:[%s3440] ss:$4 sm:$0xff] %v3419
    %s3442 = scalar_lea.vmem [#allocation1], 35
    %3443 = vst [vmem:[%s3442] ss:$4 sm:$0xff] %v3420
    %v3444 = vld.sshfl [vmem:[#allocation1] sm:$0xff pattern:$0x73625140]
    %v3445 = vld.sshfl [vmem:[#allocation1 + $0x20] sm:$0xff pattern:$0x73625140]
    %v3448 = vpack.c.bf16 %v3445, %v3444
    %v3449 = vld [vmem:[%s12] sm:$0xff]
    %v3450 = vld [vmem:[%s12 + $0x8] sm:$0xff]
    %v3451 = vld [vmem:[%s12 + $0x40] sm:$0xff]
    %v3452 = vld [vmem:[%s12 + $0x48] sm:$0xff]
    %v3453 = vld [vmem:[%s12 + $0x80] sm:$0xff]
    %v3454 = vld [vmem:[%s12 + $0x88] sm:$0xff]
    %v3455 = vld [vmem:[%s12 + $0xc0] sm:$0xff]
    %v3456 = vld [vmem:[%s12 + $0xc8] sm:$0xff]
    %v3457 = vld [vmem:[%s13] ss:$2 sm:$0xf]
    %v3459 = vperm.slane %v3457, 0
    %v3460 = vperm.slane %v3457, 1
    %v3461 = vperm.slane %v3457, 2
    %v3462 = vperm.slane %v3457, 3
    %v3475 = vunpack.c.l.b16 %v3449
    %v3476 = vunpack.c.h.b16 %v3449
    %v3477 = vunpack.c.l.b16 %v3450
    %v3478 = vunpack.c.h.b16 %v3450
    %v3479 = vunpack.c.l.b16 %v3451
    %v3480 = vunpack.c.h.b16 %v3451
    %v3481 = vunpack.c.l.b16 %v3452
    %v3482 = vunpack.c.h.b16 %v3452
    %v3483 = vunpack.c.l.b16 %v3453
    %v3484 = vunpack.c.h.b16 %v3453
    %v3485 = vunpack.c.l.b16 %v3454
    %v3486 = vunpack.c.h.b16 %v3454
    %v3487 = vunpack.c.l.b16 %v3455
    %v3488 = vunpack.c.h.b16 %v3455
    %v3489 = vunpack.c.l.b16 %v3456
    %v3490 = vunpack.c.h.b16 %v3456
    %v3491 = vpack.c.b16 %v3479, %v3475
    %v3492 = vpack.c.b16 %v3480, %v3476
    %v3493 = vpack.c.b16 %v3481, %v3477
    %v3494 = vpack.c.b16 %v3482, %v3478
    %v3495 = vpack.c.b16 %v3487, %v3483
    %v3496 = vpack.c.b16 %v3488, %v3484
    %v3497 = vpack.c.b16 %v3489, %v3485
    %v3498 = vpack.c.b16 %v3490, %v3486
    %v3508 = vsel %vm220, %v3448, 0
    %3510 = vmatpush.bf16.msra.mxu0 0
    %3511 = vmatpush.bf16.msra.mxu0 0
    %3512 = vmatpush.bf16.msra.mxu0 0
    %3513 = vmatpush.bf16.msra.mxu0 0
    %3514 = vmatpush.bf16.msra.mxu0 0
    %3515 = vmatpush.bf16.msra.mxu0 0
    %3516 = vmatpush.bf16.msra.mxu0 %v3495
    %3517 = vmatpush.bf16.msra.mxu0 %v3491
    %3518 = vmatmul.bf16.gmra.mxu0 %v3508
    %v3519 = vpop.f32.mrf.mxu0
    %v3520 = vadd.f32 %v3459, %v3519
    %v3521 = vpop.f32.mrf.mxu0
    %v3522 = vadd.f32 %v3459, %v3521
    %3523 = vdwg.mxu0
    %3524 = vmatpush.bf16.msra.mxu0 0
    %3525 = vmatpush.bf16.msra.mxu0 0
    %3526 = vmatpush.bf16.msra.mxu0 0
    %3527 = vmatpush.bf16.msra.mxu0 0
    %3528 = vmatpush.bf16.msra.mxu0 0
    %3529 = vmatpush.bf16.msra.mxu0 0
    %3530 = vmatpush.bf16.msra.mxu0 %v3496
    %3531 = vmatpush.bf16.msra.mxu0 %v3492
    %3532 = vmatmul.bf16.gmra.mxu0 %v3508
    %v3533 = vpop.f32.mrf.mxu0
    %v3534 = vadd.f32 %v3460, %v3533
    %v3535 = vpop.f32.mrf.mxu0
    %v3536 = vadd.f32 %v3460, %v3535
    %3537 = vdwg.mxu0
    %3538 = vmatpush.bf16.msra.mxu0 0
    %3539 = vmatpush.bf16.msra.mxu0 0
    %3540 = vmatpush.bf16.msra.mxu0 0
    %3541 = vmatpush.bf16.msra.mxu0 0
    %3542 = vmatpush.bf16.msra.mxu0 0
    %3543 = vmatpush.bf16.msra.mxu0 0
    %3544 = vmatpush.bf16.msra.mxu0 %v3497
    %3545 = vmatpush.bf16.msra.mxu0 %v3493
    %3546 = vmatmul.bf16.gmra.mxu0 %v3508
    %v3547 = vpop.f32.mrf.mxu0
    %v3548 = vadd.f32 %v3461, %v3547
    %v3549 = vpop.f32.mrf.mxu0
    %v3550 = vadd.f32 %v3461, %v3549
    %3551 = vdwg.mxu0
    %3552 = vmatpush.bf16.msra.mxu0 0
    %3553 = vmatpush.bf16.msra.mxu0 0
    %3554 = vmatpush.bf16.msra.mxu0 0
    %3555 = vmatpush.bf16.msra.mxu0 0
    %3556 = vmatpush.bf16.msra.mxu0 0
    %3557 = vmatpush.bf16.msra.mxu0 0
    %3558 = vmatpush.bf16.msra.mxu0 %v3498
    %3559 = vmatpush.bf16.msra.mxu0 %v3494
    %3560 = vmatmul.bf16.gmra.mxu0 %v3508
    %v3561 = vpop.f32.mrf.mxu0
    %v3562 = vadd.f32 %v3462, %v3561
    %v3563 = vpop.f32.mrf.mxu0
    %v3564 = vadd.f32 %v3462, %v3563
    %3565 = vdwg.mxu0
    %v3566 = vmax.f32 %v3520, 0.0
    %v3567 = vmax.f32 %v3534, 0.0
    %v3568 = vmax.f32 %v3548, 0.0
    %v3569 = vmax.f32 %v3562, 0.0
    %v3570 = vmax.f32 %v3522, 0.0
    %v3571 = vmax.f32 %v3536, 0.0
    %v3572 = vmax.f32 %v3550, 0.0
    %v3573 = vmax.f32 %v3564, 0.0
    %v3574 = vpack.c.bf16 %v3570, %v3566
    %v3575 = vpack.c.bf16 %v3571, %v3567
    %v3576 = vpack.c.bf16 %v3572, %v3568
    %v3577 = vpack.c.bf16 %v3573, %v3569
    %v3578 = vld [vmem:[%s14] sm:$0xf]
    %v3579 = vld [vmem:[%s14 + $0x4] sm:$0xf]
    %v3580 = vld [vmem:[%s14 + $0x8] sm:$0xf]
    %v3581 = vld [vmem:[%s14 + $0xc] sm:$0xf]
    %v3582 = vld [vmem:[%s14 + $0x10] sm:$0xf]
    %v3583 = vld [vmem:[%s14 + $0x14] sm:$0xf]
    %v3584 = vld [vmem:[%s14 + $0x18] sm:$0xf]
    %v3585 = vld [vmem:[%s14 + $0x1c] sm:$0xf]
    %v3586 = vld [vmem:[%s14 + $0x20] sm:$0xf]
    %v3587 = vld [vmem:[%s14 + $0x24] sm:$0xf]
    %v3588 = vld [vmem:[%s14 + $0x28] sm:$0xf]
    %v3589 = vld [vmem:[%s14 + $0x2c] sm:$0xf]
    %v3590 = vld [vmem:[%s14 + $0x30] sm:$0xf]
    %v3591 = vld [vmem:[%s14 + $0x34] sm:$0xf]
    %v3592 = vld [vmem:[%s14 + $0x38] sm:$0xf]
    %v3593 = vld [vmem:[%s14 + $0x3c] sm:$0xf]
    %v3594 = vld [vmem:[%s14 + $0x40] sm:$0xf]
    %v3595 = vld [vmem:[%s14 + $0x44] sm:$0xf]
    %v3596 = vld [vmem:[%s14 + $0x48] sm:$0xf]
    %v3597 = vld [vmem:[%s14 + $0x4c] sm:$0xf]
    %v3598 = vld [vmem:[%s14 + $0x50] sm:$0xf]
    %v3599 = vld [vmem:[%s14 + $0x54] sm:$0xf]
    %v3600 = vld [vmem:[%s14 + $0x58] sm:$0xf]
    %v3601 = vld [vmem:[%s14 + $0x5c] sm:$0xf]
    %v3602 = vld [vmem:[%s14 + $0x60] sm:$0xf]
    %v3603 = vld [vmem:[%s14 + $0x64] sm:$0xf]
    %v3604 = vld [vmem:[%s14 + $0x68] sm:$0xf]
    %v3605 = vld [vmem:[%s14 + $0x6c] sm:$0xf]
    %v3606 = vld [vmem:[%s14 + $0x70] sm:$0xf]
    %v3607 = vld [vmem:[%s14 + $0x74] sm:$0xf]
    %v3608 = vld [vmem:[%s14 + $0x78] sm:$0xf]
    %v3609 = vld [vmem:[%s14 + $0x7c] sm:$0xf]
    %v3610 = vld [vmem:[%s14 + $0x80] sm:$0xf]
    %v3611 = vld [vmem:[%s14 + $0x84] sm:$0xf]
    %v3612 = vld [vmem:[%s14 + $0x88] sm:$0xf]
    %v3613 = vld [vmem:[%s14 + $0x8c] sm:$0xf]
    %v3614 = vld [vmem:[%s14 + $0x90] sm:$0xf]
    %v3615 = vld [vmem:[%s14 + $0x94] sm:$0xf]
    %v3616 = vld [vmem:[%s14 + $0x98] sm:$0xf]
    %v3617 = vld [vmem:[%s14 + $0x9c] sm:$0xf]
    %v3618 = vld [vmem:[%s14 + $0xa0] sm:$0xf]
    %v3619 = vld [vmem:[%s14 + $0xa4] sm:$0xf]
    %v3620 = vld [vmem:[%s14 + $0xa8] sm:$0xf]
    %v3621 = vld [vmem:[%s14 + $0xac] sm:$0xf]
    %v3622 = vld [vmem:[%s14 + $0xb0] sm:$0xf]
    %v3623 = vld [vmem:[%s14 + $0xb4] sm:$0xf]
    %v3624 = vld [vmem:[%s14 + $0xb8] sm:$0xf]
    %v3625 = vld [vmem:[%s14 + $0xbc] sm:$0xf]
    %v3626 = vld [vmem:[%s14 + $0xc0] sm:$0xf]
    %v3627 = vld [vmem:[%s14 + $0xc4] sm:$0xf]
    %v3628 = vld [vmem:[%s14 + $0xc8] sm:$0xf]
    %v3629 = vld [vmem:[%s14 + $0xcc] sm:$0xf]
    %v3630 = vld [vmem:[%s14 + $0xd0] sm:$0xf]
    %v3631 = vld [vmem:[%s14 + $0xd4] sm:$0xf]
    %v3632 = vld [vmem:[%s14 + $0xd8] sm:$0xf]
    %v3633 = vld [vmem:[%s14 + $0xdc] sm:$0xf]
    %v3634 = vld [vmem:[%s14 + $0xe0] sm:$0xf]
    %v3635 = vld [vmem:[%s14 + $0xe4] sm:$0xf]
    %v3636 = vld [vmem:[%s14 + $0xe8] sm:$0xf]
    %v3637 = vld [vmem:[%s14 + $0xec] sm:$0xf]
    %v3638 = vld [vmem:[%s14 + $0xf0] sm:$0xf]
    %v3639 = vld [vmem:[%s14 + $0xf4] sm:$0xf]
    %v3640 = vld [vmem:[%s14 + $0xf8] sm:$0xf]
    %v3641 = vld [vmem:[%s14 + $0xfc] sm:$0xf]
    %v3642 = vld [vmem:[%s12 + $0x10] sm:$0xff]
    %v3643 = vld [vmem:[%s12 + $0x18] sm:$0xff]
    %v3644 = vld [vmem:[%s12 + $0x50] sm:$0xff]
    %v3645 = vld [vmem:[%s12 + $0x58] sm:$0xff]
    %v3646 = vld [vmem:[%s12 + $0x90] sm:$0xff]
    %v3647 = vld [vmem:[%s12 + $0x98] sm:$0xff]
    %v3648 = vld [vmem:[%s12 + $0xd0] sm:$0xff]
    %v3649 = vld [vmem:[%s12 + $0xd8] sm:$0xff]
    %s3650 = scalar_lea.vmem %s13, 8
    %v3651 = vld [vmem:[%s3650] ss:$2 sm:$0xf]
    %v3653 = vperm.slane %v3651, 0
    %v3654 = vperm.slane %v3651, 1
    %v3655 = vperm.slane %v3651, 2
    %v3656 = vperm.slane %v3651, 3
    %v3669 = vunpack.c.l.b16 %v3642
    %v3670 = vunpack.c.h.b16 %v3642
    %v3671 = vunpack.c.l.b16 %v3643
    %v3672 = vunpack.c.h.b16 %v3643
    %v3673 = vunpack.c.l.b16 %v3644
    %v3674 = vunpack.c.h.b16 %v3644
    %v3675 = vunpack.c.l.b16 %v3645
    %v3676 = vunpack.c.h.b16 %v3645
    %v3677 = vunpack.c.l.b16 %v3646
    %v3678 = vunpack.c.h.b16 %v3646
    %v3679 = vunpack.c.l.b16 %v3647
    %v3680 = vunpack.c.h.b16 %v3647
    %v3681 = vunpack.c.l.b16 %v3648
    %v3682 = vunpack.c.h.b16 %v3648
    %v3683 = vunpack.c.l.b16 %v3649
    %v3684 = vunpack.c.h.b16 %v3649
    %v3685 = vpack.c.b16 %v3673, %v3669
    %v3686 = vpack.c.b16 %v3674, %v3670
    %v3687 = vpack.c.b16 %v3675, %v3671
    %v3688 = vpack.c.b16 %v3676, %v3672
    %v3689 = vpack.c.b16 %v3681, %v3677
    %v3690 = vpack.c.b16 %v3682, %v3678
    %v3691 = vpack.c.b16 %v3683, %v3679
    %v3692 = vpack.c.b16 %v3684, %v3680
    %3701 = vmatpush.bf16.msra.mxu0 0
    %3702 = vmatpush.bf16.msra.mxu0 0
    %3703 = vmatpush.bf16.msra.mxu0 0
    %3704 = vmatpush.bf16.msra.mxu0 0
    %3705 = vmatpush.bf16.msra.mxu0 0
    %3706 = vmatpush.bf16.msra.mxu0 0
    %3707 = vmatpush.bf16.msra.mxu0 %v3689
    %3708 = vmatpush.bf16.msra.mxu0 %v3685
    %3709 = vmatmul.bf16.gmra.mxu0 %v3508
    %v3710 = vpop.f32.mrf.mxu0
    %v3711 = vadd.f32 %v3653, %v3710
    %v3712 = vpop.f32.mrf.mxu0
    %v3713 = vadd.f32 %v3653, %v3712
    %3714 = vdwg.mxu0
    %3715 = vmatpush.bf16.msra.mxu0 0
    %3716 = vmatpush.bf16.msra.mxu0 0
    %3717 = vmatpush.bf16.msra.mxu0 0
    %3718 = vmatpush.bf16.msra.mxu0 0
    %3719 = vmatpush.bf16.msra.mxu0 0
    %3720 = vmatpush.bf16.msra.mxu0 0
    %3721 = vmatpush.bf16.msra.mxu0 %v3690
    %3722 = vmatpush.bf16.msra.mxu0 %v3686
    %3723 = vmatmul.bf16.gmra.mxu0 %v3508
    %v3724 = vpop.f32.mrf.mxu0
    %v3725 = vadd.f32 %v3654, %v3724
    %v3726 = vpop.f32.mrf.mxu0
    %v3727 = vadd.f32 %v3654, %v3726
    %3728 = vdwg.mxu0
    %3729 = vmatpush.bf16.msra.mxu0 0
    %3730 = vmatpush.bf16.msra.mxu0 0
    %3731 = vmatpush.bf16.msra.mxu0 0
    %3732 = vmatpush.bf16.msra.mxu0 0
    %3733 = vmatpush.bf16.msra.mxu0 0
    %3734 = vmatpush.bf16.msra.mxu0 0
    %3735 = vmatpush.bf16.msra.mxu0 %v3691
    %3736 = vmatpush.bf16.msra.mxu0 %v3687
    %3737 = vmatmul.bf16.gmra.mxu0 %v3508
    %v3738 = vpop.f32.mrf.mxu0
    %v3739 = vadd.f32 %v3655, %v3738
    %v3740 = vpop.f32.mrf.mxu0
    %v3741 = vadd.f32 %v3655, %v3740
    %3742 = vdwg.mxu0
    %3743 = vmatpush.bf16.msra.mxu0 0
    %3744 = vmatpush.bf16.msra.mxu0 0
    %3745 = vmatpush.bf16.msra.mxu0 0
    %3746 = vmatpush.bf16.msra.mxu0 0
    %3747 = vmatpush.bf16.msra.mxu0 0
    %3748 = vmatpush.bf16.msra.mxu0 0
    %3749 = vmatpush.bf16.msra.mxu0 %v3692
    %3750 = vmatpush.bf16.msra.mxu0 %v3688
    %3751 = vmatmul.bf16.gmra.mxu0 %v3508
    %v3752 = vpop.f32.mrf.mxu0
    %v3753 = vadd.f32 %v3656, %v3752
    %v3754 = vpop.f32.mrf.mxu0
    %v3755 = vadd.f32 %v3656, %v3754
    %3756 = vdwg.mxu0
    %v3757 = vmax.f32 %v3711, 0.0
    %v3758 = vmax.f32 %v3725, 0.0
    %v3759 = vmax.f32 %v3739, 0.0
    %v3760 = vmax.f32 %v3753, 0.0
    %v3761 = vmax.f32 %v3713, 0.0
    %v3762 = vmax.f32 %v3727, 0.0
    %v3763 = vmax.f32 %v3741, 0.0
    %v3764 = vmax.f32 %v3755, 0.0
    %v3765 = vpack.c.bf16 %v3761, %v3757
    %v3766 = vpack.c.bf16 %v3762, %v3758
    %v3767 = vpack.c.bf16 %v3763, %v3759
    %v3768 = vpack.c.bf16 %v3764, %v3760
    %v3769 = vld [vmem:[%s14 + $0x100] sm:$0xf]
    %v3770 = vld [vmem:[%s14 + $0x104] sm:$0xf]
    %v3771 = vld [vmem:[%s14 + $0x108] sm:$0xf]
    %v3772 = vld [vmem:[%s14 + $0x10c] sm:$0xf]
    %v3773 = vld [vmem:[%s14 + $0x110] sm:$0xf]
    %v3774 = vld [vmem:[%s14 + $0x114] sm:$0xf]
    %v3775 = vld [vmem:[%s14 + $0x118] sm:$0xf]
    %v3776 = vld [vmem:[%s14 + $0x11c] sm:$0xf]
    %v3777 = vld [vmem:[%s14 + $0x120] sm:$0xf]
    %v3778 = vld [vmem:[%s14 + $0x124] sm:$0xf]
    %v3779 = vld [vmem:[%s14 + $0x128] sm:$0xf]
    %v3780 = vld [vmem:[%s14 + $0x12c] sm:$0xf]
    %v3781 = vld [vmem:[%s14 + $0x130] sm:$0xf]
    %v3782 = vld [vmem:[%s14 + $0x134] sm:$0xf]
    %v3783 = vld [vmem:[%s14 + $0x138] sm:$0xf]
    %v3784 = vld [vmem:[%s14 + $0x13c] sm:$0xf]
    %v3785 = vld [vmem:[%s14 + $0x140] sm:$0xf]
    %v3786 = vld [vmem:[%s14 + $0x144] sm:$0xf]
    %v3787 = vld [vmem:[%s14 + $0x148] sm:$0xf]
    %v3788 = vld [vmem:[%s14 + $0x14c] sm:$0xf]
    %v3789 = vld [vmem:[%s14 + $0x150] sm:$0xf]
    %v3790 = vld [vmem:[%s14 + $0x154] sm:$0xf]
    %v3791 = vld [vmem:[%s14 + $0x158] sm:$0xf]
    %v3792 = vld [vmem:[%s14 + $0x15c] sm:$0xf]
    %v3793 = vld [vmem:[%s14 + $0x160] sm:$0xf]
    %v3794 = vld [vmem:[%s14 + $0x164] sm:$0xf]
    %v3795 = vld [vmem:[%s14 + $0x168] sm:$0xf]
    %v3796 = vld [vmem:[%s14 + $0x16c] sm:$0xf]
    %v3797 = vld [vmem:[%s14 + $0x170] sm:$0xf]
    %v3798 = vld [vmem:[%s14 + $0x174] sm:$0xf]
    %v3799 = vld [vmem:[%s14 + $0x178] sm:$0xf]
    %v3800 = vld [vmem:[%s14 + $0x17c] sm:$0xf]
    %v3801 = vld [vmem:[%s14 + $0x180] sm:$0xf]
    %v3802 = vld [vmem:[%s14 + $0x184] sm:$0xf]
    %v3803 = vld [vmem:[%s14 + $0x188] sm:$0xf]
    %v3804 = vld [vmem:[%s14 + $0x18c] sm:$0xf]
    %v3805 = vld [vmem:[%s14 + $0x190] sm:$0xf]
    %v3806 = vld [vmem:[%s14 + $0x194] sm:$0xf]
    %v3807 = vld [vmem:[%s14 + $0x198] sm:$0xf]
    %v3808 = vld [vmem:[%s14 + $0x19c] sm:$0xf]
    %v3809 = vld [vmem:[%s14 + $0x1a0] sm:$0xf]
    %v3810 = vld [vmem:[%s14 + $0x1a4] sm:$0xf]
    %v3811 = vld [vmem:[%s14 + $0x1a8] sm:$0xf]
    %v3812 = vld [vmem:[%s14 + $0x1ac] sm:$0xf]
    %v3813 = vld [vmem:[%s14 + $0x1b0] sm:$0xf]
    %v3814 = vld [vmem:[%s14 + $0x1b4] sm:$0xf]
    %v3815 = vld [vmem:[%s14 + $0x1b8] sm:$0xf]
    %v3816 = vld [vmem:[%s14 + $0x1bc] sm:$0xf]
    %v3817 = vld [vmem:[%s14 + $0x1c0] sm:$0xf]
    %v3818 = vld [vmem:[%s14 + $0x1c4] sm:$0xf]
    %v3819 = vld [vmem:[%s14 + $0x1c8] sm:$0xf]
    %v3820 = vld [vmem:[%s14 + $0x1cc] sm:$0xf]
    %v3821 = vld [vmem:[%s14 + $0x1d0] sm:$0xf]
    %v3822 = vld [vmem:[%s14 + $0x1d4] sm:$0xf]
    %v3823 = vld [vmem:[%s14 + $0x1d8] sm:$0xf]
    %v3824 = vld [vmem:[%s14 + $0x1dc] sm:$0xf]
    %v3825 = vld [vmem:[%s14 + $0x1e0] sm:$0xf]
    %v3826 = vld [vmem:[%s14 + $0x1e4] sm:$0xf]
    %v3827 = vld [vmem:[%s14 + $0x1e8] sm:$0xf]
    %v3828 = vld [vmem:[%s14 + $0x1ec] sm:$0xf]
    %v3829 = vld [vmem:[%s14 + $0x1f0] sm:$0xf]
    %v3830 = vld [vmem:[%s14 + $0x1f4] sm:$0xf]
    %v3831 = vld [vmem:[%s14 + $0x1f8] sm:$0xf]
    %v3832 = vld [vmem:[%s14 + $0x1fc] sm:$0xf]
    %v3897 = vunpack.c.l.b16 %v3769
    %v3898 = vunpack.c.l.b16 %v3770
    %v3899 = vunpack.c.l.b16 %v3771
    %v3900 = vunpack.c.l.b16 %v3772
    %v3901 = vunpack.c.l.b16 %v3773
    %v3902 = vunpack.c.l.b16 %v3774
    %v3903 = vunpack.c.l.b16 %v3775
    %v3904 = vunpack.c.l.b16 %v3776
    %v3905 = vunpack.c.l.b16 %v3777
    %v3906 = vunpack.c.l.b16 %v3778
    %v3907 = vunpack.c.l.b16 %v3779
    %v3908 = vunpack.c.l.b16 %v3780
    %v3909 = vunpack.c.l.b16 %v3781
    %v3910 = vunpack.c.l.b16 %v3782
    %v3911 = vunpack.c.l.b16 %v3783
    %v3912 = vunpack.c.l.b16 %v3784
    %v3913 = vunpack.c.l.b16 %v3785
    %v3914 = vunpack.c.l.b16 %v3786
    %v3915 = vunpack.c.l.b16 %v3787
    %v3916 = vunpack.c.l.b16 %v3788
    %v3917 = vunpack.c.l.b16 %v3789
    %v3918 = vunpack.c.l.b16 %v3790
    %v3919 = vunpack.c.l.b16 %v3791
    %v3920 = vunpack.c.l.b16 %v3792
    %v3921 = vunpack.c.l.b16 %v3793
    %v3922 = vunpack.c.l.b16 %v3794
    %v3923 = vunpack.c.l.b16 %v3795
    %v3924 = vunpack.c.l.b16 %v3796
    %v3925 = vunpack.c.l.b16 %v3797
    %v3926 = vunpack.c.l.b16 %v3798
    %v3927 = vunpack.c.l.b16 %v3799
    %v3928 = vunpack.c.l.b16 %v3800
    %v3929 = vunpack.c.l.b16 %v3801
    %v3930 = vunpack.c.l.b16 %v3802
    %v3931 = vunpack.c.l.b16 %v3803
    %v3932 = vunpack.c.l.b16 %v3804
    %v3933 = vunpack.c.l.b16 %v3805
    %v3934 = vunpack.c.l.b16 %v3806
    %v3935 = vunpack.c.l.b16 %v3807
    %v3936 = vunpack.c.l.b16 %v3808
    %v3937 = vunpack.c.l.b16 %v3809
    %v3938 = vunpack.c.l.b16 %v3810
    %v3939 = vunpack.c.l.b16 %v3811
    %v3940 = vunpack.c.l.b16 %v3812
    %v3941 = vunpack.c.l.b16 %v3813
    %v3942 = vunpack.c.l.b16 %v3814
    %v3943 = vunpack.c.l.b16 %v3815
    %v3944 = vunpack.c.l.b16 %v3816
    %v3945 = vunpack.c.l.b16 %v3817
    %v3946 = vunpack.c.l.b16 %v3818
    %v3947 = vunpack.c.l.b16 %v3819
    %v3948 = vunpack.c.l.b16 %v3820
    %v3949 = vunpack.c.l.b16 %v3821
    %v3950 = vunpack.c.l.b16 %v3822
    %v3951 = vunpack.c.l.b16 %v3823
    %v3952 = vunpack.c.l.b16 %v3824
    %v3953 = vunpack.c.l.b16 %v3825
    %v3954 = vunpack.c.l.b16 %v3826
    %v3955 = vunpack.c.l.b16 %v3827
    %v3956 = vunpack.c.l.b16 %v3828
    %v3957 = vunpack.c.l.b16 %v3829
    %v3958 = vunpack.c.l.b16 %v3830
    %v3959 = vunpack.c.l.b16 %v3831
    %v3960 = vunpack.c.l.b16 %v3832
    %v3961 = vpack.c.b16 %v3898, %v3897
    %v3962 = vpack.c.b16 %v3900, %v3899
    %v3963 = vpack.c.b16 %v3902, %v3901
    %v3964 = vpack.c.b16 %v3904, %v3903
    %v3965 = vpack.c.b16 %v3906, %v3905
    %v3966 = vpack.c.b16 %v3908, %v3907
    %v3967 = vpack.c.b16 %v3910, %v3909
    %v3968 = vpack.c.b16 %v3912, %v3911
    %v3969 = vpack.c.b16 %v3914, %v3913
    %v3970 = vpack.c.b16 %v3916, %v3915
    %v3971 = vpack.c.b16 %v3918, %v3917
    %v3972 = vpack.c.b16 %v3920, %v3919
    %v3973 = vpack.c.b16 %v3922, %v3921
    %v3974 = vpack.c.b16 %v3924, %v3923
    %v3975 = vpack.c.b16 %v3926, %v3925
    %v3976 = vpack.c.b16 %v3928, %v3927
    %v3977 = vpack.c.b16 %v3930, %v3929
    %v3978 = vpack.c.b16 %v3932, %v3931
    %v3979 = vpack.c.b16 %v3934, %v3933
    %v3980 = vpack.c.b16 %v3936, %v3935
    %v3981 = vpack.c.b16 %v3938, %v3937
    %v3982 = vpack.c.b16 %v3940, %v3939
    %v3983 = vpack.c.b16 %v3942, %v3941
    %v3984 = vpack.c.b16 %v3944, %v3943
    %v3985 = vpack.c.b16 %v3946, %v3945
    %v3986 = vpack.c.b16 %v3948, %v3947
    %v3987 = vpack.c.b16 %v3950, %v3949
    %v3988 = vpack.c.b16 %v3952, %v3951
    %v3989 = vpack.c.b16 %v3954, %v3953
    %v3990 = vpack.c.b16 %v3956, %v3955
    %v3991 = vpack.c.b16 %v3958, %v3957
    %v3992 = vpack.c.b16 %v3960, %v3959
    %4025 = vmatpush.bf16.msra.mxu0 %v3968
    %4026 = vmatpush.bf16.msra.mxu0 %v3967
    %4027 = vmatpush.bf16.msra.mxu0 %v3966
    %4028 = vmatpush.bf16.msra.mxu0 %v3965
    %4029 = vmatpush.bf16.msra.mxu0 %v3964
    %4030 = vmatpush.bf16.msra.mxu0 %v3963
    %4031 = vmatpush.bf16.msra.mxu0 %v3962
    %4032 = vmatpush.bf16.msra.mxu0 %v3961
    %4033 = vmatmul.bf16.gmra.mxu0 %v3765
    %v4034 = vpop.f32.mrf.mxu0
    %v4035 = vadd.f32 0.0, %v4034
    %v4036 = vpop.f32.mrf.mxu0
    %v4037 = vadd.f32 0.0, %v4036
    %4038 = vdwg.mxu0
    %4039 = vmatpush.bf16.msra.mxu0 %v3976
    %4040 = vmatpush.bf16.msra.mxu0 %v3975
    %4041 = vmatpush.bf16.msra.mxu0 %v3974
    %4042 = vmatpush.bf16.msra.mxu0 %v3973
    %4043 = vmatpush.bf16.msra.mxu0 %v3972
    %4044 = vmatpush.bf16.msra.mxu0 %v3971
    %4045 = vmatpush.bf16.msra.mxu0 %v3970
    %4046 = vmatpush.bf16.msra.mxu0 %v3969
    %4047 = vmatmul.bf16.gmra.mxu0 %v3766
    %v4048 = vpop.f32.mrf.mxu0
    %v4049 = vadd.f32 %v4035, %v4048
    %v4050 = vpop.f32.mrf.mxu0
    %v4051 = vadd.f32 %v4037, %v4050
    %4052 = vdwg.mxu0
    %4053 = vmatpush.bf16.msra.mxu0 %v3984
    %4054 = vmatpush.bf16.msra.mxu0 %v3983
    %4055 = vmatpush.bf16.msra.mxu0 %v3982
    %4056 = vmatpush.bf16.msra.mxu0 %v3981
    %4057 = vmatpush.bf16.msra.mxu0 %v3980
    %4058 = vmatpush.bf16.msra.mxu0 %v3979
    %4059 = vmatpush.bf16.msra.mxu0 %v3978
    %4060 = vmatpush.bf16.msra.mxu0 %v3977
    %4061 = vmatmul.bf16.gmra.mxu0 %v3767
    %v4062 = vpop.f32.mrf.mxu0
    %v4063 = vadd.f32 %v4049, %v4062
    %v4064 = vpop.f32.mrf.mxu0
    %v4065 = vadd.f32 %v4051, %v4064
    %4066 = vdwg.mxu0
    %4067 = vmatpush.bf16.msra.mxu0 %v3992
    %4068 = vmatpush.bf16.msra.mxu0 %v3991
    %4069 = vmatpush.bf16.msra.mxu0 %v3990
    %4070 = vmatpush.bf16.msra.mxu0 %v3989
    %4071 = vmatpush.bf16.msra.mxu0 %v3988
    %4072 = vmatpush.bf16.msra.mxu0 %v3987
    %4073 = vmatpush.bf16.msra.mxu0 %v3986
    %4074 = vmatpush.bf16.msra.mxu0 %v3985
    %4075 = vmatmul.bf16.gmra.mxu0 %v3768
    %v4076 = vpop.f32.mrf.mxu0
    %v4077 = vadd.f32 %v4063, %v4076
    %v4078 = vpop.f32.mrf.mxu0
    %v4079 = vadd.f32 %v4065, %v4078
    %4080 = vdwg.mxu0
    %v4145 = vunpack.c.l.b16 %v3578
    %v4146 = vunpack.c.l.b16 %v3579
    %v4147 = vunpack.c.l.b16 %v3580
    %v4148 = vunpack.c.l.b16 %v3581
    %v4149 = vunpack.c.l.b16 %v3582
    %v4150 = vunpack.c.l.b16 %v3583
    %v4151 = vunpack.c.l.b16 %v3584
    %v4152 = vunpack.c.l.b16 %v3585
    %v4153 = vunpack.c.l.b16 %v3586
    %v4154 = vunpack.c.l.b16 %v3587
    %v4155 = vunpack.c.l.b16 %v3588
    %v4156 = vunpack.c.l.b16 %v3589
    %v4157 = vunpack.c.l.b16 %v3590
    %v4158 = vunpack.c.l.b16 %v3591
    %v4159 = vunpack.c.l.b16 %v3592
    %v4160 = vunpack.c.l.b16 %v3593
    %v4161 = vunpack.c.l.b16 %v3594
    %v4162 = vunpack.c.l.b16 %v3595
    %v4163 = vunpack.c.l.b16 %v3596
    %v4164 = vunpack.c.l.b16 %v3597
    %v4165 = vunpack.c.l.b16 %v3598
    %v4166 = vunpack.c.l.b16 %v3599
    %v4167 = vunpack.c.l.b16 %v3600
    %v4168 = vunpack.c.l.b16 %v3601
    %v4169 = vunpack.c.l.b16 %v3602
    %v4170 = vunpack.c.l.b16 %v3603
    %v4171 = vunpack.c.l.b16 %v3604
    %v4172 = vunpack.c.l.b16 %v3605
    %v4173 = vunpack.c.l.b16 %v3606
    %v4174 = vunpack.c.l.b16 %v3607
    %v4175 = vunpack.c.l.b16 %v3608
    %v4176 = vunpack.c.l.b16 %v3609
    %v4177 = vunpack.c.l.b16 %v3610
    %v4178 = vunpack.c.l.b16 %v3611
    %v4179 = vunpack.c.l.b16 %v3612
    %v4180 = vunpack.c.l.b16 %v3613
    %v4181 = vunpack.c.l.b16 %v3614
    %v4182 = vunpack.c.l.b16 %v3615
    %v4183 = vunpack.c.l.b16 %v3616
    %v4184 = vunpack.c.l.b16 %v3617
    %v4185 = vunpack.c.l.b16 %v3618
    %v4186 = vunpack.c.l.b16 %v3619
    %v4187 = vunpack.c.l.b16 %v3620
    %v4188 = vunpack.c.l.b16 %v3621
    %v4189 = vunpack.c.l.b16 %v3622
    %v4190 = vunpack.c.l.b16 %v3623
    %v4191 = vunpack.c.l.b16 %v3624
    %v4192 = vunpack.c.l.b16 %v3625
    %v4193 = vunpack.c.l.b16 %v3626
    %v4194 = vunpack.c.l.b16 %v3627
    %v4195 = vunpack.c.l.b16 %v3628
    %v4196 = vunpack.c.l.b16 %v3629
    %v4197 = vunpack.c.l.b16 %v3630
    %v4198 = vunpack.c.l.b16 %v3631
    %v4199 = vunpack.c.l.b16 %v3632
    %v4200 = vunpack.c.l.b16 %v3633
    %v4201 = vunpack.c.l.b16 %v3634
    %v4202 = vunpack.c.l.b16 %v3635
    %v4203 = vunpack.c.l.b16 %v3636
    %v4204 = vunpack.c.l.b16 %v3637
    %v4205 = vunpack.c.l.b16 %v3638
    %v4206 = vunpack.c.l.b16 %v3639
    %v4207 = vunpack.c.l.b16 %v3640
    %v4208 = vunpack.c.l.b16 %v3641
    %v4209 = vpack.c.b16 %v4146, %v4145
    %v4210 = vpack.c.b16 %v4148, %v4147
    %v4211 = vpack.c.b16 %v4150, %v4149
    %v4212 = vpack.c.b16 %v4152, %v4151
    %v4213 = vpack.c.b16 %v4154, %v4153
    %v4214 = vpack.c.b16 %v4156, %v4155
    %v4215 = vpack.c.b16 %v4158, %v4157
    %v4216 = vpack.c.b16 %v4160, %v4159
    %v4217 = vpack.c.b16 %v4162, %v4161
    %v4218 = vpack.c.b16 %v4164, %v4163
    %v4219 = vpack.c.b16 %v4166, %v4165
    %v4220 = vpack.c.b16 %v4168, %v4167
    %v4221 = vpack.c.b16 %v4170, %v4169
    %v4222 = vpack.c.b16 %v4172, %v4171
    %v4223 = vpack.c.b16 %v4174, %v4173
    %v4224 = vpack.c.b16 %v4176, %v4175
    %v4225 = vpack.c.b16 %v4178, %v4177
    %v4226 = vpack.c.b16 %v4180, %v4179
    %v4227 = vpack.c.b16 %v4182, %v4181
    %v4228 = vpack.c.b16 %v4184, %v4183
    %v4229 = vpack.c.b16 %v4186, %v4185
    %v4230 = vpack.c.b16 %v4188, %v4187
    %v4231 = vpack.c.b16 %v4190, %v4189
    %v4232 = vpack.c.b16 %v4192, %v4191
    %v4233 = vpack.c.b16 %v4194, %v4193
    %v4234 = vpack.c.b16 %v4196, %v4195
    %v4235 = vpack.c.b16 %v4198, %v4197
    %v4236 = vpack.c.b16 %v4200, %v4199
    %v4237 = vpack.c.b16 %v4202, %v4201
    %v4238 = vpack.c.b16 %v4204, %v4203
    %v4239 = vpack.c.b16 %v4206, %v4205
    %v4240 = vpack.c.b16 %v4208, %v4207
    %4273 = vmatpush.bf16.msra.mxu0 %v4216
    %4274 = vmatpush.bf16.msra.mxu0 %v4215
    %4275 = vmatpush.bf16.msra.mxu0 %v4214
    %4276 = vmatpush.bf16.msra.mxu0 %v4213
    %4277 = vmatpush.bf16.msra.mxu0 %v4212
    %4278 = vmatpush.bf16.msra.mxu0 %v4211
    %4279 = vmatpush.bf16.msra.mxu0 %v4210
    %4280 = vmatpush.bf16.msra.mxu0 %v4209
    %4281 = vmatmul.bf16.gmra.mxu0 %v3574
    %v4282 = vpop.f32.mrf.mxu0
    %v4283 = vadd.f32 %v4077, %v4282
    %v4284 = vpop.f32.mrf.mxu0
    %v4285 = vadd.f32 %v4079, %v4284
    %4286 = vdwg.mxu0
    %4287 = vmatpush.bf16.msra.mxu0 %v4224
    %4288 = vmatpush.bf16.msra.mxu0 %v4223
    %4289 = vmatpush.bf16.msra.mxu0 %v4222
    %4290 = vmatpush.bf16.msra.mxu0 %v4221
    %4291 = vmatpush.bf16.msra.mxu0 %v4220
    %4292 = vmatpush.bf16.msra.mxu0 %v4219
    %4293 = vmatpush.bf16.msra.mxu0 %v4218
    %4294 = vmatpush.bf16.msra.mxu0 %v4217
    %4295 = vmatmul.bf16.gmra.mxu0 %v3575
    %v4296 = vpop.f32.mrf.mxu0
    %v4297 = vadd.f32 %v4283, %v4296
    %v4298 = vpop.f32.mrf.mxu0
    %v4299 = vadd.f32 %v4285, %v4298
    %4300 = vdwg.mxu0
    %4301 = vmatpush.bf16.msra.mxu0 %v4232
    %4302 = vmatpush.bf16.msra.mxu0 %v4231
    %4303 = vmatpush.bf16.msra.mxu0 %v4230
    %4304 = vmatpush.bf16.msra.mxu0 %v4229
    %4305 = vmatpush.bf16.msra.mxu0 %v4228
    %4306 = vmatpush.bf16.msra.mxu0 %v4227
    %4307 = vmatpush.bf16.msra.mxu0 %v4226
    %4308 = vmatpush.bf16.msra.mxu0 %v4225
    %4309 = vmatmul.bf16.gmra.mxu0 %v3576
    %v4310 = vpop.f32.mrf.mxu0
    %v4311 = vadd.f32 %v4297, %v4310
    %v4312 = vpop.f32.mrf.mxu0
    %v4313 = vadd.f32 %v4299, %v4312
    %4314 = vdwg.mxu0
    %4315 = vmatpush.bf16.msra.mxu0 %v4240
    %4316 = vmatpush.bf16.msra.mxu0 %v4239
    %4317 = vmatpush.bf16.msra.mxu0 %v4238
    %4318 = vmatpush.bf16.msra.mxu0 %v4237
    %4319 = vmatpush.bf16.msra.mxu0 %v4236
    %4320 = vmatpush.bf16.msra.mxu0 %v4235
    %4321 = vmatpush.bf16.msra.mxu0 %v4234
    %4322 = vmatpush.bf16.msra.mxu0 %v4233
    %4323 = vmatmul.bf16.gmra.mxu0 %v3577
    %v4324 = vpop.f32.mrf.mxu0
    %v4325 = vadd.f32 %v4311, %v4324
    %v4326 = vpop.f32.mrf.mxu0
    %v4327 = vadd.f32 %v4313, %v4326
    %4328 = vdwg.mxu0
    %v4329 = vld [vmem:[%s12 + $0x20] sm:$0xff]
    %v4330 = vld [vmem:[%s12 + $0x28] sm:$0xff]
    %v4331 = vld [vmem:[%s12 + $0x60] sm:$0xff]
    %v4332 = vld [vmem:[%s12 + $0x68] sm:$0xff]
    %v4333 = vld [vmem:[%s12 + $0xa0] sm:$0xff]
    %v4334 = vld [vmem:[%s12 + $0xa8] sm:$0xff]
    %v4335 = vld [vmem:[%s12 + $0xe0] sm:$0xff]
    %v4336 = vld [vmem:[%s12 + $0xe8] sm:$0xff]
    %s4337 = scalar_lea.vmem %s13, 16
    %v4338 = vld [vmem:[%s4337] ss:$2 sm:$0xf]
    %v4340 = vperm.slane %v4338, 0
    %v4341 = vperm.slane %v4338, 1
    %v4342 = vperm.slane %v4338, 2
    %v4343 = vperm.slane %v4338, 3
    %v4356 = vunpack.c.l.b16 %v4329
    %v4357 = vunpack.c.h.b16 %v4329
    %v4358 = vunpack.c.l.b16 %v4330
    %v4359 = vunpack.c.h.b16 %v4330
    %v4360 = vunpack.c.l.b16 %v4331
    %v4361 = vunpack.c.h.b16 %v4331
    %v4362 = vunpack.c.l.b16 %v4332
    %v4363 = vunpack.c.h.b16 %v4332
    %v4364 = vunpack.c.l.b16 %v4333
    %v4365 = vunpack.c.h.b16 %v4333
    %v4366 = vunpack.c.l.b16 %v4334
    %v4367 = vunpack.c.h.b16 %v4334
    %v4368 = vunpack.c.l.b16 %v4335
    %v4369 = vunpack.c.h.b16 %v4335
    %v4370 = vunpack.c.l.b16 %v4336
    %v4371 = vunpack.c.h.b16 %v4336
    %v4372 = vpack.c.b16 %v4360, %v4356
    %v4373 = vpack.c.b16 %v4361, %v4357
    %v4374 = vpack.c.b16 %v4362, %v4358
    %v4375 = vpack.c.b16 %v4363, %v4359
    %v4376 = vpack.c.b16 %v4368, %v4364
    %v4377 = vpack.c.b16 %v4369, %v4365
    %v4378 = vpack.c.b16 %v4370, %v4366
    %v4379 = vpack.c.b16 %v4371, %v4367
    %4388 = vmatpush.bf16.msra.mxu0 0
    %4389 = vmatpush.bf16.msra.mxu0 0
    %4390 = vmatpush.bf16.msra.mxu0 0
    %4391 = vmatpush.bf16.msra.mxu0 0
    %4392 = vmatpush.bf16.msra.mxu0 0
    %4393 = vmatpush.bf16.msra.mxu0 0
    %4394 = vmatpush.bf16.msra.mxu0 %v4376
    %4395 = vmatpush.bf16.msra.mxu0 %v4372
    %4396 = vmatmul.bf16.gmra.mxu0 %v3508
    %v4397 = vpop.f32.mrf.mxu0
    %v4398 = vadd.f32 %v4340, %v4397
    %v4399 = vpop.f32.mrf.mxu0
    %v4400 = vadd.f32 %v4340, %v4399
    %4401 = vdwg.mxu0
    %4402 = vmatpush.bf16.msra.mxu0 0
    %4403 = vmatpush.bf16.msra.mxu0 0
    %4404 = vmatpush.bf16.msra.mxu0 0
    %4405 = vmatpush.bf16.msra.mxu0 0
    %4406 = vmatpush.bf16.msra.mxu0 0
    %4407 = vmatpush.bf16.msra.mxu0 0
    %4408 = vmatpush.bf16.msra.mxu0 %v4377
    %4409 = vmatpush.bf16.msra.mxu0 %v4373
    %4410 = vmatmul.bf16.gmra.mxu0 %v3508
    %v4411 = vpop.f32.mrf.mxu0
    %v4412 = vadd.f32 %v4341, %v4411
    %v4413 = vpop.f32.mrf.mxu0
    %v4414 = vadd.f32 %v4341, %v4413
    %4415 = vdwg.mxu0
    %4416 = vmatpush.bf16.msra.mxu0 0
    %4417 = vmatpush.bf16.msra.mxu0 0
    %4418 = vmatpush.bf16.msra.mxu0 0
    %4419 = vmatpush.bf16.msra.mxu0 0
    %4420 = vmatpush.bf16.msra.mxu0 0
    %4421 = vmatpush.bf16.msra.mxu0 0
    %4422 = vmatpush.bf16.msra.mxu0 %v4378
    %4423 = vmatpush.bf16.msra.mxu0 %v4374
    %4424 = vmatmul.bf16.gmra.mxu0 %v3508
    %v4425 = vpop.f32.mrf.mxu0
    %v4426 = vadd.f32 %v4342, %v4425
    %v4427 = vpop.f32.mrf.mxu0
    %v4428 = vadd.f32 %v4342, %v4427
    %4429 = vdwg.mxu0
    %4430 = vmatpush.bf16.msra.mxu0 0
    %4431 = vmatpush.bf16.msra.mxu0 0
    %4432 = vmatpush.bf16.msra.mxu0 0
    %4433 = vmatpush.bf16.msra.mxu0 0
    %4434 = vmatpush.bf16.msra.mxu0 0
    %4435 = vmatpush.bf16.msra.mxu0 0
    %4436 = vmatpush.bf16.msra.mxu0 %v4379
    %4437 = vmatpush.bf16.msra.mxu0 %v4375
    %4438 = vmatmul.bf16.gmra.mxu0 %v3508
    %v4439 = vpop.f32.mrf.mxu0
    %v4440 = vadd.f32 %v4343, %v4439
    %v4441 = vpop.f32.mrf.mxu0
    %v4442 = vadd.f32 %v4343, %v4441
    %4443 = vdwg.mxu0
    %v4444 = vmax.f32 %v4398, 0.0
    %v4445 = vmax.f32 %v4412, 0.0
    %v4446 = vmax.f32 %v4426, 0.0
    %v4447 = vmax.f32 %v4440, 0.0
    %v4448 = vmax.f32 %v4400, 0.0
    %v4449 = vmax.f32 %v4414, 0.0
    %v4450 = vmax.f32 %v4428, 0.0
    %v4451 = vmax.f32 %v4442, 0.0
    %v4452 = vpack.c.bf16 %v4448, %v4444
    %v4453 = vpack.c.bf16 %v4449, %v4445
    %v4454 = vpack.c.bf16 %v4450, %v4446
    %v4455 = vpack.c.bf16 %v4451, %v4447
    %v4456 = vld [vmem:[%s14 + $0x200] sm:$0xf]
    %v4457 = vld [vmem:[%s14 + $0x204] sm:$0xf]
    %v4458 = vld [vmem:[%s14 + $0x208] sm:$0xf]
    %v4459 = vld [vmem:[%s14 + $0x20c] sm:$0xf]
    %v4460 = vld [vmem:[%s14 + $0x210] sm:$0xf]
    %v4461 = vld [vmem:[%s14 + $0x214] sm:$0xf]
    %v4462 = vld [vmem:[%s14 + $0x218] sm:$0xf]
    %v4463 = vld [vmem:[%s14 + $0x21c] sm:$0xf]
    %v4464 = vld [vmem:[%s14 + $0x220] sm:$0xf]
    %v4465 = vld [vmem:[%s14 + $0x224] sm:$0xf]
    %v4466 = vld [vmem:[%s14 + $0x228] sm:$0xf]
    %v4467 = vld [vmem:[%s14 + $0x22c] sm:$0xf]
    %v4468 = vld [vmem:[%s14 + $0x230] sm:$0xf]
    %v4469 = vld [vmem:[%s14 + $0x234] sm:$0xf]
    %v4470 = vld [vmem:[%s14 + $0x238] sm:$0xf]
    %v4471 = vld [vmem:[%s14 + $0x23c] sm:$0xf]
    %v4472 = vld [vmem:[%s14 + $0x240] sm:$0xf]
    %v4473 = vld [vmem:[%s14 + $0x244] sm:$0xf]
    %v4474 = vld [vmem:[%s14 + $0x248] sm:$0xf]
    %v4475 = vld [vmem:[%s14 + $0x24c] sm:$0xf]
    %v4476 = vld [vmem:[%s14 + $0x250] sm:$0xf]
    %v4477 = vld [vmem:[%s14 + $0x254] sm:$0xf]
    %v4478 = vld [vmem:[%s14 + $0x258] sm:$0xf]
    %v4479 = vld [vmem:[%s14 + $0x25c] sm:$0xf]
    %v4480 = vld [vmem:[%s14 + $0x260] sm:$0xf]
    %v4481 = vld [vmem:[%s14 + $0x264] sm:$0xf]
    %v4482 = vld [vmem:[%s14 + $0x268] sm:$0xf]
    %v4483 = vld [vmem:[%s14 + $0x26c] sm:$0xf]
    %v4484 = vld [vmem:[%s14 + $0x270] sm:$0xf]
    %v4485 = vld [vmem:[%s14 + $0x274] sm:$0xf]
    %v4486 = vld [vmem:[%s14 + $0x278] sm:$0xf]
    %v4487 = vld [vmem:[%s14 + $0x27c] sm:$0xf]
    %v4488 = vld [vmem:[%s14 + $0x280] sm:$0xf]
    %v4489 = vld [vmem:[%s14 + $0x284] sm:$0xf]
    %v4490 = vld [vmem:[%s14 + $0x288] sm:$0xf]
    %v4491 = vld [vmem:[%s14 + $0x28c] sm:$0xf]
    %v4492 = vld [vmem:[%s14 + $0x290] sm:$0xf]
    %v4493 = vld [vmem:[%s14 + $0x294] sm:$0xf]
    %v4494 = vld [vmem:[%s14 + $0x298] sm:$0xf]
    %v4495 = vld [vmem:[%s14 + $0x29c] sm:$0xf]
    %v4496 = vld [vmem:[%s14 + $0x2a0] sm:$0xf]
    %v4497 = vld [vmem:[%s14 + $0x2a4] sm:$0xf]
    %v4498 = vld [vmem:[%s14 + $0x2a8] sm:$0xf]
    %v4499 = vld [vmem:[%s14 + $0x2ac] sm:$0xf]
    %v4500 = vld [vmem:[%s14 + $0x2b0] sm:$0xf]
    %v4501 = vld [vmem:[%s14 + $0x2b4] sm:$0xf]
    %v4502 = vld [vmem:[%s14 + $0x2b8] sm:$0xf]
    %v4503 = vld [vmem:[%s14 + $0x2bc] sm:$0xf]
    %v4504 = vld [vmem:[%s14 + $0x2c0] sm:$0xf]
    %v4505 = vld [vmem:[%s14 + $0x2c4] sm:$0xf]
    %v4506 = vld [vmem:[%s14 + $0x2c8] sm:$0xf]
    %v4507 = vld [vmem:[%s14 + $0x2cc] sm:$0xf]
    %v4508 = vld [vmem:[%s14 + $0x2d0] sm:$0xf]
    %v4509 = vld [vmem:[%s14 + $0x2d4] sm:$0xf]
    %v4510 = vld [vmem:[%s14 + $0x2d8] sm:$0xf]
    %v4511 = vld [vmem:[%s14 + $0x2dc] sm:$0xf]
    %v4512 = vld [vmem:[%s14 + $0x2e0] sm:$0xf]
    %v4513 = vld [vmem:[%s14 + $0x2e4] sm:$0xf]
    %v4514 = vld [vmem:[%s14 + $0x2e8] sm:$0xf]
    %v4515 = vld [vmem:[%s14 + $0x2ec] sm:$0xf]
    %v4516 = vld [vmem:[%s14 + $0x2f0] sm:$0xf]
    %v4517 = vld [vmem:[%s14 + $0x2f4] sm:$0xf]
    %v4518 = vld [vmem:[%s14 + $0x2f8] sm:$0xf]
    %v4519 = vld [vmem:[%s14 + $0x2fc] sm:$0xf]
    %v4584 = vunpack.c.l.b16 %v4456
    %v4585 = vunpack.c.l.b16 %v4457
    %v4586 = vunpack.c.l.b16 %v4458
    %v4587 = vunpack.c.l.b16 %v4459
    %v4588 = vunpack.c.l.b16 %v4460
    %v4589 = vunpack.c.l.b16 %v4461
    %v4590 = vunpack.c.l.b16 %v4462
    %v4591 = vunpack.c.l.b16 %v4463
    %v4592 = vunpack.c.l.b16 %v4464
    %v4593 = vunpack.c.l.b16 %v4465
    %v4594 = vunpack.c.l.b16 %v4466
    %v4595 = vunpack.c.l.b16 %v4467
    %v4596 = vunpack.c.l.b16 %v4468
    %v4597 = vunpack.c.l.b16 %v4469
    %v4598 = vunpack.c.l.b16 %v4470
    %v4599 = vunpack.c.l.b16 %v4471
    %v4600 = vunpack.c.l.b16 %v4472
    %v4601 = vunpack.c.l.b16 %v4473
    %v4602 = vunpack.c.l.b16 %v4474
    %v4603 = vunpack.c.l.b16 %v4475
    %v4604 = vunpack.c.l.b16 %v4476
    %v4605 = vunpack.c.l.b16 %v4477
    %v4606 = vunpack.c.l.b16 %v4478
    %v4607 = vunpack.c.l.b16 %v4479
    %v4608 = vunpack.c.l.b16 %v4480
    %v4609 = vunpack.c.l.b16 %v4481
    %v4610 = vunpack.c.l.b16 %v4482
    %v4611 = vunpack.c.l.b16 %v4483
    %v4612 = vunpack.c.l.b16 %v4484
    %v4613 = vunpack.c.l.b16 %v4485
    %v4614 = vunpack.c.l.b16 %v4486
    %v4615 = vunpack.c.l.b16 %v4487
    %v4616 = vunpack.c.l.b16 %v4488
    %v4617 = vunpack.c.l.b16 %v4489
    %v4618 = vunpack.c.l.b16 %v4490
    %v4619 = vunpack.c.l.b16 %v4491
    %v4620 = vunpack.c.l.b16 %v4492
    %v4621 = vunpack.c.l.b16 %v4493
    %v4622 = vunpack.c.l.b16 %v4494
    %v4623 = vunpack.c.l.b16 %v4495
    %v4624 = vunpack.c.l.b16 %v4496
    %v4625 = vunpack.c.l.b16 %v4497
    %v4626 = vunpack.c.l.b16 %v4498
    %v4627 = vunpack.c.l.b16 %v4499
    %v4628 = vunpack.c.l.b16 %v4500
    %v4629 = vunpack.c.l.b16 %v4501
    %v4630 = vunpack.c.l.b16 %v4502
    %v4631 = vunpack.c.l.b16 %v4503
    %v4632 = vunpack.c.l.b16 %v4504
    %v4633 = vunpack.c.l.b16 %v4505
    %v4634 = vunpack.c.l.b16 %v4506
    %v4635 = vunpack.c.l.b16 %v4507
    %v4636 = vunpack.c.l.b16 %v4508
    %v4637 = vunpack.c.l.b16 %v4509
    %v4638 = vunpack.c.l.b16 %v4510
    %v4639 = vunpack.c.l.b16 %v4511
    %v4640 = vunpack.c.l.b16 %v4512
    %v4641 = vunpack.c.l.b16 %v4513
    %v4642 = vunpack.c.l.b16 %v4514
    %v4643 = vunpack.c.l.b16 %v4515
    %v4644 = vunpack.c.l.b16 %v4516
    %v4645 = vunpack.c.l.b16 %v4517
    %v4646 = vunpack.c.l.b16 %v4518
    %v4647 = vunpack.c.l.b16 %v4519
    %v4648 = vpack.c.b16 %v4585, %v4584
    %v4649 = vpack.c.b16 %v4587, %v4586
    %v4650 = vpack.c.b16 %v4589, %v4588
    %v4651 = vpack.c.b16 %v4591, %v4590
    %v4652 = vpack.c.b16 %v4593, %v4592
    %v4653 = vpack.c.b16 %v4595, %v4594
    %v4654 = vpack.c.b16 %v4597, %v4596
    %v4655 = vpack.c.b16 %v4599, %v4598
    %v4656 = vpack.c.b16 %v4601, %v4600
    %v4657 = vpack.c.b16 %v4603, %v4602
    %v4658 = vpack.c.b16 %v4605, %v4604
    %v4659 = vpack.c.b16 %v4607, %v4606
    %v4660 = vpack.c.b16 %v4609, %v4608
    %v4661 = vpack.c.b16 %v4611, %v4610
    %v4662 = vpack.c.b16 %v4613, %v4612
    %v4663 = vpack.c.b16 %v4615, %v4614
    %v4664 = vpack.c.b16 %v4617, %v4616
    %v4665 = vpack.c.b16 %v4619, %v4618
    %v4666 = vpack.c.b16 %v4621, %v4620
    %v4667 = vpack.c.b16 %v4623, %v4622
    %v4668 = vpack.c.b16 %v4625, %v4624
    %v4669 = vpack.c.b16 %v4627, %v4626
    %v4670 = vpack.c.b16 %v4629, %v4628
    %v4671 = vpack.c.b16 %v4631, %v4630
    %v4672 = vpack.c.b16 %v4633, %v4632
    %v4673 = vpack.c.b16 %v4635, %v4634
    %v4674 = vpack.c.b16 %v4637, %v4636
    %v4675 = vpack.c.b16 %v4639, %v4638
    %v4676 = vpack.c.b16 %v4641, %v4640
    %v4677 = vpack.c.b16 %v4643, %v4642
    %v4678 = vpack.c.b16 %v4645, %v4644
    %v4679 = vpack.c.b16 %v4647, %v4646
    %4712 = vmatpush.bf16.msra.mxu0 %v4655
    %4713 = vmatpush.bf16.msra.mxu0 %v4654
    %4714 = vmatpush.bf16.msra.mxu0 %v4653
    %4715 = vmatpush.bf16.msra.mxu0 %v4652
    %4716 = vmatpush.bf16.msra.mxu0 %v4651
    %4717 = vmatpush.bf16.msra.mxu0 %v4650
    %4718 = vmatpush.bf16.msra.mxu0 %v4649
    %4719 = vmatpush.bf16.msra.mxu0 %v4648
    %4720 = vmatmul.bf16.gmra.mxu0 %v4452
    %v4721 = vpop.f32.mrf.mxu0
    %v4722 = vadd.f32 0.0, %v4721
    %v4723 = vpop.f32.mrf.mxu0
    %v4724 = vadd.f32 0.0, %v4723
    %4725 = vdwg.mxu0
    %4726 = vmatpush.bf16.msra.mxu0 %v4663
    %4727 = vmatpush.bf16.msra.mxu0 %v4662
    %4728 = vmatpush.bf16.msra.mxu0 %v4661
    %4729 = vmatpush.bf16.msra.mxu0 %v4660
    %4730 = vmatpush.bf16.msra.mxu0 %v4659
    %4731 = vmatpush.bf16.msra.mxu0 %v4658
    %4732 = vmatpush.bf16.msra.mxu0 %v4657
    %4733 = vmatpush.bf16.msra.mxu0 %v4656
    %4734 = vmatmul.bf16.gmra.mxu0 %v4453
    %v4735 = vpop.f32.mrf.mxu0
    %v4736 = vadd.f32 %v4722, %v4735
    %v4737 = vpop.f32.mrf.mxu0
    %v4738 = vadd.f32 %v4724, %v4737
    %4739 = vdwg.mxu0
    %4740 = vmatpush.bf16.msra.mxu0 %v4671
    %4741 = vmatpush.bf16.msra.mxu0 %v4670
    %4742 = vmatpush.bf16.msra.mxu0 %v4669
    %4743 = vmatpush.bf16.msra.mxu0 %v4668
    %4744 = vmatpush.bf16.msra.mxu0 %v4667
    %4745 = vmatpush.bf16.msra.mxu0 %v4666
    %4746 = vmatpush.bf16.msra.mxu0 %v4665
    %4747 = vmatpush.bf16.msra.mxu0 %v4664
    %4748 = vmatmul.bf16.gmra.mxu0 %v4454
    %v4749 = vpop.f32.mrf.mxu0
    %v4750 = vadd.f32 %v4736, %v4749
    %v4751 = vpop.f32.mrf.mxu0
    %v4752 = vadd.f32 %v4738, %v4751
    %4753 = vdwg.mxu0
    %4754 = vmatpush.bf16.msra.mxu0 %v4679
    %4755 = vmatpush.bf16.msra.mxu0 %v4678
    %4756 = vmatpush.bf16.msra.mxu0 %v4677
    %4757 = vmatpush.bf16.msra.mxu0 %v4676
    %4758 = vmatpush.bf16.msra.mxu0 %v4675
    %4759 = vmatpush.bf16.msra.mxu0 %v4674
    %4760 = vmatpush.bf16.msra.mxu0 %v4673
    %4761 = vmatpush.bf16.msra.mxu0 %v4672
    %4762 = vmatmul.bf16.gmra.mxu0 %v4455
    %v4763 = vpop.f32.mrf.mxu0
    %v4764 = vadd.f32 %v4750, %v4763
    %v4765 = vpop.f32.mrf.mxu0
    %v4766 = vadd.f32 %v4752, %v4765
    %4767 = vdwg.mxu0
    %v4768 = vadd.f32 %v4325, %v4764
    %v4769 = vadd.f32 %v4327, %v4766
    %v4770 = vld [vmem:[%s12 + $0x30] sm:$0xff]
    %v4771 = vld [vmem:[%s12 + $0x38] sm:$0xff]
    %v4772 = vld [vmem:[%s12 + $0x70] sm:$0xff]
    %v4773 = vld [vmem:[%s12 + $0x78] sm:$0xff]
    %v4774 = vld [vmem:[%s12 + $0xb0] sm:$0xff]
    %v4775 = vld [vmem:[%s12 + $0xb8] sm:$0xff]
    %v4776 = vld [vmem:[%s12 + $0xf0] sm:$0xff]
    %v4777 = vld [vmem:[%s12 + $0xf8] sm:$0xff]
    %s4778 = scalar_lea.vmem %s13, 24
    %v4779 = vld [vmem:[%s4778] ss:$2 sm:$0xf]
    %v4781 = vperm.slane %v4779, 0
    %v4782 = vperm.slane %v4779, 1
    %v4783 = vperm.slane %v4779, 2
    %v4784 = vperm.slane %v4779, 3
    %v4797 = vunpack.c.l.b16 %v4770
    %v4798 = vunpack.c.h.b16 %v4770
    %v4799 = vunpack.c.l.b16 %v4771
    %v4800 = vunpack.c.h.b16 %v4771
    %v4801 = vunpack.c.l.b16 %v4772
    %v4802 = vunpack.c.h.b16 %v4772
    %v4803 = vunpack.c.l.b16 %v4773
    %v4804 = vunpack.c.h.b16 %v4773
    %v4805 = vunpack.c.l.b16 %v4774
    %v4806 = vunpack.c.h.b16 %v4774
    %v4807 = vunpack.c.l.b16 %v4775
    %v4808 = vunpack.c.h.b16 %v4775
    %v4809 = vunpack.c.l.b16 %v4776
    %v4810 = vunpack.c.h.b16 %v4776
    %v4811 = vunpack.c.l.b16 %v4777
    %v4812 = vunpack.c.h.b16 %v4777
    %v4813 = vpack.c.b16 %v4801, %v4797
    %v4814 = vpack.c.b16 %v4802, %v4798
    %v4815 = vpack.c.b16 %v4803, %v4799
    %v4816 = vpack.c.b16 %v4804, %v4800
    %v4817 = vpack.c.b16 %v4809, %v4805
    %v4818 = vpack.c.b16 %v4810, %v4806
    %v4819 = vpack.c.b16 %v4811, %v4807
    %v4820 = vpack.c.b16 %v4812, %v4808
    %4829 = vmatpush.bf16.msra.mxu0 0
    %4830 = vmatpush.bf16.msra.mxu0 0
    %4831 = vmatpush.bf16.msra.mxu0 0
    %4832 = vmatpush.bf16.msra.mxu0 0
    %4833 = vmatpush.bf16.msra.mxu0 0
    %4834 = vmatpush.bf16.msra.mxu0 0
    %4835 = vmatpush.bf16.msra.mxu0 %v4817
    %4836 = vmatpush.bf16.msra.mxu0 %v4813
    %4837 = vmatmul.bf16.gmra.mxu0 %v3508
    %v4838 = vpop.f32.mrf.mxu0
    %v4839 = vadd.f32 %v4781, %v4838
    %v4840 = vpop.f32.mrf.mxu0
    %v4841 = vadd.f32 %v4781, %v4840
    %4842 = vdwg.mxu0
    %4843 = vmatpush.bf16.msra.mxu0 0
    %4844 = vmatpush.bf16.msra.mxu0 0
    %4845 = vmatpush.bf16.msra.mxu0 0
    %4846 = vmatpush.bf16.msra.mxu0 0
    %4847 = vmatpush.bf16.msra.mxu0 0
    %4848 = vmatpush.bf16.msra.mxu0 0
    %4849 = vmatpush.bf16.msra.mxu0 %v4818
    %4850 = vmatpush.bf16.msra.mxu0 %v4814
    %4851 = vmatmul.bf16.gmra.mxu0 %v3508
    %v4852 = vpop.f32.mrf.mxu0
    %v4853 = vadd.f32 %v4782, %v4852
    %v4854 = vpop.f32.mrf.mxu0
    %v4855 = vadd.f32 %v4782, %v4854
    %4856 = vdwg.mxu0
    %4857 = vmatpush.bf16.msra.mxu0 0
    %4858 = vmatpush.bf16.msra.mxu0 0
    %4859 = vmatpush.bf16.msra.mxu0 0
    %4860 = vmatpush.bf16.msra.mxu0 0
    %4861 = vmatpush.bf16.msra.mxu0 0
    %4862 = vmatpush.bf16.msra.mxu0 0
    %4863 = vmatpush.bf16.msra.mxu0 %v4819
    %4864 = vmatpush.bf16.msra.mxu0 %v4815
    %4865 = vmatmul.bf16.gmra.mxu0 %v3508
    %v4866 = vpop.f32.mrf.mxu0
    %v4867 = vadd.f32 %v4783, %v4866
    %v4868 = vpop.f32.mrf.mxu0
    %v4869 = vadd.f32 %v4783, %v4868
    %4870 = vdwg.mxu0
    %4871 = vmatpush.bf16.msra.mxu0 0
    %4872 = vmatpush.bf16.msra.mxu0 0
    %4873 = vmatpush.bf16.msra.mxu0 0
    %4874 = vmatpush.bf16.msra.mxu0 0
    %4875 = vmatpush.bf16.msra.mxu0 0
    %4876 = vmatpush.bf16.msra.mxu0 0
    %4877 = vmatpush.bf16.msra.mxu0 %v4820
    %4878 = vmatpush.bf16.msra.mxu0 %v4816
    %4879 = vmatmul.bf16.gmra.mxu0 %v3508
    %v4880 = vpop.f32.mrf.mxu0
    %v4881 = vadd.f32 %v4784, %v4880
    %v4882 = vpop.f32.mrf.mxu0
    %v4883 = vadd.f32 %v4784, %v4882
    %4884 = vdwg.mxu0
    %v4885 = vmax.f32 %v4839, 0.0
    %v4886 = vmax.f32 %v4853, 0.0
    %v4887 = vmax.f32 %v4867, 0.0
    %v4888 = vmax.f32 %v4881, 0.0
    %v4889 = vmax.f32 %v4841, 0.0
    %v4890 = vmax.f32 %v4855, 0.0
    %v4891 = vmax.f32 %v4869, 0.0
    %v4892 = vmax.f32 %v4883, 0.0
    %v4893 = vpack.c.bf16 %v4889, %v4885
    %v4894 = vpack.c.bf16 %v4890, %v4886
    %v4895 = vpack.c.bf16 %v4891, %v4887
    %v4896 = vpack.c.bf16 %v4892, %v4888
    %v4897 = vld [vmem:[%s14 + $0x300] sm:$0xf]
    %v4898 = vld [vmem:[%s14 + $0x304] sm:$0xf]
    %v4899 = vld [vmem:[%s14 + $0x308] sm:$0xf]
    %v4900 = vld [vmem:[%s14 + $0x30c] sm:$0xf]
    %v4901 = vld [vmem:[%s14 + $0x310] sm:$0xf]
    %v4902 = vld [vmem:[%s14 + $0x314] sm:$0xf]
    %v4903 = vld [vmem:[%s14 + $0x318] sm:$0xf]
    %v4904 = vld [vmem:[%s14 + $0x31c] sm:$0xf]
    %v4905 = vld [vmem:[%s14 + $0x320] sm:$0xf]
    %v4906 = vld [vmem:[%s14 + $0x324] sm:$0xf]
    %v4907 = vld [vmem:[%s14 + $0x328] sm:$0xf]
    %v4908 = vld [vmem:[%s14 + $0x32c] sm:$0xf]
    %v4909 = vld [vmem:[%s14 + $0x330] sm:$0xf]
    %v4910 = vld [vmem:[%s14 + $0x334] sm:$0xf]
    %v4911 = vld [vmem:[%s14 + $0x338] sm:$0xf]
    %v4912 = vld [vmem:[%s14 + $0x33c] sm:$0xf]
    %v4913 = vld [vmem:[%s14 + $0x340] sm:$0xf]
    %v4914 = vld [vmem:[%s14 + $0x344] sm:$0xf]
    %v4915 = vld [vmem:[%s14 + $0x348] sm:$0xf]
    %v4916 = vld [vmem:[%s14 + $0x34c] sm:$0xf]
    %v4917 = vld [vmem:[%s14 + $0x350] sm:$0xf]
    %v4918 = vld [vmem:[%s14 + $0x354] sm:$0xf]
    %v4919 = vld [vmem:[%s14 + $0x358] sm:$0xf]
    %v4920 = vld [vmem:[%s14 + $0x35c] sm:$0xf]
    %v4921 = vld [vmem:[%s14 + $0x360] sm:$0xf]
    %v4922 = vld [vmem:[%s14 + $0x364] sm:$0xf]
    %v4923 = vld [vmem:[%s14 + $0x368] sm:$0xf]
    %v4924 = vld [vmem:[%s14 + $0x36c] sm:$0xf]
    %v4925 = vld [vmem:[%s14 + $0x370] sm:$0xf]
    %v4926 = vld [vmem:[%s14 + $0x374] sm:$0xf]
    %v4927 = vld [vmem:[%s14 + $0x378] sm:$0xf]
    %v4928 = vld [vmem:[%s14 + $0x37c] sm:$0xf]
    %v4929 = vld [vmem:[%s14 + $0x380] sm:$0xf]
    %v4930 = vld [vmem:[%s14 + $0x384] sm:$0xf]
    %v4931 = vld [vmem:[%s14 + $0x388] sm:$0xf]
    %v4932 = vld [vmem:[%s14 + $0x38c] sm:$0xf]
    %v4933 = vld [vmem:[%s14 + $0x390] sm:$0xf]
    %v4934 = vld [vmem:[%s14 + $0x394] sm:$0xf]
    %v4935 = vld [vmem:[%s14 + $0x398] sm:$0xf]
    %v4936 = vld [vmem:[%s14 + $0x39c] sm:$0xf]
    %v4937 = vld [vmem:[%s14 + $0x3a0] sm:$0xf]
    %v4938 = vld [vmem:[%s14 + $0x3a4] sm:$0xf]
    %v4939 = vld [vmem:[%s14 + $0x3a8] sm:$0xf]
    %v4940 = vld [vmem:[%s14 + $0x3ac] sm:$0xf]
    %v4941 = vld [vmem:[%s14 + $0x3b0] sm:$0xf]
    %v4942 = vld [vmem:[%s14 + $0x3b4] sm:$0xf]
    %v4943 = vld [vmem:[%s14 + $0x3b8] sm:$0xf]
    %v4944 = vld [vmem:[%s14 + $0x3bc] sm:$0xf]
    %v4945 = vld [vmem:[%s14 + $0x3c0] sm:$0xf]
    %v4946 = vld [vmem:[%s14 + $0x3c4] sm:$0xf]
    %v4947 = vld [vmem:[%s14 + $0x3c8] sm:$0xf]
    %v4948 = vld [vmem:[%s14 + $0x3cc] sm:$0xf]
    %v4949 = vld [vmem:[%s14 + $0x3d0] sm:$0xf]
    %v4950 = vld [vmem:[%s14 + $0x3d4] sm:$0xf]
    %v4951 = vld [vmem:[%s14 + $0x3d8] sm:$0xf]
    %v4952 = vld [vmem:[%s14 + $0x3dc] sm:$0xf]
    %v4953 = vld [vmem:[%s14 + $0x3e0] sm:$0xf]
    %v4954 = vld [vmem:[%s14 + $0x3e4] sm:$0xf]
    %v4955 = vld [vmem:[%s14 + $0x3e8] sm:$0xf]
    %v4956 = vld [vmem:[%s14 + $0x3ec] sm:$0xf]
    %v4957 = vld [vmem:[%s14 + $0x3f0] sm:$0xf]
    %v4958 = vld [vmem:[%s14 + $0x3f4] sm:$0xf]
    %v4959 = vld [vmem:[%s14 + $0x3f8] sm:$0xf]
    %v4960 = vld [vmem:[%s14 + $0x3fc] sm:$0xf]
    %v5025 = vunpack.c.l.b16 %v4897
    %v5026 = vunpack.c.l.b16 %v4898
    %v5027 = vunpack.c.l.b16 %v4899
    %v5028 = vunpack.c.l.b16 %v4900
    %v5029 = vunpack.c.l.b16 %v4901
    %v5030 = vunpack.c.l.b16 %v4902
    %v5031 = vunpack.c.l.b16 %v4903
    %v5032 = vunpack.c.l.b16 %v4904
    %v5033 = vunpack.c.l.b16 %v4905
    %v5034 = vunpack.c.l.b16 %v4906
    %v5035 = vunpack.c.l.b16 %v4907
    %v5036 = vunpack.c.l.b16 %v4908
    %v5037 = vunpack.c.l.b16 %v4909
    %v5038 = vunpack.c.l.b16 %v4910
    %v5039 = vunpack.c.l.b16 %v4911
    %v5040 = vunpack.c.l.b16 %v4912
    %v5041 = vunpack.c.l.b16 %v4913
    %v5042 = vunpack.c.l.b16 %v4914
    %v5043 = vunpack.c.l.b16 %v4915
    %v5044 = vunpack.c.l.b16 %v4916
    %v5045 = vunpack.c.l.b16 %v4917
    %v5046 = vunpack.c.l.b16 %v4918
    %v5047 = vunpack.c.l.b16 %v4919
    %v5048 = vunpack.c.l.b16 %v4920
    %v5049 = vunpack.c.l.b16 %v4921
    %v5050 = vunpack.c.l.b16 %v4922
    %v5051 = vunpack.c.l.b16 %v4923
    %v5052 = vunpack.c.l.b16 %v4924
    %v5053 = vunpack.c.l.b16 %v4925
    %v5054 = vunpack.c.l.b16 %v4926
    %v5055 = vunpack.c.l.b16 %v4927
    %v5056 = vunpack.c.l.b16 %v4928
    %v5057 = vunpack.c.l.b16 %v4929
    %v5058 = vunpack.c.l.b16 %v4930
    %v5059 = vunpack.c.l.b16 %v4931
    %v5060 = vunpack.c.l.b16 %v4932
    %v5061 = vunpack.c.l.b16 %v4933
    %v5062 = vunpack.c.l.b16 %v4934
    %v5063 = vunpack.c.l.b16 %v4935
    %v5064 = vunpack.c.l.b16 %v4936
    %v5065 = vunpack.c.l.b16 %v4937
    %v5066 = vunpack.c.l.b16 %v4938
    %v5067 = vunpack.c.l.b16 %v4939
    %v5068 = vunpack.c.l.b16 %v4940
    %v5069 = vunpack.c.l.b16 %v4941
    %v5070 = vunpack.c.l.b16 %v4942
    %v5071 = vunpack.c.l.b16 %v4943
    %v5072 = vunpack.c.l.b16 %v4944
    %v5073 = vunpack.c.l.b16 %v4945
    %v5074 = vunpack.c.l.b16 %v4946
    %v5075 = vunpack.c.l.b16 %v4947
    %v5076 = vunpack.c.l.b16 %v4948
    %v5077 = vunpack.c.l.b16 %v4949
    %v5078 = vunpack.c.l.b16 %v4950
    %v5079 = vunpack.c.l.b16 %v4951
    %v5080 = vunpack.c.l.b16 %v4952
    %v5081 = vunpack.c.l.b16 %v4953
    %v5082 = vunpack.c.l.b16 %v4954
    %v5083 = vunpack.c.l.b16 %v4955
    %v5084 = vunpack.c.l.b16 %v4956
    %v5085 = vunpack.c.l.b16 %v4957
    %v5086 = vunpack.c.l.b16 %v4958
    %v5087 = vunpack.c.l.b16 %v4959
    %v5088 = vunpack.c.l.b16 %v4960
    %v5089 = vpack.c.b16 %v5026, %v5025
    %v5090 = vpack.c.b16 %v5028, %v5027
    %v5091 = vpack.c.b16 %v5030, %v5029
    %v5092 = vpack.c.b16 %v5032, %v5031
    %v5093 = vpack.c.b16 %v5034, %v5033
    %v5094 = vpack.c.b16 %v5036, %v5035
    %v5095 = vpack.c.b16 %v5038, %v5037
    %v5096 = vpack.c.b16 %v5040, %v5039
    %v5097 = vpack.c.b16 %v5042, %v5041
    %v5098 = vpack.c.b16 %v5044, %v5043
    %v5099 = vpack.c.b16 %v5046, %v5045
    %v5100 = vpack.c.b16 %v5048, %v5047
    %v5101 = vpack.c.b16 %v5050, %v5049
    %v5102 = vpack.c.b16 %v5052, %v5051
    %v5103 = vpack.c.b16 %v5054, %v5053
    %v5104 = vpack.c.b16 %v5056, %v5055
    %v5105 = vpack.c.b16 %v5058, %v5057
    %v5106 = vpack.c.b16 %v5060, %v5059
    %v5107 = vpack.c.b16 %v5062, %v5061
    %v5108 = vpack.c.b16 %v5064, %v5063
    %v5109 = vpack.c.b16 %v5066, %v5065
    %v5110 = vpack.c.b16 %v5068, %v5067
    %v5111 = vpack.c.b16 %v5070, %v5069
    %v5112 = vpack.c.b16 %v5072, %v5071
    %v5113 = vpack.c.b16 %v5074, %v5073
    %v5114 = vpack.c.b16 %v5076, %v5075
    %v5115 = vpack.c.b16 %v5078, %v5077
    %v5116 = vpack.c.b16 %v5080, %v5079
    %v5117 = vpack.c.b16 %v5082, %v5081
    %v5118 = vpack.c.b16 %v5084, %v5083
    %v5119 = vpack.c.b16 %v5086, %v5085
    %v5120 = vpack.c.b16 %v5088, %v5087
    %5153 = vmatpush.bf16.msra.mxu0 %v5096
    %5154 = vmatpush.bf16.msra.mxu0 %v5095
    %5155 = vmatpush.bf16.msra.mxu0 %v5094
    %5156 = vmatpush.bf16.msra.mxu0 %v5093
    %5157 = vmatpush.bf16.msra.mxu0 %v5092
    %5158 = vmatpush.bf16.msra.mxu0 %v5091
    %5159 = vmatpush.bf16.msra.mxu0 %v5090
    %5160 = vmatpush.bf16.msra.mxu0 %v5089
    %5161 = vmatmul.bf16.gmra.mxu0 %v4893
    %v5162 = vpop.f32.mrf.mxu0
    %v5163 = vadd.f32 0.0, %v5162
    %v5164 = vpop.f32.mrf.mxu0
    %v5165 = vadd.f32 0.0, %v5164
    %5166 = vdwg.mxu0
    %5167 = vmatpush.bf16.msra.mxu0 %v5104
    %5168 = vmatpush.bf16.msra.mxu0 %v5103
    %5169 = vmatpush.bf16.msra.mxu0 %v5102
    %5170 = vmatpush.bf16.msra.mxu0 %v5101
    %5171 = vmatpush.bf16.msra.mxu0 %v5100
    %5172 = vmatpush.bf16.msra.mxu0 %v5099
    %5173 = vmatpush.bf16.msra.mxu0 %v5098
    %5174 = vmatpush.bf16.msra.mxu0 %v5097
    %5175 = vmatmul.bf16.gmra.mxu0 %v4894
    %v5176 = vpop.f32.mrf.mxu0
    %v5177 = vadd.f32 %v5163, %v5176
    %v5178 = vpop.f32.mrf.mxu0
    %v5179 = vadd.f32 %v5165, %v5178
    %5180 = vdwg.mxu0
    %5181 = vmatpush.bf16.msra.mxu0 %v5112
    %5182 = vmatpush.bf16.msra.mxu0 %v5111
    %5183 = vmatpush.bf16.msra.mxu0 %v5110
    %5184 = vmatpush.bf16.msra.mxu0 %v5109
    %5185 = vmatpush.bf16.msra.mxu0 %v5108
    %5186 = vmatpush.bf16.msra.mxu0 %v5107
    %5187 = vmatpush.bf16.msra.mxu0 %v5106
    %5188 = vmatpush.bf16.msra.mxu0 %v5105
    %5189 = vmatmul.bf16.gmra.mxu0 %v4895
    %v5190 = vpop.f32.mrf.mxu0
    %v5191 = vadd.f32 %v5177, %v5190
    %v5192 = vpop.f32.mrf.mxu0
    %v5193 = vadd.f32 %v5179, %v5192
    %5194 = vdwg.mxu0
    %5195 = vmatpush.bf16.msra.mxu0 %v5120
    %5196 = vmatpush.bf16.msra.mxu0 %v5119
    %5197 = vmatpush.bf16.msra.mxu0 %v5118
    %5198 = vmatpush.bf16.msra.mxu0 %v5117
    %5199 = vmatpush.bf16.msra.mxu0 %v5116
    %5200 = vmatpush.bf16.msra.mxu0 %v5115
    %5201 = vmatpush.bf16.msra.mxu0 %v5114
    %5202 = vmatpush.bf16.msra.mxu0 %v5113
    %5203 = vmatmul.bf16.gmra.mxu0 %v4896
    %v5204 = vpop.f32.mrf.mxu0
    %v5205 = vadd.f32 %v5191, %v5204
    %v5206 = vpop.f32.mrf.mxu0
    %v5207 = vadd.f32 %v5193, %v5206
    %5208 = vdwg.mxu0
    %v5209 = vadd.f32 %v4768, %v5205
    %v5210 = vadd.f32 %v4769, %v5207
    %v5211 = vld [vmem:[%s15] sm:$0x1]
    %v5212 = vperm.slane %v5211, 0
    %v5213 = vadd.f32 %v5209, %v5212
    %v5214 = vadd.f32 %v5210, %v5212
    %v5217 = vrot.slane %v5213, 2
    %v5218 = vrot.slane %v5213, 4
    %v5219 = vrot.slane %v5213, 6
    %v5220 = vrot.slane %v5214, 2
    %v5221 = vrot.slane %v5214, 4
    %v5222 = vrot.slane %v5214, 6
    %v5229 = vadd.f32 %v3413, %v5213
    %v5230 = vadd.f32 %v3414, %v5217
    %v5231 = vadd.f32 %v3415, %v5218
    %v5232 = vadd.f32 %v3416, %v5219
    %v5233 = vadd.f32 %v3417, %v5214
    %v5234 = vadd.f32 %v3418, %v5220
    %v5235 = vadd.f32 %v3419, %v5221
    %v5236 = vadd.f32 %v3420, %v5222
    %v5237 = vld [vmem:[%s10] sm:$0x1]
    %v5238 = vld [vmem:[%s11] sm:$0x1]
    %5247 = vst [vmem:[#allocation1] ss:$4 sm:$0xff] %v5229
    %s5248 = scalar_lea.vmem [#allocation1], 1
    %5249 = vst [vmem:[%s5248] ss:$4 sm:$0xff] %v5230
    %s5250 = scalar_lea.vmem [#allocation1], 2
    %5251 = vst [vmem:[%s5250] ss:$4 sm:$0xff] %v5231
    %s5252 = scalar_lea.vmem [#allocation1], 3
    %5253 = vst [vmem:[%s5252] ss:$4 sm:$0xff] %v5232
    %s5254 = scalar_lea.vmem [#allocation1], 32
    %5255 = vst [vmem:[%s5254] ss:$4 sm:$0xff] %v5233
    %s5256 = scalar_lea.vmem [#allocation1], 33
    %5257 = vst [vmem:[%s5256] ss:$4 sm:$0xff] %v5234
    %s5258 = scalar_lea.vmem [#allocation1], 34
    %5259 = vst [vmem:[%s5258] ss:$4 sm:$0xff] %v5235
    %s5260 = scalar_lea.vmem [#allocation1], 35
    %5261 = vst [vmem:[%s5260] ss:$4 sm:$0xff] %v5236
    %v5262 = vld.sshfl [vmem:[#allocation1] sm:$0xff pattern:$0x73625140]
    %v5263 = vld.sshfl [vmem:[#allocation1 + $0x20] sm:$0xff pattern:$0x73625140]
    %v5266 = vsel %vm220, %v5262, 0.0
    %5267 = vadd.xlane.f32.xlu0 %v5266
    %v5268 = vpop.xlane.xlu0 %5267
    %v5269 = vsel %vm220, %v5263, 0.0
    %5270 = vadd.xlane.f32.xlu0 %v5269
    %v5271 = vpop.xlane.xlu0 %5270
    %v5272 = vmul.f32 %v5268, %v3221
    %v5273 = vmul.f32 %v5271, %v3221
    %v5277 = vunpack.c.l.s4 269488144
    %v5278 = vunpack.c.0.s8 %v5277
    %v5279 = vperm.slane %v5272, %v5278
    %v5281 = vunpack.c.l.s4 842150450
    %v5282 = vunpack.c.0.s8 %v5281
    %v5283 = vperm.slane %v5272, %v5282
    %v5285 = vunpack.c.l.s4 1414812756
    %v5286 = vunpack.c.0.s8 %v5285
    %v5287 = vperm.slane %v5272, %v5286
    %v5289 = vunpack.c.l.s4 1987475062
    %v5290 = vunpack.c.0.s8 %v5289
    %v5291 = vperm.slane %v5272, %v5290
    %v5293 = vunpack.c.l.s4 269488144
    %v5294 = vunpack.c.0.s8 %v5293
    %v5295 = vperm.slane %v5273, %v5294
    %v5297 = vunpack.c.l.s4 842150450
    %v5298 = vunpack.c.0.s8 %v5297
    %v5299 = vperm.slane %v5273, %v5298
    %v5301 = vunpack.c.l.s4 1414812756
    %v5302 = vunpack.c.0.s8 %v5301
    %v5303 = vperm.slane %v5273, %v5302
    %v5305 = vunpack.c.l.s4 1987475062
    %v5306 = vunpack.c.0.s8 %v5305
    %v5307 = vperm.slane %v5273, %v5306
    %v5316 = vsub.f32 %v5229, %v5279
    %v5317 = vsub.f32 %v5230, %v5283
    %v5318 = vsub.f32 %v5231, %v5287
    %v5319 = vsub.f32 %v5232, %v5291
    %v5320 = vsub.f32 %v5233, %v5295
    %v5321 = vsub.f32 %v5234, %v5299
    %v5322 = vsub.f32 %v5235, %v5303
    %v5323 = vsub.f32 %v5236, %v5307
    %v5324 = vmul.f32 %v5316, %v5316
    %v5325 = vmul.f32 %v5317, %v5317
    %v5326 = vmul.f32 %v5318, %v5318
    %v5327 = vmul.f32 %v5319, %v5319
    %v5328 = vmul.f32 %v5320, %v5320
    %v5329 = vmul.f32 %v5321, %v5321
    %v5330 = vmul.f32 %v5322, %v5322
    %v5331 = vmul.f32 %v5323, %v5323
    %5340 = vst [vmem:[#allocation1] ss:$4 sm:$0xff] %v5324
    %s5341 = scalar_lea.vmem [#allocation1], 1
    %5342 = vst [vmem:[%s5341] ss:$4 sm:$0xff] %v5325
    %s5343 = scalar_lea.vmem [#allocation1], 2
    %5344 = vst [vmem:[%s5343] ss:$4 sm:$0xff] %v5326
    %s5345 = scalar_lea.vmem [#allocation1], 3
    %5346 = vst [vmem:[%s5345] ss:$4 sm:$0xff] %v5327
    %s5347 = scalar_lea.vmem [#allocation1], 32
    %5348 = vst [vmem:[%s5347] ss:$4 sm:$0xff] %v5328
    %s5349 = scalar_lea.vmem [#allocation1], 33
    %5350 = vst [vmem:[%s5349] ss:$4 sm:$0xff] %v5329
    %s5351 = scalar_lea.vmem [#allocation1], 34
    %5352 = vst [vmem:[%s5351] ss:$4 sm:$0xff] %v5330
    %s5353 = scalar_lea.vmem [#allocation1], 35
    %5354 = vst [vmem:[%s5353] ss:$4 sm:$0xff] %v5331
    %v5355 = vld.sshfl [vmem:[#allocation1] sm:$0xff pattern:$0x73625140]
    %v5356 = vld.sshfl [vmem:[#allocation1 + $0x20] sm:$0xff pattern:$0x73625140]
    %v5359 = vsel %vm220, %v5355, 0.0
    %5360 = vadd.xlane.f32.xlu0 %v5359
    %v5361 = vpop.xlane.xlu0 %5360
    %v5362 = vsel %vm220, %v5356, 0.0
    %5363 = vadd.xlane.f32.xlu0 %v5362
    %v5364 = vpop.xlane.xlu0 %5363
    %v5365 = vmul.f32 %v5361, %v3221
    %v5366 = vmul.f32 %v5364, %v3221
    %v5367 = vadd.f32 %v5365, 1e-05
    %v5368 = vadd.f32 %v5366, 1e-05
    %v5369 = vrsqrt.pop %v5367
    %v5370 = vmul.f32 %v5369, %v5367
    %v5371 = vmul.f32 %v5370, %v5369
    %v5372 = vmul.f32 0.5, %v5371
    %v5373 = vsub.f32 1.5, %v5372
    %v5374 = vmul.f32 %v5369, %v5373
    %vm5375 = vweird.f32 %v5367
    %vm5376 = vweird.f32 %v5369
    %vm5377 = vmor %vm5375, %vm5376
    %v5378 = vsel %vm5377, %v5369, %v5374
    %v5379 = vrsqrt.pop %v5368
    %v5380 = vmul.f32 %v5379, %v5368
    %v5381 = vmul.f32 %v5380, %v5379
    %v5382 = vmul.f32 0.5, %v5381
    %v5383 = vsub.f32 1.5, %v5382
    %v5384 = vmul.f32 %v5379, %v5383
    %vm5385 = vweird.f32 %v5368
    %vm5386 = vweird.f32 %v5379
    %vm5387 = vmor %vm5385, %vm5386
    %v5388 = vsel %vm5387, %v5379, %v5384
    %v5392 = vunpack.c.l.s4 269488144
    %v5393 = vunpack.c.0.s8 %v5392
    %v5394 = vperm.slane %v5378, %v5393
    %v5396 = vunpack.c.l.s4 842150450
    %v5397 = vunpack.c.0.s8 %v5396
    %v5398 = vperm.slane %v5378, %v5397
    %v5400 = vunpack.c.l.s4 1414812756
    %v5401 = vunpack.c.0.s8 %v5400
    %v5402 = vperm.slane %v5378, %v5401
    %v5404 = vunpack.c.l.s4 1987475062
    %v5405 = vunpack.c.0.s8 %v5404
    %v5406 = vperm.slane %v5378, %v5405
    %v5408 = vunpack.c.l.s4 269488144
    %v5409 = vunpack.c.0.s8 %v5408
    %v5410 = vperm.slane %v5388, %v5409
    %v5412 = vunpack.c.l.s4 842150450
    %v5413 = vunpack.c.0.s8 %v5412
    %v5414 = vperm.slane %v5388, %v5413
    %v5416 = vunpack.c.l.s4 1414812756
    %v5417 = vunpack.c.0.s8 %v5416
    %v5418 = vperm.slane %v5388, %v5417
    %v5420 = vunpack.c.l.s4 1987475062
    %v5421 = vunpack.c.0.s8 %v5420
    %v5422 = vperm.slane %v5388, %v5421
    %v5431 = vmul.f32 %v5316, %v5394
    %v5432 = vmul.f32 %v5317, %v5398
    %v5433 = vmul.f32 %v5318, %v5402
    %v5434 = vmul.f32 %v5319, %v5406
    %v5435 = vmul.f32 %v5320, %v5410
    %v5436 = vmul.f32 %v5321, %v5414
    %v5437 = vmul.f32 %v5322, %v5418
    %v5438 = vmul.f32 %v5323, %v5422
    %v5439 = vperm.slane %v5237, 0
    %v5441 = vrot.slane %v5439, 2
    %v5442 = vrot.slane %v5439, 4
    %v5443 = vrot.slane %v5439, 6
    %v5447 = vmul.f32 %v5431, %v5439
    %v5448 = vmul.f32 %v5432, %v5441
    %v5449 = vmul.f32 %v5433, %v5442
    %v5450 = vmul.f32 %v5434, %v5443
    %v5451 = vmul.f32 %v5435, %v5439
    %v5452 = vmul.f32 %v5436, %v5441
    %v5453 = vmul.f32 %v5437, %v5442
    %v5454 = vmul.f32 %v5438, %v5443
    %v5455 = vperm.slane %v5238, 0
    %v5457 = vrot.slane %v5455, 2
    %v5458 = vrot.slane %v5455, 4
    %v5459 = vrot.slane %v5455, 6
    %v5463 = vadd.f32 %v5447, %v5455
    %v5464 = vadd.f32 %v5448, %v5457
    %v5465 = vadd.f32 %v5449, %v5458
    %v5466 = vadd.f32 %v5450, %v5459
    %v5467 = vadd.f32 %v5451, %v5455
    %v5468 = vadd.f32 %v5452, %v5457
    %v5469 = vadd.f32 %v5453, %v5458
    %v5470 = vadd.f32 %v5454, %v5459
    %5479 = vst [vmem:[#allocation1] ss:$4 sm:$0xff] %v5463
    %s5480 = scalar_lea.vmem [#allocation1], 1
    %5481 = vst [vmem:[%s5480] ss:$4 sm:$0xff] %v5464
    %s5482 = scalar_lea.vmem [#allocation1], 2
    %5483 = vst [vmem:[%s5482] ss:$4 sm:$0xff] %v5465
    %s5484 = scalar_lea.vmem [#allocation1], 3
    %5485 = vst [vmem:[%s5484] ss:$4 sm:$0xff] %v5466
    %s5486 = scalar_lea.vmem [#allocation1], 32
    %5487 = vst [vmem:[%s5486] ss:$4 sm:$0xff] %v5467
    %s5488 = scalar_lea.vmem [#allocation1], 33
    %5489 = vst [vmem:[%s5488] ss:$4 sm:$0xff] %v5468
    %s5490 = scalar_lea.vmem [#allocation1], 34
    %5491 = vst [vmem:[%s5490] ss:$4 sm:$0xff] %v5469
    %s5492 = scalar_lea.vmem [#allocation1], 35
    %5493 = vst [vmem:[%s5492] ss:$4 sm:$0xff] %v5470
    %v5494 = vld.sshfl [vmem:[#allocation1] sm:$0xff pattern:$0x73625140]
    %v5495 = vld.sshfl [vmem:[#allocation1 + $0x20] sm:$0xff pattern:$0x73625140]
    %v5498 = vpack.c.bf16 %v5495, %v5494
    %s5499 = scalar_lea.vmem %s4, 16
    %v5500 = vld [vmem:[%s5499] sm:$0xf]
    %v5501 = vld [vmem:[%s5499 + $0x4] sm:$0xf]
    %v5502 = vld [vmem:[%s5499 + $0x8] sm:$0xf]
    %v5503 = vld [vmem:[%s5499 + $0xc] sm:$0xf]
    %v5504 = vld [vmem:[%s5 + $0x1] sm:$0x1]
    %v5505 = vperm.slane %v5504, 0
    %v5510 = vunpack.c.l.b16 %v5500
    %v5511 = vunpack.c.l.b16 %v5501
    %v5512 = vunpack.c.l.b16 %v5502
    %v5513 = vunpack.c.l.b16 %v5503
    %v5514 = vpack.c.b16 %v5511, %v5510
    %v5515 = vpack.c.b16 %v5513, %v5512
    %v5519 = vsel %vm220, %v5498, 0
    %5521 = vmatpush.bf16.msra.mxu0 0
    %5522 = vmatpush.bf16.msra.mxu0 0
    %5523 = vmatpush.bf16.msra.mxu0 0
    %5524 = vmatpush.bf16.msra.mxu0 0
    %5525 = vmatpush.bf16.msra.mxu0 0
    %5526 = vmatpush.bf16.msra.mxu0 0
    %5527 = vmatpush.bf16.msra.mxu0 %v5515
    %5528 = vmatpush.bf16.msra.mxu0 %v5514
    %5529 = vmatmul.bf16.gmra.mxu0 %v5519
    %v5530 = vpop.f32.mrf.mxu0
    %v5531 = vadd.f32 %v5505, %v5530
    %v5532 = vpop.f32.mrf.mxu0
    %v5533 = vadd.f32 %v5505, %v5532
    %5534 = vdwg.mxu0
    %v5537 = vrot.slane %v5531, 2
    %v5538 = vrot.slane %v5531, 4
    %v5539 = vrot.slane %v5531, 6
    %v5540 = vrot.slane %v5533, 2
    %v5541 = vrot.slane %v5533, 4
    %v5542 = vrot.slane %v5533, 6
    %5543 = vst [vmem:[#allocation1] ss:$4 sm:$0xff] %v5531
    %v5544 = vld.sshfl [vmem:[#allocation1] sm:$0xff pattern:$0x73625140]
    %5545 = vrot.lane.b32.xlu0 %v5544, 96
    %v5546 = vpop.permute.xlu0 %5545
    %v5547 = vsel %vm250, %v5531, 0
    %v5549 = vsel %vm250, %v5546, 0
    %5551 = vmatpush.xpose.msra.mxu0 0.0
    %5552 = vmatpush.xpose.msra.mxu0 0.0
    %5553 = vmatpush.xpose.msra.mxu0 0.0
    %5554 = vmatpush.xpose.msra.mxu0 0.0
    %5555 = vmatpush.xpose.msra.mxu0 0.0
    %5556 = vmatpush.xpose.msra.mxu0 0.0
    %5557 = vmatpush.xpose.msra.mxu0 0.0
    %5558 = vmatpush.xpose.msra.mxu0 0.0
    %5559 = vmatpush.xpose.msra.mxu0 0.0
    %5560 = vmatpush.xpose.msra.mxu0 0.0
    %5561 = vmatpush.xpose.msra.mxu0 0.0
    %5562 = vmatpush.xpose.msra.mxu0 0.0
    %5563 = vmatpush.xpose.msra.mxu0 0.0
    %5564 = vmatpush.xpose.msra.mxu0 0.0
    %5565 = vmatpush.xpose.msra.mxu0 0.0
    %5566 = vmatpush.xpose.msra.mxu0 %v5549
    %5567 = vmatmul.f32.gmra.mxu0 %v5547
    %v5568 = vpop.f32.mrf.mxu0
    %v5569 = vadd.f32 0.0, %v5568
    %5570 = vdwg.mxu0
    %5571 = vst [vmem:[#allocation1] ss:$4 sm:$0xff] %v5537
    %v5572 = vld.sshfl [vmem:[#allocation1] sm:$0xff pattern:$0x73625140]
    %5573 = vrot.lane.b32.xlu0 %v5572, 96
    %v5574 = vpop.permute.xlu0 %5573
    %v5575 = vsel %vm250, %v5537, 0
    %v5577 = vsel %vm250, %v5574, 0
    %5579 = vmatpush.xpose.msra.mxu0 0.0
    %5580 = vmatpush.xpose.msra.mxu0 0.0
    %5581 = vmatpush.xpose.msra.mxu0 0.0
    %5582 = vmatpush.xpose.msra.mxu0 0.0
    %5583 = vmatpush.xpose.msra.mxu0 0.0
    %5584 = vmatpush.xpose.msra.mxu0 0.0
    %5585 = vmatpush.xpose.msra.mxu0 0.0
    %5586 = vmatpush.xpose.msra.mxu0 0.0
    %5587 = vmatpush.xpose.msra.mxu0 0.0
    %5588 = vmatpush.xpose.msra.mxu0 0.0
    %5589 = vmatpush.xpose.msra.mxu0 0.0
    %5590 = vmatpush.xpose.msra.mxu0 0.0
    %5591 = vmatpush.xpose.msra.mxu0 0.0
    %5592 = vmatpush.xpose.msra.mxu0 0.0
    %5593 = vmatpush.xpose.msra.mxu0 0.0
    %5594 = vmatpush.xpose.msra.mxu0 %v5577
    %5595 = vmatmul.f32.gmra.mxu0 %v5575
    %v5596 = vpop.f32.mrf.mxu0
    %v5597 = vadd.f32 0.0, %v5596
    %5598 = vdwg.mxu0
    %5599 = vst [vmem:[#allocation1] ss:$4 sm:$0xff] %v5538
    %v5600 = vld.sshfl [vmem:[#allocation1] sm:$0xff pattern:$0x73625140]
    %5601 = vrot.lane.b32.xlu0 %v5600, 96
    %v5602 = vpop.permute.xlu0 %5601
    %v5603 = vsel %vm250, %v5538, 0
    %v5605 = vsel %vm250, %v5602, 0
    %5607 = vmatpush.xpose.msra.mxu0 0.0
    %5608 = vmatpush.xpose.msra.mxu0 0.0
    %5609 = vmatpush.xpose.msra.mxu0 0.0
    %5610 = vmatpush.xpose.msra.mxu0 0.0
    %5611 = vmatpush.xpose.msra.mxu0 0.0
    %5612 = vmatpush.xpose.msra.mxu0 0.0
    %5613 = vmatpush.xpose.msra.mxu0 0.0
    %5614 = vmatpush.xpose.msra.mxu0 0.0
    %5615 = vmatpush.xpose.msra.mxu0 0.0
    %5616 = vmatpush.xpose.msra.mxu0 0.0
    %5617 = vmatpush.xpose.msra.mxu0 0.0
    %5618 = vmatpush.xpose.msra.mxu0 0.0
    %5619 = vmatpush.xpose.msra.mxu0 0.0
    %5620 = vmatpush.xpose.msra.mxu0 0.0
    %5621 = vmatpush.xpose.msra.mxu0 0.0
    %5622 = vmatpush.xpose.msra.mxu0 %v5605
    %5623 = vmatmul.f32.gmra.mxu0 %v5603
    %v5624 = vpop.f32.mrf.mxu0
    %v5625 = vadd.f32 0.0, %v5624
    %5626 = vdwg.mxu0
    %5627 = vst [vmem:[#allocation1] ss:$4 sm:$0xff] %v5539
    %v5628 = vld.sshfl [vmem:[#allocation1] sm:$0xff pattern:$0x73625140]
    %5629 = vrot.lane.b32.xlu0 %v5628, 96
    %v5630 = vpop.permute.xlu0 %5629
    %v5631 = vsel %vm250, %v5539, 0
    %v5633 = vsel %vm250, %v5630, 0
    %5635 = vmatpush.xpose.msra.mxu0 0.0
    %5636 = vmatpush.xpose.msra.mxu0 0.0
    %5637 = vmatpush.xpose.msra.mxu0 0.0
    %5638 = vmatpush.xpose.msra.mxu0 0.0
    %5639 = vmatpush.xpose.msra.mxu0 0.0
    %5640 = vmatpush.xpose.msra.mxu0 0.0
    %5641 = vmatpush.xpose.msra.mxu0 0.0
    %5642 = vmatpush.xpose.msra.mxu0 0.0
    %5643 = vmatpush.xpose.msra.mxu0 0.0
    %5644 = vmatpush.xpose.msra.mxu0 0.0
    %5645 = vmatpush.xpose.msra.mxu0 0.0
    %5646 = vmatpush.xpose.msra.mxu0 0.0
    %5647 = vmatpush.xpose.msra.mxu0 0.0
    %5648 = vmatpush.xpose.msra.mxu0 0.0
    %5649 = vmatpush.xpose.msra.mxu0 0.0
    %5650 = vmatpush.xpose.msra.mxu0 %v5633
    %5651 = vmatmul.f32.gmra.mxu0 %v5631
    %v5652 = vpop.f32.mrf.mxu0
    %v5653 = vadd.f32 0.0, %v5652
    %5654 = vdwg.mxu0
    %5655 = vst [vmem:[#allocation1] ss:$4 sm:$0xff] %v5533
    %v5656 = vld.sshfl [vmem:[#allocation1] sm:$0xff pattern:$0x73625140]
    %5657 = vrot.lane.b32.xlu0 %v5656, 96
    %v5658 = vpop.permute.xlu0 %5657
    %v5659 = vsel %vm250, %v5533, 0
    %v5661 = vsel %vm250, %v5658, 0
    %5663 = vmatpush.xpose.msra.mxu0 0.0
    %5664 = vmatpush.xpose.msra.mxu0 0.0
    %5665 = vmatpush.xpose.msra.mxu0 0.0
    %5666 = vmatpush.xpose.msra.mxu0 0.0
    %5667 = vmatpush.xpose.msra.mxu0 0.0
    %5668 = vmatpush.xpose.msra.mxu0 0.0
    %5669 = vmatpush.xpose.msra.mxu0 0.0
    %5670 = vmatpush.xpose.msra.mxu0 0.0
    %5671 = vmatpush.xpose.msra.mxu0 0.0
    %5672 = vmatpush.xpose.msra.mxu0 0.0
    %5673 = vmatpush.xpose.msra.mxu0 0.0
    %5674 = vmatpush.xpose.msra.mxu0 0.0
    %5675 = vmatpush.xpose.msra.mxu0 0.0
    %5676 = vmatpush.xpose.msra.mxu0 0.0
    %5677 = vmatpush.xpose.msra.mxu0 0.0
    %5678 = vmatpush.xpose.msra.mxu0 %v5661
    %5679 = vmatmul.f32.gmra.mxu0 %v5659
    %v5680 = vpop.f32.mrf.mxu0
    %v5681 = vadd.f32 0.0, %v5680
    %5682 = vdwg.mxu0
    %5683 = vst [vmem:[#allocation1] ss:$4 sm:$0xff] %v5540
    %v5684 = vld.sshfl [vmem:[#allocation1] sm:$0xff pattern:$0x73625140]
    %5685 = vrot.lane.b32.xlu0 %v5684, 96
    %v5686 = vpop.permute.xlu0 %5685
    %v5687 = vsel %vm250, %v5540, 0
    %v5689 = vsel %vm250, %v5686, 0
    %5691 = vmatpush.xpose.msra.mxu0 0.0
    %5692 = vmatpush.xpose.msra.mxu0 0.0
    %5693 = vmatpush.xpose.msra.mxu0 0.0
    %5694 = vmatpush.xpose.msra.mxu0 0.0
    %5695 = vmatpush.xpose.msra.mxu0 0.0
    %5696 = vmatpush.xpose.msra.mxu0 0.0
    %5697 = vmatpush.xpose.msra.mxu0 0.0
    %5698 = vmatpush.xpose.msra.mxu0 0.0
    %5699 = vmatpush.xpose.msra.mxu0 0.0
    %5700 = vmatpush.xpose.msra.mxu0 0.0
    %5701 = vmatpush.xpose.msra.mxu0 0.0
    %5702 = vmatpush.xpose.msra.mxu0 0.0
    %5703 = vmatpush.xpose.msra.mxu0 0.0
    %5704 = vmatpush.xpose.msra.mxu0 0.0
    %5705 = vmatpush.xpose.msra.mxu0 0.0
    %5706 = vmatpush.xpose.msra.mxu0 %v5689
    %5707 = vmatmul.f32.gmra.mxu0 %v5687
    %v5708 = vpop.f32.mrf.mxu0
    %v5709 = vadd.f32 0.0, %v5708
    %5710 = vdwg.mxu0
    %5711 = vst [vmem:[#allocation1] ss:$4 sm:$0xff] %v5541
    %v5712 = vld.sshfl [vmem:[#allocation1] sm:$0xff pattern:$0x73625140]
    %5713 = vrot.lane.b32.xlu0 %v5712, 96
    %v5714 = vpop.permute.xlu0 %5713
    %v5715 = vsel %vm250, %v5541, 0
    %v5717 = vsel %vm250, %v5714, 0
    %5719 = vmatpush.xpose.msra.mxu0 0.0
    %5720 = vmatpush.xpose.msra.mxu0 0.0
    %5721 = vmatpush.xpose.msra.mxu0 0.0
    %5722 = vmatpush.xpose.msra.mxu0 0.0
    %5723 = vmatpush.xpose.msra.mxu0 0.0
    %5724 = vmatpush.xpose.msra.mxu0 0.0
    %5725 = vmatpush.xpose.msra.mxu0 0.0
    %5726 = vmatpush.xpose.msra.mxu0 0.0
    %5727 = vmatpush.xpose.msra.mxu0 0.0
    %5728 = vmatpush.xpose.msra.mxu0 0.0
    %5729 = vmatpush.xpose.msra.mxu0 0.0
    %5730 = vmatpush.xpose.msra.mxu0 0.0
    %5731 = vmatpush.xpose.msra.mxu0 0.0
    %5732 = vmatpush.xpose.msra.mxu0 0.0
    %5733 = vmatpush.xpose.msra.mxu0 0.0
    %5734 = vmatpush.xpose.msra.mxu0 %v5717
    %5735 = vmatmul.f32.gmra.mxu0 %v5715
    %v5736 = vpop.f32.mrf.mxu0
    %v5737 = vadd.f32 0.0, %v5736
    %5738 = vdwg.mxu0
    %5739 = vst [vmem:[#allocation1] ss:$4 sm:$0xff] %v5542
    %v5740 = vld.sshfl [vmem:[#allocation1] sm:$0xff pattern:$0x73625140]
    %5741 = vrot.lane.b32.xlu0 %v5740, 96
    %v5742 = vpop.permute.xlu0 %5741
    %v5743 = vsel %vm250, %v5542, 0
    %v5745 = vsel %vm250, %v5742, 0
    %5747 = vmatpush.xpose.msra.mxu0 0.0
    %5748 = vmatpush.xpose.msra.mxu0 0.0
    %5749 = vmatpush.xpose.msra.mxu0 0.0
    %5750 = vmatpush.xpose.msra.mxu0 0.0
    %5751 = vmatpush.xpose.msra.mxu0 0.0
    %5752 = vmatpush.xpose.msra.mxu0 0.0
    %5753 = vmatpush.xpose.msra.mxu0 0.0
    %5754 = vmatpush.xpose.msra.mxu0 0.0
    %5755 = vmatpush.xpose.msra.mxu0 0.0
    %5756 = vmatpush.xpose.msra.mxu0 0.0
    %5757 = vmatpush.xpose.msra.mxu0 0.0
    %5758 = vmatpush.xpose.msra.mxu0 0.0
    %5759 = vmatpush.xpose.msra.mxu0 0.0
    %5760 = vmatpush.xpose.msra.mxu0 0.0
    %5761 = vmatpush.xpose.msra.mxu0 0.0
    %5762 = vmatpush.xpose.msra.mxu0 %v5745
    %5763 = vmatmul.f32.gmra.mxu0 %v5743
    %v5764 = vpop.f32.mrf.mxu0
    %v5765 = vadd.f32 0.0, %v5764
    %5766 = vdwg.mxu0
    %v5767 = vsel %vm471, %v5569, -inf
    %5768 = vmax.xlane.f32.xlu0 %v5767
    %v5769 = vpop.xlane.xlu0 %5768
    %v5770 = vsel %vm471, %v5597, -inf
    %5771 = vmax.xlane.f32.xlu0 %v5770
    %v5772 = vpop.xlane.xlu0 %5771
    %v5773 = vsel %vm471, %v5625, -inf
    %5774 = vmax.xlane.f32.xlu0 %v5773
    %v5775 = vpop.xlane.xlu0 %5774
    %v5776 = vsel %vm471, %v5653, -inf
    %5777 = vmax.xlane.f32.xlu0 %v5776
    %v5778 = vpop.xlane.xlu0 %5777
    %v5779 = vsel %vm471, %v5681, -inf
    %5780 = vmax.xlane.f32.xlu0 %v5779
    %v5781 = vpop.xlane.xlu0 %5780
    %v5782 = vsel %vm471, %v5709, -inf
    %5783 = vmax.xlane.f32.xlu0 %v5782
    %v5784 = vpop.xlane.xlu0 %5783
    %v5785 = vsel %vm471, %v5737, -inf
    %5786 = vmax.xlane.f32.xlu0 %v5785
    %v5787 = vpop.xlane.xlu0 %5786
    %v5788 = vsel %vm471, %v5765, -inf
    %5789 = vmax.xlane.f32.xlu0 %v5788
    %v5790 = vpop.xlane.xlu0 %5789
    %v5791 = vsub.f32 %v5569, %v5769
    %v5792 = vsub.f32 %v5597, %v5772
    %v5793 = vsub.f32 %v5625, %v5775
    %v5794 = vsub.f32 %v5653, %v5778
    %v5795 = vsub.f32 %v5681, %v5781
    %v5796 = vsub.f32 %v5709, %v5784
    %v5797 = vsub.f32 %v5737, %v5787
    %v5798 = vsub.f32 %v5765, %v5790
    %v5799 = vmul.f32 %v5791, 1.442695
    %v5800 = vpow.pop %v5799
    %v5801 = vmul.f32 %v5792, 1.442695
    %v5802 = vpow.pop %v5801
    %v5803 = vmul.f32 %v5793, 1.442695
    %v5804 = vpow.pop %v5803
    %v5805 = vmul.f32 %v5794, 1.442695
    %v5806 = vpow.pop %v5805
    %v5807 = vmul.f32 %v5795, 1.442695
    %v5808 = vpow.pop %v5807
    %v5809 = vmul.f32 %v5796, 1.442695
    %v5810 = vpow.pop %v5809
    %v5811 = vmul.f32 %v5797, 1.442695
    %v5812 = vpow.pop %v5811
    %v5813 = vmul.f32 %v5798, 1.442695
    %v5814 = vpow.pop %v5813
    %v5815 = vsel %vm471, %v5800, 0.0
    %5816 = vadd.xlane.f32.xlu0 %v5815
    %v5817 = vpop.xlane.xlu0 %5816
    %v5818 = vsel %vm471, %v5802, 0.0
    %5819 = vadd.xlane.f32.xlu0 %v5818
    %v5820 = vpop.xlane.xlu0 %5819
    %v5821 = vsel %vm471, %v5804, 0.0
    %5822 = vadd.xlane.f32.xlu0 %v5821
    %v5823 = vpop.xlane.xlu0 %5822
    %v5824 = vsel %vm471, %v5806, 0.0
    %5825 = vadd.xlane.f32.xlu0 %v5824
    %v5826 = vpop.xlane.xlu0 %5825
    %v5827 = vsel %vm471, %v5808, 0.0
    %5828 = vadd.xlane.f32.xlu0 %v5827
    %v5829 = vpop.xlane.xlu0 %5828
    %v5830 = vsel %vm471, %v5810, 0.0
    %5831 = vadd.xlane.f32.xlu0 %v5830
    %v5832 = vpop.xlane.xlu0 %5831
    %v5833 = vsel %vm471, %v5812, 0.0
    %5834 = vadd.xlane.f32.xlu0 %v5833
    %v5835 = vpop.xlane.xlu0 %5834
    %v5836 = vsel %vm471, %v5814, 0.0
    %5837 = vadd.xlane.f32.xlu0 %v5836
    %v5838 = vpop.xlane.xlu0 %5837
    %v5839 = vrcp.pop %v5817
    %v5840 = vmul.f32 %v5817, %v5839
    %v5841 = vsub.f32 1.0, %v5840
    %v5842 = vmul.f32 %v5839, %v5841
    %v5843 = vadd.f32 %v5839, %v5842
    %vm5844 = vweird.f32 %v5817
    %vm5845 = vweird.f32 %v5839
    %vm5846 = vmor %vm5844, %vm5845
    %v5847 = vsel %vm5846, %v5839, %v5843
    %v5848 = vand.u32 2147483647, %v5817
    %vm5849 = vcmp.eq.f32.partialorder %v5848, 8.507059e+37
    %v5850 = vand.u32 %v5817, 2147483648
    %v5851 = vor.u32 1.1754944e-38, %v5850
    %v5852 = vsel %vm5849, %v5851, %v5847
    %v5853 = vmul.f32 %v5800, %v5852
    %v5854 = vrcp.pop %v5820
    %v5855 = vmul.f32 %v5820, %v5854
    %v5856 = vsub.f32 1.0, %v5855
    %v5857 = vmul.f32 %v5854, %v5856
    %v5858 = vadd.f32 %v5854, %v5857
    %vm5859 = vweird.f32 %v5820
    %vm5860 = vweird.f32 %v5854
    %vm5861 = vmor %vm5859, %vm5860
    %v5862 = vsel %vm5861, %v5854, %v5858
    %v5863 = vand.u32 2147483647, %v5820
    %vm5864 = vcmp.eq.f32.partialorder %v5863, 8.507059e+37
    %v5865 = vand.u32 %v5820, 2147483648
    %v5866 = vor.u32 1.1754944e-38, %v5865
    %v5867 = vsel %vm5864, %v5866, %v5862
    %v5868 = vmul.f32 %v5802, %v5867
    %v5869 = vrcp.pop %v5823
    %v5870 = vmul.f32 %v5823, %v5869
    %v5871 = vsub.f32 1.0, %v5870
    %v5872 = vmul.f32 %v5869, %v5871
    %v5873 = vadd.f32 %v5869, %v5872
    %vm5874 = vweird.f32 %v5823
    %vm5875 = vweird.f32 %v5869
    %vm5876 = vmor %vm5874, %vm5875
    %v5877 = vsel %vm5876, %v5869, %v5873
    %v5878 = vand.u32 2147483647, %v5823
    %vm5879 = vcmp.eq.f32.partialorder %v5878, 8.507059e+37
    %v5880 = vand.u32 %v5823, 2147483648
    %v5881 = vor.u32 1.1754944e-38, %v5880
    %v5882 = vsel %vm5879, %v5881, %v5877
    %v5883 = vmul.f32 %v5804, %v5882
    %v5884 = vrcp.pop %v5826
    %v5885 = vmul.f32 %v5826, %v5884
    %v5886 = vsub.f32 1.0, %v5885
    %v5887 = vmul.f32 %v5884, %v5886
    %v5888 = vadd.f32 %v5884, %v5887
    %vm5889 = vweird.f32 %v5826
    %vm5890 = vweird.f32 %v5884
    %vm5891 = vmor %vm5889, %vm5890
    %v5892 = vsel %vm5891, %v5884, %v5888
    %v5893 = vand.u32 2147483647, %v5826
    %vm5894 = vcmp.eq.f32.partialorder %v5893, 8.507059e+37
    %v5895 = vand.u32 %v5826, 2147483648
    %v5896 = vor.u32 1.1754944e-38, %v5895
    %v5897 = vsel %vm5894, %v5896, %v5892
    %v5898 = vmul.f32 %v5806, %v5897
    %v5899 = vrcp.pop %v5829
    %v5900 = vmul.f32 %v5829, %v5899
    %v5901 = vsub.f32 1.0, %v5900
    %v5902 = vmul.f32 %v5899, %v5901
    %v5903 = vadd.f32 %v5899, %v5902
    %vm5904 = vweird.f32 %v5829
    %vm5905 = vweird.f32 %v5899
    %vm5906 = vmor %vm5904, %vm5905
    %v5907 = vsel %vm5906, %v5899, %v5903
    %v5908 = vand.u32 2147483647, %v5829
    %vm5909 = vcmp.eq.f32.partialorder %v5908, 8.507059e+37
    %v5910 = vand.u32 %v5829, 2147483648
    %v5911 = vor.u32 1.1754944e-38, %v5910
    %v5912 = vsel %vm5909, %v5911, %v5907
    %v5913 = vmul.f32 %v5808, %v5912
    %v5914 = vrcp.pop %v5832
    %v5915 = vmul.f32 %v5832, %v5914
    %v5916 = vsub.f32 1.0, %v5915
    %v5917 = vmul.f32 %v5914, %v5916
    %v5918 = vadd.f32 %v5914, %v5917
    %vm5919 = vweird.f32 %v5832
    %vm5920 = vweird.f32 %v5914
    %vm5921 = vmor %vm5919, %vm5920
    %v5922 = vsel %vm5921, %v5914, %v5918
    %v5923 = vand.u32 2147483647, %v5832
    %vm5924 = vcmp.eq.f32.partialorder %v5923, 8.507059e+37
    %v5925 = vand.u32 %v5832, 2147483648
    %v5926 = vor.u32 1.1754944e-38, %v5925
    %v5927 = vsel %vm5924, %v5926, %v5922
    %v5928 = vmul.f32 %v5810, %v5927
    %v5929 = vrcp.pop %v5835
    %v5930 = vmul.f32 %v5835, %v5929
    %v5931 = vsub.f32 1.0, %v5930
    %v5932 = vmul.f32 %v5929, %v5931
    %v5933 = vadd.f32 %v5929, %v5932
    %vm5934 = vweird.f32 %v5835
    %vm5935 = vweird.f32 %v5929
    %vm5936 = vmor %vm5934, %vm5935
    %v5937 = vsel %vm5936, %v5929, %v5933
    %v5938 = vand.u32 2147483647, %v5835
    %vm5939 = vcmp.eq.f32.partialorder %v5938, 8.507059e+37
    %v5940 = vand.u32 %v5835, 2147483648
    %v5941 = vor.u32 1.1754944e-38, %v5940
    %v5942 = vsel %vm5939, %v5941, %v5937
    %v5943 = vmul.f32 %v5812, %v5942
    %v5944 = vrcp.pop %v5838
    %v5945 = vmul.f32 %v5838, %v5944
    %v5946 = vsub.f32 1.0, %v5945
    %v5947 = vmul.f32 %v5944, %v5946
    %v5948 = vadd.f32 %v5944, %v5947
    %vm5949 = vweird.f32 %v5838
    %vm5950 = vweird.f32 %v5944
    %vm5951 = vmor %vm5949, %vm5950
    %v5952 = vsel %vm5951, %v5944, %v5948
    %v5953 = vand.u32 2147483647, %v5838
    %vm5954 = vcmp.eq.f32.partialorder %v5953, 8.507059e+37
    %v5955 = vand.u32 %v5838, 2147483648
    %v5956 = vor.u32 1.1754944e-38, %v5955
    %v5957 = vsel %vm5954, %v5956, %v5952
    %v5958 = vmul.f32 %v5814, %v5957
    %5959 = vst [vmem:[#allocation1] ss:$4 sm:$0xff] %v5531
    %v5960 = vld.sshfl [vmem:[#allocation1] sm:$0xff pattern:$0x73625140]
    %5961 = vrot.lane.b32.xlu0 %v5960, 64
    %v5962 = vpop.permute.xlu0 %5961
    %v5964 = vsel %vm668, %v5853, 0
    %v5966 = vsel %vm672, %v5962, 0
    %5968 = vmatpush.msra.mxu0 0.0
    %5969 = vmatpush.msra.mxu0 0.0
    %5970 = vmatpush.msra.mxu0 0.0
    %5971 = vmatpush.msra.mxu0 0.0
    %5972 = vmatpush.msra.mxu0 0.0
    %5973 = vmatpush.msra.mxu0 0.0
    %5974 = vmatpush.msra.mxu0 0.0
    %5975 = vmatpush.msra.mxu0 0.0
    %5976 = vmatpush.msra.mxu0 0.0
    %5977 = vmatpush.msra.mxu0 0.0
    %5978 = vmatpush.msra.mxu0 0.0
    %5979 = vmatpush.msra.mxu0 0.0
    %5980 = vmatpush.msra.mxu0 0.0
    %5981 = vmatpush.msra.mxu0 0.0
    %5982 = vmatpush.msra.mxu0 0.0
    %5983 = vmatpush.msra.mxu0 %v5966
    %5984 = vmatmul.f32.gmra.mxu0 %v5964
    %v5985 = vpop.f32.mrf.mxu0
    %v5986 = vadd.f32 0.0, %v5985
    %5987 = vdwg.mxu0
    %5988 = vst [vmem:[#allocation1] ss:$4 sm:$0xff] %v5537
    %v5989 = vld.sshfl [vmem:[#allocation1] sm:$0xff pattern:$0x73625140]
    %5990 = vrot.lane.b32.xlu0 %v5989, 64
    %v5991 = vpop.permute.xlu0 %5990
    %v5993 = vsel %vm668, %v5868, 0
    %v5995 = vsel %vm672, %v5991, 0
    %5997 = vmatpush.msra.mxu0 0.0
    %5998 = vmatpush.msra.mxu0 0.0
    %5999 = vmatpush.msra.mxu0 0.0
    %6000 = vmatpush.msra.mxu0 0.0
    %6001 = vmatpush.msra.mxu0 0.0
    %6002 = vmatpush.msra.mxu0 0.0
    %6003 = vmatpush.msra.mxu0 0.0
    %6004 = vmatpush.msra.mxu0 0.0
    %6005 = vmatpush.msra.mxu0 0.0
    %6006 = vmatpush.msra.mxu0 0.0
    %6007 = vmatpush.msra.mxu0 0.0
    %6008 = vmatpush.msra.mxu0 0.0
    %6009 = vmatpush.msra.mxu0 0.0
    %6010 = vmatpush.msra.mxu0 0.0
    %6011 = vmatpush.msra.mxu0 0.0
    %6012 = vmatpush.msra.mxu0 %v5995
    %6013 = vmatmul.f32.gmra.mxu0 %v5993
    %v6014 = vpop.f32.mrf.mxu0
    %v6015 = vadd.f32 0.0, %v6014
    %6016 = vdwg.mxu0
    %6017 = vst [vmem:[#allocation1] ss:$4 sm:$0xff] %v5538
    %v6018 = vld.sshfl [vmem:[#allocation1] sm:$0xff pattern:$0x73625140]
    %6019 = vrot.lane.b32.xlu0 %v6018, 64
    %v6020 = vpop.permute.xlu0 %6019
    %v6022 = vsel %vm668, %v5883, 0
    %v6024 = vsel %vm672, %v6020, 0
    %6026 = vmatpush.msra.mxu0 0.0
    %6027 = vmatpush.msra.mxu0 0.0
    %6028 = vmatpush.msra.mxu0 0.0
    %6029 = vmatpush.msra.mxu0 0.0
    %6030 = vmatpush.msra.mxu0 0.0
    %6031 = vmatpush.msra.mxu0 0.0
    %6032 = vmatpush.msra.mxu0 0.0
    %6033 = vmatpush.msra.mxu0 0.0
    %6034 = vmatpush.msra.mxu0 0.0
    %6035 = vmatpush.msra.mxu0 0.0
    %6036 = vmatpush.msra.mxu0 0.0
    %6037 = vmatpush.msra.mxu0 0.0
    %6038 = vmatpush.msra.mxu0 0.0
    %6039 = vmatpush.msra.mxu0 0.0
    %6040 = vmatpush.msra.mxu0 0.0
    %6041 = vmatpush.msra.mxu0 %v6024
    %6042 = vmatmul.f32.gmra.mxu0 %v6022
    %v6043 = vpop.f32.mrf.mxu0
    %v6044 = vadd.f32 0.0, %v6043
    %6045 = vdwg.mxu0
    %6046 = vst [vmem:[#allocation1] ss:$4 sm:$0xff] %v5539
    %v6047 = vld.sshfl [vmem:[#allocation1] sm:$0xff pattern:$0x73625140]
    %6048 = vrot.lane.b32.xlu0 %v6047, 64
    %v6049 = vpop.permute.xlu0 %6048
    %v6051 = vsel %vm668, %v5898, 0
    %v6053 = vsel %vm672, %v6049, 0
    %6055 = vmatpush.msra.mxu0 0.0
    %6056 = vmatpush.msra.mxu0 0.0
    %6057 = vmatpush.msra.mxu0 0.0
    %6058 = vmatpush.msra.mxu0 0.0
    %6059 = vmatpush.msra.mxu0 0.0
    %6060 = vmatpush.msra.mxu0 0.0
    %6061 = vmatpush.msra.mxu0 0.0
    %6062 = vmatpush.msra.mxu0 0.0
    %6063 = vmatpush.msra.mxu0 0.0
    %6064 = vmatpush.msra.mxu0 0.0
    %6065 = vmatpush.msra.mxu0 0.0
    %6066 = vmatpush.msra.mxu0 0.0
    %6067 = vmatpush.msra.mxu0 0.0
    %6068 = vmatpush.msra.mxu0 0.0
    %6069 = vmatpush.msra.mxu0 0.0
    %6070 = vmatpush.msra.mxu0 %v6053
    %6071 = vmatmul.f32.gmra.mxu0 %v6051
    %v6072 = vpop.f32.mrf.mxu0
    %v6073 = vadd.f32 0.0, %v6072
    %6074 = vdwg.mxu0
    %6075 = vst [vmem:[#allocation1] ss:$4 sm:$0xff] %v5533
    %v6076 = vld.sshfl [vmem:[#allocation1] sm:$0xff pattern:$0x73625140]
    %6077 = vrot.lane.b32.xlu0 %v6076, 64
    %v6078 = vpop.permute.xlu0 %6077
    %v6080 = vsel %vm668, %v5913, 0
    %v6082 = vsel %vm672, %v6078, 0
    %6084 = vmatpush.msra.mxu0 0.0
    %6085 = vmatpush.msra.mxu0 0.0
    %6086 = vmatpush.msra.mxu0 0.0
    %6087 = vmatpush.msra.mxu0 0.0
    %6088 = vmatpush.msra.mxu0 0.0
    %6089 = vmatpush.msra.mxu0 0.0
    %6090 = vmatpush.msra.mxu0 0.0
    %6091 = vmatpush.msra.mxu0 0.0
    %6092 = vmatpush.msra.mxu0 0.0
    %6093 = vmatpush.msra.mxu0 0.0
    %6094 = vmatpush.msra.mxu0 0.0
    %6095 = vmatpush.msra.mxu0 0.0
    %6096 = vmatpush.msra.mxu0 0.0
    %6097 = vmatpush.msra.mxu0 0.0
    %6098 = vmatpush.msra.mxu0 0.0
    %6099 = vmatpush.msra.mxu0 %v6082
    %6100 = vmatmul.f32.gmra.mxu0 %v6080
    %v6101 = vpop.f32.mrf.mxu0
    %v6102 = vadd.f32 0.0, %v6101
    %6103 = vdwg.mxu0
    %6104 = vst [vmem:[#allocation1] ss:$4 sm:$0xff] %v5540
    %v6105 = vld.sshfl [vmem:[#allocation1] sm:$0xff pattern:$0x73625140]
    %6106 = vrot.lane.b32.xlu0 %v6105, 64
    %v6107 = vpop.permute.xlu0 %6106
    %v6109 = vsel %vm668, %v5928, 0
    %v6111 = vsel %vm672, %v6107, 0
    %6113 = vmatpush.msra.mxu0 0.0
    %6114 = vmatpush.msra.mxu0 0.0
    %6115 = vmatpush.msra.mxu0 0.0
    %6116 = vmatpush.msra.mxu0 0.0
    %6117 = vmatpush.msra.mxu0 0.0
    %6118 = vmatpush.msra.mxu0 0.0
    %6119 = vmatpush.msra.mxu0 0.0
    %6120 = vmatpush.msra.mxu0 0.0
    %6121 = vmatpush.msra.mxu0 0.0
    %6122 = vmatpush.msra.mxu0 0.0
    %6123 = vmatpush.msra.mxu0 0.0
    %6124 = vmatpush.msra.mxu0 0.0
    %6125 = vmatpush.msra.mxu0 0.0
    %6126 = vmatpush.msra.mxu0 0.0
    %6127 = vmatpush.msra.mxu0 0.0
    %6128 = vmatpush.msra.mxu0 %v6111
    %6129 = vmatmul.f32.gmra.mxu0 %v6109
    %v6130 = vpop.f32.mrf.mxu0
    %v6131 = vadd.f32 0.0, %v6130
    %6132 = vdwg.mxu0
    %6133 = vst [vmem:[#allocation1] ss:$4 sm:$0xff] %v5541
    %v6134 = vld.sshfl [vmem:[#allocation1] sm:$0xff pattern:$0x73625140]
    %6135 = vrot.lane.b32.xlu0 %v6134, 64
    %v6136 = vpop.permute.xlu0 %6135
    %v6138 = vsel %vm668, %v5943, 0
    %v6140 = vsel %vm672, %v6136, 0
    %6142 = vmatpush.msra.mxu0 0.0
    %6143 = vmatpush.msra.mxu0 0.0
    %6144 = vmatpush.msra.mxu0 0.0
    %6145 = vmatpush.msra.mxu0 0.0
    %6146 = vmatpush.msra.mxu0 0.0
    %6147 = vmatpush.msra.mxu0 0.0
    %6148 = vmatpush.msra.mxu0 0.0
    %6149 = vmatpush.msra.mxu0 0.0
    %6150 = vmatpush.msra.mxu0 0.0
    %6151 = vmatpush.msra.mxu0 0.0
    %6152 = vmatpush.msra.mxu0 0.0
    %6153 = vmatpush.msra.mxu0 0.0
    %6154 = vmatpush.msra.mxu0 0.0
    %6155 = vmatpush.msra.mxu0 0.0
    %6156 = vmatpush.msra.mxu0 0.0
    %6157 = vmatpush.msra.mxu0 %v6140
    %6158 = vmatmul.f32.gmra.mxu0 %v6138
    %v6159 = vpop.f32.mrf.mxu0
    %v6160 = vadd.f32 0.0, %v6159
    %6161 = vdwg.mxu0
    %6162 = vst [vmem:[#allocation1] ss:$4 sm:$0xff] %v5542
    %v6163 = vld.sshfl [vmem:[#allocation1] sm:$0xff pattern:$0x73625140]
    %6164 = vrot.lane.b32.xlu0 %v6163, 64
    %v6165 = vpop.permute.xlu0 %6164
    %v6167 = vsel %vm668, %v5958, 0
    %v6169 = vsel %vm672, %v6165, 0
    %6171 = vmatpush.msra.mxu0 0.0
    %6172 = vmatpush.msra.mxu0 0.0
    %6173 = vmatpush.msra.mxu0 0.0
    %6174 = vmatpush.msra.mxu0 0.0
    %6175 = vmatpush.msra.mxu0 0.0
    %6176 = vmatpush.msra.mxu0 0.0
    %6177 = vmatpush.msra.mxu0 0.0
    %6178 = vmatpush.msra.mxu0 0.0
    %6179 = vmatpush.msra.mxu0 0.0
    %6180 = vmatpush.msra.mxu0 0.0
    %6181 = vmatpush.msra.mxu0 0.0
    %6182 = vmatpush.msra.mxu0 0.0
    %6183 = vmatpush.msra.mxu0 0.0
    %6184 = vmatpush.msra.mxu0 0.0
    %6185 = vmatpush.msra.mxu0 0.0
    %6186 = vmatpush.msra.mxu0 %v6169
    %6187 = vmatmul.f32.gmra.mxu0 %v6167
    %v6188 = vpop.f32.mrf.mxu0
    %v6189 = vadd.f32 0.0, %v6188
    %6190 = vdwg.mxu0
    %s6191 = scalar_lea.vmem %s6, 32
    %v6192 = vld [vmem:[%s6191] sm:$0xff]
    %6193 = vst [vmem:[#allocation1] ss:$4 sm:$0xff] %v5531
    %v6194 = vld.sshfl [vmem:[#allocation1] sm:$0xff pattern:$0x73625140]
    %6195 = vrot.lane.b32.xlu0 %v6194, 120
    %v6196 = vpop.permute.xlu0 %6195
    %6197 = vst [vmem:[#allocation1] ss:$4 sm:$0xff] %v5531
    %v6198 = vld.sshfl [vmem:[#allocation1] sm:$0xff pattern:$0x73625140]
    %6199 = vrot.lane.b32.xlu0 %v6198, 88
    %v6200 = vpop.permute.xlu0 %6199
    %v6201 = vsel %vm250, %v6196, 0
    %v6203 = vsel %vm250, %v6200, 0
    %6205 = vmatpush.xpose.msra.mxu0 0.0
    %6206 = vmatpush.xpose.msra.mxu0 0.0
    %6207 = vmatpush.xpose.msra.mxu0 0.0
    %6208 = vmatpush.xpose.msra.mxu0 0.0
    %6209 = vmatpush.xpose.msra.mxu0 0.0
    %6210 = vmatpush.xpose.msra.mxu0 0.0
    %6211 = vmatpush.xpose.msra.mxu0 0.0
    %6212 = vmatpush.xpose.msra.mxu0 0.0
    %6213 = vmatpush.xpose.msra.mxu0 0.0
    %6214 = vmatpush.xpose.msra.mxu0 0.0
    %6215 = vmatpush.xpose.msra.mxu0 0.0
    %6216 = vmatpush.xpose.msra.mxu0 0.0
    %6217 = vmatpush.xpose.msra.mxu0 0.0
    %6218 = vmatpush.xpose.msra.mxu0 0.0
    %6219 = vmatpush.xpose.msra.mxu0 0.0
    %6220 = vmatpush.xpose.msra.mxu0 %v6203
    %6221 = vmatmul.f32.gmra.mxu0 %v6201
    %v6222 = vpop.f32.mrf.mxu0
    %v6223 = vadd.f32 0.0, %v6222
    %6224 = vdwg.mxu0
    %6225 = vst [vmem:[#allocation1] ss:$4 sm:$0xff] %v5537
    %v6226 = vld.sshfl [vmem:[#allocation1] sm:$0xff pattern:$0x73625140]
    %6227 = vrot.lane.b32.xlu0 %v6226, 120
    %v6228 = vpop.permute.xlu0 %6227
    %6229 = vst [vmem:[#allocation1] ss:$4 sm:$0xff] %v5537
    %v6230 = vld.sshfl [vmem:[#allocation1] sm:$0xff pattern:$0x73625140]
    %6231 = vrot.lane.b32.xlu0 %v6230, 88
    %v6232 = vpop.permute.xlu0 %6231
    %v6233 = vsel %vm250, %v6228, 0
    %v6235 = vsel %vm250, %v6232, 0
    %6237 = vmatpush.xpose.msra.mxu0 0.0
    %6238 = vmatpush.xpose.msra.mxu0 0.0
    %6239 = vmatpush.xpose.msra.mxu0 0.0
    %6240 = vmatpush.xpose.msra.mxu0 0.0
    %6241 = vmatpush.xpose.msra.mxu0 0.0
    %6242 = vmatpush.xpose.msra.mxu0 0.0
    %6243 = vmatpush.xpose.msra.mxu0 0.0
    %6244 = vmatpush.xpose.msra.mxu0 0.0
    %6245 = vmatpush.xpose.msra.mxu0 0.0
    %6246 = vmatpush.xpose.msra.mxu0 0.0
    %6247 = vmatpush.xpose.msra.mxu0 0.0
    %6248 = vmatpush.xpose.msra.mxu0 0.0
    %6249 = vmatpush.xpose.msra.mxu0 0.0
    %6250 = vmatpush.xpose.msra.mxu0 0.0
    %6251 = vmatpush.xpose.msra.mxu0 0.0
    %6252 = vmatpush.xpose.msra.mxu0 %v6235
    %6253 = vmatmul.f32.gmra.mxu0 %v6233
    %v6254 = vpop.f32.mrf.mxu0
    %v6255 = vadd.f32 0.0, %v6254
    %6256 = vdwg.mxu0
    %6257 = vst [vmem:[#allocation1] ss:$4 sm:$0xff] %v5538
    %v6258 = vld.sshfl [vmem:[#allocation1] sm:$0xff pattern:$0x73625140]
    %6259 = vrot.lane.b32.xlu0 %v6258, 120
    %v6260 = vpop.permute.xlu0 %6259
    %6261 = vst [vmem:[#allocation1] ss:$4 sm:$0xff] %v5538
    %v6262 = vld.sshfl [vmem:[#allocation1] sm:$0xff pattern:$0x73625140]
    %6263 = vrot.lane.b32.xlu0 %v6262, 88
    %v6264 = vpop.permute.xlu0 %6263
    %v6265 = vsel %vm250, %v6260, 0
    %v6267 = vsel %vm250, %v6264, 0
    %6269 = vmatpush.xpose.msra.mxu0 0.0
    %6270 = vmatpush.xpose.msra.mxu0 0.0
    %6271 = vmatpush.xpose.msra.mxu0 0.0
    %6272 = vmatpush.xpose.msra.mxu0 0.0
    %6273 = vmatpush.xpose.msra.mxu0 0.0
    %6274 = vmatpush.xpose.msra.mxu0 0.0
    %6275 = vmatpush.xpose.msra.mxu0 0.0
    %6276 = vmatpush.xpose.msra.mxu0 0.0
    %6277 = vmatpush.xpose.msra.mxu0 0.0
    %6278 = vmatpush.xpose.msra.mxu0 0.0
    %6279 = vmatpush.xpose.msra.mxu0 0.0
    %6280 = vmatpush.xpose.msra.mxu0 0.0
    %6281 = vmatpush.xpose.msra.mxu0 0.0
    %6282 = vmatpush.xpose.msra.mxu0 0.0
    %6283 = vmatpush.xpose.msra.mxu0 0.0
    %6284 = vmatpush.xpose.msra.mxu0 %v6267
    %6285 = vmatmul.f32.gmra.mxu0 %v6265
    %v6286 = vpop.f32.mrf.mxu0
    %v6287 = vadd.f32 0.0, %v6286
    %6288 = vdwg.mxu0
    %6289 = vst [vmem:[#allocation1] ss:$4 sm:$0xff] %v5539
    %v6290 = vld.sshfl [vmem:[#allocation1] sm:$0xff pattern:$0x73625140]
    %6291 = vrot.lane.b32.xlu0 %v6290, 120
    %v6292 = vpop.permute.xlu0 %6291
    %6293 = vst [vmem:[#allocation1] ss:$4 sm:$0xff] %v5539
    %v6294 = vld.sshfl [vmem:[#allocation1] sm:$0xff pattern:$0x73625140]
    %6295 = vrot.lane.b32.xlu0 %v6294, 88
    %v6296 = vpop.permute.xlu0 %6295
    %v6297 = vsel %vm250, %v6292, 0
    %v6299 = vsel %vm250, %v6296, 0
    %6301 = vmatpush.xpose.msra.mxu0 0.0
    %6302 = vmatpush.xpose.msra.mxu0 0.0
    %6303 = vmatpush.xpose.msra.mxu0 0.0
    %6304 = vmatpush.xpose.msra.mxu0 0.0
    %6305 = vmatpush.xpose.msra.mxu0 0.0
    %6306 = vmatpush.xpose.msra.mxu0 0.0
    %6307 = vmatpush.xpose.msra.mxu0 0.0
    %6308 = vmatpush.xpose.msra.mxu0 0.0
    %6309 = vmatpush.xpose.msra.mxu0 0.0
    %6310 = vmatpush.xpose.msra.mxu0 0.0
    %6311 = vmatpush.xpose.msra.mxu0 0.0
    %6312 = vmatpush.xpose.msra.mxu0 0.0
    %6313 = vmatpush.xpose.msra.mxu0 0.0
    %6314 = vmatpush.xpose.msra.mxu0 0.0
    %6315 = vmatpush.xpose.msra.mxu0 0.0
    %6316 = vmatpush.xpose.msra.mxu0 %v6299
    %6317 = vmatmul.f32.gmra.mxu0 %v6297
    %v6318 = vpop.f32.mrf.mxu0
    %v6319 = vadd.f32 0.0, %v6318
    %6320 = vdwg.mxu0
    %6321 = vst [vmem:[#allocation1] ss:$4 sm:$0xff] %v5533
    %v6322 = vld.sshfl [vmem:[#allocation1] sm:$0xff pattern:$0x73625140]
    %6323 = vrot.lane.b32.xlu0 %v6322, 120
    %v6324 = vpop.permute.xlu0 %6323
    %6325 = vst [vmem:[#allocation1] ss:$4 sm:$0xff] %v5533
    %v6326 = vld.sshfl [vmem:[#allocation1] sm:$0xff pattern:$0x73625140]
    %6327 = vrot.lane.b32.xlu0 %v6326, 88
    %v6328 = vpop.permute.xlu0 %6327
    %v6329 = vsel %vm250, %v6324, 0
    %v6331 = vsel %vm250, %v6328, 0
    %6333 = vmatpush.xpose.msra.mxu0 0.0
    %6334 = vmatpush.xpose.msra.mxu0 0.0
    %6335 = vmatpush.xpose.msra.mxu0 0.0
    %6336 = vmatpush.xpose.msra.mxu0 0.0
    %6337 = vmatpush.xpose.msra.mxu0 0.0
    %6338 = vmatpush.xpose.msra.mxu0 0.0
    %6339 = vmatpush.xpose.msra.mxu0 0.0
    %6340 = vmatpush.xpose.msra.mxu0 0.0
    %6341 = vmatpush.xpose.msra.mxu0 0.0
    %6342 = vmatpush.xpose.msra.mxu0 0.0
    %6343 = vmatpush.xpose.msra.mxu0 0.0
    %6344 = vmatpush.xpose.msra.mxu0 0.0
    %6345 = vmatpush.xpose.msra.mxu0 0.0
    %6346 = vmatpush.xpose.msra.mxu0 0.0
    %6347 = vmatpush.xpose.msra.mxu0 0.0
    %6348 = vmatpush.xpose.msra.mxu0 %v6331
    %6349 = vmatmul.f32.gmra.mxu0 %v6329
    %v6350 = vpop.f32.mrf.mxu0
    %v6351 = vadd.f32 0.0, %v6350
    %6352 = vdwg.mxu0
    %6353 = vst [vmem:[#allocation1] ss:$4 sm:$0xff] %v5540
    %v6354 = vld.sshfl [vmem:[#allocation1] sm:$0xff pattern:$0x73625140]
    %6355 = vrot.lane.b32.xlu0 %v6354, 120
    %v6356 = vpop.permute.xlu0 %6355
    %6357 = vst [vmem:[#allocation1] ss:$4 sm:$0xff] %v5540
    %v6358 = vld.sshfl [vmem:[#allocation1] sm:$0xff pattern:$0x73625140]
    %6359 = vrot.lane.b32.xlu0 %v6358, 88
    %v6360 = vpop.permute.xlu0 %6359
    %v6361 = vsel %vm250, %v6356, 0
    %v6363 = vsel %vm250, %v6360, 0
    %6365 = vmatpush.xpose.msra.mxu0 0.0
    %6366 = vmatpush.xpose.msra.mxu0 0.0
    %6367 = vmatpush.xpose.msra.mxu0 0.0
    %6368 = vmatpush.xpose.msra.mxu0 0.0
    %6369 = vmatpush.xpose.msra.mxu0 0.0
    %6370 = vmatpush.xpose.msra.mxu0 0.0
    %6371 = vmatpush.xpose.msra.mxu0 0.0
    %6372 = vmatpush.xpose.msra.mxu0 0.0
    %6373 = vmatpush.xpose.msra.mxu0 0.0
    %6374 = vmatpush.xpose.msra.mxu0 0.0
    %6375 = vmatpush.xpose.msra.mxu0 0.0
    %6376 = vmatpush.xpose.msra.mxu0 0.0
    %6377 = vmatpush.xpose.msra.mxu0 0.0
    %6378 = vmatpush.xpose.msra.mxu0 0.0
    %6379 = vmatpush.xpose.msra.mxu0 0.0
    %6380 = vmatpush.xpose.msra.mxu0 %v6363
    %6381 = vmatmul.f32.gmra.mxu0 %v6361
    %v6382 = vpop.f32.mrf.mxu0
    %v6383 = vadd.f32 0.0, %v6382
    %6384 = vdwg.mxu0
    %6385 = vst [vmem:[#allocation1] ss:$4 sm:$0xff] %v5541
    %v6386 = vld.sshfl [vmem:[#allocation1] sm:$0xff pattern:$0x73625140]
    %6387 = vrot.lane.b32.xlu0 %v6386, 120
    %v6388 = vpop.permute.xlu0 %6387
    %6389 = vst [vmem:[#allocation1] ss:$4 sm:$0xff] %v5541
    %v6390 = vld.sshfl [vmem:[#allocation1] sm:$0xff pattern:$0x73625140]
    %6391 = vrot.lane.b32.xlu0 %v6390, 88
    %v6392 = vpop.permute.xlu0 %6391
    %v6393 = vsel %vm250, %v6388, 0
    %v6395 = vsel %vm250, %v6392, 0
    %6397 = vmatpush.xpose.msra.mxu0 0.0
    %6398 = vmatpush.xpose.msra.mxu0 0.0
    %6399 = vmatpush.xpose.msra.mxu0 0.0
    %6400 = vmatpush.xpose.msra.mxu0 0.0
    %6401 = vmatpush.xpose.msra.mxu0 0.0
    %6402 = vmatpush.xpose.msra.mxu0 0.0
    %6403 = vmatpush.xpose.msra.mxu0 0.0
    %6404 = vmatpush.xpose.msra.mxu0 0.0
    %6405 = vmatpush.xpose.msra.mxu0 0.0
    %6406 = vmatpush.xpose.msra.mxu0 0.0
    %6407 = vmatpush.xpose.msra.mxu0 0.0
    %6408 = vmatpush.xpose.msra.mxu0 0.0
    %6409 = vmatpush.xpose.msra.mxu0 0.0
    %6410 = vmatpush.xpose.msra.mxu0 0.0
    %6411 = vmatpush.xpose.msra.mxu0 0.0
    %6412 = vmatpush.xpose.msra.mxu0 %v6395
    %6413 = vmatmul.f32.gmra.mxu0 %v6393
    %v6414 = vpop.f32.mrf.mxu0
    %v6415 = vadd.f32 0.0, %v6414
    %6416 = vdwg.mxu0
    %6417 = vst [vmem:[#allocation1] ss:$4 sm:$0xff] %v5542
    %v6418 = vld.sshfl [vmem:[#allocation1] sm:$0xff pattern:$0x73625140]
    %6419 = vrot.lane.b32.xlu0 %v6418, 120
    %v6420 = vpop.permute.xlu0 %6419
    %6421 = vst [vmem:[#allocation1] ss:$4 sm:$0xff] %v5542
    %v6422 = vld.sshfl [vmem:[#allocation1] sm:$0xff pattern:$0x73625140]
    %6423 = vrot.lane.b32.xlu0 %v6422, 88
    %v6424 = vpop.permute.xlu0 %6423
    %v6425 = vsel %vm250, %v6420, 0
    %v6427 = vsel %vm250, %v6424, 0
    %6429 = vmatpush.xpose.msra.mxu0 0.0
    %6430 = vmatpush.xpose.msra.mxu0 0.0
    %6431 = vmatpush.xpose.msra.mxu0 0.0
    %6432 = vmatpush.xpose.msra.mxu0 0.0
    %6433 = vmatpush.xpose.msra.mxu0 0.0
    %6434 = vmatpush.xpose.msra.mxu0 0.0
    %6435 = vmatpush.xpose.msra.mxu0 0.0
    %6436 = vmatpush.xpose.msra.mxu0 0.0
    %6437 = vmatpush.xpose.msra.mxu0 0.0
    %6438 = vmatpush.xpose.msra.mxu0 0.0
    %6439 = vmatpush.xpose.msra.mxu0 0.0
    %6440 = vmatpush.xpose.msra.mxu0 0.0
    %6441 = vmatpush.xpose.msra.mxu0 0.0
    %6442 = vmatpush.xpose.msra.mxu0 0.0
    %6443 = vmatpush.xpose.msra.mxu0 0.0
    %6444 = vmatpush.xpose.msra.mxu0 %v6427
    %6445 = vmatmul.f32.gmra.mxu0 %v6425
    %v6446 = vpop.f32.mrf.mxu0
    %v6447 = vadd.f32 0.0, %v6446
    %6448 = vdwg.mxu0
    %v6449 = vsel %vm471, %v6223, -inf
    %6450 = vmax.xlane.f32.xlu0 %v6449
    %v6451 = vpop.xlane.xlu0 %6450
    %v6452 = vsel %vm471, %v6255, -inf
    %6453 = vmax.xlane.f32.xlu0 %v6452
    %v6454 = vpop.xlane.xlu0 %6453
    %v6455 = vsel %vm471, %v6287, -inf
    %6456 = vmax.xlane.f32.xlu0 %v6455
    %v6457 = vpop.xlane.xlu0 %6456
    %v6458 = vsel %vm471, %v6319, -inf
    %6459 = vmax.xlane.f32.xlu0 %v6458
    %v6460 = vpop.xlane.xlu0 %6459
    %v6461 = vsel %vm471, %v6351, -inf
    %6462 = vmax.xlane.f32.xlu0 %v6461
    %v6463 = vpop.xlane.xlu0 %6462
    %v6464 = vsel %vm471, %v6383, -inf
    %6465 = vmax.xlane.f32.xlu0 %v6464
    %v6466 = vpop.xlane.xlu0 %6465
    %v6467 = vsel %vm471, %v6415, -inf
    %6468 = vmax.xlane.f32.xlu0 %v6467
    %v6469 = vpop.xlane.xlu0 %6468
    %v6470 = vsel %vm471, %v6447, -inf
    %6471 = vmax.xlane.f32.xlu0 %v6470
    %v6472 = vpop.xlane.xlu0 %6471
    %v6473 = vsub.f32 %v6223, %v6451
    %v6474 = vsub.f32 %v6255, %v6454
    %v6475 = vsub.f32 %v6287, %v6457
    %v6476 = vsub.f32 %v6319, %v6460
    %v6477 = vsub.f32 %v6351, %v6463
    %v6478 = vsub.f32 %v6383, %v6466
    %v6479 = vsub.f32 %v6415, %v6469
    %v6480 = vsub.f32 %v6447, %v6472
    %v6481 = vmul.f32 %v6473, 1.442695
    %v6482 = vpow.pop %v6481
    %v6483 = vmul.f32 %v6474, 1.442695
    %v6484 = vpow.pop %v6483
    %v6485 = vmul.f32 %v6475, 1.442695
    %v6486 = vpow.pop %v6485
    %v6487 = vmul.f32 %v6476, 1.442695
    %v6488 = vpow.pop %v6487
    %v6489 = vmul.f32 %v6477, 1.442695
    %v6490 = vpow.pop %v6489
    %v6491 = vmul.f32 %v6478, 1.442695
    %v6492 = vpow.pop %v6491
    %v6493 = vmul.f32 %v6479, 1.442695
    %v6494 = vpow.pop %v6493
    %v6495 = vmul.f32 %v6480, 1.442695
    %v6496 = vpow.pop %v6495
    %v6497 = vsel %vm471, %v6482, 0.0
    %6498 = vadd.xlane.f32.xlu0 %v6497
    %v6499 = vpop.xlane.xlu0 %6498
    %v6500 = vsel %vm471, %v6484, 0.0
    %6501 = vadd.xlane.f32.xlu0 %v6500
    %v6502 = vpop.xlane.xlu0 %6501
    %v6503 = vsel %vm471, %v6486, 0.0
    %6504 = vadd.xlane.f32.xlu0 %v6503
    %v6505 = vpop.xlane.xlu0 %6504
    %v6506 = vsel %vm471, %v6488, 0.0
    %6507 = vadd.xlane.f32.xlu0 %v6506
    %v6508 = vpop.xlane.xlu0 %6507
    %v6509 = vsel %vm471, %v6490, 0.0
    %6510 = vadd.xlane.f32.xlu0 %v6509
    %v6511 = vpop.xlane.xlu0 %6510
    %v6512 = vsel %vm471, %v6492, 0.0
    %6513 = vadd.xlane.f32.xlu0 %v6512
    %v6514 = vpop.xlane.xlu0 %6513
    %v6515 = vsel %vm471, %v6494, 0.0
    %6516 = vadd.xlane.f32.xlu0 %v6515
    %v6517 = vpop.xlane.xlu0 %6516
    %v6518 = vsel %vm471, %v6496, 0.0
    %6519 = vadd.xlane.f32.xlu0 %v6518
    %v6520 = vpop.xlane.xlu0 %6519
    %v6521 = vrcp.pop %v6499
    %v6522 = vmul.f32 %v6499, %v6521
    %v6523 = vsub.f32 1.0, %v6522
    %v6524 = vmul.f32 %v6521, %v6523
    %v6525 = vadd.f32 %v6521, %v6524
    %vm6526 = vweird.f32 %v6499
    %vm6527 = vweird.f32 %v6521
    %vm6528 = vmor %vm6526, %vm6527
    %v6529 = vsel %vm6528, %v6521, %v6525
    %v6530 = vand.u32 2147483647, %v6499
    %vm6531 = vcmp.eq.f32.partialorder %v6530, 8.507059e+37
    %v6532 = vand.u32 %v6499, 2147483648
    %v6533 = vor.u32 1.1754944e-38, %v6532
    %v6534 = vsel %vm6531, %v6533, %v6529
    %v6535 = vmul.f32 %v6482, %v6534
    %v6536 = vrcp.pop %v6502
    %v6537 = vmul.f32 %v6502, %v6536
    %v6538 = vsub.f32 1.0, %v6537
    %v6539 = vmul.f32 %v6536, %v6538
    %v6540 = vadd.f32 %v6536, %v6539
    %vm6541 = vweird.f32 %v6502
    %vm6542 = vweird.f32 %v6536
    %vm6543 = vmor %vm6541, %vm6542
    %v6544 = vsel %vm6543, %v6536, %v6540
    %v6545 = vand.u32 2147483647, %v6502
    %vm6546 = vcmp.eq.f32.partialorder %v6545, 8.507059e+37
    %v6547 = vand.u32 %v6502, 2147483648
    %v6548 = vor.u32 1.1754944e-38, %v6547
    %v6549 = vsel %vm6546, %v6548, %v6544
    %v6550 = vmul.f32 %v6484, %v6549
    %v6551 = vrcp.pop %v6505
    %v6552 = vmul.f32 %v6505, %v6551
    %v6553 = vsub.f32 1.0, %v6552
    %v6554 = vmul.f32 %v6551, %v6553
    %v6555 = vadd.f32 %v6551, %v6554
    %vm6556 = vweird.f32 %v6505
    %vm6557 = vweird.f32 %v6551
    %vm6558 = vmor %vm6556, %vm6557
    %v6559 = vsel %vm6558, %v6551, %v6555
    %v6560 = vand.u32 2147483647, %v6505
    %vm6561 = vcmp.eq.f32.partialorder %v6560, 8.507059e+37
    %v6562 = vand.u32 %v6505, 2147483648
    %v6563 = vor.u32 1.1754944e-38, %v6562
    %v6564 = vsel %vm6561, %v6563, %v6559
    %v6565 = vmul.f32 %v6486, %v6564
    %v6566 = vrcp.pop %v6508
    %v6567 = vmul.f32 %v6508, %v6566
    %v6568 = vsub.f32 1.0, %v6567
    %v6569 = vmul.f32 %v6566, %v6568
    %v6570 = vadd.f32 %v6566, %v6569
    %vm6571 = vweird.f32 %v6508
    %vm6572 = vweird.f32 %v6566
    %vm6573 = vmor %vm6571, %vm6572
    %v6574 = vsel %vm6573, %v6566, %v6570
    %v6575 = vand.u32 2147483647, %v6508
    %vm6576 = vcmp.eq.f32.partialorder %v6575, 8.507059e+37
    %v6577 = vand.u32 %v6508, 2147483648
    %v6578 = vor.u32 1.1754944e-38, %v6577
    %v6579 = vsel %vm6576, %v6578, %v6574
    %v6580 = vmul.f32 %v6488, %v6579
    %v6581 = vrcp.pop %v6511
    %v6582 = vmul.f32 %v6511, %v6581
    %v6583 = vsub.f32 1.0, %v6582
    %v6584 = vmul.f32 %v6581, %v6583
    %v6585 = vadd.f32 %v6581, %v6584
    %vm6586 = vweird.f32 %v6511
    %vm6587 = vweird.f32 %v6581
    %vm6588 = vmor %vm6586, %vm6587
    %v6589 = vsel %vm6588, %v6581, %v6585
    %v6590 = vand.u32 2147483647, %v6511
    %vm6591 = vcmp.eq.f32.partialorder %v6590, 8.507059e+37
    %v6592 = vand.u32 %v6511, 2147483648
    %v6593 = vor.u32 1.1754944e-38, %v6592
    %v6594 = vsel %vm6591, %v6593, %v6589
    %v6595 = vmul.f32 %v6490, %v6594
    %v6596 = vrcp.pop %v6514
    %v6597 = vmul.f32 %v6514, %v6596
    %v6598 = vsub.f32 1.0, %v6597
    %v6599 = vmul.f32 %v6596, %v6598
    %v6600 = vadd.f32 %v6596, %v6599
    %vm6601 = vweird.f32 %v6514
    %vm6602 = vweird.f32 %v6596
    %vm6603 = vmor %vm6601, %vm6602
    %v6604 = vsel %vm6603, %v6596, %v6600
    %v6605 = vand.u32 2147483647, %v6514
    %vm6606 = vcmp.eq.f32.partialorder %v6605, 8.507059e+37
    %v6607 = vand.u32 %v6514, 2147483648
    %v6608 = vor.u32 1.1754944e-38, %v6607
    %v6609 = vsel %vm6606, %v6608, %v6604
    %v6610 = vmul.f32 %v6492, %v6609
    %v6611 = vrcp.pop %v6517
    %v6612 = vmul.f32 %v6517, %v6611
    %v6613 = vsub.f32 1.0, %v6612
    %v6614 = vmul.f32 %v6611, %v6613
    %v6615 = vadd.f32 %v6611, %v6614
    %vm6616 = vweird.f32 %v6517
    %vm6617 = vweird.f32 %v6611
    %vm6618 = vmor %vm6616, %vm6617
    %v6619 = vsel %vm6618, %v6611, %v6615
    %v6620 = vand.u32 2147483647, %v6517
    %vm6621 = vcmp.eq.f32.partialorder %v6620, 8.507059e+37
    %v6622 = vand.u32 %v6517, 2147483648
    %v6623 = vor.u32 1.1754944e-38, %v6622
    %v6624 = vsel %vm6621, %v6623, %v6619
    %v6625 = vmul.f32 %v6494, %v6624
    %v6626 = vrcp.pop %v6520
    %v6627 = vmul.f32 %v6520, %v6626
    %v6628 = vsub.f32 1.0, %v6627
    %v6629 = vmul.f32 %v6626, %v6628
    %v6630 = vadd.f32 %v6626, %v6629
    %vm6631 = vweird.f32 %v6520
    %vm6632 = vweird.f32 %v6626
    %vm6633 = vmor %vm6631, %vm6632
    %v6634 = vsel %vm6633, %v6626, %v6630
    %v6635 = vand.u32 2147483647, %v6520
    %vm6636 = vcmp.eq.f32.partialorder %v6635, 8.507059e+37
    %v6637 = vand.u32 %v6520, 2147483648
    %v6638 = vor.u32 1.1754944e-38, %v6637
    %v6639 = vsel %vm6636, %v6638, %v6634
    %v6640 = vmul.f32 %v6496, %v6639
    %6641 = vst [vmem:[#allocation1] ss:$4 sm:$0xff] %v5531
    %v6642 = vld.sshfl [vmem:[#allocation1] sm:$0xff pattern:$0x73625140]
    %6643 = vrot.lane.b32.xlu0 %v6642, 56
    %v6644 = vpop.permute.xlu0 %6643
    %v6646 = vsel %vm668, %v6535, 0
    %v6648 = vsel %vm672, %v6644, 0
    %6650 = vmatpush.msra.mxu0 0.0
    %6651 = vmatpush.msra.mxu0 0.0
    %6652 = vmatpush.msra.mxu0 0.0
    %6653 = vmatpush.msra.mxu0 0.0
    %6654 = vmatpush.msra.mxu0 0.0
    %6655 = vmatpush.msra.mxu0 0.0
    %6656 = vmatpush.msra.mxu0 0.0
    %6657 = vmatpush.msra.mxu0 0.0
    %6658 = vmatpush.msra.mxu0 0.0
    %6659 = vmatpush.msra.mxu0 0.0
    %6660 = vmatpush.msra.mxu0 0.0
    %6661 = vmatpush.msra.mxu0 0.0
    %6662 = vmatpush.msra.mxu0 0.0
    %6663 = vmatpush.msra.mxu0 0.0
    %6664 = vmatpush.msra.mxu0 0.0
    %6665 = vmatpush.msra.mxu0 %v6648
    %6666 = vmatmul.f32.gmra.mxu0 %v6646
    %v6667 = vpop.f32.mrf.mxu0
    %v6668 = vadd.f32 0.0, %v6667
    %6669 = vdwg.mxu0
    %6670 = vst [vmem:[#allocation1] ss:$4 sm:$0xff] %v5537
    %v6671 = vld.sshfl [vmem:[#allocation1] sm:$0xff pattern:$0x73625140]
    %6672 = vrot.lane.b32.xlu0 %v6671, 56
    %v6673 = vpop.permute.xlu0 %6672
    %v6675 = vsel %vm668, %v6550, 0
    %v6677 = vsel %vm672, %v6673, 0
    %6679 = vmatpush.msra.mxu0 0.0
    %6680 = vmatpush.msra.mxu0 0.0
    %6681 = vmatpush.msra.mxu0 0.0
    %6682 = vmatpush.msra.mxu0 0.0
    %6683 = vmatpush.msra.mxu0 0.0
    %6684 = vmatpush.msra.mxu0 0.0
    %6685 = vmatpush.msra.mxu0 0.0
    %6686 = vmatpush.msra.mxu0 0.0
    %6687 = vmatpush.msra.mxu0 0.0
    %6688 = vmatpush.msra.mxu0 0.0
    %6689 = vmatpush.msra.mxu0 0.0
    %6690 = vmatpush.msra.mxu0 0.0
    %6691 = vmatpush.msra.mxu0 0.0
    %6692 = vmatpush.msra.mxu0 0.0
    %6693 = vmatpush.msra.mxu0 0.0
    %6694 = vmatpush.msra.mxu0 %v6677
    %6695 = vmatmul.f32.gmra.mxu0 %v6675
    %v6696 = vpop.f32.mrf.mxu0
    %v6697 = vadd.f32 0.0, %v6696
    %6698 = vdwg.mxu0
    %6699 = vst [vmem:[#allocation1] ss:$4 sm:$0xff] %v5538
    %v6700 = vld.sshfl [vmem:[#allocation1] sm:$0xff pattern:$0x73625140]
    %6701 = vrot.lane.b32.xlu0 %v6700, 56
    %v6702 = vpop.permute.xlu0 %6701
    %v6704 = vsel %vm668, %v6565, 0
    %v6706 = vsel %vm672, %v6702, 0
    %6708 = vmatpush.msra.mxu0 0.0
    %6709 = vmatpush.msra.mxu0 0.0
    %6710 = vmatpush.msra.mxu0 0.0
    %6711 = vmatpush.msra.mxu0 0.0
    %6712 = vmatpush.msra.mxu0 0.0
    %6713 = vmatpush.msra.mxu0 0.0
    %6714 = vmatpush.msra.mxu0 0.0
    %6715 = vmatpush.msra.mxu0 0.0
    %6716 = vmatpush.msra.mxu0 0.0
    %6717 = vmatpush.msra.mxu0 0.0
    %6718 = vmatpush.msra.mxu0 0.0
    %6719 = vmatpush.msra.mxu0 0.0
    %6720 = vmatpush.msra.mxu0 0.0
    %6721 = vmatpush.msra.mxu0 0.0
    %6722 = vmatpush.msra.mxu0 0.0
    %6723 = vmatpush.msra.mxu0 %v6706
    %6724 = vmatmul.f32.gmra.mxu0 %v6704
    %v6725 = vpop.f32.mrf.mxu0
    %v6726 = vadd.f32 0.0, %v6725
    %6727 = vdwg.mxu0
    %6728 = vst [vmem:[#allocation1] ss:$4 sm:$0xff] %v5539
    %v6729 = vld.sshfl [vmem:[#allocation1] sm:$0xff pattern:$0x73625140]
    %6730 = vrot.lane.b32.xlu0 %v6729, 56
    %v6731 = vpop.permute.xlu0 %6730
    %v6733 = vsel %vm668, %v6580, 0
    %v6735 = vsel %vm672, %v6731, 0
    %6737 = vmatpush.msra.mxu0 0.0
    %6738 = vmatpush.msra.mxu0 0.0
    %6739 = vmatpush.msra.mxu0 0.0
    %6740 = vmatpush.msra.mxu0 0.0
    %6741 = vmatpush.msra.mxu0 0.0
    %6742 = vmatpush.msra.mxu0 0.0
    %6743 = vmatpush.msra.mxu0 0.0
    %6744 = vmatpush.msra.mxu0 0.0
    %6745 = vmatpush.msra.mxu0 0.0
    %6746 = vmatpush.msra.mxu0 0.0
    %6747 = vmatpush.msra.mxu0 0.0
    %6748 = vmatpush.msra.mxu0 0.0
    %6749 = vmatpush.msra.mxu0 0.0
    %6750 = vmatpush.msra.mxu0 0.0
    %6751 = vmatpush.msra.mxu0 0.0
    %6752 = vmatpush.msra.mxu0 %v6735
    %6753 = vmatmul.f32.gmra.mxu0 %v6733
    %v6754 = vpop.f32.mrf.mxu0
    %v6755 = vadd.f32 0.0, %v6754
    %6756 = vdwg.mxu0
    %6757 = vst [vmem:[#allocation1] ss:$4 sm:$0xff] %v5533
    %v6758 = vld.sshfl [vmem:[#allocation1] sm:$0xff pattern:$0x73625140]
    %6759 = vrot.lane.b32.xlu0 %v6758, 56
    %v6760 = vpop.permute.xlu0 %6759
    %v6762 = vsel %vm668, %v6595, 0
    %v6764 = vsel %vm672, %v6760, 0
    %6766 = vmatpush.msra.mxu0 0.0
    %6767 = vmatpush.msra.mxu0 0.0
    %6768 = vmatpush.msra.mxu0 0.0
    %6769 = vmatpush.msra.mxu0 0.0
    %6770 = vmatpush.msra.mxu0 0.0
    %6771 = vmatpush.msra.mxu0 0.0
    %6772 = vmatpush.msra.mxu0 0.0
    %6773 = vmatpush.msra.mxu0 0.0
    %6774 = vmatpush.msra.mxu0 0.0
    %6775 = vmatpush.msra.mxu0 0.0
    %6776 = vmatpush.msra.mxu0 0.0
    %6777 = vmatpush.msra.mxu0 0.0
    %6778 = vmatpush.msra.mxu0 0.0
    %6779 = vmatpush.msra.mxu0 0.0
    %6780 = vmatpush.msra.mxu0 0.0
    %6781 = vmatpush.msra.mxu0 %v6764
    %6782 = vmatmul.f32.gmra.mxu0 %v6762
    %v6783 = vpop.f32.mrf.mxu0
    %v6784 = vadd.f32 0.0, %v6783
    %6785 = vdwg.mxu0
    %6786 = vst [vmem:[#allocation1] ss:$4 sm:$0xff] %v5540
    %v6787 = vld.sshfl [vmem:[#allocation1] sm:$0xff pattern:$0x73625140]
    %6788 = vrot.lane.b32.xlu0 %v6787, 56
    %v6789 = vpop.permute.xlu0 %6788
    %v6791 = vsel %vm668, %v6610, 0
    %v6793 = vsel %vm672, %v6789, 0
    %6795 = vmatpush.msra.mxu0 0.0
    %6796 = vmatpush.msra.mxu0 0.0
    %6797 = vmatpush.msra.mxu0 0.0
    %6798 = vmatpush.msra.mxu0 0.0
    %6799 = vmatpush.msra.mxu0 0.0
    %6800 = vmatpush.msra.mxu0 0.0
    %6801 = vmatpush.msra.mxu0 0.0
    %6802 = vmatpush.msra.mxu0 0.0
    %6803 = vmatpush.msra.mxu0 0.0
    %6804 = vmatpush.msra.mxu0 0.0
    %6805 = vmatpush.msra.mxu0 0.0
    %6806 = vmatpush.msra.mxu0 0.0
    %6807 = vmatpush.msra.mxu0 0.0
    %6808 = vmatpush.msra.mxu0 0.0
    %6809 = vmatpush.msra.mxu0 0.0
    %6810 = vmatpush.msra.mxu0 %v6793
    %6811 = vmatmul.f32.gmra.mxu0 %v6791
    %v6812 = vpop.f32.mrf.mxu0
    %v6813 = vadd.f32 0.0, %v6812
    %6814 = vdwg.mxu0
    %6815 = vst [vmem:[#allocation1] ss:$4 sm:$0xff] %v5541
    %v6816 = vld.sshfl [vmem:[#allocation1] sm:$0xff pattern:$0x73625140]
    %6817 = vrot.lane.b32.xlu0 %v6816, 56
    %v6818 = vpop.permute.xlu0 %6817
    %v6820 = vsel %vm668, %v6625, 0
    %v6822 = vsel %vm672, %v6818, 0
    %6824 = vmatpush.msra.mxu0 0.0
    %6825 = vmatpush.msra.mxu0 0.0
    %6826 = vmatpush.msra.mxu0 0.0
    %6827 = vmatpush.msra.mxu0 0.0
    %6828 = vmatpush.msra.mxu0 0.0
    %6829 = vmatpush.msra.mxu0 0.0
    %6830 = vmatpush.msra.mxu0 0.0
    %6831 = vmatpush.msra.mxu0 0.0
    %6832 = vmatpush.msra.mxu0 0.0
    %6833 = vmatpush.msra.mxu0 0.0
    %6834 = vmatpush.msra.mxu0 0.0
    %6835 = vmatpush.msra.mxu0 0.0
    %6836 = vmatpush.msra.mxu0 0.0
    %6837 = vmatpush.msra.mxu0 0.0
    %6838 = vmatpush.msra.mxu0 0.0
    %6839 = vmatpush.msra.mxu0 %v6822
    %6840 = vmatmul.f32.gmra.mxu0 %v6820
    %v6841 = vpop.f32.mrf.mxu0
    %v6842 = vadd.f32 0.0, %v6841
    %6843 = vdwg.mxu0
    %6844 = vst [vmem:[#allocation1] ss:$4 sm:$0xff] %v5542
    %v6845 = vld.sshfl [vmem:[#allocation1] sm:$0xff pattern:$0x73625140]
    %6846 = vrot.lane.b32.xlu0 %v6845, 56
    %v6847 = vpop.permute.xlu0 %6846
    %v6849 = vsel %vm668, %v6640, 0
    %v6851 = vsel %vm672, %v6847, 0
    %6853 = vmatpush.msra.mxu0 0.0
    %6854 = vmatpush.msra.mxu0 0.0
    %6855 = vmatpush.msra.mxu0 0.0
    %6856 = vmatpush.msra.mxu0 0.0
    %6857 = vmatpush.msra.mxu0 0.0
    %6858 = vmatpush.msra.mxu0 0.0
    %6859 = vmatpush.msra.mxu0 0.0
    %6860 = vmatpush.msra.mxu0 0.0
    %6861 = vmatpush.msra.mxu0 0.0
    %6862 = vmatpush.msra.mxu0 0.0
    %6863 = vmatpush.msra.mxu0 0.0
    %6864 = vmatpush.msra.mxu0 0.0
    %6865 = vmatpush.msra.mxu0 0.0
    %6866 = vmatpush.msra.mxu0 0.0
    %6867 = vmatpush.msra.mxu0 0.0
    %6868 = vmatpush.msra.mxu0 %v6851
    %6869 = vmatmul.f32.gmra.mxu0 %v6849
    %v6870 = vpop.f32.mrf.mxu0
    %v6871 = vadd.f32 0.0, %v6870
    %6872 = vdwg.mxu0
    %v6873 = vld [vmem:[%s6191 + $0x8] sm:$0xff]
    %6882 = vst [vmem:[#allocation1] ss:$4 sm:$0xff] %v6668
    %s6883 = scalar_lea.vmem [#allocation1], 1
    %6884 = vst [vmem:[%s6883] ss:$4 sm:$0xff] %v6697
    %s6885 = scalar_lea.vmem [#allocation1], 2
    %6886 = vst [vmem:[%s6885] ss:$4 sm:$0xff] %v6726
    %s6887 = scalar_lea.vmem [#allocation1], 3
    %6888 = vst [vmem:[%s6887] ss:$4 sm:$0xff] %v6755
    %s6889 = scalar_lea.vmem [#allocation1], 32
    %6890 = vst [vmem:[%s6889] ss:$4 sm:$0xff] %v6784
    %s6891 = scalar_lea.vmem [#allocation1], 33
    %6892 = vst [vmem:[%s6891] ss:$4 sm:$0xff] %v6813
    %s6893 = scalar_lea.vmem [#allocation1], 34
    %6894 = vst [vmem:[%s6893] ss:$4 sm:$0xff] %v6842
    %s6895 = scalar_lea.vmem [#allocation1], 35
    %6896 = vst [vmem:[%s6895] ss:$4 sm:$0xff] %v6871
    %v6897 = vld.sshfl [vmem:[#allocation1] sm:$0xff pattern:$0x73625140]
    %v6898 = vld.sshfl [vmem:[#allocation1 + $0x20] sm:$0xff pattern:$0x73625140]
    %v6899 = vsel %vm250, %v6897, 0
    %v6901 = vsel %vm250, %v6898, 0
    %6903 = vmatpush.msra.mxu0 0.0
    %6904 = vmatpush.msra.mxu0 0.0
    %6905 = vmatpush.msra.mxu0 0.0
    %6906 = vmatpush.msra.mxu0 0.0
    %6907 = vmatpush.msra.mxu0 0.0
    %6908 = vmatpush.msra.mxu0 0.0
    %6909 = vmatpush.msra.mxu0 0.0
    %6910 = vmatpush.msra.mxu0 0.0
    %6911 = vmatpush.msra.mxu0 0.0
    %6912 = vmatpush.msra.mxu0 0.0
    %6913 = vmatpush.msra.mxu0 0.0
    %6914 = vmatpush.msra.mxu0 0.0
    %6915 = vmatpush.msra.mxu0 0.0
    %6916 = vmatpush.msra.mxu0 0.0
    %6917 = vmatpush.msra.mxu0 0.0
    %6918 = vmatpush.msra.mxu0 %v6873
    %6919 = vmatmul.f32.gmra.mxu0 %v6899
    %v6920 = vpop.f32.mrf.mxu0
    %v6921 = vadd.f32 0.0, %v6920
    %6922 = vmatmul.f32.gmra.mxu0 %v6901
    %v6923 = vpop.f32.mrf.mxu0
    %v6924 = vadd.f32 0.0, %v6923
    %6925 = vdwg.mxu0
    %6934 = vst [vmem:[#allocation1] ss:$4 sm:$0xff] %v5986
    %s6935 = scalar_lea.vmem [#allocation1], 1
    %6936 = vst [vmem:[%s6935] ss:$4 sm:$0xff] %v6015
    %s6937 = scalar_lea.vmem [#allocation1], 2
    %6938 = vst [vmem:[%s6937] ss:$4 sm:$0xff] %v6044
    %s6939 = scalar_lea.vmem [#allocation1], 3
    %6940 = vst [vmem:[%s6939] ss:$4 sm:$0xff] %v6073
    %s6941 = scalar_lea.vmem [#allocation1], 32
    %6942 = vst [vmem:[%s6941] ss:$4 sm:$0xff] %v6102
    %s6943 = scalar_lea.vmem [#allocation1], 33
    %6944 = vst [vmem:[%s6943] ss:$4 sm:$0xff] %v6131
    %s6945 = scalar_lea.vmem [#allocation1], 34
    %6946 = vst [vmem:[%s6945] ss:$4 sm:$0xff] %v6160
    %s6947 = scalar_lea.vmem [#allocation1], 35
    %6948 = vst [vmem:[%s6947] ss:$4 sm:$0xff] %v6189
    %v6949 = vld.sshfl [vmem:[#allocation1] sm:$0xff pattern:$0x73625140]
    %v6950 = vld.sshfl [vmem:[#allocation1 + $0x20] sm:$0xff pattern:$0x73625140]
    %v6951 = vsel %vm250, %v6949, 0
    %v6953 = vsel %vm250, %v6950, 0
    %6955 = vmatpush.msra.mxu0 0.0
    %6956 = vmatpush.msra.mxu0 0.0
    %6957 = vmatpush.msra.mxu0 0.0
    %6958 = vmatpush.msra.mxu0 0.0
    %6959 = vmatpush.msra.mxu0 0.0
    %6960 = vmatpush.msra.mxu0 0.0
    %6961 = vmatpush.msra.mxu0 0.0
    %6962 = vmatpush.msra.mxu0 0.0
    %6963 = vmatpush.msra.mxu0 0.0
    %6964 = vmatpush.msra.mxu0 0.0
    %6965 = vmatpush.msra.mxu0 0.0
    %6966 = vmatpush.msra.mxu0 0.0
    %6967 = vmatpush.msra.mxu0 0.0
    %6968 = vmatpush.msra.mxu0 0.0
    %6969 = vmatpush.msra.mxu0 0.0
    %6970 = vmatpush.msra.mxu0 %v6192
    %6971 = vmatmul.f32.gmra.mxu0 %v6951
    %v6972 = vpop.f32.mrf.mxu0
    %v6973 = vadd.f32 %v6921, %v6972
    %6974 = vmatmul.f32.gmra.mxu0 %v6953
    %v6975 = vpop.f32.mrf.mxu0
    %v6976 = vadd.f32 %v6924, %v6975
    %6977 = vdwg.mxu0
    %6978 = vst [vmem:[#allocation1] ss:$4 sm:$0xff] %v5531
    %v6979 = vld.sshfl [vmem:[#allocation1] sm:$0xff pattern:$0x73625140]
    %6980 = vrot.lane.b32.xlu0 %v6979, 112
    %v6981 = vpop.permute.xlu0 %6980
    %6982 = vst [vmem:[#allocation1] ss:$4 sm:$0xff] %v5531
    %v6983 = vld.sshfl [vmem:[#allocation1] sm:$0xff pattern:$0x73625140]
    %6984 = vrot.lane.b32.xlu0 %v6983, 80
    %v6985 = vpop.permute.xlu0 %6984
    %v6986 = vsel %vm250, %v6981, 0
    %v6988 = vsel %vm250, %v6985, 0
    %6990 = vmatpush.xpose.msra.mxu0 0.0
    %6991 = vmatpush.xpose.msra.mxu0 0.0
    %6992 = vmatpush.xpose.msra.mxu0 0.0
    %6993 = vmatpush.xpose.msra.mxu0 0.0
    %6994 = vmatpush.xpose.msra.mxu0 0.0
    %6995 = vmatpush.xpose.msra.mxu0 0.0
    %6996 = vmatpush.xpose.msra.mxu0 0.0
    %6997 = vmatpush.xpose.msra.mxu0 0.0
    %6998 = vmatpush.xpose.msra.mxu0 0.0
    %6999 = vmatpush.xpose.msra.mxu0 0.0
    %7000 = vmatpush.xpose.msra.mxu0 0.0
    %7001 = vmatpush.xpose.msra.mxu0 0.0
    %7002 = vmatpush.xpose.msra.mxu0 0.0
    %7003 = vmatpush.xpose.msra.mxu0 0.0
    %7004 = vmatpush.xpose.msra.mxu0 0.0
    %7005 = vmatpush.xpose.msra.mxu0 %v6988
    %7006 = vmatmul.f32.gmra.mxu0 %v6986
    %v7007 = vpop.f32.mrf.mxu0
    %v7008 = vadd.f32 0.0, %v7007
    %7009 = vdwg.mxu0
    %7010 = vst [vmem:[#allocation1] ss:$4 sm:$0xff] %v5537
    %v7011 = vld.sshfl [vmem:[#allocation1] sm:$0xff pattern:$0x73625140]
    %7012 = vrot.lane.b32.xlu0 %v7011, 112
    %v7013 = vpop.permute.xlu0 %7012
    %7014 = vst [vmem:[#allocation1] ss:$4 sm:$0xff] %v5537
    %v7015 = vld.sshfl [vmem:[#allocation1] sm:$0xff pattern:$0x73625140]
    %7016 = vrot.lane.b32.xlu0 %v7015, 80
    %v7017 = vpop.permute.xlu0 %7016
    %v7018 = vsel %vm250, %v7013, 0
    %v7020 = vsel %vm250, %v7017, 0
    %7022 = vmatpush.xpose.msra.mxu0 0.0
    %7023 = vmatpush.xpose.msra.mxu0 0.0
    %7024 = vmatpush.xpose.msra.mxu0 0.0
    %7025 = vmatpush.xpose.msra.mxu0 0.0
    %7026 = vmatpush.xpose.msra.mxu0 0.0
    %7027 = vmatpush.xpose.msra.mxu0 0.0
    %7028 = vmatpush.xpose.msra.mxu0 0.0
    %7029 = vmatpush.xpose.msra.mxu0 0.0
    %7030 = vmatpush.xpose.msra.mxu0 0.0
    %7031 = vmatpush.xpose.msra.mxu0 0.0
    %7032 = vmatpush.xpose.msra.mxu0 0.0
    %7033 = vmatpush.xpose.msra.mxu0 0.0
    %7034 = vmatpush.xpose.msra.mxu0 0.0
    %7035 = vmatpush.xpose.msra.mxu0 0.0
    %7036 = vmatpush.xpose.msra.mxu0 0.0
    %7037 = vmatpush.xpose.msra.mxu0 %v7020
    %7038 = vmatmul.f32.gmra.mxu0 %v7018
    %v7039 = vpop.f32.mrf.mxu0
    %v7040 = vadd.f32 0.0, %v7039
    %7041 = vdwg.mxu0
    %7042 = vst [vmem:[#allocation1] ss:$4 sm:$0xff] %v5538
    %v7043 = vld.sshfl [vmem:[#allocation1] sm:$0xff pattern:$0x73625140]
    %7044 = vrot.lane.b32.xlu0 %v7043, 112
    %v7045 = vpop.permute.xlu0 %7044
    %7046 = vst [vmem:[#allocation1] ss:$4 sm:$0xff] %v5538
    %v7047 = vld.sshfl [vmem:[#allocation1] sm:$0xff pattern:$0x73625140]
    %7048 = vrot.lane.b32.xlu0 %v7047, 80
    %v7049 = vpop.permute.xlu0 %7048
    %v7050 = vsel %vm250, %v7045, 0
    %v7052 = vsel %vm250, %v7049, 0
    %7054 = vmatpush.xpose.msra.mxu0 0.0
    %7055 = vmatpush.xpose.msra.mxu0 0.0
    %7056 = vmatpush.xpose.msra.mxu0 0.0
    %7057 = vmatpush.xpose.msra.mxu0 0.0
    %7058 = vmatpush.xpose.msra.mxu0 0.0
    %7059 = vmatpush.xpose.msra.mxu0 0.0
    %7060 = vmatpush.xpose.msra.mxu0 0.0
    %7061 = vmatpush.xpose.msra.mxu0 0.0
    %7062 = vmatpush.xpose.msra.mxu0 0.0
    %7063 = vmatpush.xpose.msra.mxu0 0.0
    %7064 = vmatpush.xpose.msra.mxu0 0.0
    %7065 = vmatpush.xpose.msra.mxu0 0.0
    %7066 = vmatpush.xpose.msra.mxu0 0.0
    %7067 = vmatpush.xpose.msra.mxu0 0.0
    %7068 = vmatpush.xpose.msra.mxu0 0.0
    %7069 = vmatpush.xpose.msra.mxu0 %v7052
    %7070 = vmatmul.f32.gmra.mxu0 %v7050
    %v7071 = vpop.f32.mrf.mxu0
    %v7072 = vadd.f32 0.0, %v7071
    %7073 = vdwg.mxu0
    %7074 = vst [vmem:[#allocation1] ss:$4 sm:$0xff] %v5539
    %v7075 = vld.sshfl [vmem:[#allocation1] sm:$0xff pattern:$0x73625140]
    %7076 = vrot.lane.b32.xlu0 %v7075, 112
    %v7077 = vpop.permute.xlu0 %7076
    %7078 = vst [vmem:[#allocation1] ss:$4 sm:$0xff] %v5539
    %v7079 = vld.sshfl [vmem:[#allocation1] sm:$0xff pattern:$0x73625140]
    %7080 = vrot.lane.b32.xlu0 %v7079, 80
    %v7081 = vpop.permute.xlu0 %7080
    %v7082 = vsel %vm250, %v7077, 0
    %v7084 = vsel %vm250, %v7081, 0
    %7086 = vmatpush.xpose.msra.mxu0 0.0
    %7087 = vmatpush.xpose.msra.mxu0 0.0
    %7088 = vmatpush.xpose.msra.mxu0 0.0
    %7089 = vmatpush.xpose.msra.mxu0 0.0
    %7090 = vmatpush.xpose.msra.mxu0 0.0
    %7091 = vmatpush.xpose.msra.mxu0 0.0
    %7092 = vmatpush.xpose.msra.mxu0 0.0
    %7093 = vmatpush.xpose.msra.mxu0 0.0
    %7094 = vmatpush.xpose.msra.mxu0 0.0
    %7095 = vmatpush.xpose.msra.mxu0 0.0
    %7096 = vmatpush.xpose.msra.mxu0 0.0
    %7097 = vmatpush.xpose.msra.mxu0 0.0
    %7098 = vmatpush.xpose.msra.mxu0 0.0
    %7099 = vmatpush.xpose.msra.mxu0 0.0
    %7100 = vmatpush.xpose.msra.mxu0 0.0
    %7101 = vmatpush.xpose.msra.mxu0 %v7084
    %7102 = vmatmul.f32.gmra.mxu0 %v7082
    %v7103 = vpop.f32.mrf.mxu0
    %v7104 = vadd.f32 0.0, %v7103
    %7105 = vdwg.mxu0
    %7106 = vst [vmem:[#allocation1] ss:$4 sm:$0xff] %v5533
    %v7107 = vld.sshfl [vmem:[#allocation1] sm:$0xff pattern:$0x73625140]
    %7108 = vrot.lane.b32.xlu0 %v7107, 112
    %v7109 = vpop.permute.xlu0 %7108
    %7110 = vst [vmem:[#allocation1] ss:$4 sm:$0xff] %v5533
    %v7111 = vld.sshfl [vmem:[#allocation1] sm:$0xff pattern:$0x73625140]
    %7112 = vrot.lane.b32.xlu0 %v7111, 80
    %v7113 = vpop.permute.xlu0 %7112
    %v7114 = vsel %vm250, %v7109, 0
    %v7116 = vsel %vm250, %v7113, 0
    %7118 = vmatpush.xpose.msra.mxu0 0.0
    %7119 = vmatpush.xpose.msra.mxu0 0.0
    %7120 = vmatpush.xpose.msra.mxu0 0.0
    %7121 = vmatpush.xpose.msra.mxu0 0.0
    %7122 = vmatpush.xpose.msra.mxu0 0.0
    %7123 = vmatpush.xpose.msra.mxu0 0.0
    %7124 = vmatpush.xpose.msra.mxu0 0.0
    %7125 = vmatpush.xpose.msra.mxu0 0.0
    %7126 = vmatpush.xpose.msra.mxu0 0.0
    %7127 = vmatpush.xpose.msra.mxu0 0.0
    %7128 = vmatpush.xpose.msra.mxu0 0.0
    %7129 = vmatpush.xpose.msra.mxu0 0.0
    %7130 = vmatpush.xpose.msra.mxu0 0.0
    %7131 = vmatpush.xpose.msra.mxu0 0.0
    %7132 = vmatpush.xpose.msra.mxu0 0.0
    %7133 = vmatpush.xpose.msra.mxu0 %v7116
    %7134 = vmatmul.f32.gmra.mxu0 %v7114
    %v7135 = vpop.f32.mrf.mxu0
    %v7136 = vadd.f32 0.0, %v7135
    %7137 = vdwg.mxu0
    %7138 = vst [vmem:[#allocation1] ss:$4 sm:$0xff] %v5540
    %v7139 = vld.sshfl [vmem:[#allocation1] sm:$0xff pattern:$0x73625140]
    %7140 = vrot.lane.b32.xlu0 %v7139, 112
    %v7141 = vpop.permute.xlu0 %7140
    %7142 = vst [vmem:[#allocation1] ss:$4 sm:$0xff] %v5540
    %v7143 = vld.sshfl [vmem:[#allocation1] sm:$0xff pattern:$0x73625140]
    %7144 = vrot.lane.b32.xlu0 %v7143, 80
    %v7145 = vpop.permute.xlu0 %7144
    %v7146 = vsel %vm250, %v7141, 0
    %v7148 = vsel %vm250, %v7145, 0
    %7150 = vmatpush.xpose.msra.mxu0 0.0
    %7151 = vmatpush.xpose.msra.mxu0 0.0
    %7152 = vmatpush.xpose.msra.mxu0 0.0
    %7153 = vmatpush.xpose.msra.mxu0 0.0
    %7154 = vmatpush.xpose.msra.mxu0 0.0
    %7155 = vmatpush.xpose.msra.mxu0 0.0
    %7156 = vmatpush.xpose.msra.mxu0 0.0
    %7157 = vmatpush.xpose.msra.mxu0 0.0
    %7158 = vmatpush.xpose.msra.mxu0 0.0
    %7159 = vmatpush.xpose.msra.mxu0 0.0
    %7160 = vmatpush.xpose.msra.mxu0 0.0
    %7161 = vmatpush.xpose.msra.mxu0 0.0
    %7162 = vmatpush.xpose.msra.mxu0 0.0
    %7163 = vmatpush.xpose.msra.mxu0 0.0
    %7164 = vmatpush.xpose.msra.mxu0 0.0
    %7165 = vmatpush.xpose.msra.mxu0 %v7148
    %7166 = vmatmul.f32.gmra.mxu0 %v7146
    %v7167 = vpop.f32.mrf.mxu0
    %v7168 = vadd.f32 0.0, %v7167
    %7169 = vdwg.mxu0
    %7170 = vst [vmem:[#allocation1] ss:$4 sm:$0xff] %v5541
    %v7171 = vld.sshfl [vmem:[#allocation1] sm:$0xff pattern:$0x73625140]
    %7172 = vrot.lane.b32.xlu0 %v7171, 112
    %v7173 = vpop.permute.xlu0 %7172
    %7174 = vst [vmem:[#allocation1] ss:$4 sm:$0xff] %v5541
    %v7175 = vld.sshfl [vmem:[#allocation1] sm:$0xff pattern:$0x73625140]
    %7176 = vrot.lane.b32.xlu0 %v7175, 80
    %v7177 = vpop.permute.xlu0 %7176
    %v7178 = vsel %vm250, %v7173, 0
    %v7180 = vsel %vm250, %v7177, 0
    %7182 = vmatpush.xpose.msra.mxu0 0.0
    %7183 = vmatpush.xpose.msra.mxu0 0.0
    %7184 = vmatpush.xpose.msra.mxu0 0.0
    %7185 = vmatpush.xpose.msra.mxu0 0.0
    %7186 = vmatpush.xpose.msra.mxu0 0.0
    %7187 = vmatpush.xpose.msra.mxu0 0.0
    %7188 = vmatpush.xpose.msra.mxu0 0.0
    %7189 = vmatpush.xpose.msra.mxu0 0.0
    %7190 = vmatpush.xpose.msra.mxu0 0.0
    %7191 = vmatpush.xpose.msra.mxu0 0.0
    %7192 = vmatpush.xpose.msra.mxu0 0.0
    %7193 = vmatpush.xpose.msra.mxu0 0.0
    %7194 = vmatpush.xpose.msra.mxu0 0.0
    %7195 = vmatpush.xpose.msra.mxu0 0.0
    %7196 = vmatpush.xpose.msra.mxu0 0.0
    %7197 = vmatpush.xpose.msra.mxu0 %v7180
    %7198 = vmatmul.f32.gmra.mxu0 %v7178
    %v7199 = vpop.f32.mrf.mxu0
    %v7200 = vadd.f32 0.0, %v7199
    %7201 = vdwg.mxu0
    %7202 = vst [vmem:[#allocation1] ss:$4 sm:$0xff] %v5542
    %v7203 = vld.sshfl [vmem:[#allocation1] sm:$0xff pattern:$0x73625140]
    %7204 = vrot.lane.b32.xlu0 %v7203, 112
    %v7205 = vpop.permute.xlu0 %7204
    %7206 = vst [vmem:[#allocation1] ss:$4 sm:$0xff] %v5542
    %v7207 = vld.sshfl [vmem:[#allocation1] sm:$0xff pattern:$0x73625140]
    %7208 = vrot.lane.b32.xlu0 %v7207, 80
    %v7209 = vpop.permute.xlu0 %7208
    %v7210 = vsel %vm250, %v7205, 0
    %v7212 = vsel %vm250, %v7209, 0
    %7214 = vmatpush.xpose.msra.mxu0 0.0
    %7215 = vmatpush.xpose.msra.mxu0 0.0
    %7216 = vmatpush.xpose.msra.mxu0 0.0
    %7217 = vmatpush.xpose.msra.mxu0 0.0
    %7218 = vmatpush.xpose.msra.mxu0 0.0
    %7219 = vmatpush.xpose.msra.mxu0 0.0
    %7220 = vmatpush.xpose.msra.mxu0 0.0
    %7221 = vmatpush.xpose.msra.mxu0 0.0
    %7222 = vmatpush.xpose.msra.mxu0 0.0
    %7223 = vmatpush.xpose.msra.mxu0 0.0
    %7224 = vmatpush.xpose.msra.mxu0 0.0
    %7225 = vmatpush.xpose.msra.mxu0 0.0
    %7226 = vmatpush.xpose.msra.mxu0 0.0
    %7227 = vmatpush.xpose.msra.mxu0 0.0
    %7228 = vmatpush.xpose.msra.mxu0 0.0
    %7229 = vmatpush.xpose.msra.mxu0 %v7212
    %7230 = vmatmul.f32.gmra.mxu0 %v7210
    %v7231 = vpop.f32.mrf.mxu0
    %v7232 = vadd.f32 0.0, %v7231
    %7233 = vdwg.mxu0
    %v7234 = vsel %vm471, %v7008, -inf
    %7235 = vmax.xlane.f32.xlu0 %v7234
    %v7236 = vpop.xlane.xlu0 %7235
    %v7237 = vsel %vm471, %v7040, -inf
    %7238 = vmax.xlane.f32.xlu0 %v7237
    %v7239 = vpop.xlane.xlu0 %7238
    %v7240 = vsel %vm471, %v7072, -inf
    %7241 = vmax.xlane.f32.xlu0 %v7240
    %v7242 = vpop.xlane.xlu0 %7241
    %v7243 = vsel %vm471, %v7104, -inf
    %7244 = vmax.xlane.f32.xlu0 %v7243
    %v7245 = vpop.xlane.xlu0 %7244
    %v7246 = vsel %vm471, %v7136, -inf
    %7247 = vmax.xlane.f32.xlu0 %v7246
    %v7248 = vpop.xlane.xlu0 %7247
    %v7249 = vsel %vm471, %v7168, -inf
    %7250 = vmax.xlane.f32.xlu0 %v7249
    %v7251 = vpop.xlane.xlu0 %7250
    %v7252 = vsel %vm471, %v7200, -inf
    %7253 = vmax.xlane.f32.xlu0 %v7252
    %v7254 = vpop.xlane.xlu0 %7253
    %v7255 = vsel %vm471, %v7232, -inf
    %7256 = vmax.xlane.f32.xlu0 %v7255
    %v7257 = vpop.xlane.xlu0 %7256
    %v7258 = vsub.f32 %v7008, %v7236
    %v7259 = vsub.f32 %v7040, %v7239
    %v7260 = vsub.f32 %v7072, %v7242
    %v7261 = vsub.f32 %v7104, %v7245
    %v7262 = vsub.f32 %v7136, %v7248
    %v7263 = vsub.f32 %v7168, %v7251
    %v7264 = vsub.f32 %v7200, %v7254
    %v7265 = vsub.f32 %v7232, %v7257
    %v7266 = vmul.f32 %v7258, 1.442695
    %v7267 = vpow.pop %v7266
    %v7268 = vmul.f32 %v7259, 1.442695
    %v7269 = vpow.pop %v7268
    %v7270 = vmul.f32 %v7260, 1.442695
    %v7271 = vpow.pop %v7270
    %v7272 = vmul.f32 %v7261, 1.442695
    %v7273 = vpow.pop %v7272
    %v7274 = vmul.f32 %v7262, 1.442695
    %v7275 = vpow.pop %v7274
    %v7276 = vmul.f32 %v7263, 1.442695
    %v7277 = vpow.pop %v7276
    %v7278 = vmul.f32 %v7264, 1.442695
    %v7279 = vpow.pop %v7278
    %v7280 = vmul.f32 %v7265, 1.442695
    %v7281 = vpow.pop %v7280
    %v7282 = vsel %vm471, %v7267, 0.0
    %7283 = vadd.xlane.f32.xlu0 %v7282
    %v7284 = vpop.xlane.xlu0 %7283
    %v7285 = vsel %vm471, %v7269, 0.0
    %7286 = vadd.xlane.f32.xlu0 %v7285
    %v7287 = vpop.xlane.xlu0 %7286
    %v7288 = vsel %vm471, %v7271, 0.0
    %7289 = vadd.xlane.f32.xlu0 %v7288
    %v7290 = vpop.xlane.xlu0 %7289
    %v7291 = vsel %vm471, %v7273, 0.0
    %7292 = vadd.xlane.f32.xlu0 %v7291
    %v7293 = vpop.xlane.xlu0 %7292
    %v7294 = vsel %vm471, %v7275, 0.0
    %7295 = vadd.xlane.f32.xlu0 %v7294
    %v7296 = vpop.xlane.xlu0 %7295
    %v7297 = vsel %vm471, %v7277, 0.0
    %7298 = vadd.xlane.f32.xlu0 %v7297
    %v7299 = vpop.xlane.xlu0 %7298
    %v7300 = vsel %vm471, %v7279, 0.0
    %7301 = vadd.xlane.f32.xlu0 %v7300
    %v7302 = vpop.xlane.xlu0 %7301
    %v7303 = vsel %vm471, %v7281, 0.0
    %7304 = vadd.xlane.f32.xlu0 %v7303
    %v7305 = vpop.xlane.xlu0 %7304
    %v7306 = vrcp.pop %v7284
    %v7307 = vmul.f32 %v7284, %v7306
    %v7308 = vsub.f32 1.0, %v7307
    %v7309 = vmul.f32 %v7306, %v7308
    %v7310 = vadd.f32 %v7306, %v7309
    %vm7311 = vweird.f32 %v7284
    %vm7312 = vweird.f32 %v7306
    %vm7313 = vmor %vm7311, %vm7312
    %v7314 = vsel %vm7313, %v7306, %v7310
    %v7315 = vand.u32 2147483647, %v7284
    %vm7316 = vcmp.eq.f32.partialorder %v7315, 8.507059e+37
    %v7317 = vand.u32 %v7284, 2147483648
    %v7318 = vor.u32 1.1754944e-38, %v7317
    %v7319 = vsel %vm7316, %v7318, %v7314
    %v7320 = vmul.f32 %v7267, %v7319
    %v7321 = vrcp.pop %v7287
    %v7322 = vmul.f32 %v7287, %v7321
    %v7323 = vsub.f32 1.0, %v7322
    %v7324 = vmul.f32 %v7321, %v7323
    %v7325 = vadd.f32 %v7321, %v7324
    %vm7326 = vweird.f32 %v7287
    %vm7327 = vweird.f32 %v7321
    %vm7328 = vmor %vm7326, %vm7327
    %v7329 = vsel %vm7328, %v7321, %v7325
    %v7330 = vand.u32 2147483647, %v7287
    %vm7331 = vcmp.eq.f32.partialorder %v7330, 8.507059e+37
    %v7332 = vand.u32 %v7287, 2147483648
    %v7333 = vor.u32 1.1754944e-38, %v7332
    %v7334 = vsel %vm7331, %v7333, %v7329
    %v7335 = vmul.f32 %v7269, %v7334
    %v7336 = vrcp.pop %v7290
    %v7337 = vmul.f32 %v7290, %v7336
    %v7338 = vsub.f32 1.0, %v7337
    %v7339 = vmul.f32 %v7336, %v7338
    %v7340 = vadd.f32 %v7336, %v7339
    %vm7341 = vweird.f32 %v7290
    %vm7342 = vweird.f32 %v7336
    %vm7343 = vmor %vm7341, %vm7342
    %v7344 = vsel %vm7343, %v7336, %v7340
    %v7345 = vand.u32 2147483647, %v7290
    %vm7346 = vcmp.eq.f32.partialorder %v7345, 8.507059e+37
    %v7347 = vand.u32 %v7290, 2147483648
    %v7348 = vor.u32 1.1754944e-38, %v7347
    %v7349 = vsel %vm7346, %v7348, %v7344
    %v7350 = vmul.f32 %v7271, %v7349
    %v7351 = vrcp.pop %v7293
    %v7352 = vmul.f32 %v7293, %v7351
    %v7353 = vsub.f32 1.0, %v7352
    %v7354 = vmul.f32 %v7351, %v7353
    %v7355 = vadd.f32 %v7351, %v7354
    %vm7356 = vweird.f32 %v7293
    %vm7357 = vweird.f32 %v7351
    %vm7358 = vmor %vm7356, %vm7357
    %v7359 = vsel %vm7358, %v7351, %v7355
    %v7360 = vand.u32 2147483647, %v7293
    %vm7361 = vcmp.eq.f32.partialorder %v7360, 8.507059e+37
    %v7362 = vand.u32 %v7293, 2147483648
    %v7363 = vor.u32 1.1754944e-38, %v7362
    %v7364 = vsel %vm7361, %v7363, %v7359
    %v7365 = vmul.f32 %v7273, %v7364
    %v7366 = vrcp.pop %v7296
    %v7367 = vmul.f32 %v7296, %v7366
    %v7368 = vsub.f32 1.0, %v7367
    %v7369 = vmul.f32 %v7366, %v7368
    %v7370 = vadd.f32 %v7366, %v7369
    %vm7371 = vweird.f32 %v7296
    %vm7372 = vweird.f32 %v7366
    %vm7373 = vmor %vm7371, %vm7372
    %v7374 = vsel %vm7373, %v7366, %v7370
    %v7375 = vand.u32 2147483647, %v7296
    %vm7376 = vcmp.eq.f32.partialorder %v7375, 8.507059e+37
    %v7377 = vand.u32 %v7296, 2147483648
    %v7378 = vor.u32 1.1754944e-38, %v7377
    %v7379 = vsel %vm7376, %v7378, %v7374
    %v7380 = vmul.f32 %v7275, %v7379
    %v7381 = vrcp.pop %v7299
    %v7382 = vmul.f32 %v7299, %v7381
    %v7383 = vsub.f32 1.0, %v7382
    %v7384 = vmul.f32 %v7381, %v7383
    %v7385 = vadd.f32 %v7381, %v7384
    %vm7386 = vweird.f32 %v7299
    %vm7387 = vweird.f32 %v7381
    %vm7388 = vmor %vm7386, %vm7387
    %v7389 = vsel %vm7388, %v7381, %v7385
    %v7390 = vand.u32 2147483647, %v7299
    %vm7391 = vcmp.eq.f32.partialorder %v7390, 8.507059e+37
    %v7392 = vand.u32 %v7299, 2147483648
    %v7393 = vor.u32 1.1754944e-38, %v7392
    %v7394 = vsel %vm7391, %v7393, %v7389
    %v7395 = vmul.f32 %v7277, %v7394
    %v7396 = vrcp.pop %v7302
    %v7397 = vmul.f32 %v7302, %v7396
    %v7398 = vsub.f32 1.0, %v7397
    %v7399 = vmul.f32 %v7396, %v7398
    %v7400 = vadd.f32 %v7396, %v7399
    %vm7401 = vweird.f32 %v7302
    %vm7402 = vweird.f32 %v7396
    %vm7403 = vmor %vm7401, %vm7402
    %v7404 = vsel %vm7403, %v7396, %v7400
    %v7405 = vand.u32 2147483647, %v7302
    %vm7406 = vcmp.eq.f32.partialorder %v7405, 8.507059e+37
    %v7407 = vand.u32 %v7302, 2147483648
    %v7408 = vor.u32 1.1754944e-38, %v7407
    %v7409 = vsel %vm7406, %v7408, %v7404
    %v7410 = vmul.f32 %v7279, %v7409
    %v7411 = vrcp.pop %v7305
    %v7412 = vmul.f32 %v7305, %v7411
    %v7413 = vsub.f32 1.0, %v7412
    %v7414 = vmul.f32 %v7411, %v7413
    %v7415 = vadd.f32 %v7411, %v7414
    %vm7416 = vweird.f32 %v7305
    %vm7417 = vweird.f32 %v7411
    %vm7418 = vmor %vm7416, %vm7417
    %v7419 = vsel %vm7418, %v7411, %v7415
    %v7420 = vand.u32 2147483647, %v7305
    %vm7421 = vcmp.eq.f32.partialorder %v7420, 8.507059e+37
    %v7422 = vand.u32 %v7305, 2147483648
    %v7423 = vor.u32 1.1754944e-38, %v7422
    %v7424 = vsel %vm7421, %v7423, %v7419
    %v7425 = vmul.f32 %v7281, %v7424
    %7426 = vst [vmem:[#allocation1] ss:$4 sm:$0xff] %v5531
    %v7427 = vld.sshfl [vmem:[#allocation1] sm:$0xff pattern:$0x73625140]
    %7428 = vrot.lane.b32.xlu0 %v7427, 48
    %v7429 = vpop.permute.xlu0 %7428
    %v7431 = vsel %vm668, %v7320, 0
    %v7433 = vsel %vm672, %v7429, 0
    %7435 = vmatpush.msra.mxu0 0.0
    %7436 = vmatpush.msra.mxu0 0.0
    %7437 = vmatpush.msra.mxu0 0.0
    %7438 = vmatpush.msra.mxu0 0.0
    %7439 = vmatpush.msra.mxu0 0.0
    %7440 = vmatpush.msra.mxu0 0.0
    %7441 = vmatpush.msra.mxu0 0.0
    %7442 = vmatpush.msra.mxu0 0.0
    %7443 = vmatpush.msra.mxu0 0.0
    %7444 = vmatpush.msra.mxu0 0.0
    %7445 = vmatpush.msra.mxu0 0.0
    %7446 = vmatpush.msra.mxu0 0.0
    %7447 = vmatpush.msra.mxu0 0.0
    %7448 = vmatpush.msra.mxu0 0.0
    %7449 = vmatpush.msra.mxu0 0.0
    %7450 = vmatpush.msra.mxu0 %v7433
    %7451 = vmatmul.f32.gmra.mxu0 %v7431
    %v7452 = vpop.f32.mrf.mxu0
    %v7453 = vadd.f32 0.0, %v7452
    %7454 = vdwg.mxu0
    %7455 = vst [vmem:[#allocation1] ss:$4 sm:$0xff] %v5537
    %v7456 = vld.sshfl [vmem:[#allocation1] sm:$0xff pattern:$0x73625140]
    %7457 = vrot.lane.b32.xlu0 %v7456, 48
    %v7458 = vpop.permute.xlu0 %7457
    %v7460 = vsel %vm668, %v7335, 0
    %v7462 = vsel %vm672, %v7458, 0
    %7464 = vmatpush.msra.mxu0 0.0
    %7465 = vmatpush.msra.mxu0 0.0
    %7466 = vmatpush.msra.mxu0 0.0
    %7467 = vmatpush.msra.mxu0 0.0
    %7468 = vmatpush.msra.mxu0 0.0
    %7469 = vmatpush.msra.mxu0 0.0
    %7470 = vmatpush.msra.mxu0 0.0
    %7471 = vmatpush.msra.mxu0 0.0
    %7472 = vmatpush.msra.mxu0 0.0
    %7473 = vmatpush.msra.mxu0 0.0
    %7474 = vmatpush.msra.mxu0 0.0
    %7475 = vmatpush.msra.mxu0 0.0
    %7476 = vmatpush.msra.mxu0 0.0
    %7477 = vmatpush.msra.mxu0 0.0
    %7478 = vmatpush.msra.mxu0 0.0
    %7479 = vmatpush.msra.mxu0 %v7462
    %7480 = vmatmul.f32.gmra.mxu0 %v7460
    %v7481 = vpop.f32.mrf.mxu0
    %v7482 = vadd.f32 0.0, %v7481
    %7483 = vdwg.mxu0
    %7484 = vst [vmem:[#allocation1] ss:$4 sm:$0xff] %v5538
    %v7485 = vld.sshfl [vmem:[#allocation1] sm:$0xff pattern:$0x73625140]
    %7486 = vrot.lane.b32.xlu0 %v7485, 48
    %v7487 = vpop.permute.xlu0 %7486
    %v7489 = vsel %vm668, %v7350, 0
    %v7491 = vsel %vm672, %v7487, 0
    %7493 = vmatpush.msra.mxu0 0.0
    %7494 = vmatpush.msra.mxu0 0.0
    %7495 = vmatpush.msra.mxu0 0.0
    %7496 = vmatpush.msra.mxu0 0.0
    %7497 = vmatpush.msra.mxu0 0.0
    %7498 = vmatpush.msra.mxu0 0.0
    %7499 = vmatpush.msra.mxu0 0.0
    %7500 = vmatpush.msra.mxu0 0.0
    %7501 = vmatpush.msra.mxu0 0.0
    %7502 = vmatpush.msra.mxu0 0.0
    %7503 = vmatpush.msra.mxu0 0.0
    %7504 = vmatpush.msra.mxu0 0.0
    %7505 = vmatpush.msra.mxu0 0.0
    %7506 = vmatpush.msra.mxu0 0.0
    %7507 = vmatpush.msra.mxu0 0.0
    %7508 = vmatpush.msra.mxu0 %v7491
    %7509 = vmatmul.f32.gmra.mxu0 %v7489
    %v7510 = vpop.f32.mrf.mxu0
    %v7511 = vadd.f32 0.0, %v7510
    %7512 = vdwg.mxu0
    %7513 = vst [vmem:[#allocation1] ss:$4 sm:$0xff] %v5539
    %v7514 = vld.sshfl [vmem:[#allocation1] sm:$0xff pattern:$0x73625140]
    %7515 = vrot.lane.b32.xlu0 %v7514, 48
    %v7516 = vpop.permute.xlu0 %7515
    %v7518 = vsel %vm668, %v7365, 0
    %v7520 = vsel %vm672, %v7516, 0
    %7522 = vmatpush.msra.mxu0 0.0
    %7523 = vmatpush.msra.mxu0 0.0
    %7524 = vmatpush.msra.mxu0 0.0
    %7525 = vmatpush.msra.mxu0 0.0
    %7526 = vmatpush.msra.mxu0 0.0
    %7527 = vmatpush.msra.mxu0 0.0
    %7528 = vmatpush.msra.mxu0 0.0
    %7529 = vmatpush.msra.mxu0 0.0
    %7530 = vmatpush.msra.mxu0 0.0
    %7531 = vmatpush.msra.mxu0 0.0
    %7532 = vmatpush.msra.mxu0 0.0
    %7533 = vmatpush.msra.mxu0 0.0
    %7534 = vmatpush.msra.mxu0 0.0
    %7535 = vmatpush.msra.mxu0 0.0
    %7536 = vmatpush.msra.mxu0 0.0
    %7537 = vmatpush.msra.mxu0 %v7520
    %7538 = vmatmul.f32.gmra.mxu0 %v7518
    %v7539 = vpop.f32.mrf.mxu0
    %v7540 = vadd.f32 0.0, %v7539
    %7541 = vdwg.mxu0
    %7542 = vst [vmem:[#allocation1] ss:$4 sm:$0xff] %v5533
    %v7543 = vld.sshfl [vmem:[#allocation1] sm:$0xff pattern:$0x73625140]
    %7544 = vrot.lane.b32.xlu0 %v7543, 48
    %v7545 = vpop.permute.xlu0 %7544
    %v7547 = vsel %vm668, %v7380, 0
    %v7549 = vsel %vm672, %v7545, 0
    %7551 = vmatpush.msra.mxu0 0.0
    %7552 = vmatpush.msra.mxu0 0.0
    %7553 = vmatpush.msra.mxu0 0.0
    %7554 = vmatpush.msra.mxu0 0.0
    %7555 = vmatpush.msra.mxu0 0.0
    %7556 = vmatpush.msra.mxu0 0.0
    %7557 = vmatpush.msra.mxu0 0.0
    %7558 = vmatpush.msra.mxu0 0.0
    %7559 = vmatpush.msra.mxu0 0.0
    %7560 = vmatpush.msra.mxu0 0.0
    %7561 = vmatpush.msra.mxu0 0.0
    %7562 = vmatpush.msra.mxu0 0.0
    %7563 = vmatpush.msra.mxu0 0.0
    %7564 = vmatpush.msra.mxu0 0.0
    %7565 = vmatpush.msra.mxu0 0.0
    %7566 = vmatpush.msra.mxu0 %v7549
    %7567 = vmatmul.f32.gmra.mxu0 %v7547
    %v7568 = vpop.f32.mrf.mxu0
    %v7569 = vadd.f32 0.0, %v7568
    %7570 = vdwg.mxu0
    %7571 = vst [vmem:[#allocation1] ss:$4 sm:$0xff] %v5540
    %v7572 = vld.sshfl [vmem:[#allocation1] sm:$0xff pattern:$0x73625140]
    %7573 = vrot.lane.b32.xlu0 %v7572, 48
    %v7574 = vpop.permute.xlu0 %7573
    %v7576 = vsel %vm668, %v7395, 0
    %v7578 = vsel %vm672, %v7574, 0
    %7580 = vmatpush.msra.mxu0 0.0
    %7581 = vmatpush.msra.mxu0 0.0
    %7582 = vmatpush.msra.mxu0 0.0
    %7583 = vmatpush.msra.mxu0 0.0
    %7584 = vmatpush.msra.mxu0 0.0
    %7585 = vmatpush.msra.mxu0 0.0
    %7586 = vmatpush.msra.mxu0 0.0
    %7587 = vmatpush.msra.mxu0 0.0
    %7588 = vmatpush.msra.mxu0 0.0
    %7589 = vmatpush.msra.mxu0 0.0
    %7590 = vmatpush.msra.mxu0 0.0
    %7591 = vmatpush.msra.mxu0 0.0
    %7592 = vmatpush.msra.mxu0 0.0
    %7593 = vmatpush.msra.mxu0 0.0
    %7594 = vmatpush.msra.mxu0 0.0
    %7595 = vmatpush.msra.mxu0 %v7578
    %7596 = vmatmul.f32.gmra.mxu0 %v7576
    %v7597 = vpop.f32.mrf.mxu0
    %v7598 = vadd.f32 0.0, %v7597
    %7599 = vdwg.mxu0
    %7600 = vst [vmem:[#allocation1] ss:$4 sm:$0xff] %v5541
    %v7601 = vld.sshfl [vmem:[#allocation1] sm:$0xff pattern:$0x73625140]
    %7602 = vrot.lane.b32.xlu0 %v7601, 48
    %v7603 = vpop.permute.xlu0 %7602
    %v7605 = vsel %vm668, %v7410, 0
    %v7607 = vsel %vm672, %v7603, 0
    %7609 = vmatpush.msra.mxu0 0.0
    %7610 = vmatpush.msra.mxu0 0.0
    %7611 = vmatpush.msra.mxu0 0.0
    %7612 = vmatpush.msra.mxu0 0.0
    %7613 = vmatpush.msra.mxu0 0.0
    %7614 = vmatpush.msra.mxu0 0.0
    %7615 = vmatpush.msra.mxu0 0.0
    %7616 = vmatpush.msra.mxu0 0.0
    %7617 = vmatpush.msra.mxu0 0.0
    %7618 = vmatpush.msra.mxu0 0.0
    %7619 = vmatpush.msra.mxu0 0.0
    %7620 = vmatpush.msra.mxu0 0.0
    %7621 = vmatpush.msra.mxu0 0.0
    %7622 = vmatpush.msra.mxu0 0.0
    %7623 = vmatpush.msra.mxu0 0.0
    %7624 = vmatpush.msra.mxu0 %v7607
    %7625 = vmatmul.f32.gmra.mxu0 %v7605
    %v7626 = vpop.f32.mrf.mxu0
    %v7627 = vadd.f32 0.0, %v7626
    %7628 = vdwg.mxu0
    %7629 = vst [vmem:[#allocation1] ss:$4 sm:$0xff] %v5542
    %v7630 = vld.sshfl [vmem:[#allocation1] sm:$0xff pattern:$0x73625140]
    %7631 = vrot.lane.b32.xlu0 %v7630, 48
    %v7632 = vpop.permute.xlu0 %7631
    %v7634 = vsel %vm668, %v7425, 0
    %v7636 = vsel %vm672, %v7632, 0
    %7638 = vmatpush.msra.mxu0 0.0
    %7639 = vmatpush.msra.mxu0 0.0
    %7640 = vmatpush.msra.mxu0 0.0
    %7641 = vmatpush.msra.mxu0 0.0
    %7642 = vmatpush.msra.mxu0 0.0
    %7643 = vmatpush.msra.mxu0 0.0
    %7644 = vmatpush.msra.mxu0 0.0
    %7645 = vmatpush.msra.mxu0 0.0
    %7646 = vmatpush.msra.mxu0 0.0
    %7647 = vmatpush.msra.mxu0 0.0
    %7648 = vmatpush.msra.mxu0 0.0
    %7649 = vmatpush.msra.mxu0 0.0
    %7650 = vmatpush.msra.mxu0 0.0
    %7651 = vmatpush.msra.mxu0 0.0
    %7652 = vmatpush.msra.mxu0 0.0
    %7653 = vmatpush.msra.mxu0 %v7636
    %7654 = vmatmul.f32.gmra.mxu0 %v7634
    %v7655 = vpop.f32.mrf.mxu0
    %v7656 = vadd.f32 0.0, %v7655
    %7657 = vdwg.mxu0
    %v7658 = vld [vmem:[%s6191 + $0x10] sm:$0xff]
    %7667 = vst [vmem:[#allocation1] ss:$4 sm:$0xff] %v7453
    %s7668 = scalar_lea.vmem [#allocation1], 1
    %7669 = vst [vmem:[%s7668] ss:$4 sm:$0xff] %v7482
    %s7670 = scalar_lea.vmem [#allocation1], 2
    %7671 = vst [vmem:[%s7670] ss:$4 sm:$0xff] %v7511
    %s7672 = scalar_lea.vmem [#allocation1], 3
    %7673 = vst [vmem:[%s7672] ss:$4 sm:$0xff] %v7540
    %s7674 = scalar_lea.vmem [#allocation1], 32
    %7675 = vst [vmem:[%s7674] ss:$4 sm:$0xff] %v7569
    %s7676 = scalar_lea.vmem [#allocation1], 33
    %7677 = vst [vmem:[%s7676] ss:$4 sm:$0xff] %v7598
    %s7678 = scalar_lea.vmem [#allocation1], 34
    %7679 = vst [vmem:[%s7678] ss:$4 sm:$0xff] %v7627
    %s7680 = scalar_lea.vmem [#allocation1], 35
    %7681 = vst [vmem:[%s7680] ss:$4 sm:$0xff] %v7656
    %v7682 = vld.sshfl [vmem:[#allocation1] sm:$0xff pattern:$0x73625140]
    %v7683 = vld.sshfl [vmem:[#allocation1 + $0x20] sm:$0xff pattern:$0x73625140]
    %v7684 = vsel %vm250, %v7682, 0
    %v7686 = vsel %vm250, %v7683, 0
    %7688 = vmatpush.msra.mxu0 0.0
    %7689 = vmatpush.msra.mxu0 0.0
    %7690 = vmatpush.msra.mxu0 0.0
    %7691 = vmatpush.msra.mxu0 0.0
    %7692 = vmatpush.msra.mxu0 0.0
    %7693 = vmatpush.msra.mxu0 0.0
    %7694 = vmatpush.msra.mxu0 0.0
    %7695 = vmatpush.msra.mxu0 0.0
    %7696 = vmatpush.msra.mxu0 0.0
    %7697 = vmatpush.msra.mxu0 0.0
    %7698 = vmatpush.msra.mxu0 0.0
    %7699 = vmatpush.msra.mxu0 0.0
    %7700 = vmatpush.msra.mxu0 0.0
    %7701 = vmatpush.msra.mxu0 0.0
    %7702 = vmatpush.msra.mxu0 0.0
    %7703 = vmatpush.msra.mxu0 %v7658
    %7704 = vmatmul.f32.gmra.mxu0 %v7684
    %v7705 = vpop.f32.mrf.mxu0
    %v7706 = vadd.f32 0.0, %v7705
    %7707 = vmatmul.f32.gmra.mxu0 %v7686
    %v7708 = vpop.f32.mrf.mxu0
    %v7709 = vadd.f32 0.0, %v7708
    %7710 = vdwg.mxu0
    %v7711 = vadd.f32 %v6973, %v7706
    %v7712 = vadd.f32 %v6976, %v7709
    %7713 = vst [vmem:[#allocation1] ss:$4 sm:$0xff] %v5531
    %v7714 = vld.sshfl [vmem:[#allocation1] sm:$0xff pattern:$0x73625140]
    %7715 = vrot.lane.b32.xlu0 %v7714, 104
    %v7716 = vpop.permute.xlu0 %7715
    %7717 = vst [vmem:[#allocation1] ss:$4 sm:$0xff] %v5531
    %v7718 = vld.sshfl [vmem:[#allocation1] sm:$0xff pattern:$0x73625140]
    %7719 = vrot.lane.b32.xlu0 %v7718, 72
    %v7720 = vpop.permute.xlu0 %7719
    %v7721 = vsel %vm250, %v7716, 0
    %v7723 = vsel %vm250, %v7720, 0
    %7725 = vmatpush.xpose.msra.mxu0 0.0
    %7726 = vmatpush.xpose.msra.mxu0 0.0
    %7727 = vmatpush.xpose.msra.mxu0 0.0
    %7728 = vmatpush.xpose.msra.mxu0 0.0
    %7729 = vmatpush.xpose.msra.mxu0 0.0
    %7730 = vmatpush.xpose.msra.mxu0 0.0
    %7731 = vmatpush.xpose.msra.mxu0 0.0
    %7732 = vmatpush.xpose.msra.mxu0 0.0
    %7733 = vmatpush.xpose.msra.mxu0 0.0
    %7734 = vmatpush.xpose.msra.mxu0 0.0
    %7735 = vmatpush.xpose.msra.mxu0 0.0
    %7736 = vmatpush.xpose.msra.mxu0 0.0
    %7737 = vmatpush.xpose.msra.mxu0 0.0
    %7738 = vmatpush.xpose.msra.mxu0 0.0
    %7739 = vmatpush.xpose.msra.mxu0 0.0
    %7740 = vmatpush.xpose.msra.mxu0 %v7723
    %7741 = vmatmul.f32.gmra.mxu0 %v7721
    %v7742 = vpop.f32.mrf.mxu0
    %v7743 = vadd.f32 0.0, %v7742
    %7744 = vdwg.mxu0
    %7745 = vst [vmem:[#allocation1] ss:$4 sm:$0xff] %v5537
    %v7746 = vld.sshfl [vmem:[#allocation1] sm:$0xff pattern:$0x73625140]
    %7747 = vrot.lane.b32.xlu0 %v7746, 104
    %v7748 = vpop.permute.xlu0 %7747
    %7749 = vst [vmem:[#allocation1] ss:$4 sm:$0xff] %v5537
    %v7750 = vld.sshfl [vmem:[#allocation1] sm:$0xff pattern:$0x73625140]
    %7751 = vrot.lane.b32.xlu0 %v7750, 72
    %v7752 = vpop.permute.xlu0 %7751
    %v7753 = vsel %vm250, %v7748, 0
    %v7755 = vsel %vm250, %v7752, 0
    %7757 = vmatpush.xpose.msra.mxu0 0.0
    %7758 = vmatpush.xpose.msra.mxu0 0.0
    %7759 = vmatpush.xpose.msra.mxu0 0.0
    %7760 = vmatpush.xpose.msra.mxu0 0.0
    %7761 = vmatpush.xpose.msra.mxu0 0.0
    %7762 = vmatpush.xpose.msra.mxu0 0.0
    %7763 = vmatpush.xpose.msra.mxu0 0.0
    %7764 = vmatpush.xpose.msra.mxu0 0.0
    %7765 = vmatpush.xpose.msra.mxu0 0.0
    %7766 = vmatpush.xpose.msra.mxu0 0.0
    %7767 = vmatpush.xpose.msra.mxu0 0.0
    %7768 = vmatpush.xpose.msra.mxu0 0.0
    %7769 = vmatpush.xpose.msra.mxu0 0.0
    %7770 = vmatpush.xpose.msra.mxu0 0.0
    %7771 = vmatpush.xpose.msra.mxu0 0.0
    %7772 = vmatpush.xpose.msra.mxu0 %v7755
    %7773 = vmatmul.f32.gmra.mxu0 %v7753
    %v7774 = vpop.f32.mrf.mxu0
    %v7775 = vadd.f32 0.0, %v7774
    %7776 = vdwg.mxu0
    %7777 = vst [vmem:[#allocation1] ss:$4 sm:$0xff] %v5538
    %v7778 = vld.sshfl [vmem:[#allocation1] sm:$0xff pattern:$0x73625140]
    %7779 = vrot.lane.b32.xlu0 %v7778, 104
    %v7780 = vpop.permute.xlu0 %7779
    %7781 = vst [vmem:[#allocation1] ss:$4 sm:$0xff] %v5538
    %v7782 = vld.sshfl [vmem:[#allocation1] sm:$0xff pattern:$0x73625140]
    %7783 = vrot.lane.b32.xlu0 %v7782, 72
    %v7784 = vpop.permute.xlu0 %7783
    %v7785 = vsel %vm250, %v7780, 0
    %v7787 = vsel %vm250, %v7784, 0
    %7789 = vmatpush.xpose.msra.mxu0 0.0
    %7790 = vmatpush.xpose.msra.mxu0 0.0
    %7791 = vmatpush.xpose.msra.mxu0 0.0
    %7792 = vmatpush.xpose.msra.mxu0 0.0
    %7793 = vmatpush.xpose.msra.mxu0 0.0
    %7794 = vmatpush.xpose.msra.mxu0 0.0
    %7795 = vmatpush.xpose.msra.mxu0 0.0
    %7796 = vmatpush.xpose.msra.mxu0 0.0
    %7797 = vmatpush.xpose.msra.mxu0 0.0
    %7798 = vmatpush.xpose.msra.mxu0 0.0
    %7799 = vmatpush.xpose.msra.mxu0 0.0
    %7800 = vmatpush.xpose.msra.mxu0 0.0
    %7801 = vmatpush.xpose.msra.mxu0 0.0
    %7802 = vmatpush.xpose.msra.mxu0 0.0
    %7803 = vmatpush.xpose.msra.mxu0 0.0
    %7804 = vmatpush.xpose.msra.mxu0 %v7787
    %7805 = vmatmul.f32.gmra.mxu0 %v7785
    %v7806 = vpop.f32.mrf.mxu0
    %v7807 = vadd.f32 0.0, %v7806
    %7808 = vdwg.mxu0
    %7809 = vst [vmem:[#allocation1] ss:$4 sm:$0xff] %v5539
    %v7810 = vld.sshfl [vmem:[#allocation1] sm:$0xff pattern:$0x73625140]
    %7811 = vrot.lane.b32.xlu0 %v7810, 104
    %v7812 = vpop.permute.xlu0 %7811
    %7813 = vst [vmem:[#allocation1] ss:$4 sm:$0xff] %v5539
    %v7814 = vld.sshfl [vmem:[#allocation1] sm:$0xff pattern:$0x73625140]
    %7815 = vrot.lane.b32.xlu0 %v7814, 72
    %v7816 = vpop.permute.xlu0 %7815
    %v7817 = vsel %vm250, %v7812, 0
    %v7819 = vsel %vm250, %v7816, 0
    %7821 = vmatpush.xpose.msra.mxu0 0.0
    %7822 = vmatpush.xpose.msra.mxu0 0.0
    %7823 = vmatpush.xpose.msra.mxu0 0.0
    %7824 = vmatpush.xpose.msra.mxu0 0.0
    %7825 = vmatpush.xpose.msra.mxu0 0.0
    %7826 = vmatpush.xpose.msra.mxu0 0.0
    %7827 = vmatpush.xpose.msra.mxu0 0.0
    %7828 = vmatpush.xpose.msra.mxu0 0.0
    %7829 = vmatpush.xpose.msra.mxu0 0.0
    %7830 = vmatpush.xpose.msra.mxu0 0.0
    %7831 = vmatpush.xpose.msra.mxu0 0.0
    %7832 = vmatpush.xpose.msra.mxu0 0.0
    %7833 = vmatpush.xpose.msra.mxu0 0.0
    %7834 = vmatpush.xpose.msra.mxu0 0.0
    %7835 = vmatpush.xpose.msra.mxu0 0.0
    %7836 = vmatpush.xpose.msra.mxu0 %v7819
    %7837 = vmatmul.f32.gmra.mxu0 %v7817
    %v7838 = vpop.f32.mrf.mxu0
    %v7839 = vadd.f32 0.0, %v7838
    %7840 = vdwg.mxu0
    %7841 = vst [vmem:[#allocation1] ss:$4 sm:$0xff] %v5533
    %v7842 = vld.sshfl [vmem:[#allocation1] sm:$0xff pattern:$0x73625140]
    %7843 = vrot.lane.b32.xlu0 %v7842, 104
    %v7844 = vpop.permute.xlu0 %7843
    %7845 = vst [vmem:[#allocation1] ss:$4 sm:$0xff] %v5533
    %v7846 = vld.sshfl [vmem:[#allocation1] sm:$0xff pattern:$0x73625140]
    %7847 = vrot.lane.b32.xlu0 %v7846, 72
    %v7848 = vpop.permute.xlu0 %7847
    %v7849 = vsel %vm250, %v7844, 0
    %v7851 = vsel %vm250, %v7848, 0
    %7853 = vmatpush.xpose.msra.mxu0 0.0
    %7854 = vmatpush.xpose.msra.mxu0 0.0
    %7855 = vmatpush.xpose.msra.mxu0 0.0
    %7856 = vmatpush.xpose.msra.mxu0 0.0
    %7857 = vmatpush.xpose.msra.mxu0 0.0
    %7858 = vmatpush.xpose.msra.mxu0 0.0
    %7859 = vmatpush.xpose.msra.mxu0 0.0
    %7860 = vmatpush.xpose.msra.mxu0 0.0
    %7861 = vmatpush.xpose.msra.mxu0 0.0
    %7862 = vmatpush.xpose.msra.mxu0 0.0
    %7863 = vmatpush.xpose.msra.mxu0 0.0
    %7864 = vmatpush.xpose.msra.mxu0 0.0
    %7865 = vmatpush.xpose.msra.mxu0 0.0
    %7866 = vmatpush.xpose.msra.mxu0 0.0
    %7867 = vmatpush.xpose.msra.mxu0 0.0
    %7868 = vmatpush.xpose.msra.mxu0 %v7851
    %7869 = vmatmul.f32.gmra.mxu0 %v7849
    %v7870 = vpop.f32.mrf.mxu0
    %v7871 = vadd.f32 0.0, %v7870
    %7872 = vdwg.mxu0
    %7873 = vst [vmem:[#allocation1] ss:$4 sm:$0xff] %v5540
    %v7874 = vld.sshfl [vmem:[#allocation1] sm:$0xff pattern:$0x73625140]
    %7875 = vrot.lane.b32.xlu0 %v7874, 104
    %v7876 = vpop.permute.xlu0 %7875
    %7877 = vst [vmem:[#allocation1] ss:$4 sm:$0xff] %v5540
    %v7878 = vld.sshfl [vmem:[#allocation1] sm:$0xff pattern:$0x73625140]
    %7879 = vrot.lane.b32.xlu0 %v7878, 72
    %v7880 = vpop.permute.xlu0 %7879
    %v7881 = vsel %vm250, %v7876, 0
    %v7883 = vsel %vm250, %v7880, 0
    %7885 = vmatpush.xpose.msra.mxu0 0.0
    %7886 = vmatpush.xpose.msra.mxu0 0.0
    %7887 = vmatpush.xpose.msra.mxu0 0.0
    %7888 = vmatpush.xpose.msra.mxu0 0.0
    %7889 = vmatpush.xpose.msra.mxu0 0.0
    %7890 = vmatpush.xpose.msra.mxu0 0.0
    %7891 = vmatpush.xpose.msra.mxu0 0.0
    %7892 = vmatpush.xpose.msra.mxu0 0.0
    %7893 = vmatpush.xpose.msra.mxu0 0.0
    %7894 = vmatpush.xpose.msra.mxu0 0.0
    %7895 = vmatpush.xpose.msra.mxu0 0.0
    %7896 = vmatpush.xpose.msra.mxu0 0.0
    %7897 = vmatpush.xpose.msra.mxu0 0.0
    %7898 = vmatpush.xpose.msra.mxu0 0.0
    %7899 = vmatpush.xpose.msra.mxu0 0.0
    %7900 = vmatpush.xpose.msra.mxu0 %v7883
    %7901 = vmatmul.f32.gmra.mxu0 %v7881
    %v7902 = vpop.f32.mrf.mxu0
    %v7903 = vadd.f32 0.0, %v7902
    %7904 = vdwg.mxu0
    %7905 = vst [vmem:[#allocation1] ss:$4 sm:$0xff] %v5541
    %v7906 = vld.sshfl [vmem:[#allocation1] sm:$0xff pattern:$0x73625140]
    %7907 = vrot.lane.b32.xlu0 %v7906, 104
    %v7908 = vpop.permute.xlu0 %7907
    %7909 = vst [vmem:[#allocation1] ss:$4 sm:$0xff] %v5541
    %v7910 = vld.sshfl [vmem:[#allocation1] sm:$0xff pattern:$0x73625140]
    %7911 = vrot.lane.b32.xlu0 %v7910, 72
    %v7912 = vpop.permute.xlu0 %7911
    %v7913 = vsel %vm250, %v7908, 0
    %v7915 = vsel %vm250, %v7912, 0
    %7917 = vmatpush.xpose.msra.mxu0 0.0
    %7918 = vmatpush.xpose.msra.mxu0 0.0
    %7919 = vmatpush.xpose.msra.mxu0 0.0
    %7920 = vmatpush.xpose.msra.mxu0 0.0
    %7921 = vmatpush.xpose.msra.mxu0 0.0
    %7922 = vmatpush.xpose.msra.mxu0 0.0
    %7923 = vmatpush.xpose.msra.mxu0 0.0
    %7924 = vmatpush.xpose.msra.mxu0 0.0
    %7925 = vmatpush.xpose.msra.mxu0 0.0
    %7926 = vmatpush.xpose.msra.mxu0 0.0
    %7927 = vmatpush.xpose.msra.mxu0 0.0
    %7928 = vmatpush.xpose.msra.mxu0 0.0
    %7929 = vmatpush.xpose.msra.mxu0 0.0
    %7930 = vmatpush.xpose.msra.mxu0 0.0
    %7931 = vmatpush.xpose.msra.mxu0 0.0
    %7932 = vmatpush.xpose.msra.mxu0 %v7915
    %7933 = vmatmul.f32.gmra.mxu0 %v7913
    %v7934 = vpop.f32.mrf.mxu0
    %v7935 = vadd.f32 0.0, %v7934
    %7936 = vdwg.mxu0
    %7937 = vst [vmem:[#allocation1] ss:$4 sm:$0xff] %v5542
    %v7938 = vld.sshfl [vmem:[#allocation1] sm:$0xff pattern:$0x73625140]
    %7939 = vrot.lane.b32.xlu0 %v7938, 104
    %v7940 = vpop.permute.xlu0 %7939
    %7941 = vst [vmem:[#allocation1] ss:$4 sm:$0xff] %v5542
    %v7942 = vld.sshfl [vmem:[#allocation1] sm:$0xff pattern:$0x73625140]
    %7943 = vrot.lane.b32.xlu0 %v7942, 72
    %v7944 = vpop.permute.xlu0 %7943
    %v7945 = vsel %vm250, %v7940, 0
    %v7947 = vsel %vm250, %v7944, 0
    %7949 = vmatpush.xpose.msra.mxu0 0.0
    %7950 = vmatpush.xpose.msra.mxu0 0.0
    %7951 = vmatpush.xpose.msra.mxu0 0.0
    %7952 = vmatpush.xpose.msra.mxu0 0.0
    %7953 = vmatpush.xpose.msra.mxu0 0.0
    %7954 = vmatpush.xpose.msra.mxu0 0.0
    %7955 = vmatpush.xpose.msra.mxu0 0.0
    %7956 = vmatpush.xpose.msra.mxu0 0.0
    %7957 = vmatpush.xpose.msra.mxu0 0.0
    %7958 = vmatpush.xpose.msra.mxu0 0.0
    %7959 = vmatpush.xpose.msra.mxu0 0.0
    %7960 = vmatpush.xpose.msra.mxu0 0.0
    %7961 = vmatpush.xpose.msra.mxu0 0.0
    %7962 = vmatpush.xpose.msra.mxu0 0.0
    %7963 = vmatpush.xpose.msra.mxu0 0.0
    %7964 = vmatpush.xpose.msra.mxu0 %v7947
    %7965 = vmatmul.f32.gmra.mxu0 %v7945
    %v7966 = vpop.f32.mrf.mxu0
    %v7967 = vadd.f32 0.0, %v7966
    %7968 = vdwg.mxu0
    %v7969 = vsel %vm471, %v7743, -inf
    %7970 = vmax.xlane.f32.xlu0 %v7969
    %v7971 = vpop.xlane.xlu0 %7970
    %v7972 = vsel %vm471, %v7775, -inf
    %7973 = vmax.xlane.f32.xlu0 %v7972
    %v7974 = vpop.xlane.xlu0 %7973
    %v7975 = vsel %vm471, %v7807, -inf
    %7976 = vmax.xlane.f32.xlu0 %v7975
    %v7977 = vpop.xlane.xlu0 %7976
    %v7978 = vsel %vm471, %v7839, -inf
    %7979 = vmax.xlane.f32.xlu0 %v7978
    %v7980 = vpop.xlane.xlu0 %7979
    %v7981 = vsel %vm471, %v7871, -inf
    %7982 = vmax.xlane.f32.xlu0 %v7981
    %v7983 = vpop.xlane.xlu0 %7982
    %v7984 = vsel %vm471, %v7903, -inf
    %7985 = vmax.xlane.f32.xlu0 %v7984
    %v7986 = vpop.xlane.xlu0 %7985
    %v7987 = vsel %vm471, %v7935, -inf
    %7988 = vmax.xlane.f32.xlu0 %v7987
    %v7989 = vpop.xlane.xlu0 %7988
    %v7990 = vsel %vm471, %v7967, -inf
    %7991 = vmax.xlane.f32.xlu0 %v7990
    %v7992 = vpop.xlane.xlu0 %7991
    %v7993 = vsub.f32 %v7743, %v7971
    %v7994 = vsub.f32 %v7775, %v7974
    %v7995 = vsub.f32 %v7807, %v7977
    %v7996 = vsub.f32 %v7839, %v7980
    %v7997 = vsub.f32 %v7871, %v7983
    %v7998 = vsub.f32 %v7903, %v7986
    %v7999 = vsub.f32 %v7935, %v7989
    %v8000 = vsub.f32 %v7967, %v7992
    %v8001 = vmul.f32 %v7993, 1.442695
    %v8002 = vpow.pop %v8001
    %v8003 = vmul.f32 %v7994, 1.442695
    %v8004 = vpow.pop %v8003
    %v8005 = vmul.f32 %v7995, 1.442695
    %v8006 = vpow.pop %v8005
    %v8007 = vmul.f32 %v7996, 1.442695
    %v8008 = vpow.pop %v8007
    %v8009 = vmul.f32 %v7997, 1.442695
    %v8010 = vpow.pop %v8009
    %v8011 = vmul.f32 %v7998, 1.442695
    %v8012 = vpow.pop %v8011
    %v8013 = vmul.f32 %v7999, 1.442695
    %v8014 = vpow.pop %v8013
    %v8015 = vmul.f32 %v8000, 1.442695
    %v8016 = vpow.pop %v8015
    %v8017 = vsel %vm471, %v8002, 0.0
    %8018 = vadd.xlane.f32.xlu0 %v8017
    %v8019 = vpop.xlane.xlu0 %8018
    %v8020 = vsel %vm471, %v8004, 0.0
    %8021 = vadd.xlane.f32.xlu0 %v8020
    %v8022 = vpop.xlane.xlu0 %8021
    %v8023 = vsel %vm471, %v8006, 0.0
    %8024 = vadd.xlane.f32.xlu0 %v8023
    %v8025 = vpop.xlane.xlu0 %8024
    %v8026 = vsel %vm471, %v8008, 0.0
    %8027 = vadd.xlane.f32.xlu0 %v8026
    %v8028 = vpop.xlane.xlu0 %8027
    %v8029 = vsel %vm471, %v8010, 0.0
    %8030 = vadd.xlane.f32.xlu0 %v8029
    %v8031 = vpop.xlane.xlu0 %8030
    %v8032 = vsel %vm471, %v8012, 0.0
    %8033 = vadd.xlane.f32.xlu0 %v8032
    %v8034 = vpop.xlane.xlu0 %8033
    %v8035 = vsel %vm471, %v8014, 0.0
    %8036 = vadd.xlane.f32.xlu0 %v8035
    %v8037 = vpop.xlane.xlu0 %8036
    %v8038 = vsel %vm471, %v8016, 0.0
    %8039 = vadd.xlane.f32.xlu0 %v8038
    %v8040 = vpop.xlane.xlu0 %8039
    %v8041 = vrcp.pop %v8019
    %v8042 = vmul.f32 %v8019, %v8041
    %v8043 = vsub.f32 1.0, %v8042
    %v8044 = vmul.f32 %v8041, %v8043
    %v8045 = vadd.f32 %v8041, %v8044
    %vm8046 = vweird.f32 %v8019
    %vm8047 = vweird.f32 %v8041
    %vm8048 = vmor %vm8046, %vm8047
    %v8049 = vsel %vm8048, %v8041, %v8045
    %v8050 = vand.u32 2147483647, %v8019
    %vm8051 = vcmp.eq.f32.partialorder %v8050, 8.507059e+37
    %v8052 = vand.u32 %v8019, 2147483648
    %v8053 = vor.u32 1.1754944e-38, %v8052
    %v8054 = vsel %vm8051, %v8053, %v8049
    %v8055 = vmul.f32 %v8002, %v8054
    %v8056 = vrcp.pop %v8022
    %v8057 = vmul.f32 %v8022, %v8056
    %v8058 = vsub.f32 1.0, %v8057
    %v8059 = vmul.f32 %v8056, %v8058
    %v8060 = vadd.f32 %v8056, %v8059
    %vm8061 = vweird.f32 %v8022
    %vm8062 = vweird.f32 %v8056
    %vm8063 = vmor %vm8061, %vm8062
    %v8064 = vsel %vm8063, %v8056, %v8060
    %v8065 = vand.u32 2147483647, %v8022
    %vm8066 = vcmp.eq.f32.partialorder %v8065, 8.507059e+37
    %v8067 = vand.u32 %v8022, 2147483648
    %v8068 = vor.u32 1.1754944e-38, %v8067
    %v8069 = vsel %vm8066, %v8068, %v8064
    %v8070 = vmul.f32 %v8004, %v8069
    %v8071 = vrcp.pop %v8025
    %v8072 = vmul.f32 %v8025, %v8071
    %v8073 = vsub.f32 1.0, %v8072
    %v8074 = vmul.f32 %v8071, %v8073
    %v8075 = vadd.f32 %v8071, %v8074
    %vm8076 = vweird.f32 %v8025
    %vm8077 = vweird.f32 %v8071
    %vm8078 = vmor %vm8076, %vm8077
    %v8079 = vsel %vm8078, %v8071, %v8075
    %v8080 = vand.u32 2147483647, %v8025
    %vm8081 = vcmp.eq.f32.partialorder %v8080, 8.507059e+37
    %v8082 = vand.u32 %v8025, 2147483648
    %v8083 = vor.u32 1.1754944e-38, %v8082
    %v8084 = vsel %vm8081, %v8083, %v8079
    %v8085 = vmul.f32 %v8006, %v8084
    %v8086 = vrcp.pop %v8028
    %v8087 = vmul.f32 %v8028, %v8086
    %v8088 = vsub.f32 1.0, %v8087
    %v8089 = vmul.f32 %v8086, %v8088
    %v8090 = vadd.f32 %v8086, %v8089
    %vm8091 = vweird.f32 %v8028
    %vm8092 = vweird.f32 %v8086
    %vm8093 = vmor %vm8091, %vm8092
    %v8094 = vsel %vm8093, %v8086, %v8090
    %v8095 = vand.u32 2147483647, %v8028
    %vm8096 = vcmp.eq.f32.partialorder %v8095, 8.507059e+37
    %v8097 = vand.u32 %v8028, 2147483648
    %v8098 = vor.u32 1.1754944e-38, %v8097
    %v8099 = vsel %vm8096, %v8098, %v8094
    %v8100 = vmul.f32 %v8008, %v8099
    %v8101 = vrcp.pop %v8031
    %v8102 = vmul.f32 %v8031, %v8101
    %v8103 = vsub.f32 1.0, %v8102
    %v8104 = vmul.f32 %v8101, %v8103
    %v8105 = vadd.f32 %v8101, %v8104
    %vm8106 = vweird.f32 %v8031
    %vm8107 = vweird.f32 %v8101
    %vm8108 = vmor %vm8106, %vm8107
    %v8109 = vsel %vm8108, %v8101, %v8105
    %v8110 = vand.u32 2147483647, %v8031
    %vm8111 = vcmp.eq.f32.partialorder %v8110, 8.507059e+37
    %v8112 = vand.u32 %v8031, 2147483648
    %v8113 = vor.u32 1.1754944e-38, %v8112
    %v8114 = vsel %vm8111, %v8113, %v8109
    %v8115 = vmul.f32 %v8010, %v8114
    %v8116 = vrcp.pop %v8034
    %v8117 = vmul.f32 %v8034, %v8116
    %v8118 = vsub.f32 1.0, %v8117
    %v8119 = vmul.f32 %v8116, %v8118
    %v8120 = vadd.f32 %v8116, %v8119
    %vm8121 = vweird.f32 %v8034
    %vm8122 = vweird.f32 %v8116
    %vm8123 = vmor %vm8121, %vm8122
    %v8124 = vsel %vm8123, %v8116, %v8120
    %v8125 = vand.u32 2147483647, %v8034
    %vm8126 = vcmp.eq.f32.partialorder %v8125, 8.507059e+37
    %v8127 = vand.u32 %v8034, 2147483648
    %v8128 = vor.u32 1.1754944e-38, %v8127
    %v8129 = vsel %vm8126, %v8128, %v8124
    %v8130 = vmul.f32 %v8012, %v8129
    %v8131 = vrcp.pop %v8037
    %v8132 = vmul.f32 %v8037, %v8131
    %v8133 = vsub.f32 1.0, %v8132
    %v8134 = vmul.f32 %v8131, %v8133
    %v8135 = vadd.f32 %v8131, %v8134
    %vm8136 = vweird.f32 %v8037
    %vm8137 = vweird.f32 %v8131
    %vm8138 = vmor %vm8136, %vm8137
    %v8139 = vsel %vm8138, %v8131, %v8135
    %v8140 = vand.u32 2147483647, %v8037
    %vm8141 = vcmp.eq.f32.partialorder %v8140, 8.507059e+37
    %v8142 = vand.u32 %v8037, 2147483648
    %v8143 = vor.u32 1.1754944e-38, %v8142
    %v8144 = vsel %vm8141, %v8143, %v8139
    %v8145 = vmul.f32 %v8014, %v8144
    %v8146 = vrcp.pop %v8040
    %v8147 = vmul.f32 %v8040, %v8146
    %v8148 = vsub.f32 1.0, %v8147
    %v8149 = vmul.f32 %v8146, %v8148
    %v8150 = vadd.f32 %v8146, %v8149
    %vm8151 = vweird.f32 %v8040
    %vm8152 = vweird.f32 %v8146
    %vm8153 = vmor %vm8151, %vm8152
    %v8154 = vsel %vm8153, %v8146, %v8150
    %v8155 = vand.u32 2147483647, %v8040
    %vm8156 = vcmp.eq.f32.partialorder %v8155, 8.507059e+37
    %v8157 = vand.u32 %v8040, 2147483648
    %v8158 = vor.u32 1.1754944e-38, %v8157
    %v8159 = vsel %vm8156, %v8158, %v8154
    %v8160 = vmul.f32 %v8016, %v8159
    %8161 = vst [vmem:[#allocation1] ss:$4 sm:$0xff] %v5531
    %v8162 = vld.sshfl [vmem:[#allocation1] sm:$0xff pattern:$0x73625140]
    %8163 = vrot.lane.b32.xlu0 %v8162, 40
    %v8164 = vpop.permute.xlu0 %8163
    %v8166 = vsel %vm668, %v8055, 0
    %v8168 = vsel %vm672, %v8164, 0
    %8170 = vmatpush.msra.mxu0 0.0
    %8171 = vmatpush.msra.mxu0 0.0
    %8172 = vmatpush.msra.mxu0 0.0
    %8173 = vmatpush.msra.mxu0 0.0
    %8174 = vmatpush.msra.mxu0 0.0
    %8175 = vmatpush.msra.mxu0 0.0
    %8176 = vmatpush.msra.mxu0 0.0
    %8177 = vmatpush.msra.mxu0 0.0
    %8178 = vmatpush.msra.mxu0 0.0
    %8179 = vmatpush.msra.mxu0 0.0
    %8180 = vmatpush.msra.mxu0 0.0
    %8181 = vmatpush.msra.mxu0 0.0
    %8182 = vmatpush.msra.mxu0 0.0
    %8183 = vmatpush.msra.mxu0 0.0
    %8184 = vmatpush.msra.mxu0 0.0
    %8185 = vmatpush.msra.mxu0 %v8168
    %8186 = vmatmul.f32.gmra.mxu0 %v8166
    %v8187 = vpop.f32.mrf.mxu0
    %v8188 = vadd.f32 0.0, %v8187
    %8189 = vdwg.mxu0
    %8190 = vst [vmem:[#allocation1] ss:$4 sm:$0xff] %v5537
    %v8191 = vld.sshfl [vmem:[#allocation1] sm:$0xff pattern:$0x73625140]
    %8192 = vrot.lane.b32.xlu0 %v8191, 40
    %v8193 = vpop.permute.xlu0 %8192
    %v8195 = vsel %vm668, %v8070, 0
    %v8197 = vsel %vm672, %v8193, 0
    %8199 = vmatpush.msra.mxu0 0.0
    %8200 = vmatpush.msra.mxu0 0.0
    %8201 = vmatpush.msra.mxu0 0.0
    %8202 = vmatpush.msra.mxu0 0.0
    %8203 = vmatpush.msra.mxu0 0.0
    %8204 = vmatpush.msra.mxu0 0.0
    %8205 = vmatpush.msra.mxu0 0.0
    %8206 = vmatpush.msra.mxu0 0.0
    %8207 = vmatpush.msra.mxu0 0.0
    %8208 = vmatpush.msra.mxu0 0.0
    %8209 = vmatpush.msra.mxu0 0.0
    %8210 = vmatpush.msra.mxu0 0.0
    %8211 = vmatpush.msra.mxu0 0.0
    %8212 = vmatpush.msra.mxu0 0.0
    %8213 = vmatpush.msra.mxu0 0.0
    %8214 = vmatpush.msra.mxu0 %v8197
    %8215 = vmatmul.f32.gmra.mxu0 %v8195
    %v8216 = vpop.f32.mrf.mxu0
    %v8217 = vadd.f32 0.0, %v8216
    %8218 = vdwg.mxu0
    %8219 = vst [vmem:[#allocation1] ss:$4 sm:$0xff] %v5538
    %v8220 = vld.sshfl [vmem:[#allocation1] sm:$0xff pattern:$0x73625140]
    %8221 = vrot.lane.b32.xlu0 %v8220, 40
    %v8222 = vpop.permute.xlu0 %8221
    %v8224 = vsel %vm668, %v8085, 0
    %v8226 = vsel %vm672, %v8222, 0
    %8228 = vmatpush.msra.mxu0 0.0
    %8229 = vmatpush.msra.mxu0 0.0
    %8230 = vmatpush.msra.mxu0 0.0
    %8231 = vmatpush.msra.mxu0 0.0
    %8232 = vmatpush.msra.mxu0 0.0
    %8233 = vmatpush.msra.mxu0 0.0
    %8234 = vmatpush.msra.mxu0 0.0
    %8235 = vmatpush.msra.mxu0 0.0
    %8236 = vmatpush.msra.mxu0 0.0
    %8237 = vmatpush.msra.mxu0 0.0
    %8238 = vmatpush.msra.mxu0 0.0
    %8239 = vmatpush.msra.mxu0 0.0
    %8240 = vmatpush.msra.mxu0 0.0
    %8241 = vmatpush.msra.mxu0 0.0
    %8242 = vmatpush.msra.mxu0 0.0
    %8243 = vmatpush.msra.mxu0 %v8226
    %8244 = vmatmul.f32.gmra.mxu0 %v8224
    %v8245 = vpop.f32.mrf.mxu0
    %v8246 = vadd.f32 0.0, %v8245
    %8247 = vdwg.mxu0
    %8248 = vst [vmem:[#allocation1] ss:$4 sm:$0xff] %v5539
    %v8249 = vld.sshfl [vmem:[#allocation1] sm:$0xff pattern:$0x73625140]
    %8250 = vrot.lane.b32.xlu0 %v8249, 40
    %v8251 = vpop.permute.xlu0 %8250
    %v8253 = vsel %vm668, %v8100, 0
    %v8255 = vsel %vm672, %v8251, 0
    %8257 = vmatpush.msra.mxu0 0.0
    %8258 = vmatpush.msra.mxu0 0.0
    %8259 = vmatpush.msra.mxu0 0.0
    %8260 = vmatpush.msra.mxu0 0.0
    %8261 = vmatpush.msra.mxu0 0.0
    %8262 = vmatpush.msra.mxu0 0.0
    %8263 = vmatpush.msra.mxu0 0.0
    %8264 = vmatpush.msra.mxu0 0.0
    %8265 = vmatpush.msra.mxu0 0.0
    %8266 = vmatpush.msra.mxu0 0.0
    %8267 = vmatpush.msra.mxu0 0.0
    %8268 = vmatpush.msra.mxu0 0.0
    %8269 = vmatpush.msra.mxu0 0.0
    %8270 = vmatpush.msra.mxu0 0.0
    %8271 = vmatpush.msra.mxu0 0.0
    %8272 = vmatpush.msra.mxu0 %v8255
    %8273 = vmatmul.f32.gmra.mxu0 %v8253
    %v8274 = vpop.f32.mrf.mxu0
    %v8275 = vadd.f32 0.0, %v8274
    %8276 = vdwg.mxu0
    %8277 = vst [vmem:[#allocation1] ss:$4 sm:$0xff] %v5533
    %v8278 = vld.sshfl [vmem:[#allocation1] sm:$0xff pattern:$0x73625140]
    %8279 = vrot.lane.b32.xlu0 %v8278, 40
    %v8280 = vpop.permute.xlu0 %8279
    %v8282 = vsel %vm668, %v8115, 0
    %v8284 = vsel %vm672, %v8280, 0
    %8286 = vmatpush.msra.mxu0 0.0
    %8287 = vmatpush.msra.mxu0 0.0
    %8288 = vmatpush.msra.mxu0 0.0
    %8289 = vmatpush.msra.mxu0 0.0
    %8290 = vmatpush.msra.mxu0 0.0
    %8291 = vmatpush.msra.mxu0 0.0
    %8292 = vmatpush.msra.mxu0 0.0
    %8293 = vmatpush.msra.mxu0 0.0
    %8294 = vmatpush.msra.mxu0 0.0
    %8295 = vmatpush.msra.mxu0 0.0
    %8296 = vmatpush.msra.mxu0 0.0
    %8297 = vmatpush.msra.mxu0 0.0
    %8298 = vmatpush.msra.mxu0 0.0
    %8299 = vmatpush.msra.mxu0 0.0
    %8300 = vmatpush.msra.mxu0 0.0
    %8301 = vmatpush.msra.mxu0 %v8284
    %8302 = vmatmul.f32.gmra.mxu0 %v8282
    %v8303 = vpop.f32.mrf.mxu0
    %v8304 = vadd.f32 0.0, %v8303
    %8305 = vdwg.mxu0
    %8306 = vst [vmem:[#allocation1] ss:$4 sm:$0xff] %v5540
    %v8307 = vld.sshfl [vmem:[#allocation1] sm:$0xff pattern:$0x73625140]
    %8308 = vrot.lane.b32.xlu0 %v8307, 40
    %v8309 = vpop.permute.xlu0 %8308
    %v8311 = vsel %vm668, %v8130, 0
    %v8313 = vsel %vm672, %v8309, 0
    %8315 = vmatpush.msra.mxu0 0.0
    %8316 = vmatpush.msra.mxu0 0.0
    %8317 = vmatpush.msra.mxu0 0.0
    %8318 = vmatpush.msra.mxu0 0.0
    %8319 = vmatpush.msra.mxu0 0.0
    %8320 = vmatpush.msra.mxu0 0.0
    %8321 = vmatpush.msra.mxu0 0.0
    %8322 = vmatpush.msra.mxu0 0.0
    %8323 = vmatpush.msra.mxu0 0.0
    %8324 = vmatpush.msra.mxu0 0.0
    %8325 = vmatpush.msra.mxu0 0.0
    %8326 = vmatpush.msra.mxu0 0.0
    %8327 = vmatpush.msra.mxu0 0.0
    %8328 = vmatpush.msra.mxu0 0.0
    %8329 = vmatpush.msra.mxu0 0.0
    %8330 = vmatpush.msra.mxu0 %v8313
    %8331 = vmatmul.f32.gmra.mxu0 %v8311
    %v8332 = vpop.f32.mrf.mxu0
    %v8333 = vadd.f32 0.0, %v8332
    %8334 = vdwg.mxu0
    %8335 = vst [vmem:[#allocation1] ss:$4 sm:$0xff] %v5541
    %v8336 = vld.sshfl [vmem:[#allocation1] sm:$0xff pattern:$0x73625140]
    %8337 = vrot.lane.b32.xlu0 %v8336, 40
    %v8338 = vpop.permute.xlu0 %8337
    %v8340 = vsel %vm668, %v8145, 0
    %v8342 = vsel %vm672, %v8338, 0
    %8344 = vmatpush.msra.mxu0 0.0
    %8345 = vmatpush.msra.mxu0 0.0
    %8346 = vmatpush.msra.mxu0 0.0
    %8347 = vmatpush.msra.mxu0 0.0
    %8348 = vmatpush.msra.mxu0 0.0
    %8349 = vmatpush.msra.mxu0 0.0
    %8350 = vmatpush.msra.mxu0 0.0
    %8351 = vmatpush.msra.mxu0 0.0
    %8352 = vmatpush.msra.mxu0 0.0
    %8353 = vmatpush.msra.mxu0 0.0
    %8354 = vmatpush.msra.mxu0 0.0
    %8355 = vmatpush.msra.mxu0 0.0
    %8356 = vmatpush.msra.mxu0 0.0
    %8357 = vmatpush.msra.mxu0 0.0
    %8358 = vmatpush.msra.mxu0 0.0
    %8359 = vmatpush.msra.mxu0 %v8342
    %8360 = vmatmul.f32.gmra.mxu0 %v8340
    %v8361 = vpop.f32.mrf.mxu0
    %v8362 = vadd.f32 0.0, %v8361
    %8363 = vdwg.mxu0
    %8364 = vst [vmem:[#allocation1] ss:$4 sm:$0xff] %v5542
    %v8365 = vld.sshfl [vmem:[#allocation1] sm:$0xff pattern:$0x73625140]
    %8366 = vrot.lane.b32.xlu0 %v8365, 40
    %v8367 = vpop.permute.xlu0 %8366
    %v8369 = vsel %vm668, %v8160, 0
    %v8371 = vsel %vm672, %v8367, 0
    %8373 = vmatpush.msra.mxu0 0.0
    %8374 = vmatpush.msra.mxu0 0.0
    %8375 = vmatpush.msra.mxu0 0.0
    %8376 = vmatpush.msra.mxu0 0.0
    %8377 = vmatpush.msra.mxu0 0.0
    %8378 = vmatpush.msra.mxu0 0.0
    %8379 = vmatpush.msra.mxu0 0.0
    %8380 = vmatpush.msra.mxu0 0.0
    %8381 = vmatpush.msra.mxu0 0.0
    %8382 = vmatpush.msra.mxu0 0.0
    %8383 = vmatpush.msra.mxu0 0.0
    %8384 = vmatpush.msra.mxu0 0.0
    %8385 = vmatpush.msra.mxu0 0.0
    %8386 = vmatpush.msra.mxu0 0.0
    %8387 = vmatpush.msra.mxu0 0.0
    %8388 = vmatpush.msra.mxu0 %v8371
    %8389 = vmatmul.f32.gmra.mxu0 %v8369
    %v8390 = vpop.f32.mrf.mxu0
    %v8391 = vadd.f32 0.0, %v8390
    %8392 = vdwg.mxu0
    %v8393 = vld [vmem:[%s6191 + $0x18] sm:$0xff]
    %8402 = vst [vmem:[#allocation1] ss:$4 sm:$0xff] %v8188
    %s8403 = scalar_lea.vmem [#allocation1], 1
    %8404 = vst [vmem:[%s8403] ss:$4 sm:$0xff] %v8217
    %s8405 = scalar_lea.vmem [#allocation1], 2
    %8406 = vst [vmem:[%s8405] ss:$4 sm:$0xff] %v8246
    %s8407 = scalar_lea.vmem [#allocation1], 3
    %8408 = vst [vmem:[%s8407] ss:$4 sm:$0xff] %v8275
    %s8409 = scalar_lea.vmem [#allocation1], 32
    %8410 = vst [vmem:[%s8409] ss:$4 sm:$0xff] %v8304
    %s8411 = scalar_lea.vmem [#allocation1], 33
    %8412 = vst [vmem:[%s8411] ss:$4 sm:$0xff] %v8333
    %s8413 = scalar_lea.vmem [#allocation1], 34
    %8414 = vst [vmem:[%s8413] ss:$4 sm:$0xff] %v8362
    %s8415 = scalar_lea.vmem [#allocation1], 35
    %8416 = vst [vmem:[%s8415] ss:$4 sm:$0xff] %v8391
    %v8417 = vld.sshfl [vmem:[#allocation1] sm:$0xff pattern:$0x73625140]
    %v8418 = vld.sshfl [vmem:[#allocation1 + $0x20] sm:$0xff pattern:$0x73625140]
    %v8419 = vsel %vm250, %v8417, 0
    %v8421 = vsel %vm250, %v8418, 0
    %8423 = vmatpush.msra.mxu0 0.0
    %8424 = vmatpush.msra.mxu0 0.0
    %8425 = vmatpush.msra.mxu0 0.0
    %8426 = vmatpush.msra.mxu0 0.0
    %8427 = vmatpush.msra.mxu0 0.0
    %8428 = vmatpush.msra.mxu0 0.0
    %8429 = vmatpush.msra.mxu0 0.0
    %8430 = vmatpush.msra.mxu0 0.0
    %8431 = vmatpush.msra.mxu0 0.0
    %8432 = vmatpush.msra.mxu0 0.0
    %8433 = vmatpush.msra.mxu0 0.0
    %8434 = vmatpush.msra.mxu0 0.0
    %8435 = vmatpush.msra.mxu0 0.0
    %8436 = vmatpush.msra.mxu0 0.0
    %8437 = vmatpush.msra.mxu0 0.0
    %8438 = vmatpush.msra.mxu0 %v8393
    %8439 = vmatmul.f32.gmra.mxu0 %v8419
    %v8440 = vpop.f32.mrf.mxu0
    %v8441 = vadd.f32 0.0, %v8440
    %8442 = vmatmul.f32.gmra.mxu0 %v8421
    %v8443 = vpop.f32.mrf.mxu0
    %v8444 = vadd.f32 0.0, %v8443
    %8445 = vdwg.mxu0
    %v8446 = vadd.f32 %v7711, %v8441
    %v8447 = vadd.f32 %v7712, %v8444
    %v8448 = vld [vmem:[%s7 + $0x1] sm:$0x1]
    %v8449 = vperm.slane %v8448, 0
    %v8450 = vadd.f32 %v8446, %v8449
    %v8451 = vadd.f32 %v8447, %v8449
    %v8454 = vrot.slane %v8450, 2
    %v8455 = vrot.slane %v8450, 4
    %v8456 = vrot.slane %v8450, 6
    %v8457 = vrot.slane %v8451, 2
    %v8458 = vrot.slane %v8451, 4
    %v8459 = vrot.slane %v8451, 6
    %v8466 = vadd.f32 %v5463, %v8450
    %v8467 = vadd.f32 %v5464, %v8454
    %v8468 = vadd.f32 %v5465, %v8455
    %v8469 = vadd.f32 %v5466, %v8456
    %v8470 = vadd.f32 %v5467, %v8451
    %v8471 = vadd.f32 %v5468, %v8457
    %v8472 = vadd.f32 %v5469, %v8458
    %v8473 = vadd.f32 %v5470, %v8459
    %v8474 = vld [vmem:[%s8 + $0x1] sm:$0x1]
    %v8475 = vld [vmem:[%s9 + $0x1] sm:$0x1]
    %8484 = vst [vmem:[#allocation1] ss:$4 sm:$0xff] %v8466
    %s8485 = scalar_lea.vmem [#allocation1], 1
    %8486 = vst [vmem:[%s8485] ss:$4 sm:$0xff] %v8467
    %s8487 = scalar_lea.vmem [#allocation1], 2
    %8488 = vst [vmem:[%s8487] ss:$4 sm:$0xff] %v8468
    %s8489 = scalar_lea.vmem [#allocation1], 3
    %8490 = vst [vmem:[%s8489] ss:$4 sm:$0xff] %v8469
    %s8491 = scalar_lea.vmem [#allocation1], 32
    %8492 = vst [vmem:[%s8491] ss:$4 sm:$0xff] %v8470
    %s8493 = scalar_lea.vmem [#allocation1], 33
    %8494 = vst [vmem:[%s8493] ss:$4 sm:$0xff] %v8471
    %s8495 = scalar_lea.vmem [#allocation1], 34
    %8496 = vst [vmem:[%s8495] ss:$4 sm:$0xff] %v8472
    %s8497 = scalar_lea.vmem [#allocation1], 35
    %8498 = vst [vmem:[%s8497] ss:$4 sm:$0xff] %v8473
    %v8499 = vld.sshfl [vmem:[#allocation1] sm:$0xff pattern:$0x73625140]
    %v8500 = vld.sshfl [vmem:[#allocation1 + $0x20] sm:$0xff pattern:$0x73625140]
    %v8503 = vsel %vm220, %v8499, 0.0
    %8504 = vadd.xlane.f32.xlu0 %v8503
    %v8505 = vpop.xlane.xlu0 %8504
    %v8506 = vsel %vm220, %v8500, 0.0
    %8507 = vadd.xlane.f32.xlu0 %v8506
    %v8508 = vpop.xlane.xlu0 %8507
    %v8509 = vmul.f32 %v8505, %v3221
    %v8510 = vmul.f32 %v8508, %v3221
    %v8514 = vunpack.c.l.s4 269488144
    %v8515 = vunpack.c.0.s8 %v8514
    %v8516 = vperm.slane %v8509, %v8515
    %v8518 = vunpack.c.l.s4 842150450
    %v8519 = vunpack.c.0.s8 %v8518
    %v8520 = vperm.slane %v8509, %v8519
    %v8522 = vunpack.c.l.s4 1414812756
    %v8523 = vunpack.c.0.s8 %v8522
    %v8524 = vperm.slane %v8509, %v8523
    %v8526 = vunpack.c.l.s4 1987475062
    %v8527 = vunpack.c.0.s8 %v8526
    %v8528 = vperm.slane %v8509, %v8527
    %v8530 = vunpack.c.l.s4 269488144
    %v8531 = vunpack.c.0.s8 %v8530
    %v8532 = vperm.slane %v8510, %v8531
    %v8534 = vunpack.c.l.s4 842150450
    %v8535 = vunpack.c.0.s8 %v8534
    %v8536 = vperm.slane %v8510, %v8535
    %v8538 = vunpack.c.l.s4 1414812756
    %v8539 = vunpack.c.0.s8 %v8538
    %v8540 = vperm.slane %v8510, %v8539
    %v8542 = vunpack.c.l.s4 1987475062
    %v8543 = vunpack.c.0.s8 %v8542
    %v8544 = vperm.slane %v8510, %v8543
    %v8553 = vsub.f32 %v8466, %v8516
    %v8554 = vsub.f32 %v8467, %v8520
    %v8555 = vsub.f32 %v8468, %v8524
    %v8556 = vsub.f32 %v8469, %v8528
    %v8557 = vsub.f32 %v8470, %v8532
    %v8558 = vsub.f32 %v8471, %v8536
    %v8559 = vsub.f32 %v8472, %v8540
    %v8560 = vsub.f32 %v8473, %v8544
    %v8561 = vmul.f32 %v8553, %v8553
    %v8562 = vmul.f32 %v8554, %v8554
    %v8563 = vmul.f32 %v8555, %v8555
    %v8564 = vmul.f32 %v8556, %v8556
    %v8565 = vmul.f32 %v8557, %v8557
    %v8566 = vmul.f32 %v8558, %v8558
    %v8567 = vmul.f32 %v8559, %v8559
    %v8568 = vmul.f32 %v8560, %v8560
    %8577 = vst [vmem:[#allocation1] ss:$4 sm:$0xff] %v8561
    %s8578 = scalar_lea.vmem [#allocation1], 1
    %8579 = vst [vmem:[%s8578] ss:$4 sm:$0xff] %v8562
    %s8580 = scalar_lea.vmem [#allocation1], 2
    %8581 = vst [vmem:[%s8580] ss:$4 sm:$0xff] %v8563
    %s8582 = scalar_lea.vmem [#allocation1], 3
    %8583 = vst [vmem:[%s8582] ss:$4 sm:$0xff] %v8564
    %s8584 = scalar_lea.vmem [#allocation1], 32
    %8585 = vst [vmem:[%s8584] ss:$4 sm:$0xff] %v8565
    %s8586 = scalar_lea.vmem [#allocation1], 33
    %8587 = vst [vmem:[%s8586] ss:$4 sm:$0xff] %v8566
    %s8588 = scalar_lea.vmem [#allocation1], 34
    %8589 = vst [vmem:[%s8588] ss:$4 sm:$0xff] %v8567
    %s8590 = scalar_lea.vmem [#allocation1], 35
    %8591 = vst [vmem:[%s8590] ss:$4 sm:$0xff] %v8568
    %v8592 = vld.sshfl [vmem:[#allocation1] sm:$0xff pattern:$0x73625140]
    %v8593 = vld.sshfl [vmem:[#allocation1 + $0x20] sm:$0xff pattern:$0x73625140]
    %v8596 = vsel %vm220, %v8592, 0.0
    %8597 = vadd.xlane.f32.xlu0 %v8596
    %v8598 = vpop.xlane.xlu0 %8597
    %v8599 = vsel %vm220, %v8593, 0.0
    %8600 = vadd.xlane.f32.xlu0 %v8599
    %v8601 = vpop.xlane.xlu0 %8600
    %v8602 = vmul.f32 %v8598, %v3221
    %v8603 = vmul.f32 %v8601, %v3221
    %v8604 = vadd.f32 %v8602, 1e-05
    %v8605 = vadd.f32 %v8603, 1e-05
    %v8606 = vrsqrt.pop %v8604
    %v8607 = vmul.f32 %v8606, %v8604
    %v8608 = vmul.f32 %v8607, %v8606
    %v8609 = vmul.f32 0.5, %v8608
    %v8610 = vsub.f32 1.5, %v8609
    %v8611 = vmul.f32 %v8606, %v8610
    %vm8612 = vweird.f32 %v8604
    %vm8613 = vweird.f32 %v8606
    %vm8614 = vmor %vm8612, %vm8613
    %v8615 = vsel %vm8614, %v8606, %v8611
    %v8616 = vrsqrt.pop %v8605
    %v8617 = vmul.f32 %v8616, %v8605
    %v8618 = vmul.f32 %v8617, %v8616
    %v8619 = vmul.f32 0.5, %v8618
    %v8620 = vsub.f32 1.5, %v8619
    %v8621 = vmul.f32 %v8616, %v8620
    %vm8622 = vweird.f32 %v8605
    %vm8623 = vweird.f32 %v8616
    %vm8624 = vmor %vm8622, %vm8623
    %v8625 = vsel %vm8624, %v8616, %v8621
    %v8629 = vunpack.c.l.s4 269488144
    %v8630 = vunpack.c.0.s8 %v8629
    %v8631 = vperm.slane %v8615, %v8630
    %v8633 = vunpack.c.l.s4 842150450
    %v8634 = vunpack.c.0.s8 %v8633
    %v8635 = vperm.slane %v8615, %v8634
    %v8637 = vunpack.c.l.s4 1414812756
    %v8638 = vunpack.c.0.s8 %v8637
    %v8639 = vperm.slane %v8615, %v8638
    %v8641 = vunpack.c.l.s4 1987475062
    %v8642 = vunpack.c.0.s8 %v8641
    %v8643 = vperm.slane %v8615, %v8642
    %v8645 = vunpack.c.l.s4 269488144
    %v8646 = vunpack.c.0.s8 %v8645
    %v8647 = vperm.slane %v8625, %v8646
    %v8649 = vunpack.c.l.s4 842150450
    %v8650 = vunpack.c.0.s8 %v8649
    %v8651 = vperm.slane %v8625, %v8650
    %v8653 = vunpack.c.l.s4 1414812756
    %v8654 = vunpack.c.0.s8 %v8653
    %v8655 = vperm.slane %v8625, %v8654
    %v8657 = vunpack.c.l.s4 1987475062
    %v8658 = vunpack.c.0.s8 %v8657
    %v8659 = vperm.slane %v8625, %v8658
    %v8668 = vmul.f32 %v8553, %v8631
    %v8669 = vmul.f32 %v8554, %v8635
    %v8670 = vmul.f32 %v8555, %v8639
    %v8671 = vmul.f32 %v8556, %v8643
    %v8672 = vmul.f32 %v8557, %v8647
    %v8673 = vmul.f32 %v8558, %v8651
    %v8674 = vmul.f32 %v8559, %v8655
    %v8675 = vmul.f32 %v8560, %v8659
    %v8676 = vperm.slane %v8474, 0
    %v8678 = vrot.slane %v8676, 2
    %v8679 = vrot.slane %v8676, 4
    %v8680 = vrot.slane %v8676, 6
    %v8684 = vmul.f32 %v8668, %v8676
    %v8685 = vmul.f32 %v8669, %v8678
    %v8686 = vmul.f32 %v8670, %v8679
    %v8687 = vmul.f32 %v8671, %v8680
    %v8688 = vmul.f32 %v8672, %v8676
    %v8689 = vmul.f32 %v8673, %v8678
    %v8690 = vmul.f32 %v8674, %v8679
    %v8691 = vmul.f32 %v8675, %v8680
    %v8692 = vperm.slane %v8475, 0
    %v8694 = vrot.slane %v8692, 2
    %v8695 = vrot.slane %v8692, 4
    %v8696 = vrot.slane %v8692, 6
    %v8700 = vadd.f32 %v8684, %v8692
    %v8701 = vadd.f32 %v8685, %v8694
    %v8702 = vadd.f32 %v8686, %v8695
    %v8703 = vadd.f32 %v8687, %v8696
    %v8704 = vadd.f32 %v8688, %v8692
    %v8705 = vadd.f32 %v8689, %v8694
    %v8706 = vadd.f32 %v8690, %v8695
    %v8707 = vadd.f32 %v8691, %v8696
    %8716 = vst [vmem:[#allocation1] ss:$4 sm:$0xff] %v8700
    %s8717 = scalar_lea.vmem [#allocation1], 1
    %8718 = vst [vmem:[%s8717] ss:$4 sm:$0xff] %v8701
    %s8719 = scalar_lea.vmem [#allocation1], 2
    %8720 = vst [vmem:[%s8719] ss:$4 sm:$0xff] %v8702
    %s8721 = scalar_lea.vmem [#allocation1], 3
    %8722 = vst [vmem:[%s8721] ss:$4 sm:$0xff] %v8703
    %s8723 = scalar_lea.vmem [#allocation1], 32
    %8724 = vst [vmem:[%s8723] ss:$4 sm:$0xff] %v8704
    %s8725 = scalar_lea.vmem [#allocation1], 33
    %8726 = vst [vmem:[%s8725] ss:$4 sm:$0xff] %v8705
    %s8727 = scalar_lea.vmem [#allocation1], 34
    %8728 = vst [vmem:[%s8727] ss:$4 sm:$0xff] %v8706
    %s8729 = scalar_lea.vmem [#allocation1], 35
    %8730 = vst [vmem:[%s8729] ss:$4 sm:$0xff] %v8707
    %v8731 = vld.sshfl [vmem:[#allocation1] sm:$0xff pattern:$0x73625140]
    %v8732 = vld.sshfl [vmem:[#allocation1 + $0x20] sm:$0xff pattern:$0x73625140]
    %v8735 = vpack.c.bf16 %v8732, %v8731
    %s8736 = scalar_lea.vmem %s12, 256
    %v8737 = vld [vmem:[%s8736] sm:$0xff]
    %v8738 = vld [vmem:[%s8736 + $0x8] sm:$0xff]
    %v8739 = vld [vmem:[%s8736 + $0x40] sm:$0xff]
    %v8740 = vld [vmem:[%s8736 + $0x48] sm:$0xff]
    %v8741 = vld [vmem:[%s8736 + $0x80] sm:$0xff]
    %v8742 = vld [vmem:[%s8736 + $0x88] sm:$0xff]
    %v8743 = vld [vmem:[%s8736 + $0xc0] sm:$0xff]
    %v8744 = vld [vmem:[%s8736 + $0xc8] sm:$0xff]
    %s8745 = scalar_lea.vmem %s13, 1
    %v8746 = vld [vmem:[%s8745] ss:$2 sm:$0xf]
    %v8748 = vperm.slane %v8746, 0
    %v8749 = vperm.slane %v8746, 1
    %v8750 = vperm.slane %v8746, 2
    %v8751 = vperm.slane %v8746, 3
    %v8764 = vunpack.c.l.b16 %v8737
    %v8765 = vunpack.c.h.b16 %v8737
    %v8766 = vunpack.c.l.b16 %v8738
    %v8767 = vunpack.c.h.b16 %v8738
    %v8768 = vunpack.c.l.b16 %v8739
    %v8769 = vunpack.c.h.b16 %v8739
    %v8770 = vunpack.c.l.b16 %v8740
    %v8771 = vunpack.c.h.b16 %v8740
    %v8772 = vunpack.c.l.b16 %v8741
    %v8773 = vunpack.c.h.b16 %v8741
    %v8774 = vunpack.c.l.b16 %v8742
    %v8775 = vunpack.c.h.b16 %v8742
    %v8776 = vunpack.c.l.b16 %v8743
    %v8777 = vunpack.c.h.b16 %v8743
    %v8778 = vunpack.c.l.b16 %v8744
    %v8779 = vunpack.c.h.b16 %v8744
    %v8780 = vpack.c.b16 %v8768, %v8764
    %v8781 = vpack.c.b16 %v8769, %v8765
    %v8782 = vpack.c.b16 %v8770, %v8766
    %v8783 = vpack.c.b16 %v8771, %v8767
    %v8784 = vpack.c.b16 %v8776, %v8772
    %v8785 = vpack.c.b16 %v8777, %v8773
    %v8786 = vpack.c.b16 %v8778, %v8774
    %v8787 = vpack.c.b16 %v8779, %v8775
    %v8797 = vsel %vm220, %v8735, 0
    %8799 = vmatpush.bf16.msra.mxu0 0
    %8800 = vmatpush.bf16.msra.mxu0 0
    %8801 = vmatpush.bf16.msra.mxu0 0
    %8802 = vmatpush.bf16.msra.mxu0 0
    %8803 = vmatpush.bf16.msra.mxu0 0
    %8804 = vmatpush.bf16.msra.mxu0 0
    %8805 = vmatpush.bf16.msra.mxu0 %v8784
    %8806 = vmatpush.bf16.msra.mxu0 %v8780
    %8807 = vmatmul.bf16.gmra.mxu0 %v8797
    %v8808 = vpop.f32.mrf.mxu0
    %v8809 = vadd.f32 %v8748, %v8808
    %v8810 = vpop.f32.mrf.mxu0
    %v8811 = vadd.f32 %v8748, %v8810
    %8812 = vdwg.mxu0
    %8813 = vmatpush.bf16.msra.mxu0 0
    %8814 = vmatpush.bf16.msra.mxu0 0
    %8815 = vmatpush.bf16.msra.mxu0 0
    %8816 = vmatpush.bf16.msra.mxu0 0
    %8817 = vmatpush.bf16.msra.mxu0 0
    %8818 = vmatpush.bf16.msra.mxu0 0
    %8819 = vmatpush.bf16.msra.mxu0 %v8785
    %8820 = vmatpush.bf16.msra.mxu0 %v8781
    %8821 = vmatmul.bf16.gmra.mxu0 %v8797
    %v8822 = vpop.f32.mrf.mxu0
    %v8823 = vadd.f32 %v8749, %v8822
    %v8824 = vpop.f32.mrf.mxu0
    %v8825 = vadd.f32 %v8749, %v8824
    %8826 = vdwg.mxu0
    %8827 = vmatpush.bf16.msra.mxu0 0
    %8828 = vmatpush.bf16.msra.mxu0 0
    %8829 = vmatpush.bf16.msra.mxu0 0
    %8830 = vmatpush.bf16.msra.mxu0 0
    %8831 = vmatpush.bf16.msra.mxu0 0
    %8832 = vmatpush.bf16.msra.mxu0 0
    %8833 = vmatpush.bf16.msra.mxu0 %v8786
    %8834 = vmatpush.bf16.msra.mxu0 %v8782
    %8835 = vmatmul.bf16.gmra.mxu0 %v8797
    %v8836 = vpop.f32.mrf.mxu0
    %v8837 = vadd.f32 %v8750, %v8836
    %v8838 = vpop.f32.mrf.mxu0
    %v8839 = vadd.f32 %v8750, %v8838
    %8840 = vdwg.mxu0
    %8841 = vmatpush.bf16.msra.mxu0 0
    %8842 = vmatpush.bf16.msra.mxu0 0
    %8843 = vmatpush.bf16.msra.mxu0 0
    %8844 = vmatpush.bf16.msra.mxu0 0
    %8845 = vmatpush.bf16.msra.mxu0 0
    %8846 = vmatpush.bf16.msra.mxu0 0
    %8847 = vmatpush.bf16.msra.mxu0 %v8787
    %8848 = vmatpush.bf16.msra.mxu0 %v8783
    %8849 = vmatmul.bf16.gmra.mxu0 %v8797
    %v8850 = vpop.f32.mrf.mxu0
    %v8851 = vadd.f32 %v8751, %v8850
    %v8852 = vpop.f32.mrf.mxu0
    %v8853 = vadd.f32 %v8751, %v8852
    %8854 = vdwg.mxu0
    %v8855 = vmax.f32 %v8809, 0.0
    %v8856 = vmax.f32 %v8823, 0.0
    %v8857 = vmax.f32 %v8837, 0.0
    %v8858 = vmax.f32 %v8851, 0.0
    %v8859 = vmax.f32 %v8811, 0.0
    %v8860 = vmax.f32 %v8825, 0.0
    %v8861 = vmax.f32 %v8839, 0.0
    %v8862 = vmax.f32 %v8853, 0.0
    %v8863 = vpack.c.bf16 %v8859, %v8855
    %v8864 = vpack.c.bf16 %v8860, %v8856
    %v8865 = vpack.c.bf16 %v8861, %v8857
    %v8866 = vpack.c.bf16 %v8862, %v8858
    %s8867 = scalar_lea.vmem %s14, 1024
    %v8868 = vld [vmem:[%s8867] sm:$0xf]
    %v8869 = vld [vmem:[%s8867 + $0x4] sm:$0xf]
    %v8870 = vld [vmem:[%s8867 + $0x8] sm:$0xf]
    %v8871 = vld [vmem:[%s8867 + $0xc] sm:$0xf]
    %v8872 = vld [vmem:[%s8867 + $0x10] sm:$0xf]
    %v8873 = vld [vmem:[%s8867 + $0x14] sm:$0xf]
    %v8874 = vld [vmem:[%s8867 + $0x18] sm:$0xf]
    %v8875 = vld [vmem:[%s8867 + $0x1c] sm:$0xf]
    %v8876 = vld [vmem:[%s8867 + $0x20] sm:$0xf]
    %v8877 = vld [vmem:[%s8867 + $0x24] sm:$0xf]
    %v8878 = vld [vmem:[%s8867 + $0x28] sm:$0xf]
    %v8879 = vld [vmem:[%s8867 + $0x2c] sm:$0xf]
    %v8880 = vld [vmem:[%s8867 + $0x30] sm:$0xf]
    %v8881 = vld [vmem:[%s8867 + $0x34] sm:$0xf]
    %v8882 = vld [vmem:[%s8867 + $0x38] sm:$0xf]
    %v8883 = vld [vmem:[%s8867 + $0x3c] sm:$0xf]
    %v8884 = vld [vmem:[%s8867 + $0x40] sm:$0xf]
    %v8885 = vld [vmem:[%s8867 + $0x44] sm:$0xf]
    %v8886 = vld [vmem:[%s8867 + $0x48] sm:$0xf]
    %v8887 = vld [vmem:[%s8867 + $0x4c] sm:$0xf]
    %v8888 = vld [vmem:[%s8867 + $0x50] sm:$0xf]
    %v8889 = vld [vmem:[%s8867 + $0x54] sm:$0xf]
    %v8890 = vld [vmem:[%s8867 + $0x58] sm:$0xf]
    %v8891 = vld [vmem:[%s8867 + $0x5c] sm:$0xf]
    %v8892 = vld [vmem:[%s8867 + $0x60] sm:$0xf]
    %v8893 = vld [vmem:[%s8867 + $0x64] sm:$0xf]
    %v8894 = vld [vmem:[%s8867 + $0x68] sm:$0xf]
    %v8895 = vld [vmem:[%s8867 + $0x6c] sm:$0xf]
    %v8896 = vld [vmem:[%s8867 + $0x70] sm:$0xf]
    %v8897 = vld [vmem:[%s8867 + $0x74] sm:$0xf]
    %v8898 = vld [vmem:[%s8867 + $0x78] sm:$0xf]
    %v8899 = vld [vmem:[%s8867 + $0x7c] sm:$0xf]
    %v8900 = vld [vmem:[%s8867 + $0x80] sm:$0xf]
    %v8901 = vld [vmem:[%s8867 + $0x84] sm:$0xf]
    %v8902 = vld [vmem:[%s8867 + $0x88] sm:$0xf]
    %v8903 = vld [vmem:[%s8867 + $0x8c] sm:$0xf]
    %v8904 = vld [vmem:[%s8867 + $0x90] sm:$0xf]
    %v8905 = vld [vmem:[%s8867 + $0x94] sm:$0xf]
    %v8906 = vld [vmem:[%s8867 + $0x98] sm:$0xf]
    %v8907 = vld [vmem:[%s8867 + $0x9c] sm:$0xf]
    %v8908 = vld [vmem:[%s8867 + $0xa0] sm:$0xf]
    %v8909 = vld [vmem:[%s8867 + $0xa4] sm:$0xf]
    %v8910 = vld [vmem:[%s8867 + $0xa8] sm:$0xf]
    %v8911 = vld [vmem:[%s8867 + $0xac] sm:$0xf]
    %v8912 = vld [vmem:[%s8867 + $0xb0] sm:$0xf]
    %v8913 = vld [vmem:[%s8867 + $0xb4] sm:$0xf]
    %v8914 = vld [vmem:[%s8867 + $0xb8] sm:$0xf]
    %v8915 = vld [vmem:[%s8867 + $0xbc] sm:$0xf]
    %v8916 = vld [vmem:[%s8867 + $0xc0] sm:$0xf]
    %v8917 = vld [vmem:[%s8867 + $0xc4] sm:$0xf]
    %v8918 = vld [vmem:[%s8867 + $0xc8] sm:$0xf]
    %v8919 = vld [vmem:[%s8867 + $0xcc] sm:$0xf]
    %v8920 = vld [vmem:[%s8867 + $0xd0] sm:$0xf]
    %v8921 = vld [vmem:[%s8867 + $0xd4] sm:$0xf]
    %v8922 = vld [vmem:[%s8867 + $0xd8] sm:$0xf]
    %v8923 = vld [vmem:[%s8867 + $0xdc] sm:$0xf]
    %v8924 = vld [vmem:[%s8867 + $0xe0] sm:$0xf]
    %v8925 = vld [vmem:[%s8867 + $0xe4] sm:$0xf]
    %v8926 = vld [vmem:[%s8867 + $0xe8] sm:$0xf]
    %v8927 = vld [vmem:[%s8867 + $0xec] sm:$0xf]
    %v8928 = vld [vmem:[%s8867 + $0xf0] sm:$0xf]
    %v8929 = vld [vmem:[%s8867 + $0xf4] sm:$0xf]
    %v8930 = vld [vmem:[%s8867 + $0xf8] sm:$0xf]
    %v8931 = vld [vmem:[%s8867 + $0xfc] sm:$0xf]
    %v8932 = vld [vmem:[%s8736 + $0x10] sm:$0xff]
    %v8933 = vld [vmem:[%s8736 + $0x18] sm:$0xff]
    %v8934 = vld [vmem:[%s8736 + $0x50] sm:$0xff]
    %v8935 = vld [vmem:[%s8736 + $0x58] sm:$0xff]
    %v8936 = vld [vmem:[%s8736 + $0x90] sm:$0xff]
    %v8937 = vld [vmem:[%s8736 + $0x98] sm:$0xff]
    %v8938 = vld [vmem:[%s8736 + $0xd0] sm:$0xff]
    %v8939 = vld [vmem:[%s8736 + $0xd8] sm:$0xff]
    %s8940 = scalar_lea.vmem %s13, 9
    %v8941 = vld [vmem:[%s8940] ss:$2 sm:$0xf]
    %v8943 = vperm.slane %v8941, 0
    %v8944 = vperm.slane %v8941, 1
    %v8945 = vperm.slane %v8941, 2
    %v8946 = vperm.slane %v8941, 3
    %v8959 = vunpack.c.l.b16 %v8932
    %v8960 = vunpack.c.h.b16 %v8932
    %v8961 = vunpack.c.l.b16 %v8933
    %v8962 = vunpack.c.h.b16 %v8933
    %v8963 = vunpack.c.l.b16 %v8934
    %v8964 = vunpack.c.h.b16 %v8934
    %v8965 = vunpack.c.l.b16 %v8935
    %v8966 = vunpack.c.h.b16 %v8935
    %v8967 = vunpack.c.l.b16 %v8936
    %v8968 = vunpack.c.h.b16 %v8936
    %v8969 = vunpack.c.l.b16 %v8937
    %v8970 = vunpack.c.h.b16 %v8937
    %v8971 = vunpack.c.l.b16 %v8938
    %v8972 = vunpack.c.h.b16 %v8938
    %v8973 = vunpack.c.l.b16 %v8939
    %v8974 = vunpack.c.h.b16 %v8939
    %v8975 = vpack.c.b16 %v8963, %v8959
    %v8976 = vpack.c.b16 %v8964, %v8960
    %v8977 = vpack.c.b16 %v8965, %v8961
    %v8978 = vpack.c.b16 %v8966, %v8962
    %v8979 = vpack.c.b16 %v8971, %v8967
    %v8980 = vpack.c.b16 %v8972, %v8968
    %v8981 = vpack.c.b16 %v8973, %v8969
    %v8982 = vpack.c.b16 %v8974, %v8970
    %8991 = vmatpush.bf16.msra.mxu0 0
    %8992 = vmatpush.bf16.msra.mxu0 0
    %8993 = vmatpush.bf16.msra.mxu0 0
    %8994 = vmatpush.bf16.msra.mxu0 0
    %8995 = vmatpush.bf16.msra.mxu0 0
    %8996 = vmatpush.bf16.msra.mxu0 0
    %8997 = vmatpush.bf16.msra.mxu0 %v8979
    %8998 = vmatpush.bf16.msra.mxu0 %v8975
    %8999 = vmatmul.bf16.gmra.mxu0 %v8797
    %v9000 = vpop.f32.mrf.mxu0
    %v9001 = vadd.f32 %v8943, %v9000
    %v9002 = vpop.f32.mrf.mxu0
    %v9003 = vadd.f32 %v8943, %v9002
    %9004 = vdwg.mxu0
    %9005 = vmatpush.bf16.msra.mxu0 0
    %9006 = vmatpush.bf16.msra.mxu0 0
    %9007 = vmatpush.bf16.msra.mxu0 0
    %9008 = vmatpush.bf16.msra.mxu0 0
    %9009 = vmatpush.bf16.msra.mxu0 0
    %9010 = vmatpush.bf16.msra.mxu0 0
    %9011 = vmatpush.bf16.msra.mxu0 %v8980
    %9012 = vmatpush.bf16.msra.mxu0 %v8976
    %9013 = vmatmul.bf16.gmra.mxu0 %v8797
    %v9014 = vpop.f32.mrf.mxu0
    %v9015 = vadd.f32 %v8944, %v9014
    %v9016 = vpop.f32.mrf.mxu0
    %v9017 = vadd.f32 %v8944, %v9016
    %9018 = vdwg.mxu0
    %9019 = vmatpush.bf16.msra.mxu0 0
    %9020 = vmatpush.bf16.msra.mxu0 0
    %9021 = vmatpush.bf16.msra.mxu0 0
    %9022 = vmatpush.bf16.msra.mxu0 0
    %9023 = vmatpush.bf16.msra.mxu0 0
    %9024 = vmatpush.bf16.msra.mxu0 0
    %9025 = vmatpush.bf16.msra.mxu0 %v8981
    %9026 = vmatpush.bf16.msra.mxu0 %v8977
    %9027 = vmatmul.bf16.gmra.mxu0 %v8797
    %v9028 = vpop.f32.mrf.mxu0
    %v9029 = vadd.f32 %v8945, %v9028
    %v9030 = vpop.f32.mrf.mxu0
    %v9031 = vadd.f32 %v8945, %v9030
    %9032 = vdwg.mxu0
    %9033 = vmatpush.bf16.msra.mxu0 0
    %9034 = vmatpush.bf16.msra.mxu0 0
    %9035 = vmatpush.bf16.msra.mxu0 0
    %9036 = vmatpush.bf16.msra.mxu0 0
    %9037 = vmatpush.bf16.msra.mxu0 0
    %9038 = vmatpush.bf16.msra.mxu0 0
    %9039 = vmatpush.bf16.msra.mxu0 %v8982
    %9040 = vmatpush.bf16.msra.mxu0 %v8978
    %9041 = vmatmul.bf16.gmra.mxu0 %v8797
    %v9042 = vpop.f32.mrf.mxu0
    %v9043 = vadd.f32 %v8946, %v9042
    %v9044 = vpop.f32.mrf.mxu0
    %v9045 = vadd.f32 %v8946, %v9044
    %9046 = vdwg.mxu0
    %v9047 = vmax.f32 %v9001, 0.0
    %v9048 = vmax.f32 %v9015, 0.0
    %v9049 = vmax.f32 %v9029, 0.0
    %v9050 = vmax.f32 %v9043, 0.0
    %v9051 = vmax.f32 %v9003, 0.0
    %v9052 = vmax.f32 %v9017, 0.0
    %v9053 = vmax.f32 %v9031, 0.0
    %v9054 = vmax.f32 %v9045, 0.0
    %v9055 = vpack.c.bf16 %v9051, %v9047
    %v9056 = vpack.c.bf16 %v9052, %v9048
    %v9057 = vpack.c.bf16 %v9053, %v9049
    %v9058 = vpack.c.bf16 %v9054, %v9050
    %v9059 = vld [vmem:[%s8867 + $0x100] sm:$0xf]
    %v9060 = vld [vmem:[%s8867 + $0x104] sm:$0xf]
    %v9061 = vld [vmem:[%s8867 + $0x108] sm:$0xf]
    %v9062 = vld [vmem:[%s8867 + $0x10c] sm:$0xf]
    %v9063 = vld [vmem:[%s8867 + $0x110] sm:$0xf]
    %v9064 = vld [vmem:[%s8867 + $0x114] sm:$0xf]
    %v9065 = vld [vmem:[%s8867 + $0x118] sm:$0xf]
    %v9066 = vld [vmem:[%s8867 + $0x11c] sm:$0xf]
    %v9067 = vld [vmem:[%s8867 + $0x120] sm:$0xf]
    %v9068 = vld [vmem:[%s8867 + $0x124] sm:$0xf]
    %v9069 = vld [vmem:[%s8867 + $0x128] sm:$0xf]
    %v9070 = vld [vmem:[%s8867 + $0x12c] sm:$0xf]
    %v9071 = vld [vmem:[%s8867 + $0x130] sm:$0xf]
    %v9072 = vld [vmem:[%s8867 + $0x134] sm:$0xf]
    %v9073 = vld [vmem:[%s8867 + $0x138] sm:$0xf]
    %v9074 = vld [vmem:[%s8867 + $0x13c] sm:$0xf]
    %v9075 = vld [vmem:[%s8867 + $0x140] sm:$0xf]
    %v9076 = vld [vmem:[%s8867 + $0x144] sm:$0xf]
    %v9077 = vld [vmem:[%s8867 + $0x148] sm:$0xf]
    %v9078 = vld [vmem:[%s8867 + $0x14c] sm:$0xf]
    %v9079 = vld [vmem:[%s8867 + $0x150] sm:$0xf]
    %v9080 = vld [vmem:[%s8867 + $0x154] sm:$0xf]
    %v9081 = vld [vmem:[%s8867 + $0x158] sm:$0xf]
    %v9082 = vld [vmem:[%s8867 + $0x15c] sm:$0xf]
    %v9083 = vld [vmem:[%s8867 + $0x160] sm:$0xf]
    %v9084 = vld [vmem:[%s8867 + $0x164] sm:$0xf]
    %v9085 = vld [vmem:[%s8867 + $0x168] sm:$0xf]
    %v9086 = vld [vmem:[%s8867 + $0x16c] sm:$0xf]
    %v9087 = vld [vmem:[%s8867 + $0x170] sm:$0xf]
    %v9088 = vld [vmem:[%s8867 + $0x174] sm:$0xf]
    %v9089 = vld [vmem:[%s8867 + $0x178] sm:$0xf]
    %v9090 = vld [vmem:[%s8867 + $0x17c] sm:$0xf]
    %v9091 = vld [vmem:[%s8867 + $0x180] sm:$0xf]
    %v9092 = vld [vmem:[%s8867 + $0x184] sm:$0xf]
    %v9093 = vld [vmem:[%s8867 + $0x188] sm:$0xf]
    %v9094 = vld [vmem:[%s8867 + $0x18c] sm:$0xf]
    %v9095 = vld [vmem:[%s8867 + $0x190] sm:$0xf]
    %v9096 = vld [vmem:[%s8867 + $0x194] sm:$0xf]
    %v9097 = vld [vmem:[%s8867 + $0x198] sm:$0xf]
    %v9098 = vld [vmem:[%s8867 + $0x19c] sm:$0xf]
    %v9099 = vld [vmem:[%s8867 + $0x1a0] sm:$0xf]
    %v9100 = vld [vmem:[%s8867 + $0x1a4] sm:$0xf]
    %v9101 = vld [vmem:[%s8867 + $0x1a8] sm:$0xf]
    %v9102 = vld [vmem:[%s8867 + $0x1ac] sm:$0xf]
    %v9103 = vld [vmem:[%s8867 + $0x1b0] sm:$0xf]
    %v9104 = vld [vmem:[%s8867 + $0x1b4] sm:$0xf]
    %v9105 = vld [vmem:[%s8867 + $0x1b8] sm:$0xf]
    %v9106 = vld [vmem:[%s8867 + $0x1bc] sm:$0xf]
    %v9107 = vld [vmem:[%s8867 + $0x1c0] sm:$0xf]
    %v9108 = vld [vmem:[%s8867 + $0x1c4] sm:$0xf]
    %v9109 = vld [vmem:[%s8867 + $0x1c8] sm:$0xf]
    %v9110 = vld [vmem:[%s8867 + $0x1cc] sm:$0xf]
    %v9111 = vld [vmem:[%s8867 + $0x1d0] sm:$0xf]
    %v9112 = vld [vmem:[%s8867 + $0x1d4] sm:$0xf]
    %v9113 = vld [vmem:[%s8867 + $0x1d8] sm:$0xf]
    %v9114 = vld [vmem:[%s8867 + $0x1dc] sm:$0xf]
    %v9115 = vld [vmem:[%s8867 + $0x1e0] sm:$0xf]
    %v9116 = vld [vmem:[%s8867 + $0x1e4] sm:$0xf]
    %v9117 = vld [vmem:[%s8867 + $0x1e8] sm:$0xf]
    %v9118 = vld [vmem:[%s8867 + $0x1ec] sm:$0xf]
    %v9119 = vld [vmem:[%s8867 + $0x1f0] sm:$0xf]
    %v9120 = vld [vmem:[%s8867 + $0x1f4] sm:$0xf]
    %v9121 = vld [vmem:[%s8867 + $0x1f8] sm:$0xf]
    %v9122 = vld [vmem:[%s8867 + $0x1fc] sm:$0xf]
    %v9187 = vunpack.c.l.b16 %v9059
    %v9188 = vunpack.c.l.b16 %v9060
    %v9189 = vunpack.c.l.b16 %v9061
    %v9190 = vunpack.c.l.b16 %v9062
    %v9191 = vunpack.c.l.b16 %v9063
    %v9192 = vunpack.c.l.b16 %v9064
    %v9193 = vunpack.c.l.b16 %v9065
    %v9194 = vunpack.c.l.b16 %v9066
    %v9195 = vunpack.c.l.b16 %v9067
    %v9196 = vunpack.c.l.b16 %v9068
    %v9197 = vunpack.c.l.b16 %v9069
    %v9198 = vunpack.c.l.b16 %v9070
    %v9199 = vunpack.c.l.b16 %v9071
    %v9200 = vunpack.c.l.b16 %v9072
    %v9201 = vunpack.c.l.b16 %v9073
    %v9202 = vunpack.c.l.b16 %v9074
    %v9203 = vunpack.c.l.b16 %v9075
    %v9204 = vunpack.c.l.b16 %v9076
    %v9205 = vunpack.c.l.b16 %v9077
    %v9206 = vunpack.c.l.b16 %v9078
    %v9207 = vunpack.c.l.b16 %v9079
    %v9208 = vunpack.c.l.b16 %v9080
    %v9209 = vunpack.c.l.b16 %v9081
    %v9210 = vunpack.c.l.b16 %v9082
    %v9211 = vunpack.c.l.b16 %v9083
    %v9212 = vunpack.c.l.b16 %v9084
    %v9213 = vunpack.c.l.b16 %v9085
    %v9214 = vunpack.c.l.b16 %v9086
    %v9215 = vunpack.c.l.b16 %v9087
    %v9216 = vunpack.c.l.b16 %v9088
    %v9217 = vunpack.c.l.b16 %v9089
    %v9218 = vunpack.c.l.b16 %v9090
    %v9219 = vunpack.c.l.b16 %v9091
    %v9220 = vunpack.c.l.b16 %v9092
    %v9221 = vunpack.c.l.b16 %v9093
    %v9222 = vunpack.c.l.b16 %v9094
    %v9223 = vunpack.c.l.b16 %v9095
    %v9224 = vunpack.c.l.b16 %v9096
    %v9225 = vunpack.c.l.b16 %v9097
    %v9226 = vunpack.c.l.b16 %v9098
    %v9227 = vunpack.c.l.b16 %v9099
    %v9228 = vunpack.c.l.b16 %v9100
    %v9229 = vunpack.c.l.b16 %v9101
    %v9230 = vunpack.c.l.b16 %v9102
    %v9231 = vunpack.c.l.b16 %v9103
    %v9232 = vunpack.c.l.b16 %v9104
    %v9233 = vunpack.c.l.b16 %v9105
    %v9234 = vunpack.c.l.b16 %v9106
    %v9235 = vunpack.c.l.b16 %v9107
    %v9236 = vunpack.c.l.b16 %v9108
    %v9237 = vunpack.c.l.b16 %v9109
    %v9238 = vunpack.c.l.b16 %v9110
    %v9239 = vunpack.c.l.b16 %v9111
    %v9240 = vunpack.c.l.b16 %v9112
    %v9241 = vunpack.c.l.b16 %v9113
    %v9242 = vunpack.c.l.b16 %v9114
    %v9243 = vunpack.c.l.b16 %v9115
    %v9244 = vunpack.c.l.b16 %v9116
    %v9245 = vunpack.c.l.b16 %v9117
    %v9246 = vunpack.c.l.b16 %v9118
    %v9247 = vunpack.c.l.b16 %v9119
    %v9248 = vunpack.c.l.b16 %v9120
    %v9249 = vunpack.c.l.b16 %v9121
    %v9250 = vunpack.c.l.b16 %v9122
    %v9251 = vpack.c.b16 %v9188, %v9187
    %v9252 = vpack.c.b16 %v9190, %v9189
    %v9253 = vpack.c.b16 %v9192, %v9191
    %v9254 = vpack.c.b16 %v9194, %v9193
    %v9255 = vpack.c.b16 %v9196, %v9195
    %v9256 = vpack.c.b16 %v9198, %v9197
    %v9257 = vpack.c.b16 %v9200, %v9199
    %v9258 = vpack.c.b16 %v9202, %v9201
    %v9259 = vpack.c.b16 %v9204, %v9203
    %v9260 = vpack.c.b16 %v9206, %v9205
    %v9261 = vpack.c.b16 %v9208, %v9207
    %v9262 = vpack.c.b16 %v9210, %v9209
    %v9263 = vpack.c.b16 %v9212, %v9211
    %v9264 = vpack.c.b16 %v9214, %v9213
    %v9265 = vpack.c.b16 %v9216, %v9215
    %v9266 = vpack.c.b16 %v9218, %v9217
    %v9267 = vpack.c.b16 %v9220, %v9219
    %v9268 = vpack.c.b16 %v9222, %v9221
    %v9269 = vpack.c.b16 %v9224, %v9223
    %v9270 = vpack.c.b16 %v9226, %v9225
    %v9271 = vpack.c.b16 %v9228, %v9227
    %v9272 = vpack.c.b16 %v9230, %v9229
    %v9273 = vpack.c.b16 %v9232, %v9231
    %v9274 = vpack.c.b16 %v9234, %v9233
    %v9275 = vpack.c.b16 %v9236, %v9235
    %v9276 = vpack.c.b16 %v9238, %v9237
    %v9277 = vpack.c.b16 %v9240, %v9239
    %v9278 = vpack.c.b16 %v9242, %v9241
    %v9279 = vpack.c.b16 %v9244, %v9243
    %v9280 = vpack.c.b16 %v9246, %v9245
    %v9281 = vpack.c.b16 %v9248, %v9247
    %v9282 = vpack.c.b16 %v9250, %v9249
    %9315 = vmatpush.bf16.msra.mxu0 %v9258
    %9316 = vmatpush.bf16.msra.mxu0 %v9257
    %9317 = vmatpush.bf16.msra.mxu0 %v9256
    %9318 = vmatpush.bf16.msra.mxu0 %v9255
    %9319 = vmatpush.bf16.msra.mxu0 %v9254
    %9320 = vmatpush.bf16.msra.mxu0 %v9253
    %9321 = vmatpush.bf16.msra.mxu0 %v9252
    %9322 = vmatpush.bf16.msra.mxu0 %v9251
    %9323 = vmatmul.bf16.gmra.mxu0 %v9055
    %v9324 = vpop.f32.mrf.mxu0
    %v9325 = vadd.f32 0.0, %v9324
    %v9326 = vpop.f32.mrf.mxu0
    %v9327 = vadd.f32 0.0, %v9326
    %9328 = vdwg.mxu0
    %9329 = vmatpush.bf16.msra.mxu0 %v9266
    %9330 = vmatpush.bf16.msra.mxu0 %v9265
    %9331 = vmatpush.bf16.msra.mxu0 %v9264
    %9332 = vmatpush.bf16.msra.mxu0 %v9263
    %9333 = vmatpush.bf16.msra.mxu0 %v9262
    %9334 = vmatpush.bf16.msra.mxu0 %v9261
    %9335 = vmatpush.bf16.msra.mxu0 %v9260
    %9336 = vmatpush.bf16.msra.mxu0 %v9259
    %9337 = vmatmul.bf16.gmra.mxu0 %v9056
    %v9338 = vpop.f32.mrf.mxu0
    %v9339 = vadd.f32 %v9325, %v9338
    %v9340 = vpop.f32.mrf.mxu0
    %v9341 = vadd.f32 %v9327, %v9340
    %9342 = vdwg.mxu0
    %9343 = vmatpush.bf16.msra.mxu0 %v9274
    %9344 = vmatpush.bf16.msra.mxu0 %v9273
    %9345 = vmatpush.bf16.msra.mxu0 %v9272
    %9346 = vmatpush.bf16.msra.mxu0 %v9271
    %9347 = vmatpush.bf16.msra.mxu0 %v9270
    %9348 = vmatpush.bf16.msra.mxu0 %v9269
    %9349 = vmatpush.bf16.msra.mxu0 %v9268
    %9350 = vmatpush.bf16.msra.mxu0 %v9267
    %9351 = vmatmul.bf16.gmra.mxu0 %v9057
    %v9352 = vpop.f32.mrf.mxu0
    %v9353 = vadd.f32 %v9339, %v9352
    %v9354 = vpop.f32.mrf.mxu0
    %v9355 = vadd.f32 %v9341, %v9354
    %9356 = vdwg.mxu0
    %9357 = vmatpush.bf16.msra.mxu0 %v9282
    %9358 = vmatpush.bf16.msra.mxu0 %v9281
    %9359 = vmatpush.bf16.msra.mxu0 %v9280
    %9360 = vmatpush.bf16.msra.mxu0 %v9279
    %9361 = vmatpush.bf16.msra.mxu0 %v9278
    %9362 = vmatpush.bf16.msra.mxu0 %v9277
    %9363 = vmatpush.bf16.msra.mxu0 %v9276
    %9364 = vmatpush.bf16.msra.mxu0 %v9275
    %9365 = vmatmul.bf16.gmra.mxu0 %v9058
    %v9366 = vpop.f32.mrf.mxu0
    %v9367 = vadd.f32 %v9353, %v9366
    %v9368 = vpop.f32.mrf.mxu0
    %v9369 = vadd.f32 %v9355, %v9368
    %9370 = vdwg.mxu0
    %v9435 = vunpack.c.l.b16 %v8868
    %v9436 = vunpack.c.l.b16 %v8869
    %v9437 = vunpack.c.l.b16 %v8870
    %v9438 = vunpack.c.l.b16 %v8871
    %v9439 = vunpack.c.l.b16 %v8872
    %v9440 = vunpack.c.l.b16 %v8873
    %v9441 = vunpack.c.l.b16 %v8874
    %v9442 = vunpack.c.l.b16 %v8875
    %v9443 = vunpack.c.l.b16 %v8876
    %v9444 = vunpack.c.l.b16 %v8877
    %v9445 = vunpack.c.l.b16 %v8878
    %v9446 = vunpack.c.l.b16 %v8879
    %v9447 = vunpack.c.l.b16 %v8880
    %v9448 = vunpack.c.l.b16 %v8881
    %v9449 = vunpack.c.l.b16 %v8882
    %v9450 = vunpack.c.l.b16 %v8883
    %v9451 = vunpack.c.l.b16 %v8884
    %v9452 = vunpack.c.l.b16 %v8885
    %v9453 = vunpack.c.l.b16 %v8886
    %v9454 = vunpack.c.l.b16 %v8887
    %v9455 = vunpack.c.l.b16 %v8888
    %v9456 = vunpack.c.l.b16 %v8889
    %v9457 = vunpack.c.l.b16 %v8890
    %v9458 = vunpack.c.l.b16 %v8891
    %v9459 = vunpack.c.l.b16 %v8892
    %v9460 = vunpack.c.l.b16 %v8893
    %v9461 = vunpack.c.l.b16 %v8894
    %v9462 = vunpack.c.l.b16 %v8895
    %v9463 = vunpack.c.l.b16 %v8896
    %v9464 = vunpack.c.l.b16 %v8897
    %v9465 = vunpack.c.l.b16 %v8898
    %v9466 = vunpack.c.l.b16 %v8899
    %v9467 = vunpack.c.l.b16 %v8900
    %v9468 = vunpack.c.l.b16 %v8901
    %v9469 = vunpack.c.l.b16 %v8902
    %v9470 = vunpack.c.l.b16 %v8903
    %v9471 = vunpack.c.l.b16 %v8904
    %v9472 = vunpack.c.l.b16 %v8905
    %v9473 = vunpack.c.l.b16 %v8906
    %v9474 = vunpack.c.l.b16 %v8907
    %v9475 = vunpack.c.l.b16 %v8908
    %v9476 = vunpack.c.l.b16 %v8909
    %v9477 = vunpack.c.l.b16 %v8910
    %v9478 = vunpack.c.l.b16 %v8911
    %v9479 = vunpack.c.l.b16 %v8912
    %v9480 = vunpack.c.l.b16 %v8913
    %v9481 = vunpack.c.l.b16 %v8914
    %v9482 = vunpack.c.l.b16 %v8915
    %v9483 = vunpack.c.l.b16 %v8916
    %v9484 = vunpack.c.l.b16 %v8917
    %v9485 = vunpack.c.l.b16 %v8918
    %v9486 = vunpack.c.l.b16 %v8919
    %v9487 = vunpack.c.l.b16 %v8920
    %v9488 = vunpack.c.l.b16 %v8921
    %v9489 = vunpack.c.l.b16 %v8922
    %v9490 = vunpack.c.l.b16 %v8923
    %v9491 = vunpack.c.l.b16 %v8924
    %v9492 = vunpack.c.l.b16 %v8925
    %v9493 = vunpack.c.l.b16 %v8926
    %v9494 = vunpack.c.l.b16 %v8927
    %v9495 = vunpack.c.l.b16 %v8928
    %v9496 = vunpack.c.l.b16 %v8929
    %v9497 = vunpack.c.l.b16 %v8930
    %v9498 = vunpack.c.l.b16 %v8931
    %v9499 = vpack.c.b16 %v9436, %v9435
    %v9500 = vpack.c.b16 %v9438, %v9437
    %v9501 = vpack.c.b16 %v9440, %v9439
    %v9502 = vpack.c.b16 %v9442, %v9441
    %v9503 = vpack.c.b16 %v9444, %v9443
    %v9504 = vpack.c.b16 %v9446, %v9445
    %v9505 = vpack.c.b16 %v9448, %v9447
    %v9506 = vpack.c.b16 %v9450, %v9449
    %v9507 = vpack.c.b16 %v9452, %v9451
    %v9508 = vpack.c.b16 %v9454, %v9453
    %v9509 = vpack.c.b16 %v9456, %v9455
    %v9510 = vpack.c.b16 %v9458, %v9457
    %v9511 = vpack.c.b16 %v9460, %v9459
    %v9512 = vpack.c.b16 %v9462, %v9461
    %v9513 = vpack.c.b16 %v9464, %v9463
    %v9514 = vpack.c.b16 %v9466, %v9465
    %v9515 = vpack.c.b16 %v9468, %v9467
    %v9516 = vpack.c.b16 %v9470, %v9469
    %v9517 = vpack.c.b16 %v9472, %v9471
    %v9518 = vpack.c.b16 %v9474, %v9473
    %v9519 = vpack.c.b16 %v9476, %v9475
    %v9520 = vpack.c.b16 %v9478, %v9477
    %v9521 = vpack.c.b16 %v9480, %v9479
    %v9522 = vpack.c.b16 %v9482, %v9481
    %v9523 = vpack.c.b16 %v9484, %v9483
    %v9524 = vpack.c.b16 %v9486, %v9485
    %v9525 = vpack.c.b16 %v9488, %v9487
    %v9526 = vpack.c.b16 %v9490, %v9489
    %v9527 = vpack.c.b16 %v9492, %v9491
    %v9528 = vpack.c.b16 %v9494, %v9493
    %v9529 = vpack.c.b16 %v9496, %v9495
    %v9530 = vpack.c.b16 %v9498, %v9497
    %9563 = vmatpush.bf16.msra.mxu0 %v9506
    %9564 = vmatpush.bf16.msra.mxu0 %v9505
    %9565 = vmatpush.bf16.msra.mxu0 %v9504
    %9566 = vmatpush.bf16.msra.mxu0 %v9503
    %9567 = vmatpush.bf16.msra.mxu0 %v9502
    %9568 = vmatpush.bf16.msra.mxu0 %v9501
    %9569 = vmatpush.bf16.msra.mxu0 %v9500
    %9570 = vmatpush.bf16.msra.mxu0 %v9499
    %9571 = vmatmul.bf16.gmra.mxu0 %v8863
    %v9572 = vpop.f32.mrf.mxu0
    %v9573 = vadd.f32 %v9367, %v9572
    %v9574 = vpop.f32.mrf.mxu0
    %v9575 = vadd.f32 %v9369, %v9574
    %9576 = vdwg.mxu0
    %9577 = vmatpush.bf16.msra.mxu0 %v9514
    %9578 = vmatpush.bf16.msra.mxu0 %v9513
    %9579 = vmatpush.bf16.msra.mxu0 %v9512
    %9580 = vmatpush.bf16.msra.mxu0 %v9511
    %9581 = vmatpush.bf16.msra.mxu0 %v9510
    %9582 = vmatpush.bf16.msra.mxu0 %v9509
    %9583 = vmatpush.bf16.msra.mxu0 %v9508
    %9584 = vmatpush.bf16.msra.mxu0 %v9507
    %9585 = vmatmul.bf16.gmra.mxu0 %v8864
    %v9586 = vpop.f32.mrf.mxu0
    %v9587 = vadd.f32 %v9573, %v9586
    %v9588 = vpop.f32.mrf.mxu0
    %v9589 = vadd.f32 %v9575, %v9588
    %9590 = vdwg.mxu0
    %9591 = vmatpush.bf16.msra.mxu0 %v9522
    %9592 = vmatpush.bf16.msra.mxu0 %v9521
    %9593 = vmatpush.bf16.msra.mxu0 %v9520
    %9594 = vmatpush.bf16.msra.mxu0 %v9519
    %9595 = vmatpush.bf16.msra.mxu0 %v9518
    %9596 = vmatpush.bf16.msra.mxu0 %v9517
    %9597 = vmatpush.bf16.msra.mxu0 %v9516
    %9598 = vmatpush.bf16.msra.mxu0 %v9515
    %9599 = vmatmul.bf16.gmra.mxu0 %v8865
    %v9600 = vpop.f32.mrf.mxu0
    %v9601 = vadd.f32 %v9587, %v9600
    %v9602 = vpop.f32.mrf.mxu0
    %v9603 = vadd.f32 %v9589, %v9602
    %9604 = vdwg.mxu0
    %9605 = vmatpush.bf16.msra.mxu0 %v9530
    %9606 = vmatpush.bf16.msra.mxu0 %v9529
    %9607 = vmatpush.bf16.msra.mxu0 %v9528
    %9608 = vmatpush.bf16.msra.mxu0 %v9527
    %9609 = vmatpush.bf16.msra.mxu0 %v9526
    %9610 = vmatpush.bf16.msra.mxu0 %v9525
    %9611 = vmatpush.bf16.msra.mxu0 %v9524
    %9612 = vmatpush.bf16.msra.mxu0 %v9523
    %9613 = vmatmul.bf16.gmra.mxu0 %v8866
    %v9614 = vpop.f32.mrf.mxu0
    %v9615 = vadd.f32 %v9601, %v9614
    %v9616 = vpop.f32.mrf.mxu0
    %v9617 = vadd.f32 %v9603, %v9616
    %9618 = vdwg.mxu0
    %v9619 = vld [vmem:[%s8736 + $0x20] sm:$0xff]
    %v9620 = vld [vmem:[%s8736 + $0x28] sm:$0xff]
    %v9621 = vld [vmem:[%s8736 + $0x60] sm:$0xff]
    %v9622 = vld [vmem:[%s8736 + $0x68] sm:$0xff]
    %v9623 = vld [vmem:[%s8736 + $0xa0] sm:$0xff]
    %v9624 = vld [vmem:[%s8736 + $0xa8] sm:$0xff]
    %v9625 = vld [vmem:[%s8736 + $0xe0] sm:$0xff]
    %v9626 = vld [vmem:[%s8736 + $0xe8] sm:$0xff]
    %s9627 = scalar_lea.vmem %s13, 17
    %v9628 = vld [vmem:[%s9627] ss:$2 sm:$0xf]
    %v9630 = vperm.slane %v9628, 0
    %v9631 = vperm.slane %v9628, 1
    %v9632 = vperm.slane %v9628, 2
    %v9633 = vperm.slane %v9628, 3
    %v9646 = vunpack.c.l.b16 %v9619
    %v9647 = vunpack.c.h.b16 %v9619
    %v9648 = vunpack.c.l.b16 %v9620
    %v9649 = vunpack.c.h.b16 %v9620
    %v9650 = vunpack.c.l.b16 %v9621
    %v9651 = vunpack.c.h.b16 %v9621
    %v9652 = vunpack.c.l.b16 %v9622
    %v9653 = vunpack.c.h.b16 %v9622
    %v9654 = vunpack.c.l.b16 %v9623
    %v9655 = vunpack.c.h.b16 %v9623
    %v9656 = vunpack.c.l.b16 %v9624
    %v9657 = vunpack.c.h.b16 %v9624
    %v9658 = vunpack.c.l.b16 %v9625
    %v9659 = vunpack.c.h.b16 %v9625
    %v9660 = vunpack.c.l.b16 %v9626
    %v9661 = vunpack.c.h.b16 %v9626
    %v9662 = vpack.c.b16 %v9650, %v9646
    %v9663 = vpack.c.b16 %v9651, %v9647
    %v9664 = vpack.c.b16 %v9652, %v9648
    %v9665 = vpack.c.b16 %v9653, %v9649
    %v9666 = vpack.c.b16 %v9658, %v9654
    %v9667 = vpack.c.b16 %v9659, %v9655
    %v9668 = vpack.c.b16 %v9660, %v9656
    %v9669 = vpack.c.b16 %v9661, %v9657
    %9678 = vmatpush.bf16.msra.mxu0 0
    %9679 = vmatpush.bf16.msra.mxu0 0
    %9680 = vmatpush.bf16.msra.mxu0 0
    %9681 = vmatpush.bf16.msra.mxu0 0
    %9682 = vmatpush.bf16.msra.mxu0 0
    %9683 = vmatpush.bf16.msra.mxu0 0
    %9684 = vmatpush.bf16.msra.mxu0 %v9666
    %9685 = vmatpush.bf16.msra.mxu0 %v9662
    %9686 = vmatmul.bf16.gmra.mxu0 %v8797
    %v9687 = vpop.f32.mrf.mxu0
    %v9688 = vadd.f32 %v9630, %v9687
    %v9689 = vpop.f32.mrf.mxu0
    %v9690 = vadd.f32 %v9630, %v9689
    %9691 = vdwg.mxu0
    %9692 = vmatpush.bf16.msra.mxu0 0
    %9693 = vmatpush.bf16.msra.mxu0 0
    %9694 = vmatpush.bf16.msra.mxu0 0
    %9695 = vmatpush.bf16.msra.mxu0 0
    %9696 = vmatpush.bf16.msra.mxu0 0
    %9697 = vmatpush.bf16.msra.mxu0 0
    %9698 = vmatpush.bf16.msra.mxu0 %v9667
    %9699 = vmatpush.bf16.msra.mxu0 %v9663
    %9700 = vmatmul.bf16.gmra.mxu0 %v8797
    %v9701 = vpop.f32.mrf.mxu0
    %v9702 = vadd.f32 %v9631, %v9701
    %v9703 = vpop.f32.mrf.mxu0
    %v9704 = vadd.f32 %v9631, %v9703
    %9705 = vdwg.mxu0
    %9706 = vmatpush.bf16.msra.mxu0 0
    %9707 = vmatpush.bf16.msra.mxu0 0
    %9708 = vmatpush.bf16.msra.mxu0 0
    %9709 = vmatpush.bf16.msra.mxu0 0
    %9710 = vmatpush.bf16.msra.mxu0 0
    %9711 = vmatpush.bf16.msra.mxu0 0
    %9712 = vmatpush.bf16.msra.mxu0 %v9668
    %9713 = vmatpush.bf16.msra.mxu0 %v9664
    %9714 = vmatmul.bf16.gmra.mxu0 %v8797
    %v9715 = vpop.f32.mrf.mxu0
    %v9716 = vadd.f32 %v9632, %v9715
    %v9717 = vpop.f32.mrf.mxu0
    %v9718 = vadd.f32 %v9632, %v9717
    %9719 = vdwg.mxu0
    %9720 = vmatpush.bf16.msra.mxu0 0
    %9721 = vmatpush.bf16.msra.mxu0 0
    %9722 = vmatpush.bf16.msra.mxu0 0
    %9723 = vmatpush.bf16.msra.mxu0 0
    %9724 = vmatpush.bf16.msra.mxu0 0
    %9725 = vmatpush.bf16.msra.mxu0 0
    %9726 = vmatpush.bf16.msra.mxu0 %v9669
    %9727 = vmatpush.bf16.msra.mxu0 %v9665
    %9728 = vmatmul.bf16.gmra.mxu0 %v8797
    %v9729 = vpop.f32.mrf.mxu0
    %v9730 = vadd.f32 %v9633, %v9729
    %v9731 = vpop.f32.mrf.mxu0
    %v9732 = vadd.f32 %v9633, %v9731
    %9733 = vdwg.mxu0
    %v9734 = vmax.f32 %v9688, 0.0
    %v9735 = vmax.f32 %v9702, 0.0
    %v9736 = vmax.f32 %v9716, 0.0
    %v9737 = vmax.f32 %v9730, 0.0
    %v9738 = vmax.f32 %v9690, 0.0
    %v9739 = vmax.f32 %v9704, 0.0
    %v9740 = vmax.f32 %v9718, 0.0
    %v9741 = vmax.f32 %v9732, 0.0
    %v9742 = vpack.c.bf16 %v9738, %v9734
    %v9743 = vpack.c.bf16 %v9739, %v9735
    %v9744 = vpack.c.bf16 %v9740, %v9736
    %v9745 = vpack.c.bf16 %v9741, %v9737
    %v9746 = vld [vmem:[%s8867 + $0x200] sm:$0xf]
    %v9747 = vld [vmem:[%s8867 + $0x204] sm:$0xf]
    %v9748 = vld [vmem:[%s8867 + $0x208] sm:$0xf]
    %v9749 = vld [vmem:[%s8867 + $0x20c] sm:$0xf]
    %v9750 = vld [vmem:[%s8867 + $0x210] sm:$0xf]
    %v9751 = vld [vmem:[%s8867 + $0x214] sm:$0xf]
    %v9752 = vld [vmem:[%s8867 + $0x218] sm:$0xf]
    %v9753 = vld [vmem:[%s8867 + $0x21c] sm:$0xf]
    %v9754 = vld [vmem:[%s8867 + $0x220] sm:$0xf]
    %v9755 = vld [vmem:[%s8867 + $0x224] sm:$0xf]
    %v9756 = vld [vmem:[%s8867 + $0x228] sm:$0xf]
    %v9757 = vld [vmem:[%s8867 + $0x22c] sm:$0xf]
    %v9758 = vld [vmem:[%s8867 + $0x230] sm:$0xf]
    %v9759 = vld [vmem:[%s8867 + $0x234] sm:$0xf]
    %v9760 = vld [vmem:[%s8867 + $0x238] sm:$0xf]
    %v9761 = vld [vmem:[%s8867 + $0x23c] sm:$0xf]
    %v9762 = vld [vmem:[%s8867 + $0x240] sm:$0xf]
    %v9763 = vld [vmem:[%s8867 + $0x244] sm:$0xf]
    %v9764 = vld [vmem:[%s8867 + $0x248] sm:$0xf]
    %v9765 = vld [vmem:[%s8867 + $0x24c] sm:$0xf]
    %v9766 = vld [vmem:[%s8867 + $0x250] sm:$0xf]
    %v9767 = vld [vmem:[%s8867 + $0x254] sm:$0xf]
    %v9768 = vld [vmem:[%s8867 + $0x258] sm:$0xf]
    %v9769 = vld [vmem:[%s8867 + $0x25c] sm:$0xf]
    %v9770 = vld [vmem:[%s8867 + $0x260] sm:$0xf]
    %v9771 = vld [vmem:[%s8867 + $0x264] sm:$0xf]
    %v9772 = vld [vmem:[%s8867 + $0x268] sm:$0xf]
    %v9773 = vld [vmem:[%s8867 + $0x26c] sm:$0xf]
    %v9774 = vld [vmem:[%s8867 + $0x270] sm:$0xf]
    %v9775 = vld [vmem:[%s8867 + $0x274] sm:$0xf]
    %v9776 = vld [vmem:[%s8867 + $0x278] sm:$0xf]
    %v9777 = vld [vmem:[%s8867 + $0x27c] sm:$0xf]
    %v9778 = vld [vmem:[%s8867 + $0x280] sm:$0xf]
    %v9779 = vld [vmem:[%s8867 + $0x284] sm:$0xf]
    %v9780 = vld [vmem:[%s8867 + $0x288] sm:$0xf]
    %v9781 = vld [vmem:[%s8867 + $0x28c] sm:$0xf]
    %v9782 = vld [vmem:[%s8867 + $0x290] sm:$0xf]
    %v9783 = vld [vmem:[%s8867 + $0x294] sm:$0xf]
    %v9784 = vld [vmem:[%s8867 + $0x298] sm:$0xf]
    %v9785 = vld [vmem:[%s8867 + $0x29c] sm:$0xf]
    %v9786 = vld [vmem:[%s8867 + $0x2a0] sm:$0xf]
    %v9787 = vld [vmem:[%s8867 + $0x2a4] sm:$0xf]
    %v9788 = vld [vmem:[%s8867 + $0x2a8] sm:$0xf]
    %v9789 = vld [vmem:[%s8867 + $0x2ac] sm:$0xf]
    %v9790 = vld [vmem:[%s8867 + $0x2b0] sm:$0xf]
    %v9791 = vld [vmem:[%s8867 + $0x2b4] sm:$0xf]
    %v9792 = vld [vmem:[%s8867 + $0x2b8] sm:$0xf]
    %v9793 = vld [vmem:[%s8867 + $0x2bc] sm:$0xf]
    %v9794 = vld [vmem:[%s8867 + $0x2c0] sm:$0xf]
    %v9795 = vld [vmem:[%s8867 + $0x2c4] sm:$0xf]
    %v9796 = vld [vmem:[%s8867 + $0x2c8] sm:$0xf]
    %v9797 = vld [vmem:[%s8867 + $0x2cc] sm:$0xf]
    %v9798 = vld [vmem:[%s8867 + $0x2d0] sm:$0xf]
    %v9799 = vld [vmem:[%s8867 + $0x2d4] sm:$0xf]
    %v9800 = vld [vmem:[%s8867 + $0x2d8] sm:$0xf]
    %v9801 = vld [vmem:[%s8867 + $0x2dc] sm:$0xf]
    %v9802 = vld [vmem:[%s8867 + $0x2e0] sm:$0xf]
    %v9803 = vld [vmem:[%s8867 + $0x2e4] sm:$0xf]
    %v9804 = vld [vmem:[%s8867 + $0x2e8] sm:$0xf]
    %v9805 = vld [vmem:[%s8867 + $0x2ec] sm:$0xf]
    %v9806 = vld [vmem:[%s8867 + $0x2f0] sm:$0xf]
    %v9807 = vld [vmem:[%s8867 + $0x2f4] sm:$0xf]
    %v9808 = vld [vmem:[%s8867 + $0x2f8] sm:$0xf]
    %v9809 = vld [vmem:[%s8867 + $0x2fc] sm:$0xf]
    %v9874 = vunpack.c.l.b16 %v9746
    %v9875 = vunpack.c.l.b16 %v9747
    %v9876 = vunpack.c.l.b16 %v9748
    %v9877 = vunpack.c.l.b16 %v9749
    %v9878 = vunpack.c.l.b16 %v9750
    %v9879 = vunpack.c.l.b16 %v9751
    %v9880 = vunpack.c.l.b16 %v9752
    %v9881 = vunpack.c.l.b16 %v9753
    %v9882 = vunpack.c.l.b16 %v9754
    %v9883 = vunpack.c.l.b16 %v9755
    %v9884 = vunpack.c.l.b16 %v9756
    %v9885 = vunpack.c.l.b16 %v9757
    %v9886 = vunpack.c.l.b16 %v9758
    %v9887 = vunpack.c.l.b16 %v9759
    %v9888 = vunpack.c.l.b16 %v9760
    %v9889 = vunpack.c.l.b16 %v9761
    %v9890 = vunpack.c.l.b16 %v9762
    %v9891 = vunpack.c.l.b16 %v9763
    %v9892 = vunpack.c.l.b16 %v9764
    %v9893 = vunpack.c.l.b16 %v9765
    %v9894 = vunpack.c.l.b16 %v9766
    %v9895 = vunpack.c.l.b16 %v9767
    %v9896 = vunpack.c.l.b16 %v9768
    %v9897 = vunpack.c.l.b16 %v9769
    %v9898 = vunpack.c.l.b16 %v9770
    %v9899 = vunpack.c.l.b16 %v9771
    %v9900 = vunpack.c.l.b16 %v9772
    %v9901 = vunpack.c.l.b16 %v9773
    %v9902 = vunpack.c.l.b16 %v9774
    %v9903 = vunpack.c.l.b16 %v9775
    %v9904 = vunpack.c.l.b16 %v9776
    %v9905 = vunpack.c.l.b16 %v9777
    %v9906 = vunpack.c.l.b16 %v9778
    %v9907 = vunpack.c.l.b16 %v9779
    %v9908 = vunpack.c.l.b16 %v9780
    %v9909 = vunpack.c.l.b16 %v9781
    %v9910 = vunpack.c.l.b16 %v9782
    %v9911 = vunpack.c.l.b16 %v9783
    %v9912 = vunpack.c.l.b16 %v9784
    %v9913 = vunpack.c.l.b16 %v9785
    %v9914 = vunpack.c.l.b16 %v9786
    %v9915 = vunpack.c.l.b16 %v9787
    %v9916 = vunpack.c.l.b16 %v9788
    %v9917 = vunpack.c.l.b16 %v9789
    %v9918 = vunpack.c.l.b16 %v9790
    %v9919 = vunpack.c.l.b16 %v9791
    %v9920 = vunpack.c.l.b16 %v9792
    %v9921 = vunpack.c.l.b16 %v9793
    %v9922 = vunpack.c.l.b16 %v9794
    %v9923 = vunpack.c.l.b16 %v9795
    %v9924 = vunpack.c.l.b16 %v9796
    %v9925 = vunpack.c.l.b16 %v9797
    %v9926 = vunpack.c.l.b16 %v9798
    %v9927 = vunpack.c.l.b16 %v9799
    %v9928 = vunpack.c.l.b16 %v9800
    %v9929 = vunpack.c.l.b16 %v9801
    %v9930 = vunpack.c.l.b16 %v9802
    %v9931 = vunpack.c.l.b16 %v9803
    %v9932 = vunpack.c.l.b16 %v9804
    %v9933 = vunpack.c.l.b16 %v9805
    %v9934 = vunpack.c.l.b16 %v9806
    %v9935 = vunpack.c.l.b16 %v9807
    %v9936 = vunpack.c.l.b16 %v9808
    %v9937 = vunpack.c.l.b16 %v9809
    %v9938 = vpack.c.b16 %v9875, %v9874
    %v9939 = vpack.c.b16 %v9877, %v9876
    %v9940 = vpack.c.b16 %v9879, %v9878
    %v9941 = vpack.c.b16 %v9881, %v9880
    %v9942 = vpack.c.b16 %v9883, %v9882
    %v9943 = vpack.c.b16 %v9885, %v9884
    %v9944 = vpack.c.b16 %v9887, %v9886
    %v9945 = vpack.c.b16 %v9889, %v9888
    %v9946 = vpack.c.b16 %v9891, %v9890
    %v9947 = vpack.c.b16 %v9893, %v9892
    %v9948 = vpack.c.b16 %v9895, %v9894
    %v9949 = vpack.c.b16 %v9897, %v9896
    %v9950 = vpack.c.b16 %v9899, %v9898
    %v9951 = vpack.c.b16 %v9901, %v9900
    %v9952 = vpack.c.b16 %v9903, %v9902
    %v9953 = vpack.c.b16 %v9905, %v9904
    %v9954 = vpack.c.b16 %v9907, %v9906
    %v9955 = vpack.c.b16 %v9909, %v9908
    %v9956 = vpack.c.b16 %v9911, %v9910
    %v9957 = vpack.c.b16 %v9913, %v9912
    %v9958 = vpack.c.b16 %v9915, %v9914
    %v9959 = vpack.c.b16 %v9917, %v9916
    %v9960 = vpack.c.b16 %v9919, %v9918
    %v9961 = vpack.c.b16 %v9921, %v9920
    %v9962 = vpack.c.b16 %v9923, %v9922
    %v9963 = vpack.c.b16 %v9925, %v9924
    %v9964 = vpack.c.b16 %v9927, %v9926
    %v9965 = vpack.c.b16 %v9929, %v9928
    %v9966 = vpack.c.b16 %v9931, %v9930
    %v9967 = vpack.c.b16 %v9933, %v9932
    %v9968 = vpack.c.b16 %v9935, %v9934
    %v9969 = vpack.c.b16 %v9937, %v9936
    %10002 = vmatpush.bf16.msra.mxu0 %v9945
    %10003 = vmatpush.bf16.msra.mxu0 %v9944
    %10004 = vmatpush.bf16.msra.mxu0 %v9943
    %10005 = vmatpush.bf16.msra.mxu0 %v9942
    %10006 = vmatpush.bf16.msra.mxu0 %v9941
    %10007 = vmatpush.bf16.msra.mxu0 %v9940
    %10008 = vmatpush.bf16.msra.mxu0 %v9939
    %10009 = vmatpush.bf16.msra.mxu0 %v9938
    %10010 = vmatmul.bf16.gmra.mxu0 %v9742
    %v10011 = vpop.f32.mrf.mxu0
    %v10012 = vadd.f32 0.0, %v10011
    %v10013 = vpop.f32.mrf.mxu0
    %v10014 = vadd.f32 0.0, %v10013
    %10015 = vdwg.mxu0
    %10016 = vmatpush.bf16.msra.mxu0 %v9953
    %10017 = vmatpush.bf16.msra.mxu0 %v9952
    %10018 = vmatpush.bf16.msra.mxu0 %v9951
    %10019 = vmatpush.bf16.msra.mxu0 %v9950
    %10020 = vmatpush.bf16.msra.mxu0 %v9949
    %10021 = vmatpush.bf16.msra.mxu0 %v9948
    %10022 = vmatpush.bf16.msra.mxu0 %v9947
    %10023 = vmatpush.bf16.msra.mxu0 %v9946
    %10024 = vmatmul.bf16.gmra.mxu0 %v9743
    %v10025 = vpop.f32.mrf.mxu0
    %v10026 = vadd.f32 %v10012, %v10025
    %v10027 = vpop.f32.mrf.mxu0
    %v10028 = vadd.f32 %v10014, %v10027
    %10029 = vdwg.mxu0
    %10030 = vmatpush.bf16.msra.mxu0 %v9961
    %10031 = vmatpush.bf16.msra.mxu0 %v9960
    %10032 = vmatpush.bf16.msra.mxu0 %v9959
    %10033 = vmatpush.bf16.msra.mxu0 %v9958
    %10034 = vmatpush.bf16.msra.mxu0 %v9957
    %10035 = vmatpush.bf16.msra.mxu0 %v9956
    %10036 = vmatpush.bf16.msra.mxu0 %v9955
    %10037 = vmatpush.bf16.msra.mxu0 %v9954
    %10038 = vmatmul.bf16.gmra.mxu0 %v9744
    %v10039 = vpop.f32.mrf.mxu0
    %v10040 = vadd.f32 %v10026, %v10039
    %v10041 = vpop.f32.mrf.mxu0
    %v10042 = vadd.f32 %v10028, %v10041
    %10043 = vdwg.mxu0
    %10044 = vmatpush.bf16.msra.mxu0 %v9969
    %10045 = vmatpush.bf16.msra.mxu0 %v9968
    %10046 = vmatpush.bf16.msra.mxu0 %v9967
    %10047 = vmatpush.bf16.msra.mxu0 %v9966
    %10048 = vmatpush.bf16.msra.mxu0 %v9965
    %10049 = vmatpush.bf16.msra.mxu0 %v9964
    %10050 = vmatpush.bf16.msra.mxu0 %v9963
    %10051 = vmatpush.bf16.msra.mxu0 %v9962
    %10052 = vmatmul.bf16.gmra.mxu0 %v9745
    %v10053 = vpop.f32.mrf.mxu0
    %v10054 = vadd.f32 %v10040, %v10053
    %v10055 = vpop.f32.mrf.mxu0
    %v10056 = vadd.f32 %v10042, %v10055
    %10057 = vdwg.mxu0
    %v10058 = vadd.f32 %v9615, %v10054
    %v10059 = vadd.f32 %v9617, %v10056
    %v10060 = vld [vmem:[%s8736 + $0x30] sm:$0xff]
    %v10061 = vld [vmem:[%s8736 + $0x38] sm:$0xff]
    %v10062 = vld [vmem:[%s8736 + $0x70] sm:$0xff]
    %v10063 = vld [vmem:[%s8736 + $0x78] sm:$0xff]
    %v10064 = vld [vmem:[%s8736 + $0xb0] sm:$0xff]
    %v10065 = vld [vmem:[%s8736 + $0xb8] sm:$0xff]
    %v10066 = vld [vmem:[%s8736 + $0xf0] sm:$0xff]
    %v10067 = vld [vmem:[%s8736 + $0xf8] sm:$0xff]
    %s10068 = scalar_lea.vmem %s13, 25
    %v10069 = vld [vmem:[%s10068] ss:$2 sm:$0xf]
    %v10071 = vperm.slane %v10069, 0
    %v10072 = vperm.slane %v10069, 1
    %v10073 = vperm.slane %v10069, 2
    %v10074 = vperm.slane %v10069, 3
    %v10087 = vunpack.c.l.b16 %v10060
    %v10088 = vunpack.c.h.b16 %v10060
    %v10089 = vunpack.c.l.b16 %v10061
    %v10090 = vunpack.c.h.b16 %v10061
    %v10091 = vunpack.c.l.b16 %v10062
    %v10092 = vunpack.c.h.b16 %v10062
    %v10093 = vunpack.c.l.b16 %v10063
    %v10094 = vunpack.c.h.b16 %v10063
    %v10095 = vunpack.c.l.b16 %v10064
    %v10096 = vunpack.c.h.b16 %v10064
    %v10097 = vunpack.c.l.b16 %v10065
    %v10098 = vunpack.c.h.b16 %v10065
    %v10099 = vunpack.c.l.b16 %v10066
    %v10100 = vunpack.c.h.b16 %v10066
    %v10101 = vunpack.c.l.b16 %v10067
    %v10102 = vunpack.c.h.b16 %v10067
    %v10103 = vpack.c.b16 %v10091, %v10087
    %v10104 = vpack.c.b16 %v10092, %v10088
    %v10105 = vpack.c.b16 %v10093, %v10089
    %v10106 = vpack.c.b16 %v10094, %v10090
    %v10107 = vpack.c.b16 %v10099, %v10095
    %v10108 = vpack.c.b16 %v10100, %v10096
    %v10109 = vpack.c.b16 %v10101, %v10097
    %v10110 = vpack.c.b16 %v10102, %v10098
    %10119 = vmatpush.bf16.msra.mxu0 0
    %10120 = vmatpush.bf16.msra.mxu0 0
    %10121 = vmatpush.bf16.msra.mxu0 0
    %10122 = vmatpush.bf16.msra.mxu0 0
    %10123 = vmatpush.bf16.msra.mxu0 0
    %10124 = vmatpush.bf16.msra.mxu0 0
    %10125 = vmatpush.bf16.msra.mxu0 %v10107
    %10126 = vmatpush.bf16.msra.mxu0 %v10103
    %10127 = vmatmul.bf16.gmra.mxu0 %v8797
    %v10128 = vpop.f32.mrf.mxu0
    %v10129 = vadd.f32 %v10071, %v10128
    %v10130 = vpop.f32.mrf.mxu0
    %v10131 = vadd.f32 %v10071, %v10130
    %10132 = vdwg.mxu0
    %10133 = vmatpush.bf16.msra.mxu0 0
    %10134 = vmatpush.bf16.msra.mxu0 0
    %10135 = vmatpush.bf16.msra.mxu0 0
    %10136 = vmatpush.bf16.msra.mxu0 0
    %10137 = vmatpush.bf16.msra.mxu0 0
    %10138 = vmatpush.bf16.msra.mxu0 0
    %10139 = vmatpush.bf16.msra.mxu0 %v10108
    %10140 = vmatpush.bf16.msra.mxu0 %v10104
    %10141 = vmatmul.bf16.gmra.mxu0 %v8797
    %v10142 = vpop.f32.mrf.mxu0
    %v10143 = vadd.f32 %v10072, %v10142
    %v10144 = vpop.f32.mrf.mxu0
    %v10145 = vadd.f32 %v10072, %v10144
    %10146 = vdwg.mxu0
    %10147 = vmatpush.bf16.msra.mxu0 0
    %10148 = vmatpush.bf16.msra.mxu0 0
    %10149 = vmatpush.bf16.msra.mxu0 0
    %10150 = vmatpush.bf16.msra.mxu0 0
    %10151 = vmatpush.bf16.msra.mxu0 0
    %10152 = vmatpush.bf16.msra.mxu0 0
    %10153 = vmatpush.bf16.msra.mxu0 %v10109
    %10154 = vmatpush.bf16.msra.mxu0 %v10105
    %10155 = vmatmul.bf16.gmra.mxu0 %v8797
    %v10156 = vpop.f32.mrf.mxu0
    %v10157 = vadd.f32 %v10073, %v10156
    %v10158 = vpop.f32.mrf.mxu0
    %v10159 = vadd.f32 %v10073, %v10158
    %10160 = vdwg.mxu0
    %10161 = vmatpush.bf16.msra.mxu0 0
    %10162 = vmatpush.bf16.msra.mxu0 0
    %10163 = vmatpush.bf16.msra.mxu0 0
    %10164 = vmatpush.bf16.msra.mxu0 0
    %10165 = vmatpush.bf16.msra.mxu0 0
    %10166 = vmatpush.bf16.msra.mxu0 0
    %10167 = vmatpush.bf16.msra.mxu0 %v10110
    %10168 = vmatpush.bf16.msra.mxu0 %v10106
    %10169 = vmatmul.bf16.gmra.mxu0 %v8797
    %v10170 = vpop.f32.mrf.mxu0
    %v10171 = vadd.f32 %v10074, %v10170
    %v10172 = vpop.f32.mrf.mxu0
    %v10173 = vadd.f32 %v10074, %v10172
    %10174 = vdwg.mxu0
    %v10175 = vmax.f32 %v10129, 0.0
    %v10176 = vmax.f32 %v10143, 0.0
    %v10177 = vmax.f32 %v10157, 0.0
    %v10178 = vmax.f32 %v10171, 0.0
    %v10179 = vmax.f32 %v10131, 0.0
    %v10180 = vmax.f32 %v10145, 0.0
    %v10181 = vmax.f32 %v10159, 0.0
    %v10182 = vmax.f32 %v10173, 0.0
    %v10183 = vpack.c.bf16 %v10179, %v10175
    %v10184 = vpack.c.bf16 %v10180, %v10176
    %v10185 = vpack.c.bf16 %v10181, %v10177
    %v10186 = vpack.c.bf16 %v10182, %v10178
    %v10187 = vld [vmem:[%s8867 + $0x300] sm:$0xf]
    %v10188 = vld [vmem:[%s8867 + $0x304] sm:$0xf]
    %v10189 = vld [vmem:[%s8867 + $0x308] sm:$0xf]
    %v10190 = vld [vmem:[%s8867 + $0x30c] sm:$0xf]
    %v10191 = vld [vmem:[%s8867 + $0x310] sm:$0xf]
    %v10192 = vld [vmem:[%s8867 + $0x314] sm:$0xf]
    %v10193 = vld [vmem:[%s8867 + $0x318] sm:$0xf]
    %v10194 = vld [vmem:[%s8867 + $0x31c] sm:$0xf]
    %v10195 = vld [vmem:[%s8867 + $0x320] sm:$0xf]
    %v10196 = vld [vmem:[%s8867 + $0x324] sm:$0xf]
    %v10197 = vld [vmem:[%s8867 + $0x328] sm:$0xf]
    %v10198 = vld [vmem:[%s8867 + $0x32c] sm:$0xf]
    %v10199 = vld [vmem:[%s8867 + $0x330] sm:$0xf]
    %v10200 = vld [vmem:[%s8867 + $0x334] sm:$0xf]
    %v10201 = vld [vmem:[%s8867 + $0x338] sm:$0xf]
    %v10202 = vld [vmem:[%s8867 + $0x33c] sm:$0xf]
    %v10203 = vld [vmem:[%s8867 + $0x340] sm:$0xf]
    %v10204 = vld [vmem:[%s8867 + $0x344] sm:$0xf]
    %v10205 = vld [vmem:[%s8867 + $0x348] sm:$0xf]
    %v10206 = vld [vmem:[%s8867 + $0x34c] sm:$0xf]
    %v10207 = vld [vmem:[%s8867 + $0x350] sm:$0xf]
    %v10208 = vld [vmem:[%s8867 + $0x354] sm:$0xf]
    %v10209 = vld [vmem:[%s8867 + $0x358] sm:$0xf]
    %v10210 = vld [vmem:[%s8867 + $0x35c] sm:$0xf]
    %v10211 = vld [vmem:[%s8867 + $0x360] sm:$0xf]
    %v10212 = vld [vmem:[%s8867 + $0x364] sm:$0xf]
    %v10213 = vld [vmem:[%s8867 + $0x368] sm:$0xf]
    %v10214 = vld [vmem:[%s8867 + $0x36c] sm:$0xf]
    %v10215 = vld [vmem:[%s8867 + $0x370] sm:$0xf]
    %v10216 = vld [vmem:[%s8867 + $0x374] sm:$0xf]
    %v10217 = vld [vmem:[%s8867 + $0x378] sm:$0xf]
    %v10218 = vld [vmem:[%s8867 + $0x37c] sm:$0xf]
    %v10219 = vld [vmem:[%s8867 + $0x380] sm:$0xf]
    %v10220 = vld [vmem:[%s8867 + $0x384] sm:$0xf]
    %v10221 = vld [vmem:[%s8867 + $0x388] sm:$0xf]
    %v10222 = vld [vmem:[%s8867 + $0x38c] sm:$0xf]
    %v10223 = vld [vmem:[%s8867 + $0x390] sm:$0xf]
    %v10224 = vld [vmem:[%s8867 + $0x394] sm:$0xf]
    %v10225 = vld [vmem:[%s8867 + $0x398] sm:$0xf]
    %v10226 = vld [vmem:[%s8867 + $0x39c] sm:$0xf]
    %v10227 = vld [vmem:[%s8867 + $0x3a0] sm:$0xf]
    %v10228 = vld [vmem:[%s8867 + $0x3a4] sm:$0xf]
    %v10229 = vld [vmem:[%s8867 + $0x3a8] sm:$0xf]
    %v10230 = vld [vmem:[%s8867 + $0x3ac] sm:$0xf]
    %v10231 = vld [vmem:[%s8867 + $0x3b0] sm:$0xf]
    %v10232 = vld [vmem:[%s8867 + $0x3b4] sm:$0xf]
    %v10233 = vld [vmem:[%s8867 + $0x3b8] sm:$0xf]
    %v10234 = vld [vmem:[%s8867 + $0x3bc] sm:$0xf]
    %v10235 = vld [vmem:[%s8867 + $0x3c0] sm:$0xf]
    %v10236 = vld [vmem:[%s8867 + $0x3c4] sm:$0xf]
    %v10237 = vld [vmem:[%s8867 + $0x3c8] sm:$0xf]
    %v10238 = vld [vmem:[%s8867 + $0x3cc] sm:$0xf]
    %v10239 = vld [vmem:[%s8867 + $0x3d0] sm:$0xf]
    %v10240 = vld [vmem:[%s8867 + $0x3d4] sm:$0xf]
    %v10241 = vld [vmem:[%s8867 + $0x3d8] sm:$0xf]
    %v10242 = vld [vmem:[%s8867 + $0x3dc] sm:$0xf]
    %v10243 = vld [vmem:[%s8867 + $0x3e0] sm:$0xf]
    %v10244 = vld [vmem:[%s8867 + $0x3e4] sm:$0xf]
    %v10245 = vld [vmem:[%s8867 + $0x3e8] sm:$0xf]
    %v10246 = vld [vmem:[%s8867 + $0x3ec] sm:$0xf]
    %v10247 = vld [vmem:[%s8867 + $0x3f0] sm:$0xf]
    %v10248 = vld [vmem:[%s8867 + $0x3f4] sm:$0xf]
    %v10249 = vld [vmem:[%s8867 + $0x3f8] sm:$0xf]
    %v10250 = vld [vmem:[%s8867 + $0x3fc] sm:$0xf]
    %v10315 = vunpack.c.l.b16 %v10187
    %v10316 = vunpack.c.l.b16 %v10188
    %v10317 = vunpack.c.l.b16 %v10189
    %v10318 = vunpack.c.l.b16 %v10190
    %v10319 = vunpack.c.l.b16 %v10191
    %v10320 = vunpack.c.l.b16 %v10192
    %v10321 = vunpack.c.l.b16 %v10193
    %v10322 = vunpack.c.l.b16 %v10194
    %v10323 = vunpack.c.l.b16 %v10195
    %v10324 = vunpack.c.l.b16 %v10196
    %v10325 = vunpack.c.l.b16 %v10197
    %v10326 = vunpack.c.l.b16 %v10198
    %v10327 = vunpack.c.l.b16 %v10199
    %v10328 = vunpack.c.l.b16 %v10200
    %v10329 = vunpack.c.l.b16 %v10201
    %v10330 = vunpack.c.l.b16 %v10202
    %v10331 = vunpack.c.l.b16 %v10203
    %v10332 = vunpack.c.l.b16 %v10204
    %v10333 = vunpack.c.l.b16 %v10205
    %v10334 = vunpack.c.l.b16 %v10206
    %v10335 = vunpack.c.l.b16 %v10207
    %v10336 = vunpack.c.l.b16 %v10208
    %v10337 = vunpack.c.l.b16 %v10209
    %v10338 = vunpack.c.l.b16 %v10210
    %v10339 = vunpack.c.l.b16 %v10211
    %v10340 = vunpack.c.l.b16 %v10212
    %v10341 = vunpack.c.l.b16 %v10213
    %v10342 = vunpack.c.l.b16 %v10214
    %v10343 = vunpack.c.l.b16 %v10215
    %v10344 = vunpack.c.l.b16 %v10216
    %v10345 = vunpack.c.l.b16 %v10217
    %v10346 = vunpack.c.l.b16 %v10218
    %v10347 = vunpack.c.l.b16 %v10219
    %v10348 = vunpack.c.l.b16 %v10220
    %v10349 = vunpack.c.l.b16 %v10221
    %v10350 = vunpack.c.l.b16 %v10222
    %v10351 = vunpack.c.l.b16 %v10223
    %v10352 = vunpack.c.l.b16 %v10224
    %v10353 = vunpack.c.l.b16 %v10225
    %v10354 = vunpack.c.l.b16 %v10226
    %v10355 = vunpack.c.l.b16 %v10227
    %v10356 = vunpack.c.l.b16 %v10228
    %v10357 = vunpack.c.l.b16 %v10229
    %v10358 = vunpack.c.l.b16 %v10230
    %v10359 = vunpack.c.l.b16 %v10231
    %v10360 = vunpack.c.l.b16 %v10232
    %v10361 = vunpack.c.l.b16 %v10233
    %v10362 = vunpack.c.l.b16 %v10234
    %v10363 = vunpack.c.l.b16 %v10235
    %v10364 = vunpack.c.l.b16 %v10236
    %v10365 = vunpack.c.l.b16 %v10237
    %v10366 = vunpack.c.l.b16 %v10238
    %v10367 = vunpack.c.l.b16 %v10239
    %v10368 = vunpack.c.l.b16 %v10240
    %v10369 = vunpack.c.l.b16 %v10241
    %v10370 = vunpack.c.l.b16 %v10242
    %v10371 = vunpack.c.l.b16 %v10243
    %v10372 = vunpack.c.l.b16 %v10244
    %v10373 = vunpack.c.l.b16 %v10245
    %v10374 = vunpack.c.l.b16 %v10246
    %v10375 = vunpack.c.l.b16 %v10247
    %v10376 = vunpack.c.l.b16 %v10248
    %v10377 = vunpack.c.l.b16 %v10249
    %v10378 = vunpack.c.l.b16 %v10250
    %v10379 = vpack.c.b16 %v10316, %v10315
    %v10380 = vpack.c.b16 %v10318, %v10317
    %v10381 = vpack.c.b16 %v10320, %v10319
    %v10382 = vpack.c.b16 %v10322, %v10321
    %v10383 = vpack.c.b16 %v10324, %v10323
    %v10384 = vpack.c.b16 %v10326, %v10325
    %v10385 = vpack.c.b16 %v10328, %v10327
    %v10386 = vpack.c.b16 %v10330, %v10329
    %v10387 = vpack.c.b16 %v10332, %v10331
    %v10388 = vpack.c.b16 %v10334, %v10333
    %v10389 = vpack.c.b16 %v10336, %v10335
    %v10390 = vpack.c.b16 %v10338, %v10337
    %v10391 = vpack.c.b16 %v10340, %v10339
    %v10392 = vpack.c.b16 %v10342, %v10341
    %v10393 = vpack.c.b16 %v10344, %v10343
    %v10394 = vpack.c.b16 %v10346, %v10345
    %v10395 = vpack.c.b16 %v10348, %v10347
    %v10396 = vpack.c.b16 %v10350, %v10349
    %v10397 = vpack.c.b16 %v10352, %v10351
    %v10398 = vpack.c.b16 %v10354, %v10353
    %v10399 = vpack.c.b16 %v10356, %v10355
    %v10400 = vpack.c.b16 %v10358, %v10357
    %v10401 = vpack.c.b16 %v10360, %v10359
    %v10402 = vpack.c.b16 %v10362, %v10361
    %v10403 = vpack.c.b16 %v10364, %v10363
    %v10404 = vpack.c.b16 %v10366, %v10365
    %v10405 = vpack.c.b16 %v10368, %v10367
    %v10406 = vpack.c.b16 %v10370, %v10369
    %v10407 = vpack.c.b16 %v10372, %v10371
    %v10408 = vpack.c.b16 %v10374, %v10373
    %v10409 = vpack.c.b16 %v10376, %v10375
    %v10410 = vpack.c.b16 %v10378, %v10377
    %10443 = vmatpush.bf16.msra.mxu0 %v10386
    %10444 = vmatpush.bf16.msra.mxu0 %v10385
    %10445 = vmatpush.bf16.msra.mxu0 %v10384
    %10446 = vmatpush.bf16.msra.mxu0 %v10383
    %10447 = vmatpush.bf16.msra.mxu0 %v10382
    %10448 = vmatpush.bf16.msra.mxu0 %v10381
    %10449 = vmatpush.bf16.msra.mxu0 %v10380
    %10450 = vmatpush.bf16.msra.mxu0 %v10379
    %10451 = vmatmul.bf16.gmra.mxu0 %v10183
    %v10452 = vpop.f32.mrf.mxu0
    %v10453 = vadd.f32 0.0, %v10452
    %v10454 = vpop.f32.mrf.mxu0
    %v10455 = vadd.f32 0.0, %v10454
    %10456 = vdwg.mxu0
    %10457 = vmatpush.bf16.msra.mxu0 %v10394
    %10458 = vmatpush.bf16.msra.mxu0 %v10393
    %10459 = vmatpush.bf16.msra.mxu0 %v10392
    %10460 = vmatpush.bf16.msra.mxu0 %v10391
    %10461 = vmatpush.bf16.msra.mxu0 %v10390
    %10462 = vmatpush.bf16.msra.mxu0 %v10389
    %10463 = vmatpush.bf16.msra.mxu0 %v10388
    %10464 = vmatpush.bf16.msra.mxu0 %v10387
    %10465 = vmatmul.bf16.gmra.mxu0 %v10184
    %v10466 = vpop.f32.mrf.mxu0
    %v10467 = vadd.f32 %v10453, %v10466
    %v10468 = vpop.f32.mrf.mxu0
    %v10469 = vadd.f32 %v10455, %v10468
    %10470 = vdwg.mxu0
    %10471 = vmatpush.bf16.msra.mxu0 %v10402
    %10472 = vmatpush.bf16.msra.mxu0 %v10401
    %10473 = vmatpush.bf16.msra.mxu0 %v10400
    %10474 = vmatpush.bf16.msra.mxu0 %v10399
    %10475 = vmatpush.bf16.msra.mxu0 %v10398
    %10476 = vmatpush.bf16.msra.mxu0 %v10397
    %10477 = vmatpush.bf16.msra.mxu0 %v10396
    %10478 = vmatpush.bf16.msra.mxu0 %v10395
    %10479 = vmatmul.bf16.gmra.mxu0 %v10185
    %v10480 = vpop.f32.mrf.mxu0
    %v10481 = vadd.f32 %v10467, %v10480
    %v10482 = vpop.f32.mrf.mxu0
    %v10483 = vadd.f32 %v10469, %v10482
    %10484 = vdwg.mxu0
    %10485 = vmatpush.bf16.msra.mxu0 %v10410
    %10486 = vmatpush.bf16.msra.mxu0 %v10409
    %10487 = vmatpush.bf16.msra.mxu0 %v10408
    %10488 = vmatpush.bf16.msra.mxu0 %v10407
    %10489 = vmatpush.bf16.msra.mxu0 %v10406
    %10490 = vmatpush.bf16.msra.mxu0 %v10405
    %10491 = vmatpush.bf16.msra.mxu0 %v10404
    %10492 = vmatpush.bf16.msra.mxu0 %v10403
    %10493 = vmatmul.bf16.gmra.mxu0 %v10186
    %v10494 = vpop.f32.mrf.mxu0
    %v10495 = vadd.f32 %v10481, %v10494
    %v10496 = vpop.f32.mrf.mxu0
    %v10497 = vadd.f32 %v10483, %v10496
    %10498 = vdwg.mxu0
    %v10499 = vadd.f32 %v10058, %v10495
    %v10500 = vadd.f32 %v10059, %v10497
    %v10501 = vld [vmem:[%s15 + $0x1] sm:$0x1]
    %v10502 = vperm.slane %v10501, 0
    %v10503 = vadd.f32 %v10499, %v10502
    %v10504 = vadd.f32 %v10500, %v10502
    %v10507 = vrot.slane %v10503, 2
    %v10508 = vrot.slane %v10503, 4
    %v10509 = vrot.slane %v10503, 6
    %v10510 = vrot.slane %v10504, 2
    %v10511 = vrot.slane %v10504, 4
    %v10512 = vrot.slane %v10504, 6
    %v10519 = vadd.f32 %v8700, %v10503
    %v10520 = vadd.f32 %v8701, %v10507
    %v10521 = vadd.f32 %v8702, %v10508
    %v10522 = vadd.f32 %v8703, %v10509
    %v10523 = vadd.f32 %v8704, %v10504
    %v10524 = vadd.f32 %v8705, %v10510
    %v10525 = vadd.f32 %v8706, %v10511
    %v10526 = vadd.f32 %v8707, %v10512
    %v10527 = vld [vmem:[%s10 + $0x1] sm:$0x1]
    %v10528 = vld [vmem:[%s11 + $0x1] sm:$0x1]
    %10537 = vst [vmem:[#allocation1] ss:$4 sm:$0xff] %v10519
    %s10538 = scalar_lea.vmem [#allocation1], 1
    %10539 = vst [vmem:[%s10538] ss:$4 sm:$0xff] %v10520
    %s10540 = scalar_lea.vmem [#allocation1], 2
    %10541 = vst [vmem:[%s10540] ss:$4 sm:$0xff] %v10521
    %s10542 = scalar_lea.vmem [#allocation1], 3
    %10543 = vst [vmem:[%s10542] ss:$4 sm:$0xff] %v10522
    %s10544 = scalar_lea.vmem [#allocation1], 32
    %10545 = vst [vmem:[%s10544] ss:$4 sm:$0xff] %v10523
    %s10546 = scalar_lea.vmem [#allocation1], 33
    %10547 = vst [vmem:[%s10546] ss:$4 sm:$0xff] %v10524
    %s10548 = scalar_lea.vmem [#allocation1], 34
    %10549 = vst [vmem:[%s10548] ss:$4 sm:$0xff] %v10525
    %s10550 = scalar_lea.vmem [#allocation1], 35
    %10551 = vst [vmem:[%s10550] ss:$4 sm:$0xff] %v10526
    %v10552 = vld.sshfl [vmem:[#allocation1] sm:$0xff pattern:$0x73625140]
    %v10553 = vld.sshfl [vmem:[#allocation1 + $0x20] sm:$0xff pattern:$0x73625140]
    %v10556 = vsel %vm220, %v10552, 0.0
    %10557 = vadd.xlane.f32.xlu0 %v10556
    %v10558 = vpop.xlane.xlu0 %10557
    %v10559 = vsel %vm220, %v10553, 0.0
    %10560 = vadd.xlane.f32.xlu0 %v10559
    %v10561 = vpop.xlane.xlu0 %10560
    %v10562 = vmul.f32 %v10558, %v3221
    %v10563 = vmul.f32 %v10561, %v3221
    %v10567 = vunpack.c.l.s4 269488144
    %v10568 = vunpack.c.0.s8 %v10567
    %v10569 = vperm.slane %v10562, %v10568
    %v10571 = vunpack.c.l.s4 842150450
    %v10572 = vunpack.c.0.s8 %v10571
    %v10573 = vperm.slane %v10562, %v10572
    %v10575 = vunpack.c.l.s4 1414812756
    %v10576 = vunpack.c.0.s8 %v10575
    %v10577 = vperm.slane %v10562, %v10576
    %v10579 = vunpack.c.l.s4 1987475062
    %v10580 = vunpack.c.0.s8 %v10579
    %v10581 = vperm.slane %v10562, %v10580
    %v10583 = vunpack.c.l.s4 269488144
    %v10584 = vunpack.c.0.s8 %v10583
    %v10585 = vperm.slane %v10563, %v10584
    %v10587 = vunpack.c.l.s4 842150450
    %v10588 = vunpack.c.0.s8 %v10587
    %v10589 = vperm.slane %v10563, %v10588
    %v10591 = vunpack.c.l.s4 1414812756
    %v10592 = vunpack.c.0.s8 %v10591
    %v10593 = vperm.slane %v10563, %v10592
    %v10595 = vunpack.c.l.s4 1987475062
    %v10596 = vunpack.c.0.s8 %v10595
    %v10597 = vperm.slane %v10563, %v10596
    %v10606 = vsub.f32 %v10519, %v10569
    %v10607 = vsub.f32 %v10520, %v10573
    %v10608 = vsub.f32 %v10521, %v10577
    %v10609 = vsub.f32 %v10522, %v10581
    %v10610 = vsub.f32 %v10523, %v10585
    %v10611 = vsub.f32 %v10524, %v10589
    %v10612 = vsub.f32 %v10525, %v10593
    %v10613 = vsub.f32 %v10526, %v10597
    %v10614 = vmul.f32 %v10606, %v10606
    %v10615 = vmul.f32 %v10607, %v10607
    %v10616 = vmul.f32 %v10608, %v10608
    %v10617 = vmul.f32 %v10609, %v10609
    %v10618 = vmul.f32 %v10610, %v10610
    %v10619 = vmul.f32 %v10611, %v10611
    %v10620 = vmul.f32 %v10612, %v10612
    %v10621 = vmul.f32 %v10613, %v10613
    %10630 = vst [vmem:[#allocation1] ss:$4 sm:$0xff] %v10614
    %s10631 = scalar_lea.vmem [#allocation1], 1
    %10632 = vst [vmem:[%s10631] ss:$4 sm:$0xff] %v10615
    %s10633 = scalar_lea.vmem [#allocation1], 2
    %10634 = vst [vmem:[%s10633] ss:$4 sm:$0xff] %v10616
    %s10635 = scalar_lea.vmem [#allocation1], 3
    %10636 = vst [vmem:[%s10635] ss:$4 sm:$0xff] %v10617
    %s10637 = scalar_lea.vmem [#allocation1], 32
    %10638 = vst [vmem:[%s10637] ss:$4 sm:$0xff] %v10618
    %s10639 = scalar_lea.vmem [#allocation1], 33
    %10640 = vst [vmem:[%s10639] ss:$4 sm:$0xff] %v10619
    %s10641 = scalar_lea.vmem [#allocation1], 34
    %10642 = vst [vmem:[%s10641] ss:$4 sm:$0xff] %v10620
    %s10643 = scalar_lea.vmem [#allocation1], 35
    %10644 = vst [vmem:[%s10643] ss:$4 sm:$0xff] %v10621
    %v10645 = vld.sshfl [vmem:[#allocation1] sm:$0xff pattern:$0x73625140]
    %v10646 = vld.sshfl [vmem:[#allocation1 + $0x20] sm:$0xff pattern:$0x73625140]
    %v10649 = vsel %vm220, %v10645, 0.0
    %10650 = vadd.xlane.f32.xlu0 %v10649
    %v10651 = vpop.xlane.xlu0 %10650
    %v10652 = vsel %vm220, %v10646, 0.0
    %10653 = vadd.xlane.f32.xlu0 %v10652
    %v10654 = vpop.xlane.xlu0 %10653
    %v10655 = vmul.f32 %v10651, %v3221
    %v10656 = vmul.f32 %v10654, %v3221
    %v10657 = vadd.f32 %v10655, 1e-05
    %v10658 = vadd.f32 %v10656, 1e-05
    %v10659 = vrsqrt.pop %v10657
    %v10660 = vmul.f32 %v10659, %v10657
    %v10661 = vmul.f32 %v10660, %v10659
    %v10662 = vmul.f32 0.5, %v10661
    %v10663 = vsub.f32 1.5, %v10662
    %v10664 = vmul.f32 %v10659, %v10663
    %vm10665 = vweird.f32 %v10657
    %vm10666 = vweird.f32 %v10659
    %vm10667 = vmor %vm10665, %vm10666
    %v10668 = vsel %vm10667, %v10659, %v10664
    %v10669 = vrsqrt.pop %v10658
    %v10670 = vmul.f32 %v10669, %v10658
    %v10671 = vmul.f32 %v10670, %v10669
    %v10672 = vmul.f32 0.5, %v10671
    %v10673 = vsub.f32 1.5, %v10672
    %v10674 = vmul.f32 %v10669, %v10673
    %vm10675 = vweird.f32 %v10658
    %vm10676 = vweird.f32 %v10669
    %vm10677 = vmor %vm10675, %vm10676
    %v10678 = vsel %vm10677, %v10669, %v10674
    %v10682 = vunpack.c.l.s4 269488144
    %v10683 = vunpack.c.0.s8 %v10682
    %v10684 = vperm.slane %v10668, %v10683
    %v10686 = vunpack.c.l.s4 842150450
    %v10687 = vunpack.c.0.s8 %v10686
    %v10688 = vperm.slane %v10668, %v10687
    %v10690 = vunpack.c.l.s4 1414812756
    %v10691 = vunpack.c.0.s8 %v10690
    %v10692 = vperm.slane %v10668, %v10691
    %v10694 = vunpack.c.l.s4 1987475062
    %v10695 = vunpack.c.0.s8 %v10694
    %v10696 = vperm.slane %v10668, %v10695
    %v10698 = vunpack.c.l.s4 269488144
    %v10699 = vunpack.c.0.s8 %v10698
    %v10700 = vperm.slane %v10678, %v10699
    %v10702 = vunpack.c.l.s4 842150450
    %v10703 = vunpack.c.0.s8 %v10702
    %v10704 = vperm.slane %v10678, %v10703
    %v10706 = vunpack.c.l.s4 1414812756
    %v10707 = vunpack.c.0.s8 %v10706
    %v10708 = vperm.slane %v10678, %v10707
    %v10710 = vunpack.c.l.s4 1987475062
    %v10711 = vunpack.c.0.s8 %v10710
    %v10712 = vperm.slane %v10678, %v10711
    %v10721 = vmul.f32 %v10606, %v10684
    %v10722 = vmul.f32 %v10607, %v10688
    %v10723 = vmul.f32 %v10608, %v10692
    %v10724 = vmul.f32 %v10609, %v10696
    %v10725 = vmul.f32 %v10610, %v10700
    %v10726 = vmul.f32 %v10611, %v10704
    %v10727 = vmul.f32 %v10612, %v10708
    %v10728 = vmul.f32 %v10613, %v10712
    %v10729 = vperm.slane %v10527, 0
    %v10731 = vrot.slane %v10729, 2
    %v10732 = vrot.slane %v10729, 4
    %v10733 = vrot.slane %v10729, 6
    %v10737 = vmul.f32 %v10721, %v10729
    %v10738 = vmul.f32 %v10722, %v10731
    %v10739 = vmul.f32 %v10723, %v10732
    %v10740 = vmul.f32 %v10724, %v10733
    %v10741 = vmul.f32 %v10725, %v10729
    %v10742 = vmul.f32 %v10726, %v10731
    %v10743 = vmul.f32 %v10727, %v10732
    %v10744 = vmul.f32 %v10728, %v10733
    %v10745 = vperm.slane %v10528, 0
    %v10747 = vrot.slane %v10745, 2
    %v10748 = vrot.slane %v10745, 4
    %v10749 = vrot.slane %v10745, 6
    %v10753 = vadd.f32 %v10737, %v10745
    %v10754 = vadd.f32 %v10738, %v10747
    %v10755 = vadd.f32 %v10739, %v10748
    %v10756 = vadd.f32 %v10740, %v10749
    %v10757 = vadd.f32 %v10741, %v10745
    %v10758 = vadd.f32 %v10742, %v10747
    %v10759 = vadd.f32 %v10743, %v10748
    %v10760 = vadd.f32 %v10744, %v10749
    %vm10761 = vcmask 254976
    %v10762 = vsel %vm10761, %v10753, 0.0
    %v10763 = vsel %vm10761, %v10754, 0.0
    %v10764 = vadd.f32 %v10762, %v10763
    %v10765 = vsel %vm10761, %v10755, 0.0
    %v10766 = vadd.f32 %v10764, %v10765
    %v10767 = vsel %vm10761, %v10756, 0.0
    %v10768 = vadd.f32 %v10766, %v10767
    %v10769 = vsel %vm10761, %v10757, 0.0
    %v10770 = vadd.f32 %v10768, %v10769
    %v10771 = vsel %vm10761, %v10758, 0.0
    %v10772 = vadd.f32 %v10770, %v10771
    %v10773 = vsel %vm10761, %v10759, 0.0
    %v10774 = vadd.f32 %v10772, %v10773
    %v10775 = vsel %vm10761, %v10760, 0.0
    %v10776 = vadd.f32 %v10774, %v10775
    %v10777 = vrcp.pop 8.0
    %v10778 = vmul.f32 8.0, %v10777
    %v10779 = vsub.f32 1.0, %v10778
    %v10780 = vmul.f32 %v10777, %v10779
    %v10781 = vadd.f32 %v10777, %v10780
    %vm10782 = vweird.f32 %v10777
    %v10783 = vsel %vm10782, %v10777, %v10781
    %v10784 = vmul.f32 %v10776, %v10783
    %v10785 = vpack.c.bf16 %v10784, %v10784
    %v10786 = vld [vmem:[%s16] sm:$0xf]
    %v10787 = vld [vmem:[%s16 + $0x4] sm:$0xf]
    %v10788 = vld [vmem:[%s16 + $0x8] sm:$0xf]
    %v10789 = vld [vmem:[%s16 + $0xc] sm:$0xf]
    %v10790 = vld [vmem:[%s17] sm:$0x1]
    %v10792 = vperm.slane %v10790, 0
    %v10798 = vunpack.c.l.b16 %v10786
    %v10799 = vunpack.c.l.b16 %v10787
    %v10800 = vunpack.c.l.b16 %v10788
    %v10801 = vunpack.c.l.b16 %v10789
    %v10802 = vpack.c.b16 %v10799, %v10798
    %v10803 = vpack.c.b16 %v10801, %v10800
    %v10807 = vsel %vm220, %v10785, 0
    %10809 = vmatpush.bf16.msra.mxu0 0
    %10810 = vmatpush.bf16.msra.mxu0 0
    %10811 = vmatpush.bf16.msra.mxu0 0
    %10812 = vmatpush.bf16.msra.mxu0 0
    %10813 = vmatpush.bf16.msra.mxu0 0
    %10814 = vmatpush.bf16.msra.mxu0 0
    %10815 = vmatpush.bf16.msra.mxu0 %v10803
    %10816 = vmatpush.bf16.msra.mxu0 %v10802
    %10817 = vmatmul.bf16.gmra.mxu0 %v10807
    %v10818 = vpop.f32.mrf.mxu0
    %v10819 = vadd.f32 %v10792, %v10818
    %v10820 = vpop.f32.mrf.mxu0
    %10821 = vdwg.mxu0
    %vm10822 = vcmask 74752
    %10823 = vst.msk [vmem:[#allocation2] sm:$0x3] %vm10822, %v10819
    // Predicated region
    $region74: #{transformer_forward.1} parent=1 // pred_check
      _
    $region75: #{transformer_forward.1} parent=1 // pred_check_branch
      %10825 = sbr.rel (0) target = $region77
    $region76: #{transformer_forward.1} parent=1 // pred_region
      %10827 = vsyncadd [#allocation3], 0
      %s10829 = sshll.u32 [#allocation2], 4
      %s10830 = int_to_ptr.vmem [resolvable:$true] %s10829
      %s10831 = sshll.u32 %s18, 4
      %s10832 = int_to_ptr.hbm [resolvable:$true] %s10831
      %10834 = dma.vmem_to_hbm [thread:$0]  %s10830, 32, %s10832, [#allocation3]
    $region77: #{transformer_forward.1} parent=1 // pred_fallthru
      _
    // Predicated region
    $region78: #{transformer_forward.1} parent=1 // pred_check
      _
    $region79: #{transformer_forward.1} parent=1 // pred_check_branch
      %10836 = sbr.rel (0) target = $region81
    $region80: #{transformer_forward.1} parent=1 // pred_region
      %10838 = dma.done [#allocation3], 32
    $region81: #{transformer_forward.1} parent=1 // pred_fallthru
      _
    %10839 = vsyncpa [#allocation3], 1

</llo_original>
